<compile_context>
chip_gen: v7x
topology: tpu7x:2x2x1
jax: 0.10.0
libtpu: 0.0.40
codegen_flags: <defaults>
</compile_context>

<pallas_src>
import functools
import math

import jax
import jax.numpy as jnp
from jax import lax
from jax.experimental import pallas as pl
from jax.experimental.pallas import tpu as pltpu

# Pin full f32 matmul precision everywhere (see header).
jax.config.update("jax_default_matmul_precision", "highest")


def _round_up(x, m):
    return ((x + m - 1) // m) * m


def _unimp_kernel(adj_ref, xt_ref, kv_ref, w_row_ref, b_row_ref,
                  wba_ref, wbb_ref, ln_g_ref, ln_b_ref,
                  o_ref, row_sc, m_sc, l_sc, acc_sc,
                  *, heads, out_channels, hc, hcp):
    C = out_channels
    j = pl.program_id(1)

    # ---- once per row tile (first column step): q/skip projection + state init ----
    @pl.when(j == 0)
    def _():
        row_sc[...] = (jnp.dot(xt_ref[...], w_row_ref[...],
                               preferred_element_type=jnp.float32)
                       + b_row_ref[...])                         # [tm, 2*HCP] = (q | skip)
        m_sc[...] = jnp.full_like(m_sc, -1e30)
        l_sc[...] = jnp.zeros_like(l_sc)
        acc_sc[...] = jnp.zeros_like(acc_sc)

    # ---- per (row tile, source-column tile): online-softmax accumulation ----------
    adj = adj_ref[...].astype(jnp.float32)                        # [tm, tk] 0/1 mask
    kv = kv_ref[...]                                              # [tk, 2*HCP] = (k | v)
    row = row_sc[...]                                             # [tm, 2*HCP]

    for h in range(heads):                                        # static loop, heads small
        qh = row[:, h * C:(h + 1) * C]                            # [tm, C] (1/sqrt(C) folded in)
        kh = kv[:, h * C:(h + 1) * C]                             # [tk, C]
        vh = kv[:, hcp + h * C: hcp + (h + 1) * C]                # [tk, C]
        # scores[i, j] = <q_i, k_j>; contract dim 1 of both operands -> no k transpose.
        s = lax.dot_general(qh, kh, (((1,), (1,)), ((), ())),
                            preferred_element_type=jnp.float32)   # [tm, tk]
        # Running (unmasked) max: softmax is shift-invariant and `* adj` removes off-edge
        # terms, so no additive -1e30 bias buffer is needed.
        m_prev = m_sc[h]                                          # [tm, 1]
        m_new = jnp.maximum(m_prev, jnp.max(s, axis=-1, keepdims=True))
        alpha = jnp.exp(m_prev - m_new)
        p = jnp.exp(s - m_new) * adj                              # off-edge / padded cols -> 0
        l_sc[h] = alpha * l_sc[h] + jnp.sum(p, axis=-1, keepdims=True)
        acc_sc[h] = alpha * acc_sc[h] + jnp.dot(p, vh, preferred_element_type=jnp.float32)
        m_sc[h] = m_new

    # ---- once per row tile (last column step): normalize, beta gate, LN, ReLU ------
    @pl.when(j == pl.num_programs(1) - 1)
    def _():
        tm = o_ref.shape[0]
        ohs = []
        for h in range(heads):
            l = l_sc[h]
            inv = 1.0 / jnp.where(l == 0.0, 1.0, l)               # zero-in-degree rows -> 0
            ohs.append(acc_sc[h] * inv)                           # [tm, C]
        if hcp > hc:
            ohs.append(jnp.zeros((tm, hcp - hc), jnp.float32))
        out = jnp.concatenate(ohs, axis=-1)                       # [tm, HCP], lane-dense
        skip = row[:, hcp:]                                       # [tm, HCP] (padded cols 0)

        # Beta gate, algebraically folded on the host:
        #   wba = wb_out + wb_diff (applied to out), wbb = wb_skip - wb_diff (applied to skip)
        blogit = (jnp.sum(out * wba_ref[...], axis=-1, keepdims=True)
                  + jnp.sum(skip * wbb_ref[...], axis=-1, keepdims=True))   # [tm, 1]
        beta = jax.nn.sigmoid(blogit)
        y = beta * skip + (1.0 - beta) * out                      # padded cols stay 0

        # LayerNorm over the hc real columns (eps=1e-5, affine); padded gamma/beta are 0 so
        # padded output columns stay 0.
        inv_hc = 1.0 / hc
        mu = jnp.sum(y, axis=-1, keepdims=True) * inv_hc
        ex2 = jnp.sum(y * y, axis=-1, keepdims=True) * inv_hc
        var = jnp.maximum(ex2 - mu * mu, 0.0)
        y = (y - mu) * lax.rsqrt(var + 1e-5) * ln_g_ref[...] + ln_b_ref[...]

        # act = ReLU; Dropout is identity in eval mode.
        # TODO(synk): training-mode dropout (and attention dropout) not implemented.
        o_ref[...] = jnp.maximum(y, 0.0)


def unimp_layer(x, adj, params, *, heads, out_channels, tm=256, tk=512):
    """adj[i, j] = 1 iff there is an edge j -> i (dense 0/1 mask built from edge_index)."""
    N, F = x.shape
    HC = heads * out_channels
    HCP = _round_up(max(HC, 128), 128)            # lane-dense output / LN working width

    # Target-row tile: sublane dim of the bf16 adj tile -> multiple of 16 (or full).
    tm = _round_up(max(16, min(tm, _round_up(N, 16))), 16)
    N_dst = _round_up(N, tm)
    # Source-column tile: lane dim of the adj tile -> multiple of 128 (or full).
    tk = _round_up(max(128, min(tk, _round_up(N, 128))), 128)
    N_src = _round_up(N, tk)

    x_dst = jnp.pad(x, ((0, N_dst - N), (0, 0)))
    x_src = jnp.pad(x, ((0, N_src - N), (0, 0)))
    adj_p = jnp.pad(adj, ((0, N_dst - N), (0, N_src - N))).astype(jnp.bfloat16)

    scale = 1.0 / math.sqrt(out_channels)

    def padw(w):                                  # zero-pad last dim HC -> HCP
        return jnp.pad(w.astype(jnp.float32), ((0, 0), (0, HCP - HC)))

    # Fused / folded parameter packing (host side, one time).
    w_row = jnp.concatenate([padw(params["wq"] * scale), padw(params["ws"])], axis=1)
    b_row = jnp.concatenate([padw(params["bq"] * scale), padw(params["bs"])], axis=1)
    w_kv = jnp.concatenate([padw(params["wk"]), padw(params["wv"])], axis=1)
    b_kv = jnp.concatenate([padw(params["bk"]), padw(params["bv"])], axis=1)
    wba = padw((params["wb_out"] + params["wb_diff"]).T)     # [1, HCP]
    wbb = padw((params["wb_skip"] - params["wb_diff"]).T)    # [1, HCP]
    ln_g = padw(params["ln_g"])
    ln_b = padw(params["ln_b"])

    # k/v projection hoisted out of the grid loop: computed once here, streamed into the
    # kernel as (tk, 2*HCP) column tiles.  (Constant-index params below are tiny; their
    # default double-buffering is negligible, so no pipeline_mode override.)
    kv = x_src @ w_kv + b_kv                                 # [N_src, 2*HCP] f32

    kernel = functools.partial(_unimp_kernel, heads=heads, out_channels=out_channels,
                               hc=HC, hcp=HCP)

    out = pl.pallas_call(
        kernel,
        out_shape=jax.ShapeDtypeStruct((N_dst, HCP), jnp.float32),
        grid=(N_dst // tm, N_src // tk),
        in_specs=[
            pl.BlockSpec((tm, tk), lambda i, j: (i, j)),        # adj tile (bf16)
            pl.BlockSpec((tm, F), lambda i, j: (i, 0)),         # x row tile (q/skip proj)
            pl.BlockSpec((tk, 2 * HCP), lambda i, j: (j, 0)),   # kv column tile
            pl.BlockSpec((F, 2 * HCP), lambda i, j: (0, 0)),    # w_row = [wq*scale | ws]
            pl.BlockSpec((1, 2 * HCP), lambda i, j: (0, 0)),    # b_row
            pl.BlockSpec((1, HCP), lambda i, j: (0, 0)),        # wb_out + wb_diff
            pl.BlockSpec((1, HCP), lambda i, j: (0, 0)),        # wb_skip - wb_diff
            pl.BlockSpec((1, HCP), lambda i, j: (0, 0)),        # ln gamma (zero-padded)
            pl.BlockSpec((1, HCP), lambda i, j: (0, 0)),        # ln beta  (zero-padded)
        ],
        out_specs=pl.BlockSpec((tm, HCP), lambda i, j: (i, 0)),
        scratch_shapes=[
            pltpu.VMEM((tm, 2 * HCP), jnp.float32),             # q|skip row projection
            pltpu.VMEM((heads, tm, 1), jnp.float32),            # online-softmax running max
            pltpu.VMEM((heads, tm, 1), jnp.float32),            # online-softmax running sum
            pltpu.VMEM((heads, tm, out_channels), jnp.float32), # online-softmax running acc
        ],
        compiler_params=pltpu.CompilerParams(
            dimension_semantics=("parallel", "arbitrary")),
    )(adj_p, x_dst, kv, w_row, b_row, wba, wbb, ln_g, ln_b)

    return out[:N, :HC]


def unimp_reference(x, adj, params, *, heads, out_channels):
    """Pure-JAX reference mirroring PyG TransformerConv(beta=True) + LayerNorm + ReLU."""
    q = x @ params["wq"] + params["bq"]
    k = x @ params["wk"] + params["bk"]
    v = x @ params["wv"] + params["bv"]
    skip = x @ params["ws"] + params["bs"]
    scale = 1.0 / math.sqrt(out_channels)
    outs = []
    for h in range(heads):
        sl = slice(h * out_channels, (h + 1) * out_channels)
        scores = (q[:, sl] @ k[:, sl].T) * scale
        masked = jnp.where(adj > 0, scores, -1e30)
        m = jnp.max(masked, axis=-1, keepdims=True)
        p = jnp.where(adj > 0, jnp.exp(masked - m), 0.0)
        denom = jnp.sum(p, axis=-1, keepdims=True)
        attn = p / jnp.where(denom == 0.0, 1.0, denom)
        outs.append(attn @ v[:, sl])
    out = jnp.concatenate(outs, axis=-1)
    blogit = out @ params["wb_out"] + skip @ params["wb_skip"] + (out - skip) @ params["wb_diff"]
    beta = jax.nn.sigmoid(blogit)
    y = beta * skip + (1.0 - beta) * out
    mu = jnp.mean(y, -1, keepdims=True)
    var = jnp.mean((y - mu) ** 2, -1, keepdims=True)
    y = (y - mu) / jnp.sqrt(var + 1e-5)
    y = y * params["ln_g"] + params["ln_b"]
    return jnp.maximum(y, 0.0)


if __name__ == "__main__":
    # Small shapes: N=160 nodes (2 source-column tiles of 128, 10 target-row tiles of 16),
    # in_channels=8, out_channels=8, heads=4, concat=True.
    N, F, C, H = 160, 8, 8, 4
    HC = H * C

    key = jax.random.PRNGKey(0)
    keys = jax.random.split(key, 13)

    x = jax.random.normal(keys[0], (N, F), dtype=jnp.float32)

    # Ring edges j -> (j+1)%N and j -> (j+2)%N plus ~5% random extra edges.
    src = jnp.concatenate([jnp.arange(N), jnp.arange(N)])
    dst = jnp.concatenate([(jnp.arange(N) + 1) % N, (jnp.arange(N) + 2) % N])
    adj = jnp.zeros((N, N), jnp.float32).at[dst, src].set(1.0)   # adj[i, j]=1 iff edge j -> i
    extra = (jax.random.uniform(keys[12], (N, N)) < 0.05).astype(jnp.float32)
    adj = jnp.maximum(adj, extra)
    # Node 0 gets zero in-degree to exercise the PyG zero-row softmax path.
    adj = adj.at[0, :].set(0.0)

    s = 0.2
    params = {
        "wq": s * jax.random.normal(keys[1], (F, HC), jnp.float32),
        "bq": s * jax.random.normal(keys[2], (1, HC), jnp.float32),
        "wk": s * jax.random.normal(keys[3], (F, HC), jnp.float32),
        "bk": s * jax.random.normal(keys[4], (1, HC), jnp.float32),
        "wv": s * jax.random.normal(keys[5], (F, HC), jnp.float32),
        "bv": s * jax.random.normal(keys[6], (1, HC), jnp.float32),
        "ws": s * jax.random.normal(keys[7], (F, HC), jnp.float32),
        "bs": s * jax.random.normal(keys[8], (1, HC), jnp.float32),
        "wb_out": s * jax.random.normal(keys[9], (HC, 1), jnp.float32),
        "wb_skip": s * jax.random.normal(keys[10], (HC, 1), jnp.float32),
        "wb_diff": s * jax.random.normal(keys[11], (HC, 1), jnp.float32),
        "ln_g": jnp.ones((1, HC), jnp.float32),
        "ln_b": jnp.zeros((1, HC), jnp.float32),
    }

    # tm=16 / tk=128 so the toy graph exercises both grid axes, including the online-softmax
    # accumulation across two source-column tiles.
    y = unimp_layer(x, adj, params, heads=H, out_channels=C, tm=16, tk=128)
    y = jax.block_until_ready(y)

    y_ref = unimp_reference(x, adj, params, heads=H, out_channels=C)
    assert y.shape == (N, HC)
    max_err = float(jnp.max(jnp.abs(y - y_ref)))
    assert jnp.allclose(y, y_ref, rtol=5e-3, atol=5e-3), (
        f"mismatch vs JAX reference (max abs err {max_err:.3e})")

    print("KERNEL_OK")
</pallas_src>

<mosaic_0001>
module attributes {stable_mosaic.version = 11 : i64} {
  func.func @_unimp_kernel(%arg0: i32, %arg1: i32, %arg2: memref<16x128xbf16, #tpu.memory_space<vmem>>, %arg3: memref<16x8xf32, #tpu.memory_space<vmem>>, %arg4: memref<128x256xf32, #tpu.memory_space<vmem>>, %arg5: memref<8x256xf32, #tpu.memory_space<vmem>>, %arg6: memref<1x256xf32, #tpu.memory_space<vmem>>, %arg7: memref<1x128xf32, #tpu.memory_space<vmem>>, %arg8: memref<1x128xf32, #tpu.memory_space<vmem>>, %arg9: memref<1x128xf32, #tpu.memory_space<vmem>>, %arg10: memref<1x128xf32, #tpu.memory_space<vmem>>, %arg11: memref<16x128xf32, #tpu.memory_space<vmem>>, %arg12: memref<16x256xf32, #tpu.memory_space<vmem>>, %arg13: memref<4x16x1xf32, #tpu.memory_space<vmem>>, %arg14: memref<4x16x1xf32, #tpu.memory_space<vmem>>, %arg15: memref<4x16x8xf32, #tpu.memory_space<vmem>>) attributes {dimension_semantics = [#tpu.dimension_semantics<parallel>, #tpu.dimension_semantics<arbitrary>], iteration_bounds = array<i64: 10, 2>, scalar_prefetch = 0 : i64, scratch_operands = 4 : i64, tpu.core_type = #tpu.core_type<tc>, window_params = [{transform_indices = @transform_0, window_bounds = array<i64: 16, 128>}, {transform_indices = @transform_1, window_bounds = array<i64: 16, 8>}, {transform_indices = @transform_2, window_bounds = array<i64: 128, 256>}, {pipeline_mode = #tpu.pipeline_mode<synchronous>, transform_indices = @transform_3, window_bounds = array<i64: 8, 256>}, {pipeline_mode = #tpu.pipeline_mode<synchronous>, transform_indices = @transform_4, window_bounds = array<i64: 1, 256>}, {pipeline_mode = #tpu.pipeline_mode<synchronous>, transform_indices = @transform_5, window_bounds = array<i64: 1, 128>}, {pipeline_mode = #tpu.pipeline_mode<synchronous>, transform_indices = @transform_6, window_bounds = array<i64: 1, 128>}, {pipeline_mode = #tpu.pipeline_mode<synchronous>, transform_indices = @transform_7, window_bounds = array<i64: 1, 128>}, {pipeline_mode = #tpu.pipeline_mode<synchronous>, transform_indices = @transform_8, window_bounds = array<i64: 1, 128>}, {transform_indices = @transform_9, window_bounds = array<i64: 16, 128>}]} {
    %c0_i32 = arith.constant 0 : i32
    %0 = arith.cmpi eq, %arg1, %c0_i32 : i32
    %1 = arith.extui %0 : i1 to i32
    %c0_i32_0 = arith.constant 0 : i32
    %2 = arith.cmpi ne, %1, %c0_i32_0 : i32
    scf.if %2 {
      %c0_91 = arith.constant 0 : index
      %c0_92 = arith.constant 0 : index
      %154 = vector.load %arg3[%c0_91, %c0_92] : memref<16x8xf32, #tpu.memory_space<vmem>>, vector<16x8xf32>
      %c0_93 = arith.constant 0 : index
      %c0_94 = arith.constant 0 : index
      %155 = vector.load %arg5[%c0_93, %c0_94] : memref<8x256xf32, #tpu.memory_space<vmem>>, vector<8x256xf32>
      %cst_95 = arith.constant dense<0.000000e+00> : vector<16x256xf32>
      %156 = tpu.matmul %154, %155, %cst_95 {dimension_numbers = #tpu.dot_dimension_numbers<[1], [0], [0], [1], [0, 0, 1, 1], [], []>, precision = #tpu.contract_precision<fp32>} : vector<16x8xf32>, vector<8x256xf32>, vector<16x256xf32> -> vector<16x256xf32>
      %c0_96 = arith.constant 0 : index
      %c0_97 = arith.constant 0 : index
      %157 = vector.load %arg6[%c0_96, %c0_97] : memref<1x256xf32, #tpu.memory_space<vmem>>, vector<1x256xf32>
      %158 = vector.broadcast %157 : vector<1x256xf32> to vector<16x256xf32>
      %159 = arith.addf %156, %158 : vector<16x256xf32>
      %c0_98 = arith.constant 0 : index
      %c0_99 = arith.constant 0 : index
      %160 = vector.load %arg12[%c0_98, %c0_99] : memref<16x256xf32, #tpu.memory_space<vmem>>, vector<16x256xf32>
      tpu.vector_store %arg12[%c0_98, %c0_99], %159 {strides = array<i32>} : memref<16x256xf32, #tpu.memory_space<vmem>>, vector<16x256xf32>,
      %cst_100 = arith.constant -1.000000e+30 : f32
      %161 = vector.broadcast %cst_100 : f32 to vector<4x16x1xf32>
      %c0_101 = arith.constant 0 : index
      %c0_102 = arith.constant 0 : index
      %c0_103 = arith.constant 0 : index
      %162 = vector.load %arg13[%c0_101, %c0_102, %c0_103] : memref<4x16x1xf32, #tpu.memory_space<vmem>>, vector<4x16x1xf32>
      tpu.vector_store %arg13[%c0_101, %c0_102, %c0_103], %161 {strides = array<i32>} : memref<4x16x1xf32, #tpu.memory_space<vmem>>, vector<4x16x1xf32>,
      %cst_104 = arith.constant 0.000000e+00 : f32
      %163 = vector.broadcast %cst_104 : f32 to vector<4x16x1xf32>
      %c0_105 = arith.constant 0 : index
      %c0_106 = arith.constant 0 : index
      %c0_107 = arith.constant 0 : index
      %164 = vector.load %arg14[%c0_105, %c0_106, %c0_107] : memref<4x16x1xf32, #tpu.memory_space<vmem>>, vector<4x16x1xf32>
      tpu.vector_store %arg14[%c0_105, %c0_106, %c0_107], %163 {strides = array<i32>} : memref<4x16x1xf32, #tpu.memory_space<vmem>>, vector<4x16x1xf32>,
      %cst_108 = arith.constant 0.000000e+00 : f32
      %165 = vector.broadcast %cst_108 : f32 to vector<4x16x8xf32>
      %c0_109 = arith.constant 0 : index
      %c0_110 = arith.constant 0 : index
      %c0_111 = arith.constant 0 : index
      %166 = vector.load %arg15[%c0_109, %c0_110, %c0_111] : memref<4x16x8xf32, #tpu.memory_space<vmem>>, vector<4x16x8xf32>
      tpu.vector_store %arg15[%c0_109, %c0_110, %c0_111], %165 {strides = array<i32>} : memref<4x16x8xf32, #tpu.memory_space<vmem>>, vector<4x16x8xf32>,
    } else {
    }
    %c0 = arith.constant 0 : index
    %c0_1 = arith.constant 0 : index
    %3 = vector.load %arg2[%c0, %c0_1] : memref<16x128xbf16, #tpu.memory_space<vmem>>, vector<16x128xbf16>
    %4 = arith.extf %3 : vector<16x128xbf16> to vector<16x128xf32>
    %c0_2 = arith.constant 0 : index
    %c0_3 = arith.constant 0 : index
    %5 = vector.load %arg4[%c0_2, %c0_3] : memref<128x256xf32, #tpu.memory_space<vmem>>, vector<128x256xf32>
    %c0_4 = arith.constant 0 : index
    %c0_5 = arith.constant 0 : index
    %6 = vector.load %arg12[%c0_4, %c0_5] : memref<16x256xf32, #tpu.memory_space<vmem>>, vector<16x256xf32>
    %7 = vector.extract_strided_slice %6 {offsets = [0, 0], sizes = [16, 8], strides = [1, 1]} : vector<16x256xf32> to vector<16x8xf32>
    %8 = vector.extract_strided_slice %5 {offsets = [0, 0], sizes = [128, 8], strides = [1, 1]} : vector<128x256xf32> to vector<128x8xf32>
    %9 = vector.extract_strided_slice %5 {offsets = [0, 128], sizes = [128, 8], strides = [1, 1]} : vector<128x256xf32> to vector<128x8xf32>
    %cst = arith.constant dense<0.000000e+00> : vector<16x128xf32>
    %10 = tpu.matmul %7, %8, %cst {dimension_numbers = #tpu.dot_dimension_numbers<[1], [1], [0], [0], [0, 0, 1, 0], [], []>, precision = #tpu.contract_precision<fp32>} : vector<16x8xf32>, vector<128x8xf32>, vector<16x128xf32> -> vector<16x128xf32>
    %c0_6 = arith.constant 0 : index
    %c0_7 = arith.constant 0 : index
    %c0_8 = arith.constant 0 : index
    %11 = vector.load %arg13[%c0_6, %c0_7, %c0_8] : memref<4x16x1xf32, #tpu.memory_space<vmem>>, vector<1x16x1xf32>
    %12 = vector.shape_cast %11 : vector<1x16x1xf32> to vector<16x1xf32>
    %cst_9 = arith.constant dense<0xFF800000> : vector<16xf32>
    %13 = vector.multi_reduction <maximumf>, %10, %cst_9 [1] : vector<16x128xf32> to vector<16xf32>
    %14 = vector.shape_cast %13 : vector<16xf32> to vector<16x1xf32>
    %15 = arith.maximumf %12, %14 : vector<16x1xf32>
    %16 = arith.subf %12, %15 : vector<16x1xf32>
    %17 = math.exp %16 : vector<16x1xf32>
    %18 = vector.broadcast %15 : vector<16x1xf32> to vector<16x128xf32>
    %19 = arith.subf %10, %18 : vector<16x128xf32>
    %20 = math.exp %19 : vector<16x128xf32>
    %21 = arith.mulf %20, %4 : vector<16x128xf32>
    %c0_10 = arith.constant 0 : index
    %c0_11 = arith.constant 0 : index
    %c0_12 = arith.constant 0 : index
    %22 = vector.load %arg14[%c0_10, %c0_11, %c0_12] : memref<4x16x1xf32, #tpu.memory_space<vmem>>, vector<1x16x1xf32>
    %23 = vector.shape_cast %22 : vector<1x16x1xf32> to vector<16x1xf32>
    %24 = arith.mulf %17, %23 : vector<16x1xf32>
    %cst_13 = arith.constant dense<0.000000e+00> : vector<16xf32>
    %25 = vector.multi_reduction <add>, %21, %cst_13 [1] : vector<16x128xf32> to vector<16xf32>
    %26 = vector.shape_cast %25 : vector<16xf32> to vector<16x1xf32>
    %27 = arith.addf %24, %26 : vector<16x1xf32>
    %c0_14 = arith.constant 0 : index
    %c0_15 = arith.constant 0 : index
    %c0_16 = arith.constant 0 : index
    %28 = vector.load %arg14[%c0_14, %c0_15, %c0_16] : memref<4x16x1xf32, #tpu.memory_space<vmem>>, vector<1x16x1xf32>
    %29 = vector.shape_cast %28 : vector<1x16x1xf32> to vector<16x1xf32>
    %30 = vector.shape_cast %27 : vector<16x1xf32> to vector<1x16x1xf32>
    tpu.vector_store %arg14[%c0_14, %c0_15, %c0_16], %30 {strides = array<i32>} : memref<4x16x1xf32, #tpu.memory_space<vmem>>, vector<1x16x1xf32>,
    %c0_17 = arith.constant 0 : index
    %c0_18 = arith.constant 0 : index
    %c0_19 = arith.constant 0 : index
    %31 = vector.load %arg15[%c0_17, %c0_18, %c0_19] : memref<4x16x8xf32, #tpu.memory_space<vmem>>, vector<1x16x8xf32>
    %32 = vector.shape_cast %31 : vector<1x16x8xf32> to vector<16x8xf32>
    %33 = vector.broadcast %17 : vector<16x1xf32> to vector<16x8xf32>
    %34 = arith.mulf %33, %32 : vector<16x8xf32>
    %cst_20 = arith.constant dense<0.000000e+00> : vector<16x8xf32>
    %35 = tpu.matmul %21, %9, %cst_20 {dimension_numbers = #tpu.dot_dimension_numbers<[1], [0], [0], [1], [0, 0, 1, 1], [], []>, precision = #tpu.contract_precision<fp32>} : vector<16x128xf32>, vector<128x8xf32>, vector<16x8xf32> -> vector<16x8xf32>
    %36 = arith.addf %34, %35 : vector<16x8xf32>
    %c0_21 = arith.constant 0 : index
    %c0_22 = arith.constant 0 : index
    %c0_23 = arith.constant 0 : index
    %37 = vector.load %arg15[%c0_21, %c0_22, %c0_23] : memref<4x16x8xf32, #tpu.memory_space<vmem>>, vector<1x16x8xf32>
    %38 = vector.shape_cast %37 : vector<1x16x8xf32> to vector<16x8xf32>
    %39 = vector.shape_cast %36 : vector<16x8xf32> to vector<1x16x8xf32>
    tpu.vector_store %arg15[%c0_21, %c0_22, %c0_23], %39 {strides = array<i32>} : memref<4x16x8xf32, #tpu.memory_space<vmem>>, vector<1x16x8xf32>,
    %c0_24 = arith.constant 0 : index
    %c0_25 = arith.constant 0 : index
    %c0_26 = arith.constant 0 : index
    %40 = vector.load %arg13[%c0_24, %c0_25, %c0_26] : memref<4x16x1xf32, #tpu.memory_space<vmem>>, vector<1x16x1xf32>
    %41 = vector.shape_cast %40 : vector<1x16x1xf32> to vector<16x1xf32>
    %42 = vector.shape_cast %15 : vector<16x1xf32> to vector<1x16x1xf32>
    tpu.vector_store %arg13[%c0_24, %c0_25, %c0_26], %42 {strides = array<i32>} : memref<4x16x1xf32, #tpu.memory_space<vmem>>, vector<1x16x1xf32>,
    %43 = vector.extract_strided_slice %6 {offsets = [0, 8], sizes = [16, 8], strides = [1, 1]} : vector<16x256xf32> to vector<16x8xf32>
    %44 = vector.extract_strided_slice %5 {offsets = [0, 8], sizes = [128, 8], strides = [1, 1]} : vector<128x256xf32> to vector<128x8xf32>
    %45 = vector.extract_strided_slice %5 {offsets = [0, 136], sizes = [128, 8], strides = [1, 1]} : vector<128x256xf32> to vector<128x8xf32>
    %cst_27 = arith.constant dense<0.000000e+00> : vector<16x128xf32>
    %46 = tpu.matmul %43, %44, %cst_27 {dimension_numbers = #tpu.dot_dimension_numbers<[1], [1], [0], [0], [0, 0, 1, 0], [], []>, precision = #tpu.contract_precision<fp32>} : vector<16x8xf32>, vector<128x8xf32>, vector<16x128xf32> -> vector<16x128xf32>
    %c1 = arith.constant 1 : index
    %c0_28 = arith.constant 0 : index
    %c0_29 = arith.constant 0 : index
    %47 = vector.load %arg13[%c1, %c0_28, %c0_29] : memref<4x16x1xf32, #tpu.memory_space<vmem>>, vector<1x16x1xf32>
    %48 = vector.shape_cast %47 : vector<1x16x1xf32> to vector<16x1xf32>
    %cst_30 = arith.constant dense<0xFF800000> : vector<16xf32>
    %49 = vector.multi_reduction <maximumf>, %46, %cst_30 [1] : vector<16x128xf32> to vector<16xf32>
    %50 = vector.shape_cast %49 : vector<16xf32> to vector<16x1xf32>
    %51 = arith.maximumf %48, %50 : vector<16x1xf32>
    %52 = arith.subf %48, %51 : vector<16x1xf32>
    %53 = math.exp %52 : vector<16x1xf32>
    %54 = vector.broadcast %51 : vector<16x1xf32> to vector<16x128xf32>
    %55 = arith.subf %46, %54 : vector<16x128xf32>
    %56 = math.exp %55 : vector<16x128xf32>
    %57 = arith.mulf %56, %4 : vector<16x128xf32>
    %c1_31 = arith.constant 1 : index
    %c0_32 = arith.constant 0 : index
    %c0_33 = arith.constant 0 : index
    %58 = vector.load %arg14[%c1_31, %c0_32, %c0_33] : memref<4x16x1xf32, #tpu.memory_space<vmem>>, vector<1x16x1xf32>
    %59 = vector.shape_cast %58 : vector<1x16x1xf32> to vector<16x1xf32>
    %60 = arith.mulf %53, %59 : vector<16x1xf32>
    %cst_34 = arith.constant dense<0.000000e+00> : vector<16xf32>
    %61 = vector.multi_reduction <add>, %57, %cst_34 [1] : vector<16x128xf32> to vector<16xf32>
    %62 = vector.shape_cast %61 : vector<16xf32> to vector<16x1xf32>
    %63 = arith.addf %60, %62 : vector<16x1xf32>
    %c1_35 = arith.constant 1 : index
    %c0_36 = arith.constant 0 : index
    %c0_37 = arith.constant 0 : index
    %64 = vector.load %arg14[%c1_35, %c0_36, %c0_37] : memref<4x16x1xf32, #tpu.memory_space<vmem>>, vector<1x16x1xf32>
    %65 = vector.shape_cast %64 : vector<1x16x1xf32> to vector<16x1xf32>
    %66 = vector.shape_cast %63 : vector<16x1xf32> to vector<1x16x1xf32>
    tpu.vector_store %arg14[%c1_35, %c0_36, %c0_37], %66 {strides = array<i32>} : memref<4x16x1xf32, #tpu.memory_space<vmem>>, vector<1x16x1xf32>,
    %c1_38 = arith.constant 1 : index
    %c0_39 = arith.constant 0 : index
    %c0_40 = arith.constant 0 : index
    %67 = vector.load %arg15[%c1_38, %c0_39, %c0_40] : memref<4x16x8xf32, #tpu.memory_space<vmem>>, vector<1x16x8xf32>
    %68 = vector.shape_cast %67 : vector<1x16x8xf32> to vector<16x8xf32>
    %69 = vector.broadcast %53 : vector<16x1xf32> to vector<16x8xf32>
    %70 = arith.mulf %69, %68 : vector<16x8xf32>
    %cst_41 = arith.constant dense<0.000000e+00> : vector<16x8xf32>
    %71 = tpu.matmul %57, %45, %cst_41 {dimension_numbers = #tpu.dot_dimension_numbers<[1], [0], [0], [1], [0, 0, 1, 1], [], []>, precision = #tpu.contract_precision<fp32>} : vector<16x128xf32>, vector<128x8xf32>, vector<16x8xf32> -> vector<16x8xf32>
    %72 = arith.addf %70, %71 : vector<16x8xf32>
    %c1_42 = arith.constant 1 : index
    %c0_43 = arith.constant 0 : index
    %c0_44 = arith.constant 0 : index
    %73 = vector.load %arg15[%c1_42, %c0_43, %c0_44] : memref<4x16x8xf32, #tpu.memory_space<vmem>>, vector<1x16x8xf32>
    %74 = vector.shape_cast %73 : vector<1x16x8xf32> to vector<16x8xf32>
    %75 = vector.shape_cast %72 : vector<16x8xf32> to vector<1x16x8xf32>
    tpu.vector_store %arg15[%c1_42, %c0_43, %c0_44], %75 {strides = array<i32>} : memref<4x16x8xf32, #tpu.memory_space<vmem>>, vector<1x16x8xf32>,
    %c1_45 = arith.constant 1 : index
    %c0_46 = arith.constant 0 : index
    %c0_47 = arith.constant 0 : index
    %76 = vector.load %arg13[%c1_45, %c0_46, %c0_47] : memref<4x16x1xf32, #tpu.memory_space<vmem>>, vector<1x16x1xf32>
    %77 = vector.shape_cast %76 : vector<1x16x1xf32> to vector<16x1xf32>
    %78 = vector.shape_cast %51 : vector<16x1xf32> to vector<1x16x1xf32>
    tpu.vector_store %arg13[%c1_45, %c0_46, %c0_47], %78 {strides = array<i32>} : memref<4x16x1xf32, #tpu.memory_space<vmem>>, vector<1x16x1xf32>,
    %79 = vector.extract_strided_slice %6 {offsets = [0, 16], sizes = [16, 8], strides = [1, 1]} : vector<16x256xf32> to vector<16x8xf32>
    %80 = vector.extract_strided_slice %5 {offsets = [0, 16], sizes = [128, 8], strides = [1, 1]} : vector<128x256xf32> to vector<128x8xf32>
    %81 = vector.extract_strided_slice %5 {offsets = [0, 144], sizes = [128, 8], strides = [1, 1]} : vector<128x256xf32> to vector<128x8xf32>
    %cst_48 = arith.constant dense<0.000000e+00> : vector<16x128xf32>
    %82 = tpu.matmul %79, %80, %cst_48 {dimension_numbers = #tpu.dot_dimension_numbers<[1], [1], [0], [0], [0, 0, 1, 0], [], []>, precision = #tpu.contract_precision<fp32>} : vector<16x8xf32>, vector<128x8xf32>, vector<16x128xf32> -> vector<16x128xf32>
    %c2 = arith.constant 2 : index
    %c0_49 = arith.constant 0 : index
    %c0_50 = arith.constant 0 : index
    %83 = vector.load %arg13[%c2, %c0_49, %c0_50] : memref<4x16x1xf32, #tpu.memory_space<vmem>>, vector<1x16x1xf32>
    %84 = vector.shape_cast %83 : vector<1x16x1xf32> to vector<16x1xf32>
    %cst_51 = arith.constant dense<0xFF800000> : vector<16xf32>
    %85 = vector.multi_reduction <maximumf>, %82, %cst_51 [1] : vector<16x128xf32> to vector<16xf32>
    %86 = vector.shape_cast %85 : vector<16xf32> to vector<16x1xf32>
    %87 = arith.maximumf %84, %86 : vector<16x1xf32>
    %88 = arith.subf %84, %87 : vector<16x1xf32>
    %89 = math.exp %88 : vector<16x1xf32>
    %90 = vector.broadcast %87 : vector<16x1xf32> to vector<16x128xf32>
    %91 = arith.subf %82, %90 : vector<16x128xf32>
    %92 = math.exp %91 : vector<16x128xf32>
    %93 = arith.mulf %92, %4 : vector<16x128xf32>
    %c2_52 = arith.constant 2 : index
    %c0_53 = arith.constant 0 : index
    %c0_54 = arith.constant 0 : index
    %94 = vector.load %arg14[%c2_52, %c0_53, %c0_54] : memref<4x16x1xf32, #tpu.memory_space<vmem>>, vector<1x16x1xf32>
    %95 = vector.shape_cast %94 : vector<1x16x1xf32> to vector<16x1xf32>
    %96 = arith.mulf %89, %95 : vector<16x1xf32>
    %cst_55 = arith.constant dense<0.000000e+00> : vector<16xf32>
    %97 = vector.multi_reduction <add>, %93, %cst_55 [1] : vector<16x128xf32> to vector<16xf32>
    %98 = vector.shape_cast %97 : vector<16xf32> to vector<16x1xf32>
    %99 = arith.addf %96, %98 : vector<16x1xf32>
    %c2_56 = arith.constant 2 : index
    %c0_57 = arith.constant 0 : index
    %c0_58 = arith.constant 0 : index
    %100 = vector.load %arg14[%c2_56, %c0_57, %c0_58] : memref<4x16x1xf32, #tpu.memory_space<vmem>>, vector<1x16x1xf32>
    %101 = vector.shape_cast %100 : vector<1x16x1xf32> to vector<16x1xf32>
    %102 = vector.shape_cast %99 : vector<16x1xf32> to vector<1x16x1xf32>
    tpu.vector_store %arg14[%c2_56, %c0_57, %c0_58], %102 {strides = array<i32>} : memref<4x16x1xf32, #tpu.memory_space<vmem>>, vector<1x16x1xf32>,
    %c2_59 = arith.constant 2 : index
    %c0_60 = arith.constant 0 : index
    %c0_61 = arith.constant 0 : index
    %103 = vector.load %arg15[%c2_59, %c0_60, %c0_61] : memref<4x16x8xf32, #tpu.memory_space<vmem>>, vector<1x16x8xf32>
    %104 = vector.shape_cast %103 : vector<1x16x8xf32> to vector<16x8xf32>
    %105 = vector.broadcast %89 : vector<16x1xf32> to vector<16x8xf32>
    %106 = arith.mulf %105, %104 : vector<16x8xf32>
    %cst_62 = arith.constant dense<0.000000e+00> : vector<16x8xf32>
    %107 = tpu.matmul %93, %81, %cst_62 {dimension_numbers = #tpu.dot_dimension_numbers<[1], [0], [0], [1], [0, 0, 1, 1], [], []>, precision = #tpu.contract_precision<fp32>} : vector<16x128xf32>, vector<128x8xf32>, vector<16x8xf32> -> vector<16x8xf32>
    %108 = arith.addf %106, %107 : vector<16x8xf32>
    %c2_63 = arith.constant 2 : index
    %c0_64 = arith.constant 0 : index
    %c0_65 = arith.constant 0 : index
    %109 = vector.load %arg15[%c2_63, %c0_64, %c0_65] : memref<4x16x8xf32, #tpu.memory_space<vmem>>, vector<1x16x8xf32>
    %110 = vector.shape_cast %109 : vector<1x16x8xf32> to vector<16x8xf32>
    %111 = vector.shape_cast %108 : vector<16x8xf32> to vector<1x16x8xf32>
    tpu.vector_store %arg15[%c2_63, %c0_64, %c0_65], %111 {strides = array<i32>} : memref<4x16x8xf32, #tpu.memory_space<vmem>>, vector<1x16x8xf32>,
    %c2_66 = arith.constant 2 : index
    %c0_67 = arith.constant 0 : index
    %c0_68 = arith.constant 0 : index
    %112 = vector.load %arg13[%c2_66, %c0_67, %c0_68] : memref<4x16x1xf32, #tpu.memory_space<vmem>>, vector<1x16x1xf32>
    %113 = vector.shape_cast %112 : vector<1x16x1xf32> to vector<16x1xf32>
    %114 = vector.shape_cast %87 : vector<16x1xf32> to vector<1x16x1xf32>
    tpu.vector_store %arg13[%c2_66, %c0_67, %c0_68], %114 {strides = array<i32>} : memref<4x16x1xf32, #tpu.memory_space<vmem>>, vector<1x16x1xf32>,
    %115 = vector.extract_strided_slice %6 {offsets = [0, 24], sizes = [16, 8], strides = [1, 1]} : vector<16x256xf32> to vector<16x8xf32>
    %116 = vector.extract_strided_slice %5 {offsets = [0, 24], sizes = [128, 8], strides = [1, 1]} : vector<128x256xf32> to vector<128x8xf32>
    %117 = vector.extract_strided_slice %5 {offsets = [0, 152], sizes = [128, 8], strides = [1, 1]} : vector<128x256xf32> to vector<128x8xf32>
    %cst_69 = arith.constant dense<0.000000e+00> : vector<16x128xf32>
    %118 = tpu.matmul %115, %116, %cst_69 {dimension_numbers = #tpu.dot_dimension_numbers<[1], [1], [0], [0], [0, 0, 1, 0], [], []>, precision = #tpu.contract_precision<fp32>} : vector<16x8xf32>, vector<128x8xf32>, vector<16x128xf32> -> vector<16x128xf32>
    %c3 = arith.constant 3 : index
    %c0_70 = arith.constant 0 : index
    %c0_71 = arith.constant 0 : index
    %119 = vector.load %arg13[%c3, %c0_70, %c0_71] : memref<4x16x1xf32, #tpu.memory_space<vmem>>, vector<1x16x1xf32>
    %120 = vector.shape_cast %119 : vector<1x16x1xf32> to vector<16x1xf32>
    %cst_72 = arith.constant dense<0xFF800000> : vector<16xf32>
    %121 = vector.multi_reduction <maximumf>, %118, %cst_72 [1] : vector<16x128xf32> to vector<16xf32>
    %122 = vector.shape_cast %121 : vector<16xf32> to vector<16x1xf32>
    %123 = arith.maximumf %120, %122 : vector<16x1xf32>
    %124 = arith.subf %120, %123 : vector<16x1xf32>
    %125 = math.exp %124 : vector<16x1xf32>
    %126 = vector.broadcast %123 : vector<16x1xf32> to vector<16x128xf32>
    %127 = arith.subf %118, %126 : vector<16x128xf32>
    %128 = math.exp %127 : vector<16x128xf32>
    %129 = arith.mulf %128, %4 : vector<16x128xf32>
    %c3_73 = arith.constant 3 : index
    %c0_74 = arith.constant 0 : index
    %c0_75 = arith.constant 0 : index
    %130 = vector.load %arg14[%c3_73, %c0_74, %c0_75] : memref<4x16x1xf32, #tpu.memory_space<vmem>>, vector<1x16x1xf32>
    %131 = vector.shape_cast %130 : vector<1x16x1xf32> to vector<16x1xf32>
    %132 = arith.mulf %125, %131 : vector<16x1xf32>
    %cst_76 = arith.constant dense<0.000000e+00> : vector<16xf32>
    %133 = vector.multi_reduction <add>, %129, %cst_76 [1] : vector<16x128xf32> to vector<16xf32>
    %134 = vector.shape_cast %133 : vector<16xf32> to vector<16x1xf32>
    %135 = arith.addf %132, %134 : vector<16x1xf32>
    %c3_77 = arith.constant 3 : index
    %c0_78 = arith.constant 0 : index
    %c0_79 = arith.constant 0 : index
    %136 = vector.load %arg14[%c3_77, %c0_78, %c0_79] : memref<4x16x1xf32, #tpu.memory_space<vmem>>, vector<1x16x1xf32>
    %137 = vector.shape_cast %136 : vector<1x16x1xf32> to vector<16x1xf32>
    %138 = vector.shape_cast %135 : vector<16x1xf32> to vector<1x16x1xf32>
    tpu.vector_store %arg14[%c3_77, %c0_78, %c0_79], %138 {strides = array<i32>} : memref<4x16x1xf32, #tpu.memory_space<vmem>>, vector<1x16x1xf32>,
    %c3_80 = arith.constant 3 : index
    %c0_81 = arith.constant 0 : index
    %c0_82 = arith.constant 0 : index
    %139 = vector.load %arg15[%c3_80, %c0_81, %c0_82] : memref<4x16x8xf32, #tpu.memory_space<vmem>>, vector<1x16x8xf32>
    %140 = vector.shape_cast %139 : vector<1x16x8xf32> to vector<16x8xf32>
    %141 = vector.broadcast %125 : vector<16x1xf32> to vector<16x8xf32>
    %142 = arith.mulf %141, %140 : vector<16x8xf32>
    %cst_83 = arith.constant dense<0.000000e+00> : vector<16x8xf32>
    %143 = tpu.matmul %129, %117, %cst_83 {dimension_numbers = #tpu.dot_dimension_numbers<[1], [0], [0], [1], [0, 0, 1, 1], [], []>, precision = #tpu.contract_precision<fp32>} : vector<16x128xf32>, vector<128x8xf32>, vector<16x8xf32> -> vector<16x8xf32>
    %144 = arith.addf %142, %143 : vector<16x8xf32>
    %c3_84 = arith.constant 3 : index
    %c0_85 = arith.constant 0 : index
    %c0_86 = arith.constant 0 : index
    %145 = vector.load %arg15[%c3_84, %c0_85, %c0_86] : memref<4x16x8xf32, #tpu.memory_space<vmem>>, vector<1x16x8xf32>
    %146 = vector.shape_cast %145 : vector<1x16x8xf32> to vector<16x8xf32>
    %147 = vector.shape_cast %144 : vector<16x8xf32> to vector<1x16x8xf32>
    tpu.vector_store %arg15[%c3_84, %c0_85, %c0_86], %147 {strides = array<i32>} : memref<4x16x8xf32, #tpu.memory_space<vmem>>, vector<1x16x8xf32>,
    %c3_87 = arith.constant 3 : index
    %c0_88 = arith.constant 0 : index
    %c0_89 = arith.constant 0 : index
    %148 = vector.load %arg13[%c3_87, %c0_88, %c0_89] : memref<4x16x1xf32, #tpu.memory_space<vmem>>, vector<1x16x1xf32>
    %149 = vector.shape_cast %148 : vector<1x16x1xf32> to vector<16x1xf32>
    %150 = vector.shape_cast %123 : vector<16x1xf32> to vector<1x16x1xf32>
    tpu.vector_store %arg13[%c3_87, %c0_88, %c0_89], %150 {strides = array<i32>} : memref<4x16x1xf32, #tpu.memory_space<vmem>>, vector<1x16x1xf32>,
    %c1_i32 = arith.constant 1 : i32
    %151 = arith.cmpi eq, %arg1, %c1_i32 : i32
    %152 = arith.extui %151 : i1 to i32
    %c0_i32_90 = arith.constant 0 : i32
    %153 = arith.cmpi ne, %152, %c0_i32_90 : i32
    scf.if %153 {
      %c0_91 = arith.constant 0 : index
      %c0_92 = arith.constant 0 : index
      %c0_93 = arith.constant 0 : index
      %154 = vector.load %arg14[%c0_91, %c0_92, %c0_93] : memref<4x16x1xf32, #tpu.memory_space<vmem>>, vector<1x16x1xf32>
      %155 = vector.shape_cast %154 : vector<1x16x1xf32> to vector<16x1xf32>
      %cst_94 = arith.constant 0.000000e+00 : f32
      %156 = vector.broadcast %cst_94 : f32 to vector<16x1xf32>
      %157 = arith.cmpf oeq, %155, %156 : vector<16x1xf32>
      %cst_95 = arith.constant 1.000000e+00 : f32
      %158 = vector.broadcast %cst_95 : f32 to vector<16x1xf32>
      %159 = arith.select %157, %158, %155 : vector<16x1xi1>, vector<16x1xf32>
      %cst_96 = arith.constant 1.000000e+00 : f32
      %160 = vector.broadcast %cst_96 : f32 to vector<16x1xf32>
      %161 = arith.divf %160, %159 : vector<16x1xf32>
      %c0_97 = arith.constant 0 : index
      %c0_98 = arith.constant 0 : index
      %c0_99 = arith.constant 0 : index
      %162 = vector.load %arg15[%c0_97, %c0_98, %c0_99] : memref<4x16x8xf32, #tpu.memory_space<vmem>>, vector<1x16x8xf32>
      %163 = vector.shape_cast %162 : vector<1x16x8xf32> to vector<16x8xf32>
      %164 = vector.broadcast %161 : vector<16x1xf32> to vector<16x8xf32>
      %165 = arith.mulf %163, %164 : vector<16x8xf32>
      %c1_100 = arith.constant 1 : index
      %c0_101 = arith.constant 0 : index
      %c0_102 = arith.constant 0 : index
      %166 = vector.load %arg14[%c1_100, %c0_101, %c0_102] : memref<4x16x1xf32, #tpu.memory_space<vmem>>, vector<1x16x1xf32>
      %167 = vector.shape_cast %166 : vector<1x16x1xf32> to vector<16x1xf32>
      %cst_103 = arith.constant 0.000000e+00 : f32
      %168 = vector.broadcast %cst_103 : f32 to vector<16x1xf32>
      %169 = arith.cmpf oeq, %167, %168 : vector<16x1xf32>
      %cst_104 = arith.constant 1.000000e+00 : f32
      %170 = vector.broadcast %cst_104 : f32 to vector<16x1xf32>
      %171 = arith.select %169, %170, %167 : vector<16x1xi1>, vector<16x1xf32>
      %cst_105 = arith.constant 1.000000e+00 : f32
      %172 = vector.broadcast %cst_105 : f32 to vector<16x1xf32>
      %173 = arith.divf %172, %171 : vector<16x1xf32>
      %c1_106 = arith.constant 1 : index
      %c0_107 = arith.constant 0 : index
      %c0_108 = arith.constant 0 : index
      %174 = vector.load %arg15[%c1_106, %c0_107, %c0_108] : memref<4x16x8xf32, #tpu.memory_space<vmem>>, vector<1x16x8xf32>
      %175 = vector.shape_cast %174 : vector<1x16x8xf32> to vector<16x8xf32>
      %176 = vector.broadcast %173 : vector<16x1xf32> to vector<16x8xf32>
      %177 = arith.mulf %175, %176 : vector<16x8xf32>
      %c2_109 = arith.constant 2 : index
      %c0_110 = arith.constant 0 : index
      %c0_111 = arith.constant 0 : index
      %178 = vector.load %arg14[%c2_109, %c0_110, %c0_111] : memref<4x16x1xf32, #tpu.memory_space<vmem>>, vector<1x16x1xf32>
      %179 = vector.shape_cast %178 : vector<1x16x1xf32> to vector<16x1xf32>
      %cst_112 = arith.constant 0.000000e+00 : f32
      %180 = vector.broadcast %cst_112 : f32 to vector<16x1xf32>
      %181 = arith.cmpf oeq, %179, %180 : vector<16x1xf32>
      %cst_113 = arith.constant 1.000000e+00 : f32
      %182 = vector.broadcast %cst_113 : f32 to vector<16x1xf32>
      %183 = arith.select %181, %182, %179 : vector<16x1xi1>, vector<16x1xf32>
      %cst_114 = arith.constant 1.000000e+00 : f32
      %184 = vector.broadcast %cst_114 : f32 to vector<16x1xf32>
      %185 = arith.divf %184, %183 : vector<16x1xf32>
      %c2_115 = arith.constant 2 : index
      %c0_116 = arith.constant 0 : index
      %c0_117 = arith.constant 0 : index
      %186 = vector.load %arg15[%c2_115, %c0_116, %c0_117] : memref<4x16x8xf32, #tpu.memory_space<vmem>>, vector<1x16x8xf32>
      %187 = vector.shape_cast %186 : vector<1x16x8xf32> to vector<16x8xf32>
      %188 = vector.broadcast %185 : vector<16x1xf32> to vector<16x8xf32>
      %189 = arith.mulf %187, %188 : vector<16x8xf32>
      %c3_118 = arith.constant 3 : index
      %c0_119 = arith.constant 0 : index
      %c0_120 = arith.constant 0 : index
      %190 = vector.load %arg14[%c3_118, %c0_119, %c0_120] : memref<4x16x1xf32, #tpu.memory_space<vmem>>, vector<1x16x1xf32>
      %191 = vector.shape_cast %190 : vector<1x16x1xf32> to vector<16x1xf32>
      %cst_121 = arith.constant 0.000000e+00 : f32
      %192 = vector.broadcast %cst_121 : f32 to vector<16x1xf32>
      %193 = arith.cmpf oeq, %191, %192 : vector<16x1xf32>
      %cst_122 = arith.constant 1.000000e+00 : f32
      %194 = vector.broadcast %cst_122 : f32 to vector<16x1xf32>
      %195 = arith.select %193, %194, %191 : vector<16x1xi1>, vector<16x1xf32>
      %cst_123 = arith.constant 1.000000e+00 : f32
      %196 = vector.broadcast %cst_123 : f32 to vector<16x1xf32>
      %197 = arith.divf %196, %195 : vector<16x1xf32>
      %c3_124 = arith.constant 3 : index
      %c0_125 = arith.constant 0 : index
      %c0_126 = arith.constant 0 : index
      %198 = vector.load %arg15[%c3_124, %c0_125, %c0_126] : memref<4x16x8xf32, #tpu.memory_space<vmem>>, vector<1x16x8xf32>
      %199 = vector.shape_cast %198 : vector<1x16x8xf32> to vector<16x8xf32>
      %200 = vector.broadcast %197 : vector<16x1xf32> to vector<16x8xf32>
      %201 = arith.mulf %199, %200 : vector<16x8xf32>
      %cst_127 = arith.constant 0.000000e+00 : f32
      %202 = vector.broadcast %cst_127 : f32 to vector<16x96xf32>
      %203 = tpu.concatenate %165, %177, %189, %201, %202 in 1 : vector<16x8xf32>, vector<16x8xf32>, vector<16x8xf32>, vector<16x8xf32>, vector<16x96xf32> -> vector<16x128xf32>
      %204 = vector.extract_strided_slice %6 {offsets = [0, 128], sizes = [16, 128], strides = [1, 1]} : vector<16x256xf32> to vector<16x128xf32>
      %c0_128 = arith.constant 0 : index
      %c0_129 = arith.constant 0 : index
      %205 = vector.load %arg7[%c0_128, %c0_129] : memref<1x128xf32, #tpu.memory_space<vmem>>, vector<1x128xf32>
      %206 = vector.broadcast %205 : vector<1x128xf32> to vector<16x128xf32>
      %207 = arith.mulf %203, %206 : vector<16x128xf32>
      %cst_130 = arith.constant dense<0.000000e+00> : vector<16xf32>
      %208 = vector.multi_reduction <add>, %207, %cst_130 [1] : vector<16x128xf32> to vector<16xf32>
      %209 = vector.shape_cast %208 : vector<16xf32> to vector<16x1xf32>
      %c0_131 = arith.constant 0 : index
      %c0_132 = arith.constant 0 : index
      %210 = vector.load %arg8[%c0_131, %c0_132] : memref<1x128xf32, #tpu.memory_space<vmem>>, vector<1x128xf32>
      %211 = vector.broadcast %210 : vector<1x128xf32> to vector<16x128xf32>
      %212 = arith.mulf %204, %211 : vector<16x128xf32>
      %cst_133 = arith.constant dense<0.000000e+00> : vector<16xf32>
      %213 = vector.multi_reduction <add>, %212, %cst_133 [1] : vector<16x128xf32> to vector<16xf32>
      %214 = vector.shape_cast %213 : vector<16xf32> to vector<16x1xf32>
      %215 = arith.addf %209, %214 : vector<16x1xf32>
      %216 = arith.negf %215 : vector<16x1xf32>
      %217 = math.exp %216 : vector<16x1xf32>
      %cst_134 = arith.constant 1.000000e+00 : f32
      %218 = vector.broadcast %cst_134 : f32 to vector<16x1xf32>
      %219 = arith.addf %218, %217 : vector<16x1xf32>
      %220 = arith.divf %218, %219 : vector<16x1xf32>
      %221 = vector.broadcast %220 : vector<16x1xf32> to vector<16x128xf32>
      %222 = arith.mulf %221, %204 : vector<16x128xf32>
      %cst_135 = arith.constant 1.000000e+00 : f32
      %223 = vector.broadcast %cst_135 : f32 to vector<16x1xf32>
      %224 = arith.subf %223, %220 : vector<16x1xf32>
      %225 = vector.broadcast %224 : vector<16x1xf32> to vector<16x128xf32>
      %226 = arith.mulf %225, %203 : vector<16x128xf32>
      %227 = arith.addf %222, %226 : vector<16x128xf32>
      %cst_136 = arith.constant dense<0.000000e+00> : vector<16xf32>
      %228 = vector.multi_reduction <add>, %227, %cst_136 [1] : vector<16x128xf32> to vector<16xf32>
      %229 = vector.shape_cast %228 : vector<16xf32> to vector<16x1xf32>
      %cst_137 = arith.constant 3.125000e-02 : f32
      %230 = vector.broadcast %cst_137 : f32 to vector<16x1xf32>
      %231 = arith.mulf %229, %230 : vector<16x1xf32>
      %232 = arith.mulf %227, %227 : vector<16x128xf32>
      %cst_138 = arith.constant dense<0.000000e+00> : vector<16xf32>
      %233 = vector.multi_reduction <add>, %232, %cst_138 [1] : vector<16x128xf32> to vector<16xf32>
      %234 = vector.shape_cast %233 : vector<16xf32> to vector<16x1xf32>
      %cst_139 = arith.constant 3.125000e-02 : f32
      %235 = vector.broadcast %cst_139 : f32 to vector<16x1xf32>
      %236 = arith.mulf %234, %235 : vector<16x1xf32>
      %237 = arith.mulf %231, %231 : vector<16x1xf32>
      %238 = arith.subf %236, %237 : vector<16x1xf32>
      %cst_140 = arith.constant 0.000000e+00 : f32
      %239 = vector.broadcast %cst_140 : f32 to vector<16x1xf32>
      %240 = arith.maximumf %238, %239 : vector<16x1xf32>
      %241 = vector.broadcast %231 : vector<16x1xf32> to vector<16x128xf32>
      %242 = arith.subf %227, %241 : vector<16x128xf32>
      %cst_141 = arith.constant 9.99999974E-6 : f32
      %243 = vector.broadcast %cst_141 : f32 to vector<16x1xf32>
      %244 = arith.addf %240, %243 : vector<16x1xf32>
      %245 = math.rsqrt %244 : vector<16x1xf32>
      %246 = vector.broadcast %245 : vector<16x1xf32> to vector<16x128xf32>
      %247 = arith.mulf %242, %246 : vector<16x128xf32>
      %c0_142 = arith.constant 0 : index
      %c0_143 = arith.constant 0 : index
      %248 = vector.load %arg9[%c0_142, %c0_143] : memref<1x128xf32, #tpu.memory_space<vmem>>, vector<1x128xf32>
      %249 = vector.broadcast %248 : vector<1x128xf32> to vector<16x128xf32>
      %250 = arith.mulf %247, %249 : vector<16x128xf32>
      %c0_144 = arith.constant 0 : index
      %c0_145 = arith.constant 0 : index
      %251 = vector.load %arg10[%c0_144, %c0_145] : memref<1x128xf32, #tpu.memory_space<vmem>>, vector<1x128xf32>
      %252 = vector.broadcast %251 : vector<1x128xf32> to vector<16x128xf32>
      %253 = arith.addf %250, %252 : vector<16x128xf32>
      %cst_146 = arith.constant 0.000000e+00 : f32
      %254 = vector.broadcast %cst_146 : f32 to vector<16x128xf32>
      %255 = arith.maximumf %253, %254 : vector<16x128xf32>
      %c0_147 = arith.constant 0 : index
      %c0_148 = arith.constant 0 : index
      %256 = vector.load %arg11[%c0_147, %c0_148] : memref<16x128xf32, #tpu.memory_space<vmem>>, vector<16x128xf32>
      tpu.vector_store %arg11[%c0_147, %c0_148], %255 {strides = array<i32>} : memref<16x128xf32, #tpu.memory_space<vmem>>, vector<16x128xf32>,
    } else {
    }
    return
  }
  func.func @transform_0(%arg0: i32, %arg1: i32) -> (i32, i32) {
    %c0_i32 = arith.constant 0 : i32
    return %arg0, %arg1 : i32, i32
  }
  func.func @transform_1(%arg0: i32, %arg1: i32) -> (i32, i32) {
    %c0_i32 = arith.constant 0 : i32
    %c0_i32_0 = arith.constant 0 : i32
    return %arg0, %c0_i32 : i32, i32
  }
  func.func @transform_2(%arg0: i32, %arg1: i32) -> (i32, i32) {
    %c0_i32 = arith.constant 0 : i32
    %c0_i32_0 = arith.constant 0 : i32
    return %arg1, %c0_i32 : i32, i32
  }
  func.func @transform_3(%arg0: i32, %arg1: i32) -> (i32, i32) {
    %c0_i32 = arith.constant 0 : i32
    %c0_i32_0 = arith.constant 0 : i32
    %c0_i32_1 = arith.constant 0 : i32
    return %c0_i32, %c0_i32_0 : i32, i32
  }
  func.func @transform_4(%arg0: i32, %arg1: i32) -> (i32, i32) {
    %c0_i32 = arith.constant 0 : i32
    %c0_i32_0 = arith.constant 0 : i32
    %c0_i32_1 = arith.constant 0 : i32
    return %c0_i32, %c0_i32_0 : i32, i32
  }
  func.func @transform_5(%arg0: i32, %arg1: i32) -> (i32, i32) {
    %c0_i32 = arith.constant 0 : i32
    %c0_i32_0 = arith.constant 0 : i32
    %c0_i32_1 = arith.constant 0 : i32
    return %c0_i32, %c0_i32_0 : i32, i32
  }
  func.func @transform_6(%arg0: i32, %arg1: i32) -> (i32, i32) {
    %c0_i32 = arith.constant 0 : i32
    %c0_i32_0 = arith.constant 0 : i32
    %c0_i32_1 = arith.constant 0 : i32
    return %c0_i32, %c0_i32_0 : i32, i32
  }
  func.func @transform_7(%arg0: i32, %arg1: i32) -> (i32, i32) {
    %c0_i32 = arith.constant 0 : i32
    %c0_i32_0 = arith.constant 0 : i32
    %c0_i32_1 = arith.constant 0 : i32
    return %c0_i32, %c0_i32_0 : i32, i32
  }
  func.func @transform_8(%arg0: i32, %arg1: i32) -> (i32, i32) {
    %c0_i32 = arith.constant 0 : i32
    %c0_i32_0 = arith.constant 0 : i32
    %c0_i32_1 = arith.constant 0 : i32
    return %c0_i32, %c0_i32_0 : i32, i32
  }
  func.func @transform_9(%arg0: i32, %arg1: i32) -> (i32, i32) {
    %c0_i32 = arith.constant 0 : i32
    %c0_i32_0 = arith.constant 0 : i32
    return %arg0, %c0_i32 : i32, i32
  }
}

</mosaic_0001>

<llo_original>
// kernel: tpu_custom_call.1
$region0: #{tpu_custom_call.1}
  #allocation0 [shape = 'u32[]', space=smem, size = 0x4, offset = 0x4, fixed_abs, tag = 'smem constant byte address 0x4 - core index']
  #allocation1 [shape = 'u32[144,128]{1,0:T(1,128)}', space=vmem, size = 0x12000, scoped, tag = 'internal scratch']
  #allocation2 [shape = 'f32[16,256]{1,0:T(8,128)}', space=vmem, size = 0x4000, scoped, tag = 'scratch operand']
  #allocation3 [shape = 'f32[4,16,1]{2,1,0:T(8,128)}', space=vmem, size = 0x8000, scoped, tag = 'scratch operand']
  #allocation4 [shape = 'f32[4,16,1]{2,1,0:T(8,128)}', space=vmem, size = 0x8000, scoped, tag = 'scratch operand']
  #allocation5 [shape = 'f32[4,16,8]{2,1,0:T(8,128)}', space=vmem, size = 0x8000, scoped, tag = 'scratch operand']
  %s0 = inlined_call_operand.vmem [shape: bf16[160,256], index: 0, kind: input, shape index: {}]
  %s1 = inlined_call_operand.vmem [shape: f32[160,8], index: 1, kind: input, shape index: {}]
  %s2 = inlined_call_operand.hbm [shape: f32[256,256], index: 2, kind: input, shape index: {}]
  %s3 = inlined_call_operand.vmem [shape: f32[8,256], index: 3, kind: input, shape index: {}]
  %s4 = inlined_call_operand.vmem [shape: f32[1,256], index: 4, kind: input, shape index: {}]
  %s5 = inlined_call_operand.vmem [shape: f32[1,128], index: 5, kind: input, shape index: {}]
  %s6 = inlined_call_operand.vmem [shape: f32[1,128], index: 6, kind: input, shape index: {}]
  %s7 = inlined_call_operand.vmem [shape: f32[1,128], index: 7, kind: input, shape index: {}]
  %s8 = inlined_call_operand.vmem [shape: f32[1,128], index: 8, kind: input, shape index: {}]
  %s9 = inlined_call_operand.hbm [shape: f32[160,128], index: 9, kind: output, shape index: {}]
  %s10 = sld [smem:[#allocation0]]
  $region122: #{tpu_custom_call.1} parent=0
    _
  %s12 = ssub.s32 1, %s10
  %s13 = scalar_select 0, %s12, %s10
  $region1: #{tpu_custom_call.1} parent=0
    #allocation6 [shape = 'u8[8192]{0}', space=vmem, size = 0x2000, scoped, tag = 'input window, operand 0']
    #allocation7 [shape = 'u8[262144]{0}', space=vmem, size = 0x40000, scoped, tag = 'input window, operand 2']
    #allocation8 [shape = 's32[2]{0}', space=sflag, size = 0x8, scoped, tag = 'scoped memory for tpu_custom_call.1']
    #allocation9 [shape = 's32[2]{0}', space=sflag, size = 0x8, scoped, tag = 'scoped memory for tpu_custom_call.1']
    #allocation10 [shape = 'u8[16384]{0}', space=vmem, size = 0x4000, scoped, tag = 'output window, operand 0']
    %14 = vsyncpa [#allocation8], 0
    %s15 = scalar_lea.sflag [#allocation8], 1
    %16 = vsyncpa %s15, 0
    %17 = vsyncpa [#allocation9], 0
    %s18 = scalar_lea.sflag [#allocation9], 1
    %19 = vsyncpa %s18, 0
    loop: start=0, step=1, limit=22
    $region2: #{tpu_custom_call.1} parent=1 // loop_pre_header
      _
    $region3: #{tpu_custom_call.1} parent=1 // loop_header
      %s21 = sphi 0, %s25
      %p22 = scmp.ge.s32.totalorder %s21, 22
      %s28 = sphi 0, %s40
      %s29 = sphi 0, %s36
      %s30 = sphi 0, %s28
      %s31 = sphi 0, %s29
      %s32 = sphi 0, %s30
      %s33 = sphi 0, %s31
      %s45 = sphi 0, %s47
      %s48 = sphi 0, %s45
      %s49 = sphi 0, %s48
      %s65 = sphi 0, %s49
      %s71 = sphi 0, %s73
      %s74 = sphi 0, %s71
      %s75 = sphi 0, %s74
      %s91 = sphi 0, %s75
      %s97 = sphi 0, %s99
      %s100 = sphi 0, %s97
      %s101 = sphi 0, %s100
      %s117 = sphi 0, %s101
      %s121 = sphi 0, %s121
      %s123 = sphi 0, %s121
      %s124 = sphi 0, %s123
      %s138 = sphi 0, %s124
      %s142 = sphi 0, %s142
      %s144 = sphi 0, %s142
      %s145 = sphi 0, %s144
      %s159 = sphi 0, %s145
      %s163 = sphi 0, %s163
      %s165 = sphi 0, %s163
      %s166 = sphi 0, %s165
      %s180 = sphi 0, %s166
      %s184 = sphi 0, %s184
      %s186 = sphi 0, %s184
      %s187 = sphi 0, %s186
      %s201 = sphi 0, %s187
      %s205 = sphi 0, %s205
      %s207 = sphi 0, %s205
      %s208 = sphi 0, %s207
      %s222 = sphi 0, %s208
      %s226 = sphi 0, %s226
      %s228 = sphi 0, %s226
      %s229 = sphi 0, %s228
      %s243 = sphi 0, %s229
      %s249 = sphi 0, %s251
      %s252 = sphi 0, %s249
      %s253 = sphi 0, %s252
      %s269 = sphi 0, %s253
    $region4: #{tpu_custom_call.1} parent=1 // loop_header_branch
      %24 = sbr.rel (%p22) target = $region8
    $region5: #{tpu_custom_call.1} parent=1 // loop_body
      %s26 = ssub.s32 %s21, 1
      %s27 = ssub.s32 %s21, 2
      %s34 = sadd.s32 1, %s29
      %p35 = scmp.ge.s32.totalorder %s34, 2
      %s36 = scalar_select %p35, 0, %s34
      %s37 = sadd.s32 1, %s28
      %s38 = scalar_select %p35, %s37, %s28
      %p39 = scmp.ge.s32.totalorder %s38, 10
      %s40 = scalar_select %p39, 0, %s38
      %s41 = ssub.s32 %s28, %s40
      %s42 = ssub.s32 %s29, %s36
      %s43 = sor.u32 %s41, %s42
      %p44 = scmp.eq.s32.totalorder %s43, 0
      %s46 = sadd.s32 %s45, 1
      %s47 = scalar_select %p44, %s45, %s46
      %p50 = pneg %p44
      %p51 = scmp.eq.s32.totalorder %s21, 19
      %p52 = por %p50, %p51
      %p53 = scmp.ne.s32.totalorder %s45, %s48
      %p54 = scmp.eq.s32.totalorder %s21, 0
      %p55 = por %p53, %p54
      %p56 = scmp.ne.s32.totalorder %s45, %s48
      %p57 = scmp.eq.s32.totalorder %s26, 19
      %p58 = por %p56, %p57
      %p59 = scmp.ne.s32.totalorder %s48, %s49
      %p60 = scmp.eq.s32.totalorder %s26, 0
      %p61 = por %p59, %p60
      %p62 = scmp.ne.s32.totalorder %s48, %s49
      %p63 = scmp.eq.s32.totalorder %s27, 19
      %p64 = por %p62, %p63
      %p66 = scmp.ne.s32.totalorder %s49, %s65
      %p67 = scmp.eq.s32.totalorder %s27, 0
      %p68 = por %p66, %p67
      %s69 = ssub.s32 %s28, %s40
      %p70 = scmp.eq.s32.totalorder %s69, 0
      %s72 = sadd.s32 %s71, 1
      %s73 = scalar_select %p70, %s71, %s72
      %p76 = pneg %p70
      %p77 = scmp.eq.s32.totalorder %s21, 19
      %p78 = por %p76, %p77
      %p79 = scmp.ne.s32.totalorder %s71, %s74
      %p80 = scmp.eq.s32.totalorder %s21, 0
      %p81 = por %p79, %p80
      %p82 = scmp.ne.s32.totalorder %s71, %s74
      %p83 = scmp.eq.s32.totalorder %s26, 19
      %p84 = por %p82, %p83
      %p85 = scmp.ne.s32.totalorder %s74, %s75
      %p86 = scmp.eq.s32.totalorder %s26, 0
      %p87 = por %p85, %p86
      %p88 = scmp.ne.s32.totalorder %s74, %s75
      %p89 = scmp.eq.s32.totalorder %s27, 19
      %p90 = por %p88, %p89
      %p92 = scmp.ne.s32.totalorder %s75, %s91
      %p93 = scmp.eq.s32.totalorder %s27, 0
      %p94 = por %p92, %p93
      %s95 = ssub.s32 %s29, %s36
      %p96 = scmp.eq.s32.totalorder %s95, 0
      %s98 = sadd.s32 %s97, 1
      %s99 = scalar_select %p96, %s97, %s98
      %p102 = pneg %p96
      %p103 = scmp.eq.s32.totalorder %s21, 19
      %p104 = por %p102, %p103
      %p105 = scmp.ne.s32.totalorder %s97, %s100
      %p106 = scmp.eq.s32.totalorder %s21, 0
      %p107 = por %p105, %p106
      %p108 = scmp.ne.s32.totalorder %s97, %s100
      %p109 = scmp.eq.s32.totalorder %s26, 19
      %p110 = por %p108, %p109
      %p111 = scmp.ne.s32.totalorder %s100, %s101
      %p112 = scmp.eq.s32.totalorder %s26, 0
      %p113 = por %p111, %p112
      %p114 = scmp.ne.s32.totalorder %s100, %s101
      %p115 = scmp.eq.s32.totalorder %s27, 19
      %p116 = por %p114, %p115
      %p118 = scmp.ne.s32.totalorder %s101, %s117
      %p119 = scmp.eq.s32.totalorder %s27, 0
      %p120 = por %p118, %p119
      %s122 = sadd.s32 %s121, 1
      %p125 = scmp.eq.s32.totalorder %s21, 19
      %p126 = scmp.ne.s32.totalorder %s121, %s123
      %p127 = scmp.eq.s32.totalorder %s21, 0
      %p128 = por %p126, %p127
      %p129 = scmp.ne.s32.totalorder %s121, %s123
      %p130 = scmp.eq.s32.totalorder %s26, 19
      %p131 = por %p129, %p130
      %p132 = scmp.ne.s32.totalorder %s123, %s124
      %p133 = scmp.eq.s32.totalorder %s26, 0
      %p134 = por %p132, %p133
      %p135 = scmp.ne.s32.totalorder %s123, %s124
      %p136 = scmp.eq.s32.totalorder %s27, 19
      %p137 = por %p135, %p136
      %p139 = scmp.ne.s32.totalorder %s124, %s138
      %p140 = scmp.eq.s32.totalorder %s27, 0
      %p141 = por %p139, %p140
      %s143 = sadd.s32 %s142, 1
      %p146 = scmp.eq.s32.totalorder %s21, 19
      %p147 = scmp.ne.s32.totalorder %s142, %s144
      %p148 = scmp.eq.s32.totalorder %s21, 0
      %p149 = por %p147, %p148
      %p150 = scmp.ne.s32.totalorder %s142, %s144
      %p151 = scmp.eq.s32.totalorder %s26, 19
      %p152 = por %p150, %p151
      %p153 = scmp.ne.s32.totalorder %s144, %s145
      %p154 = scmp.eq.s32.totalorder %s26, 0
      %p155 = por %p153, %p154
      %p156 = scmp.ne.s32.totalorder %s144, %s145
      %p157 = scmp.eq.s32.totalorder %s27, 19
      %p158 = por %p156, %p157
      %p160 = scmp.ne.s32.totalorder %s145, %s159
      %p161 = scmp.eq.s32.totalorder %s27, 0
      %p162 = por %p160, %p161
      %s164 = sadd.s32 %s163, 1
      %p167 = scmp.eq.s32.totalorder %s21, 19
      %p168 = scmp.ne.s32.totalorder %s163, %s165
      %p169 = scmp.eq.s32.totalorder %s21, 0
      %p170 = por %p168, %p169
      %p171 = scmp.ne.s32.totalorder %s163, %s165
      %p172 = scmp.eq.s32.totalorder %s26, 19
      %p173 = por %p171, %p172
      %p174 = scmp.ne.s32.totalorder %s165, %s166
      %p175 = scmp.eq.s32.totalorder %s26, 0
      %p176 = por %p174, %p175
      %p177 = scmp.ne.s32.totalorder %s165, %s166
      %p178 = scmp.eq.s32.totalorder %s27, 19
      %p179 = por %p177, %p178
      %p181 = scmp.ne.s32.totalorder %s166, %s180
      %p182 = scmp.eq.s32.totalorder %s27, 0
      %p183 = por %p181, %p182
      %s185 = sadd.s32 %s184, 1
      %p188 = scmp.eq.s32.totalorder %s21, 19
      %p189 = scmp.ne.s32.totalorder %s184, %s186
      %p190 = scmp.eq.s32.totalorder %s21, 0
      %p191 = por %p189, %p190
      %p192 = scmp.ne.s32.totalorder %s184, %s186
      %p193 = scmp.eq.s32.totalorder %s26, 19
      %p194 = por %p192, %p193
      %p195 = scmp.ne.s32.totalorder %s186, %s187
      %p196 = scmp.eq.s32.totalorder %s26, 0
      %p197 = por %p195, %p196
      %p198 = scmp.ne.s32.totalorder %s186, %s187
      %p199 = scmp.eq.s32.totalorder %s27, 19
      %p200 = por %p198, %p199
      %p202 = scmp.ne.s32.totalorder %s187, %s201
      %p203 = scmp.eq.s32.totalorder %s27, 0
      %p204 = por %p202, %p203
      %s206 = sadd.s32 %s205, 1
      %p209 = scmp.eq.s32.totalorder %s21, 19
      %p210 = scmp.ne.s32.totalorder %s205, %s207
      %p211 = scmp.eq.s32.totalorder %s21, 0
      %p212 = por %p210, %p211
      %p213 = scmp.ne.s32.totalorder %s205, %s207
      %p214 = scmp.eq.s32.totalorder %s26, 19
      %p215 = por %p213, %p214
      %p216 = scmp.ne.s32.totalorder %s207, %s208
      %p217 = scmp.eq.s32.totalorder %s26, 0
      %p218 = por %p216, %p217
      %p219 = scmp.ne.s32.totalorder %s207, %s208
      %p220 = scmp.eq.s32.totalorder %s27, 19
      %p221 = por %p219, %p220
      %p223 = scmp.ne.s32.totalorder %s208, %s222
      %p224 = scmp.eq.s32.totalorder %s27, 0
      %p225 = por %p223, %p224
      %s227 = sadd.s32 %s226, 1
      %p230 = scmp.eq.s32.totalorder %s21, 19
      %p231 = scmp.ne.s32.totalorder %s226, %s228
      %p232 = scmp.eq.s32.totalorder %s21, 0
      %p233 = por %p231, %p232
      %p234 = scmp.ne.s32.totalorder %s226, %s228
      %p235 = scmp.eq.s32.totalorder %s26, 19
      %p236 = por %p234, %p235
      %p237 = scmp.ne.s32.totalorder %s228, %s229
      %p238 = scmp.eq.s32.totalorder %s26, 0
      %p239 = por %p237, %p238
      %p240 = scmp.ne.s32.totalorder %s228, %s229
      %p241 = scmp.eq.s32.totalorder %s27, 19
      %p242 = por %p240, %p241
      %p244 = scmp.ne.s32.totalorder %s229, %s243
      %p245 = scmp.eq.s32.totalorder %s27, 0
      %p246 = por %p244, %p245
      %s247 = ssub.s32 %s28, %s40
      %p248 = scmp.eq.s32.totalorder %s247, 0
      %s250 = sadd.s32 %s249, 1
      %s251 = scalar_select %p248, %s249, %s250
      %p254 = pneg %p248
      %p255 = scmp.eq.s32.totalorder %s21, 19
      %p256 = por %p254, %p255
      %p257 = scmp.ne.s32.totalorder %s249, %s252
      %p258 = scmp.eq.s32.totalorder %s21, 0
      %p259 = por %p257, %p258
      %p260 = scmp.ne.s32.totalorder %s249, %s252
      %p261 = scmp.eq.s32.totalorder %s26, 19
      %p262 = por %p260, %p261
      %p263 = scmp.ne.s32.totalorder %s252, %s253
      %p264 = scmp.eq.s32.totalorder %s26, 0
      %p265 = por %p263, %p264
      %p266 = scmp.ne.s32.totalorder %s252, %s253
      %p267 = scmp.eq.s32.totalorder %s27, 19
      %p268 = por %p266, %p267
      %p270 = scmp.ne.s32.totalorder %s253, %s269
      %p271 = scmp.eq.s32.totalorder %s27, 0
      %p272 = por %p270, %p271
      %p273 = scmp.le.s32.totalorder 1, %s21
      %p274 = scmp.lt.s32.totalorder %s21, 21
      %p275 = pnand %p273, %p274
      %p276 = pneg %p275
      // Predicated region
      $region9: #{tpu_custom_call.1} parent=5 // pred_check
        _
      $region10: #{tpu_custom_call.1} parent=5 // pred_check_branch
        %278 = sbr.rel (%p275) target = $region12
      $region11: #{tpu_custom_call.1} parent=5 // pred_region
        %s279 = ssub.s32 %s21, 1
        // Predicated region
        $region13: #{tpu_custom_call.1} parent=11 // pred_check
          %p280 = pneg %p134
        $region14: #{tpu_custom_call.1} parent=11 // pred_check_branch
          %282 = sbr.rel (%p280) target = $region16
        $region15: #{tpu_custom_call.1} parent=11 // pred_region
          _
        $region16: #{tpu_custom_call.1} parent=11 // pred_fallthru
          _
        // Predicated region
        $region17: #{tpu_custom_call.1} parent=11 // pred_check
          %p283 = pneg %p155
        $region18: #{tpu_custom_call.1} parent=11 // pred_check_branch
          %285 = sbr.rel (%p283) target = $region20
        $region19: #{tpu_custom_call.1} parent=11 // pred_region
          _
        $region20: #{tpu_custom_call.1} parent=11 // pred_fallthru
          _
        // Predicated region
        $region21: #{tpu_custom_call.1} parent=11 // pred_check
          %p286 = pneg %p176
        $region22: #{tpu_custom_call.1} parent=11 // pred_check_branch
          %288 = sbr.rel (%p286) target = $region24
        $region23: #{tpu_custom_call.1} parent=11 // pred_region
          _
        $region24: #{tpu_custom_call.1} parent=11 // pred_fallthru
          _
        // Predicated region
        $region25: #{tpu_custom_call.1} parent=11 // pred_check
          %p289 = pneg %p197
        $region26: #{tpu_custom_call.1} parent=11 // pred_check_branch
          %291 = sbr.rel (%p289) target = $region28
        $region27: #{tpu_custom_call.1} parent=11 // pred_region
          _
        $region28: #{tpu_custom_call.1} parent=11 // pred_fallthru
          _
        // Predicated region
        $region29: #{tpu_custom_call.1} parent=11 // pred_check
          %p292 = pneg %p218
        $region30: #{tpu_custom_call.1} parent=11 // pred_check_branch
          %294 = sbr.rel (%p292) target = $region32
        $region31: #{tpu_custom_call.1} parent=11 // pred_region
          _
        $region32: #{tpu_custom_call.1} parent=11 // pred_fallthru
          _
        // Predicated region
        $region33: #{tpu_custom_call.1} parent=11 // pred_check
          %p295 = pneg %p239
        $region34: #{tpu_custom_call.1} parent=11 // pred_check_branch
          %297 = sbr.rel (%p295) target = $region36
        $region35: #{tpu_custom_call.1} parent=11 // pred_region
          _
        $region36: #{tpu_custom_call.1} parent=11 // pred_fallthru
          _
      $region12: #{tpu_custom_call.1} parent=5 // pred_fallthru
        _
      %p298 = scmp.lt.s32.totalorder %s21, 20
      // Predicated region
      $region37: #{tpu_custom_call.1} parent=5 // pred_check
        %p299 = pneg %p298
      $region38: #{tpu_custom_call.1} parent=5 // pred_check_branch
        %301 = sbr.rel (%p299) target = $region40
      $region39: #{tpu_custom_call.1} parent=5 // pred_region
        // Predicated region
        $region41: #{tpu_custom_call.1} parent=39 // pred_check
          %p302 = pneg %p55
        $region42: #{tpu_custom_call.1} parent=39 // pred_check_branch
          %304 = sbr.rel (%p302) target = $region44
        $region43: #{tpu_custom_call.1} parent=39 // pred_region
          %s305 = sand.u32 %s45, 1
          %s306 = sand.u32 %s45, 1
          %s307 = smul.addr %s306, 8
          %s308 = scalar_lea.vmem [#allocation6], %s307
          %s309 = smul.u32 2, %s28
          %s310 = smul.addr %s309, 2
          %s311 = sadd.s32 %s29, %s310
          %s312 = smul.addr %s311, 4
          %s313 = scalar_lea.vmem %s0, %s312
          // Predicated region
          $region45: #{tpu_custom_call.1} parent=43 // pred_check
            _
          $region46: #{tpu_custom_call.1} parent=43 // pred_check_branch
            %315 = sbr.rel (0) target = $region48
          $region47: #{tpu_custom_call.1} parent=43 // pred_region
            // Predicated region
            $region49: #{tpu_custom_call.1} parent=47 // pred_check
              _
            $region50: #{tpu_custom_call.1} parent=47 // pred_check_branch
              %317 = sbr.rel target = $region52
            $region51: #{tpu_custom_call.1} parent=47 // pred_region
              // Predicated region
              $region64: #{tpu_custom_call.1} parent=51 // pred_check
                _
              $region65: #{tpu_custom_call.1} parent=51 // pred_check_branch
                %334 = sbr.rel (0) target = $region67
              $region66: #{tpu_custom_call.1} parent=51 // pred_region
                loop: start=0, step=1, limit=1
                $region68: #{tpu_custom_call.1} parent=66 // loop_pre_header
                  _
                $region69: #{tpu_custom_call.1} parent=66 // loop_header
                  %s336 = sphi 0, %s340
                  %p337 = scmp.ge.s32.totalorder %s336, 1
                  %s341 = sphi %s313, %s313
                  %s342 = sphi %s308, %s308
                $region70: #{tpu_custom_call.1} parent=66 // loop_header_branch
                  %339 = sbr.rel (%p337) target = $region74
                $region71: #{tpu_custom_call.1} parent=66 // loop_body
                  _
                $region72: #{tpu_custom_call.1} parent=66 // loop_footer
                  %s340 = sadd.s32 1, %s336
                $region73: #{tpu_custom_call.1} parent=66 // loop_footer_branch
                  %335 = sbr.rel target = $region69
                $region74: #{tpu_custom_call.1} parent=66 // loop_exit
                  _
                loop: start=0, step=1, limit=1
                $region75: #{tpu_custom_call.1} parent=66 // loop_pre_header
                  _
                $region76: #{tpu_custom_call.1} parent=66 // loop_header
                  %s345 = sphi 0, %s349
                  %p346 = scmp.ge.s32.totalorder %s345, 1
                  %s350 = sphi %s313, %s313
                  %s351 = sphi %s308, %s308
                $region77: #{tpu_custom_call.1} parent=66 // loop_header_branch
                  %348 = sbr.rel (%p346) target = $region81
                $region78: #{tpu_custom_call.1} parent=66 // loop_body
                  %v352 = vld [vmem:[%s350] sm:$0xf]
                  %353 = vst [vmem:[%s351] sm:$0xf] %v352
                  %v354 = vld [vmem:[%s350 + $0x8] sm:$0xf]
                  %355 = vst [vmem:[%s351 + $0x4] sm:$0xf] %v354
                $region79: #{tpu_custom_call.1} parent=66 // loop_footer
                  %s349 = sadd.s32 1, %s345
                $region80: #{tpu_custom_call.1} parent=66 // loop_footer_branch
                  %344 = sbr.rel target = $region76
                $region81: #{tpu_custom_call.1} parent=66 // loop_exit
                  _
              $region67: #{tpu_custom_call.1} parent=51 // pred_fallthru
                _
            $region52: #{tpu_custom_call.1} parent=47 // pred_fallthru
              _
            // Predicated region
            $region53: #{tpu_custom_call.1} parent=47 // pred_check
              _
            $region54: #{tpu_custom_call.1} parent=47 // pred_check_branch
              %319 = sbr.rel (0) target = $region56
            $region55: #{tpu_custom_call.1} parent=47 // pred_region
              loop: start=0, step=1, limit=1
              $region57: #{tpu_custom_call.1} parent=55 // loop_pre_header
                _
              $region58: #{tpu_custom_call.1} parent=55 // loop_header
                %s322 = sphi 0, %s326
                %p323 = scmp.ge.s32.totalorder %s322, 1
                %s327 = sphi %s313, %s313
                %s328 = sphi %s308, %s308
              $region59: #{tpu_custom_call.1} parent=55 // loop_header_branch
                %325 = sbr.rel (%p323) target = $region63
              $region60: #{tpu_custom_call.1} parent=55 // loop_body
                %v329 = vld [vmem:[%s327] sm:$0xf]
                %330 = vst [vmem:[%s328] sm:$0xf] %v329
                %v331 = vld [vmem:[%s327 + $0x8] sm:$0xf]
                %332 = vst [vmem:[%s328 + $0x4] sm:$0xf] %v331
              $region61: #{tpu_custom_call.1} parent=55 // loop_footer
                %s326 = sadd.s32 1, %s322
              $region62: #{tpu_custom_call.1} parent=55 // loop_footer_branch
                %321 = sbr.rel target = $region58
              $region63: #{tpu_custom_call.1} parent=55 // loop_exit
                _
            $region56: #{tpu_custom_call.1} parent=47 // pred_fallthru
              _
          $region48: #{tpu_custom_call.1} parent=43 // pred_fallthru
            _
          %356 = vnop
        $region44: #{tpu_custom_call.1} parent=39 // pred_fallthru
          _
        // Predicated region
        $region82: #{tpu_custom_call.1} parent=39 // pred_check
          %p357 = pneg %p81
        $region83: #{tpu_custom_call.1} parent=39 // pred_check_branch
          %359 = sbr.rel (%p357) target = $region85
        $region84: #{tpu_custom_call.1} parent=39 // pred_region
          %s360 = smul.u32 2, %s28
          %p361 = scmp.lt.s32.totalorder %s360, 19
          %s362 = scalar_select %p361, %s360, 19
          %s363 = smul.addr %s362, 8
          %s364 = scalar_lea.vmem %s1, %s363
          %s365 = smul.u32 2, %s28
        $region85: #{tpu_custom_call.1} parent=39 // pred_fallthru
          _
        // Predicated region
        $region86: #{tpu_custom_call.1} parent=39 // pred_check
          %p366 = pneg %p107
        $region87: #{tpu_custom_call.1} parent=39 // pred_check_branch
          %368 = sbr.rel (%p366) target = $region89
        $region88: #{tpu_custom_call.1} parent=39 // pred_region
          %s369 = sand.u32 %s97, 1
          %s370 = scalar_lea.sflag [#allocation8], %s369
          %s371 = sand.u32 %s97, 1
          %s372 = smul.addr %s371, 256
          %s373 = scalar_lea.vmem [#allocation7], %s372
          %s374 = smul.u32 16, %s29
          %s376 = ssub.s32 4096, 4096
          %377 = vsyncadd %s370, %s376
          %s378 = smul.addr %s374, 2
          %s379 = smul.addr %s378, 128
          %s380 = scalar_lea.hbm %s2, %s379
          %s381 = sshll.u32 %s373, 4
          %s382 = int_to_ptr.vmem [resolvable:$true] %s381
          %387 = dma.hbm_to_vmem [thread:$0]  %s380, 4096, %s382, %s370, 256, 256, 16
        $region89: #{tpu_custom_call.1} parent=39 // pred_fallthru
          _
      $region40: #{tpu_custom_call.1} parent=5 // pred_fallthru
        _
      %p388 = scmp.le.s32.totalorder 1, %s21
      %p389 = scmp.lt.s32.totalorder %s21, 21
      %p390 = pnand %p388, %p389
      %p391 = pneg %p390
      // Predicated region
      $region90: #{tpu_custom_call.1} parent=5 // pred_check
        _
      $region91: #{tpu_custom_call.1} parent=5 // pred_check_branch
        %393 = sbr.rel (%p390) target = $region93
      $region92: #{tpu_custom_call.1} parent=5 // pred_region
        %s394 = ssub.s32 %s21, 1
        %s395 = sand.u32 %s48, 1
        %s396 = sand.u32 %s48, 1
        %s397 = smul.addr %s396, 8
        %s398 = scalar_lea.vmem [#allocation6], %s397
        // Predicated region
        $region94: #{tpu_custom_call.1} parent=92 // pred_check
          %p399 = pneg %p61
        $region95: #{tpu_custom_call.1} parent=92 // pred_check_branch
          %401 = sbr.rel (%p399) target = $region97
        $region96: #{tpu_custom_call.1} parent=92 // pred_region
          _
        $region97: #{tpu_custom_call.1} parent=92 // pred_fallthru
          _
        %s402 = sand.u32 %s100, 1
        %s403 = scalar_lea.sflag [#allocation8], %s402
        %s404 = sand.u32 %s100, 1
        %s405 = smul.addr %s404, 256
        %s406 = scalar_lea.vmem [#allocation7], %s405
        // Predicated region
        $region98: #{tpu_custom_call.1} parent=92 // pred_check
          %p407 = pneg %p113
        $region99: #{tpu_custom_call.1} parent=92 // pred_check_branch
          %409 = sbr.rel (%p407) target = $region101
        $region100: #{tpu_custom_call.1} parent=92 // pred_region
          %410 = dma.done %s403, 4096
        $region101: #{tpu_custom_call.1} parent=92 // pred_fallthru
          _
        %s411 = sand.u32 %s48, 1
        %s412 = sand.u32 %s48, 1
        %s413 = smul.addr %s412, 8
        %s414 = scalar_lea.vmem [#allocation6], %s413
        %p415 = pneg %p61
        %p416 = pneg %p58
        %s417 = smul.u32 2, %s30
        %p418 = scmp.lt.s32.totalorder %s417, 19
        %s419 = scalar_select %p418, %s417, 19
        %s420 = smul.addr %s419, 8
        %s421 = scalar_lea.vmem %s1, %s420
        %p422 = pneg %p87
        %p423 = pneg %p84
        %s424 = sand.u32 %s100, 1
        %s425 = scalar_lea.sflag [#allocation8], %s424
        %s426 = sand.u32 %s100, 1
        %s427 = smul.addr %s426, 256
        %s428 = scalar_lea.vmem [#allocation7], %s427
        %p429 = pneg %p113
        %p430 = pneg %p110
        %p431 = pneg %p134
        %p432 = pneg %p131
        %p433 = pneg %p155
        %p434 = pneg %p152
        %p435 = pneg %p176
        %p436 = pneg %p173
        %p437 = pneg %p197
        %p438 = pneg %p194
        %p439 = pneg %p218
        %p440 = pneg %p215
        %p441 = pneg %p239
        %p442 = pneg %p236
        %p443 = pneg %p265
        %p444 = pneg %p262
        %s445 = sand.u32 %s252, 1
        %s446 = scalar_lea.sflag [#allocation9], %s445
        %s447 = sand.u32 %s252, 1
        %s448 = smul.addr %s447, 16
        %s449 = scalar_lea.vmem [#allocation10], %s448
        %s450 = smul.u32 2, %s30
        %s451 = smul.u32 2, %s30
        %p452 = scmp.lt.s32.totalorder %s451, 19
        %s453 = scalar_select %p452, %s451, 19
        %s454 = smul.addr %s453, 8
        %s455 = scalar_lea.vmem %s1, %s454
        %s456 = smul.u32 2, %s30
        %s457 = smul.u32 16, %s31
        %s458 = smul.u32 2, %s30
        %p459 = scmp.eq.s32.totalorder %s31, 0
        // Predicated region
        $region102: #{tpu_custom_call.1} parent=92 // pred_check
          %p460 = pneg %p459
        $region103: #{tpu_custom_call.1} parent=92 // pred_check_branch
          %462 = sbr.rel (%p460) target = $region105
        $region104: #{tpu_custom_call.1} parent=92 // pred_region
          %v463 = vld [vmem:[%s455] sm:$0xff]
          %v464 = vld [vmem:[%s455 + $0x8] sm:$0xff]
          %v465 = vld [vmem:[%s3] sm:$0xff]
          %v466 = vld [vmem:[%s3 + $0x8] sm:$0xff]
          %v467 = vld [vmem:[%s4] sm:$0x3]
          %v469 = vlaneseq
          %v470 = vshrl.u32 %v469, 7
          %v471 = vsub.s32 0, %v470
          %v472 = vrot.slane %v467, %v471
          %v473 = vlaneseq
          %v474 = vshrl.u32 %v473, 7
          %v475 = vsub.s32 1, %v474
          %v476 = vrot.slane %v467, %v475
          %vm479 = vcmask 64512
          %v481 = vsel %vm479, %v463, 0
          %v484 = vsel %vm479, %v464, 0
          %v486 = vand.u32 %v466, 4294901760
          %487 = vmatprep.subr.mxu0 %v486
          %v488 = vand.u32 %v465, 4294901760
          %489 = vmatpush1.msra.mxu0 %v488
          %490 = vmatprep.subr.mxu0 0.0
          %491 = vmatpush1.msra.mxu0 0.0
          %492 = vmatprep.subr.mxu0 0.0
          %493 = vmatpush1.msra.mxu0 0.0
          %494 = vmatprep.subr.mxu0 0.0
          %495 = vmatpush1.msra.mxu0 0.0
          %496 = vmatprep.subr.mxu0 0.0
          %497 = vmatpush1.msra.mxu0 0.0
          %498 = vmatprep.subr.mxu0 0.0
          %499 = vmatpush1.msra.mxu0 0.0
          %500 = vmatprep.subr.mxu0 0.0
          %501 = vmatpush1.msra.mxu0 0.0
          %502 = vmatprep.subr.mxu0 0.0
          %503 = vmatpush1.msra.mxu0 0.0
          %504 = vmatprep.subr.mxu0 0.0
          %505 = vmatpush1.msra.mxu0 0.0
          %506 = vmatprep.subr.mxu0 0.0
          %507 = vmatpush1.msra.mxu0 0.0
          %508 = vmatprep.subr.mxu0 0.0
          %509 = vmatpush1.msra.mxu0 0.0
          %510 = vmatprep.subr.mxu0 0.0
          %511 = vmatpush1.msra.mxu0 0.0
          %512 = vmatprep.subr.mxu0 0.0
          %513 = vmatpush1.msra.mxu0 0.0
          %514 = vmatprep.subr.mxu0 0.0
          %515 = vmatpush1.msra.mxu0 0.0
          %516 = vmatprep.subr.mxu0 0.0
          %517 = vmatpush1.msra.mxu0 0.0
          %518 = vmatprep.subr.mxu0 0.0
          %519 = vmatpush1.msra.mxu0 0.0
          %520 = vmatprep.subr.mxu0 0.0
          %521 = vmatpush1.msra.mxu0 0.0
          %522 = vmatprep.subr.mxu0 0.0
          %523 = vmatpush1.msra.mxu0 0.0
          %524 = vmatprep.subr.mxu0 0.0
          %525 = vmatpush1.msra.mxu0 0.0
          %526 = vmatprep.subr.mxu0 0.0
          %527 = vmatpush1.msra.mxu0 0.0
          %528 = vmatprep.subr.mxu0 0.0
          %529 = vmatpush1.msra.mxu0 0.0
          %530 = vmatprep.subr.mxu0 0.0
          %531 = vmatpush1.msra.mxu0 0.0
          %532 = vmatprep.subr.mxu0 0.0
          %533 = vmatpush1.msra.mxu0 0.0
          %534 = vmatprep.subr.mxu0 0.0
          %535 = vmatpush1.msra.mxu0 0.0
          %536 = vmatprep.subr.mxu0 0.0
          %537 = vmatpush1.msra.mxu0 0.0
          %538 = vmatprep.subr.mxu0 0.0
          %539 = vmatpush1.msra.mxu0 0.0
          %540 = vmatprep.subr.mxu0 0.0
          %541 = vmatpush1.msra.mxu0 0.0
          %542 = vmatprep.subr.mxu0 0.0
          %543 = vmatpush1.msra.mxu0 0.0
          %544 = vmatprep.subr.mxu0 0.0
          %545 = vmatpush1.msra.mxu0 0.0
          %546 = vmatprep.subr.mxu0 0.0
          %547 = vmatpush1.msra.mxu0 0.0
          %548 = vmatprep.subr.mxu0 0.0
          %549 = vmatpush1.msra.mxu0 0.0
          %550 = vmatprep.subr.mxu0 0.0
          %551 = vmatpush1.msra.mxu0 0.0
          %552 = vmatprep.mubr.f32.mxu0 0.0
          %v553 = vand.u32 %v481, 4294901760
          %v554 = vsub.f32 %v481, %v553
          %v555 = vand.u32 %v554, 4294901760
          %v556 = vsub.f32 %v554, %v555
          %v557 = vand.u32 %v556, 4294901760
          %558 = vmatmul.mubr.f32.gmra.mrb[0].mxu0 %v557
          %v559 = vpop.f32.mrb[0].mxu0
          %v560 = vadd.f32 %v472, %v559
          %v561 = vpop.f32.mrb[0].mxu0
          %v562 = vadd.f32 %v476, %v561
          %563 = vmatprep.mubr.f32.mxu0 0.0
          %v564 = vand.u32 %v484, 4294901760
          %v565 = vsub.f32 %v484, %v564
          %v566 = vand.u32 %v565, 4294901760
          %v567 = vsub.f32 %v565, %v566
          %v568 = vand.u32 %v567, 4294901760
          %569 = vmatmul.mubr.f32.gmra.mrb[0].mxu0 %v568
          %v570 = vpop.f32.mrb[0].mxu0
          %v571 = vadd.f32 %v472, %v570
          %v572 = vpop.f32.mrb[0].mxu0
          %v573 = vadd.f32 %v476, %v572
          %574 = vdwg.mxu0
          %v575 = vand.u32 %v466, 4294901760
          %v576 = vsub.f32 %v466, %v575
          %v577 = vand.u32 %v576, 4294901760
          %v578 = vsub.f32 %v576, %v577
          %v579 = vand.u32 %v578, 4294901760
          %580 = vmatprep.subr.mxu0 %v579
          %v581 = vand.u32 %v465, 4294901760
          %v582 = vsub.f32 %v465, %v581
          %v583 = vand.u32 %v582, 4294901760
          %v584 = vsub.f32 %v582, %v583
          %v585 = vand.u32 %v584, 4294901760
          %586 = vmatpush1.msra.mxu0 %v585
          %587 = vmatprep.subr.mxu0 0.0
          %588 = vmatpush1.msra.mxu0 0.0
          %589 = vmatprep.subr.mxu0 0.0
          %590 = vmatpush1.msra.mxu0 0.0
          %591 = vmatprep.subr.mxu0 0.0
          %592 = vmatpush1.msra.mxu0 0.0
          %593 = vmatprep.subr.mxu0 0.0
          %594 = vmatpush1.msra.mxu0 0.0
          %595 = vmatprep.subr.mxu0 0.0
          %596 = vmatpush1.msra.mxu0 0.0
          %597 = vmatprep.subr.mxu0 0.0
          %598 = vmatpush1.msra.mxu0 0.0
          %599 = vmatprep.subr.mxu0 0.0
          %600 = vmatpush1.msra.mxu0 0.0
          %601 = vmatprep.subr.mxu0 0.0
          %602 = vmatpush1.msra.mxu0 0.0
          %603 = vmatprep.subr.mxu0 0.0
          %604 = vmatpush1.msra.mxu0 0.0
          %605 = vmatprep.subr.mxu0 0.0
          %606 = vmatpush1.msra.mxu0 0.0
          %607 = vmatprep.subr.mxu0 0.0
          %608 = vmatpush1.msra.mxu0 0.0
          %609 = vmatprep.subr.mxu0 0.0
          %610 = vmatpush1.msra.mxu0 0.0
          %611 = vmatprep.subr.mxu0 0.0
          %612 = vmatpush1.msra.mxu0 0.0
          %613 = vmatprep.subr.mxu0 0.0
          %614 = vmatpush1.msra.mxu0 0.0
          %615 = vmatprep.subr.mxu0 0.0
          %616 = vmatpush1.msra.mxu0 0.0
          %617 = vmatprep.subr.mxu0 0.0
          %618 = vmatpush1.msra.mxu0 0.0
          %619 = vmatprep.subr.mxu0 0.0
          %620 = vmatpush1.msra.mxu0 0.0
          %621 = vmatprep.subr.mxu0 0.0
          %622 = vmatpush1.msra.mxu0 0.0
          %623 = vmatprep.subr.mxu0 0.0
          %624 = vmatpush1.msra.mxu0 0.0
          %625 = vmatprep.subr.mxu0 0.0
          %626 = vmatpush1.msra.mxu0 0.0
          %627 = vmatprep.subr.mxu0 0.0
          %628 = vmatpush1.msra.mxu0 0.0
          %629 = vmatprep.subr.mxu0 0.0
          %630 = vmatpush1.msra.mxu0 0.0
          %631 = vmatprep.subr.mxu0 0.0
          %632 = vmatpush1.msra.mxu0 0.0
          %633 = vmatprep.subr.mxu0 0.0
          %634 = vmatpush1.msra.mxu0 0.0
          %635 = vmatprep.subr.mxu0 0.0
          %636 = vmatpush1.msra.mxu0 0.0
          %637 = vmatprep.subr.mxu0 0.0
          %638 = vmatpush1.msra.mxu0 0.0
          %639 = vmatprep.subr.mxu0 0.0
          %640 = vmatpush1.msra.mxu0 0.0
          %641 = vmatprep.subr.mxu0 0.0
          %642 = vmatpush1.msra.mxu0 0.0
          %643 = vmatprep.subr.mxu0 0.0
          %644 = vmatpush1.msra.mxu0 0.0
          %645 = vmatprep.subr.mxu0 0.0
          %646 = vmatpush1.msra.mxu0 0.0
          %647 = vmatprep.subr.mxu0 0.0
          %648 = vmatpush1.msra.mxu0 0.0
          %649 = vmatprep.mubr.f32.mxu0 0.0
          %v650 = vand.u32 %v481, 4294901760
          %651 = vmatmul.mubr.f32.gmra.mrb[0].mxu0 %v650
          %v652 = vpop.f32.mrb[0].mxu0
          %v653 = vadd.f32 %v560, %v652
          %v654 = vpop.f32.mrb[0].mxu0
          %v655 = vadd.f32 %v562, %v654
          %656 = vmatprep.mubr.f32.mxu0 0.0
          %v657 = vand.u32 %v484, 4294901760
          %658 = vmatmul.mubr.f32.gmra.mrb[0].mxu0 %v657
          %v659 = vpop.f32.mrb[0].mxu0
          %v660 = vadd.f32 %v571, %v659
          %v661 = vpop.f32.mrb[0].mxu0
          %v662 = vadd.f32 %v573, %v661
          %663 = vdwg.mxu0
          %v664 = vand.u32 %v466, 4294901760
          %v665 = vsub.f32 %v466, %v664
          %666 = vmatprep.subr.mxu0 %v665
          %v667 = vand.u32 %v465, 4294901760
          %v668 = vsub.f32 %v465, %v667
          %669 = vmatpush1.msra.mxu0 %v668
          %670 = vmatprep.subr.mxu0 0.0
          %671 = vmatpush1.msra.mxu0 0.0
          %672 = vmatprep.subr.mxu0 0.0
          %673 = vmatpush1.msra.mxu0 0.0
          %674 = vmatprep.subr.mxu0 0.0
          %675 = vmatpush1.msra.mxu0 0.0
          %676 = vmatprep.subr.mxu0 0.0
          %677 = vmatpush1.msra.mxu0 0.0
          %678 = vmatprep.subr.mxu0 0.0
          %679 = vmatpush1.msra.mxu0 0.0
          %680 = vmatprep.subr.mxu0 0.0
          %681 = vmatpush1.msra.mxu0 0.0
          %682 = vmatprep.subr.mxu0 0.0
          %683 = vmatpush1.msra.mxu0 0.0
          %684 = vmatprep.subr.mxu0 0.0
          %685 = vmatpush1.msra.mxu0 0.0
          %686 = vmatprep.subr.mxu0 0.0
          %687 = vmatpush1.msra.mxu0 0.0
          %688 = vmatprep.subr.mxu0 0.0
          %689 = vmatpush1.msra.mxu0 0.0
          %690 = vmatprep.subr.mxu0 0.0
          %691 = vmatpush1.msra.mxu0 0.0
          %692 = vmatprep.subr.mxu0 0.0
          %693 = vmatpush1.msra.mxu0 0.0
          %694 = vmatprep.subr.mxu0 0.0
          %695 = vmatpush1.msra.mxu0 0.0
          %696 = vmatprep.subr.mxu0 0.0
          %697 = vmatpush1.msra.mxu0 0.0
          %698 = vmatprep.subr.mxu0 0.0
          %699 = vmatpush1.msra.mxu0 0.0
          %700 = vmatprep.subr.mxu0 0.0
          %701 = vmatpush1.msra.mxu0 0.0
          %702 = vmatprep.subr.mxu0 0.0
          %703 = vmatpush1.msra.mxu0 0.0
          %704 = vmatprep.subr.mxu0 0.0
          %705 = vmatpush1.msra.mxu0 0.0
          %706 = vmatprep.subr.mxu0 0.0
          %707 = vmatpush1.msra.mxu0 0.0
          %708 = vmatprep.subr.mxu0 0.0
          %709 = vmatpush1.msra.mxu0 0.0
          %710 = vmatprep.subr.mxu0 0.0
          %711 = vmatpush1.msra.mxu0 0.0
          %712 = vmatprep.subr.mxu0 0.0
          %713 = vmatpush1.msra.mxu0 0.0
          %714 = vmatprep.subr.mxu0 0.0
          %715 = vmatpush1.msra.mxu0 0.0
          %716 = vmatprep.subr.mxu0 0.0
          %717 = vmatpush1.msra.mxu0 0.0
          %718 = vmatprep.subr.mxu0 0.0
          %719 = vmatpush1.msra.mxu0 0.0
          %720 = vmatprep.subr.mxu0 0.0
          %721 = vmatpush1.msra.mxu0 0.0
          %722 = vmatprep.subr.mxu0 0.0
          %723 = vmatpush1.msra.mxu0 0.0
          %724 = vmatprep.subr.mxu0 0.0
          %725 = vmatpush1.msra.mxu0 0.0
          %726 = vmatprep.subr.mxu0 0.0
          %727 = vmatpush1.msra.mxu0 0.0
          %728 = vmatprep.subr.mxu0 0.0
          %729 = vmatpush1.msra.mxu0 0.0
          %730 = vmatprep.subr.mxu0 0.0
          %731 = vmatpush1.msra.mxu0 0.0
          %732 = vmatprep.mubr.f32.mxu0 0.0
          %v733 = vand.u32 %v481, 4294901760
          %v734 = vsub.f32 %v481, %v733
          %735 = vmatmul.mubr.f32.gmra.mrb[0].mxu0 %v734
          %v736 = vpop.f32.mrb[0].mxu0
          %v737 = vadd.f32 %v653, %v736
          %v738 = vpop.f32.mrb[0].mxu0
          %v739 = vadd.f32 %v655, %v738
          %740 = vmatprep.mubr.f32.mxu0 0.0
          %v741 = vand.u32 %v484, 4294901760
          %v742 = vsub.f32 %v484, %v741
          %743 = vmatmul.mubr.f32.gmra.mrb[0].mxu0 %v742
          %v744 = vpop.f32.mrb[0].mxu0
          %v745 = vadd.f32 %v660, %v744
          %v746 = vpop.f32.mrb[0].mxu0
          %v747 = vadd.f32 %v662, %v746
          %748 = vdwg.mxu0
          %v749 = vand.u32 %v466, 4294901760
          %750 = vmatprep.subr.mxu0 %v749
          %v751 = vand.u32 %v465, 4294901760
          %752 = vmatpush1.msra.mxu0 %v751
          %753 = vmatprep.subr.mxu0 0.0
          %754 = vmatpush1.msra.mxu0 0.0
          %755 = vmatprep.subr.mxu0 0.0
          %756 = vmatpush1.msra.mxu0 0.0
          %757 = vmatprep.subr.mxu0 0.0
          %758 = vmatpush1.msra.mxu0 0.0
          %759 = vmatprep.subr.mxu0 0.0
          %760 = vmatpush1.msra.mxu0 0.0
          %761 = vmatprep.subr.mxu0 0.0
          %762 = vmatpush1.msra.mxu0 0.0
          %763 = vmatprep.subr.mxu0 0.0
          %764 = vmatpush1.msra.mxu0 0.0
          %765 = vmatprep.subr.mxu0 0.0
          %766 = vmatpush1.msra.mxu0 0.0
          %767 = vmatprep.subr.mxu0 0.0
          %768 = vmatpush1.msra.mxu0 0.0
          %769 = vmatprep.subr.mxu0 0.0
          %770 = vmatpush1.msra.mxu0 0.0
          %771 = vmatprep.subr.mxu0 0.0
          %772 = vmatpush1.msra.mxu0 0.0
          %773 = vmatprep.subr.mxu0 0.0
          %774 = vmatpush1.msra.mxu0 0.0
          %775 = vmatprep.subr.mxu0 0.0
          %776 = vmatpush1.msra.mxu0 0.0
          %777 = vmatprep.subr.mxu0 0.0
          %778 = vmatpush1.msra.mxu0 0.0
          %779 = vmatprep.subr.mxu0 0.0
          %780 = vmatpush1.msra.mxu0 0.0
          %781 = vmatprep.subr.mxu0 0.0
          %782 = vmatpush1.msra.mxu0 0.0
          %783 = vmatprep.subr.mxu0 0.0
          %784 = vmatpush1.msra.mxu0 0.0
          %785 = vmatprep.subr.mxu0 0.0
          %786 = vmatpush1.msra.mxu0 0.0
          %787 = vmatprep.subr.mxu0 0.0
          %788 = vmatpush1.msra.mxu0 0.0
          %789 = vmatprep.subr.mxu0 0.0
          %790 = vmatpush1.msra.mxu0 0.0
          %791 = vmatprep.subr.mxu0 0.0
          %792 = vmatpush1.msra.mxu0 0.0
          %793 = vmatprep.subr.mxu0 0.0
          %794 = vmatpush1.msra.mxu0 0.0
          %795 = vmatprep.subr.mxu0 0.0
          %796 = vmatpush1.msra.mxu0 0.0
          %797 = vmatprep.subr.mxu0 0.0
          %798 = vmatpush1.msra.mxu0 0.0
          %799 = vmatprep.subr.mxu0 0.0
          %800 = vmatpush1.msra.mxu0 0.0
          %801 = vmatprep.subr.mxu0 0.0
          %802 = vmatpush1.msra.mxu0 0.0
          %803 = vmatprep.subr.mxu0 0.0
          %804 = vmatpush1.msra.mxu0 0.0
          %805 = vmatprep.subr.mxu0 0.0
          %806 = vmatpush1.msra.mxu0 0.0
          %807 = vmatprep.subr.mxu0 0.0
          %808 = vmatpush1.msra.mxu0 0.0
          %809 = vmatprep.subr.mxu0 0.0
          %810 = vmatpush1.msra.mxu0 0.0
          %811 = vmatprep.subr.mxu0 0.0
          %812 = vmatpush1.msra.mxu0 0.0
          %813 = vmatprep.subr.mxu0 0.0
          %814 = vmatpush1.msra.mxu0 0.0
          %815 = vmatprep.mubr.f32.mxu0 0.0
          %v816 = vand.u32 %v481, 4294901760
          %v817 = vsub.f32 %v481, %v816
          %v818 = vand.u32 %v817, 4294901760
          %819 = vmatmul.mubr.f32.gmra.mrb[0].mxu0 %v818
          %v820 = vpop.f32.mrb[0].mxu0
          %v821 = vadd.f32 %v737, %v820
          %v822 = vpop.f32.mrb[0].mxu0
          %v823 = vadd.f32 %v739, %v822
          %824 = vmatprep.mubr.f32.mxu0 0.0
          %v825 = vand.u32 %v484, 4294901760
          %v826 = vsub.f32 %v484, %v825
          %v827 = vand.u32 %v826, 4294901760
          %828 = vmatmul.mubr.f32.gmra.mrb[0].mxu0 %v827
          %v829 = vpop.f32.mrb[0].mxu0
          %v830 = vadd.f32 %v745, %v829
          %v831 = vpop.f32.mrb[0].mxu0
          %v832 = vadd.f32 %v747, %v831
          %833 = vdwg.mxu0
          %v834 = vand.u32 %v466, 4294901760
          %v835 = vsub.f32 %v466, %v834
          %v836 = vand.u32 %v835, 4294901760
          %837 = vmatprep.subr.mxu0 %v836
          %v838 = vand.u32 %v465, 4294901760
          %v839 = vsub.f32 %v465, %v838
          %v840 = vand.u32 %v839, 4294901760
          %841 = vmatpush1.msra.mxu0 %v840
          %842 = vmatprep.subr.mxu0 0.0
          %843 = vmatpush1.msra.mxu0 0.0
          %844 = vmatprep.subr.mxu0 0.0
          %845 = vmatpush1.msra.mxu0 0.0
          %846 = vmatprep.subr.mxu0 0.0
          %847 = vmatpush1.msra.mxu0 0.0
          %848 = vmatprep.subr.mxu0 0.0
          %849 = vmatpush1.msra.mxu0 0.0
          %850 = vmatprep.subr.mxu0 0.0
          %851 = vmatpush1.msra.mxu0 0.0
          %852 = vmatprep.subr.mxu0 0.0
          %853 = vmatpush1.msra.mxu0 0.0
          %854 = vmatprep.subr.mxu0 0.0
          %855 = vmatpush1.msra.mxu0 0.0
          %856 = vmatprep.subr.mxu0 0.0
          %857 = vmatpush1.msra.mxu0 0.0
          %858 = vmatprep.subr.mxu0 0.0
          %859 = vmatpush1.msra.mxu0 0.0
          %860 = vmatprep.subr.mxu0 0.0
          %861 = vmatpush1.msra.mxu0 0.0
          %862 = vmatprep.subr.mxu0 0.0
          %863 = vmatpush1.msra.mxu0 0.0
          %864 = vmatprep.subr.mxu0 0.0
          %865 = vmatpush1.msra.mxu0 0.0
          %866 = vmatprep.subr.mxu0 0.0
          %867 = vmatpush1.msra.mxu0 0.0
          %868 = vmatprep.subr.mxu0 0.0
          %869 = vmatpush1.msra.mxu0 0.0
          %870 = vmatprep.subr.mxu0 0.0
          %871 = vmatpush1.msra.mxu0 0.0
          %872 = vmatprep.subr.mxu0 0.0
          %873 = vmatpush1.msra.mxu0 0.0
          %874 = vmatprep.subr.mxu0 0.0
          %875 = vmatpush1.msra.mxu0 0.0
          %876 = vmatprep.subr.mxu0 0.0
          %877 = vmatpush1.msra.mxu0 0.0
          %878 = vmatprep.subr.mxu0 0.0
          %879 = vmatpush1.msra.mxu0 0.0
          %880 = vmatprep.subr.mxu0 0.0
          %881 = vmatpush1.msra.mxu0 0.0
          %882 = vmatprep.subr.mxu0 0.0
          %883 = vmatpush1.msra.mxu0 0.0
          %884 = vmatprep.subr.mxu0 0.0
          %885 = vmatpush1.msra.mxu0 0.0
          %886 = vmatprep.subr.mxu0 0.0
          %887 = vmatpush1.msra.mxu0 0.0
          %888 = vmatprep.subr.mxu0 0.0
          %889 = vmatpush1.msra.mxu0 0.0
          %890 = vmatprep.subr.mxu0 0.0
          %891 = vmatpush1.msra.mxu0 0.0
          %892 = vmatprep.subr.mxu0 0.0
          %893 = vmatpush1.msra.mxu0 0.0
          %894 = vmatprep.subr.mxu0 0.0
          %895 = vmatpush1.msra.mxu0 0.0
          %896 = vmatprep.subr.mxu0 0.0
          %897 = vmatpush1.msra.mxu0 0.0
          %898 = vmatprep.subr.mxu0 0.0
          %899 = vmatpush1.msra.mxu0 0.0
          %900 = vmatprep.subr.mxu0 0.0
          %901 = vmatpush1.msra.mxu0 0.0
          %902 = vmatprep.subr.mxu0 0.0
          %903 = vmatpush1.msra.mxu0 0.0
          %904 = vmatprep.mubr.f32.mxu0 0.0
          %v905 = vand.u32 %v481, 4294901760
          %906 = vmatmul.mubr.f32.gmra.mrb[0].mxu0 %v905
          %v907 = vpop.f32.mrb[0].mxu0
          %v908 = vadd.f32 %v821, %v907
          %v909 = vpop.f32.mrb[0].mxu0
          %v910 = vadd.f32 %v823, %v909
          %911 = vmatprep.mubr.f32.mxu0 0.0
          %v912 = vand.u32 %v484, 4294901760
          %913 = vmatmul.mubr.f32.gmra.mrb[0].mxu0 %v912
          %v914 = vpop.f32.mrb[0].mxu0
          %v915 = vadd.f32 %v830, %v914
          %v916 = vpop.f32.mrb[0].mxu0
          %v917 = vadd.f32 %v832, %v916
          %918 = vdwg.mxu0
          %v919 = vand.u32 %v466, 4294901760
          %920 = vmatprep.subr.mxu0 %v919
          %v921 = vand.u32 %v465, 4294901760
          %922 = vmatpush1.msra.mxu0 %v921
          %923 = vmatprep.subr.mxu0 0.0
          %924 = vmatpush1.msra.mxu0 0.0
          %925 = vmatprep.subr.mxu0 0.0
          %926 = vmatpush1.msra.mxu0 0.0
          %927 = vmatprep.subr.mxu0 0.0
          %928 = vmatpush1.msra.mxu0 0.0
          %929 = vmatprep.subr.mxu0 0.0
          %930 = vmatpush1.msra.mxu0 0.0
          %931 = vmatprep.subr.mxu0 0.0
          %932 = vmatpush1.msra.mxu0 0.0
          %933 = vmatprep.subr.mxu0 0.0
          %934 = vmatpush1.msra.mxu0 0.0
          %935 = vmatprep.subr.mxu0 0.0
          %936 = vmatpush1.msra.mxu0 0.0
          %937 = vmatprep.subr.mxu0 0.0
          %938 = vmatpush1.msra.mxu0 0.0
          %939 = vmatprep.subr.mxu0 0.0
          %940 = vmatpush1.msra.mxu0 0.0
          %941 = vmatprep.subr.mxu0 0.0
          %942 = vmatpush1.msra.mxu0 0.0
          %943 = vmatprep.subr.mxu0 0.0
          %944 = vmatpush1.msra.mxu0 0.0
          %945 = vmatprep.subr.mxu0 0.0
          %946 = vmatpush1.msra.mxu0 0.0
          %947 = vmatprep.subr.mxu0 0.0
          %948 = vmatpush1.msra.mxu0 0.0
          %949 = vmatprep.subr.mxu0 0.0
          %950 = vmatpush1.msra.mxu0 0.0
          %951 = vmatprep.subr.mxu0 0.0
          %952 = vmatpush1.msra.mxu0 0.0
          %953 = vmatprep.subr.mxu0 0.0
          %954 = vmatpush1.msra.mxu0 0.0
          %955 = vmatprep.subr.mxu0 0.0
          %956 = vmatpush1.msra.mxu0 0.0
          %957 = vmatprep.subr.mxu0 0.0
          %958 = vmatpush1.msra.mxu0 0.0
          %959 = vmatprep.subr.mxu0 0.0
          %960 = vmatpush1.msra.mxu0 0.0
          %961 = vmatprep.subr.mxu0 0.0
          %962 = vmatpush1.msra.mxu0 0.0
          %963 = vmatprep.subr.mxu0 0.0
          %964 = vmatpush1.msra.mxu0 0.0
          %965 = vmatprep.subr.mxu0 0.0
          %966 = vmatpush1.msra.mxu0 0.0
          %967 = vmatprep.subr.mxu0 0.0
          %968 = vmatpush1.msra.mxu0 0.0
          %969 = vmatprep.subr.mxu0 0.0
          %970 = vmatpush1.msra.mxu0 0.0
          %971 = vmatprep.subr.mxu0 0.0
          %972 = vmatpush1.msra.mxu0 0.0
          %973 = vmatprep.subr.mxu0 0.0
          %974 = vmatpush1.msra.mxu0 0.0
          %975 = vmatprep.subr.mxu0 0.0
          %976 = vmatpush1.msra.mxu0 0.0
          %977 = vmatprep.subr.mxu0 0.0
          %978 = vmatpush1.msra.mxu0 0.0
          %979 = vmatprep.subr.mxu0 0.0
          %980 = vmatpush1.msra.mxu0 0.0
          %981 = vmatprep.subr.mxu0 0.0
          %982 = vmatpush1.msra.mxu0 0.0
          %983 = vmatprep.subr.mxu0 0.0
          %984 = vmatpush1.msra.mxu0 0.0
          %985 = vmatprep.mubr.f32.mxu0 0.0
          %v986 = vand.u32 %v481, 4294901760
          %987 = vmatmul.mubr.f32.gmra.mrb[0].mxu0 %v986
          %v988 = vpop.f32.mrb[0].mxu0
          %v989 = vadd.f32 %v908, %v988
          %v990 = vpop.f32.mrb[0].mxu0
          %v991 = vadd.f32 %v910, %v990
          %992 = vmatprep.mubr.f32.mxu0 0.0
          %v993 = vand.u32 %v484, 4294901760
          %994 = vmatmul.mubr.f32.gmra.mrb[0].mxu0 %v993
          %v995 = vpop.f32.mrb[0].mxu0
          %v996 = vadd.f32 %v915, %v995
          %v997 = vpop.f32.mrb[0].mxu0
          %v998 = vadd.f32 %v917, %v997
          %999 = vdwg.mxu0
          %1000 = vst [vmem:[#allocation2] sm:$0xff] %v989
          %1001 = vst [vmem:[#allocation2 + $0x8] sm:$0xff] %v991
          %1002 = vst [vmem:[#allocation2 + $0x10] sm:$0xff] %v996
          %1003 = vst [vmem:[#allocation2 + $0x18] sm:$0xff] %v998
          %vm1004 = vcmask 7168
          %1005 = vst.msk [vmem:[#allocation3] sm:$0xff] %vm1004, -1e+30
          %1006 = vst.msk [vmem:[#allocation3 + $0x8] sm:$0xff] %vm1004, -1e+30
          %1007 = vst.msk [vmem:[#allocation3 + $0x10] sm:$0xff] %vm1004, -1e+30
          %1008 = vst.msk [vmem:[#allocation3 + $0x18] sm:$0xff] %vm1004, -1e+30
          %1009 = vst.msk [vmem:[#allocation3 + $0x20] sm:$0xff] %vm1004, -1e+30
          %1010 = vst.msk [vmem:[#allocation3 + $0x28] sm:$0xff] %vm1004, -1e+30
          %1011 = vst.msk [vmem:[#allocation3 + $0x30] sm:$0xff] %vm1004, -1e+30
          %1012 = vst.msk [vmem:[#allocation3 + $0x38] sm:$0xff] %vm1004, -1e+30
          %1013 = vst.msk [vmem:[#allocation4] sm:$0xff] %vm1004, 0.0
          %1014 = vst.msk [vmem:[#allocation4 + $0x8] sm:$0xff] %vm1004, 0.0
          %1015 = vst.msk [vmem:[#allocation4 + $0x10] sm:$0xff] %vm1004, 0.0
          %1016 = vst.msk [vmem:[#allocation4 + $0x18] sm:$0xff] %vm1004, 0.0
          %1017 = vst.msk [vmem:[#allocation4 + $0x20] sm:$0xff] %vm1004, 0.0
          %1018 = vst.msk [vmem:[#allocation4 + $0x28] sm:$0xff] %vm1004, 0.0
          %1019 = vst.msk [vmem:[#allocation4 + $0x30] sm:$0xff] %vm1004, 0.0
          %1020 = vst.msk [vmem:[#allocation4 + $0x38] sm:$0xff] %vm1004, 0.0
          %1021 = vst.msk [vmem:[#allocation5] sm:$0xff] %vm479, 0.0
          %1022 = vst.msk [vmem:[#allocation5 + $0x8] sm:$0xff] %vm479, 0.0
          %1023 = vst.msk [vmem:[#allocation5 + $0x10] sm:$0xff] %vm479, 0.0
          %1024 = vst.msk [vmem:[#allocation5 + $0x18] sm:$0xff] %vm479, 0.0
          %1025 = vst.msk [vmem:[#allocation5 + $0x20] sm:$0xff] %vm479, 0.0
          %1026 = vst.msk [vmem:[#allocation5 + $0x28] sm:$0xff] %vm479, 0.0
          %1027 = vst.msk [vmem:[#allocation5 + $0x30] sm:$0xff] %vm479, 0.0
          %1028 = vst.msk [vmem:[#allocation5 + $0x38] sm:$0xff] %vm479, 0.0
        $region105: #{tpu_custom_call.1} parent=92 // pred_fallthru
          _
        %v1029 = vld [vmem:[%s398] sm:$0xf]
        %v1030 = vld [vmem:[%s398 + $0x4] sm:$0xf]
        %v1031 = vunpack.c.l.bf16 %v1029
        %v1032 = vunpack.c.l.bf16 %v1030
        %v1033 = vld [vmem:[%s406] sm:$0xff]
        %v1034 = vld [vmem:[%s406 + $0x8] sm:$0xff]
        %v1035 = vld [vmem:[%s406 + $0x10] sm:$0xff]
        %v1036 = vld [vmem:[%s406 + $0x18] sm:$0xff]
        %v1037 = vld [vmem:[%s406 + $0x20] sm:$0xff]
        %v1038 = vld [vmem:[%s406 + $0x28] sm:$0xff]
        %v1039 = vld [vmem:[%s406 + $0x30] sm:$0xff]
        %v1040 = vld [vmem:[%s406 + $0x38] sm:$0xff]
        %v1041 = vld [vmem:[%s406 + $0x40] sm:$0xff]
        %v1042 = vld [vmem:[%s406 + $0x48] sm:$0xff]
        %v1043 = vld [vmem:[%s406 + $0x50] sm:$0xff]
        %v1044 = vld [vmem:[%s406 + $0x58] sm:$0xff]
        %v1045 = vld [vmem:[%s406 + $0x60] sm:$0xff]
        %v1046 = vld [vmem:[%s406 + $0x68] sm:$0xff]
        %v1047 = vld [vmem:[%s406 + $0x70] sm:$0xff]
        %v1048 = vld [vmem:[%s406 + $0x78] sm:$0xff]
        %v1049 = vld [vmem:[%s406 + $0x80] sm:$0xff]
        %v1050 = vld [vmem:[%s406 + $0x88] sm:$0xff]
        %v1051 = vld [vmem:[%s406 + $0x90] sm:$0xff]
        %v1052 = vld [vmem:[%s406 + $0x98] sm:$0xff]
        %v1053 = vld [vmem:[%s406 + $0xa0] sm:$0xff]
        %v1054 = vld [vmem:[%s406 + $0xa8] sm:$0xff]
        %v1055 = vld [vmem:[%s406 + $0xb0] sm:$0xff]
        %v1056 = vld [vmem:[%s406 + $0xb8] sm:$0xff]
        %v1057 = vld [vmem:[%s406 + $0xc0] sm:$0xff]
        %v1058 = vld [vmem:[%s406 + $0xc8] sm:$0xff]
        %v1059 = vld [vmem:[%s406 + $0xd0] sm:$0xff]
        %v1060 = vld [vmem:[%s406 + $0xd8] sm:$0xff]
        %v1061 = vld [vmem:[%s406 + $0xe0] sm:$0xff]
        %v1062 = vld [vmem:[%s406 + $0xe8] sm:$0xff]
        %v1063 = vld [vmem:[%s406 + $0xf0] sm:$0xff]
        %v1064 = vld [vmem:[%s406 + $0xf8] sm:$0xff]
        %v1065 = vld [vmem:[#allocation2] sm:$0xff]
        %v1066 = vld [vmem:[#allocation2 + $0x8] sm:$0xff]
        %v1067 = vld [vmem:[#allocation2 + $0x10] sm:$0xff]
        %v1068 = vld [vmem:[#allocation2 + $0x18] sm:$0xff]
        %vm1069 = vcmask 64512
        %v1071 = vsel %vm1069, %v1065, 0
        %v1074 = vsel %vm1069, %v1067, 0
        %v1077 = vsel %vm1069, %v1033, 0
        %v1080 = vsel %vm1069, %v1035, 0
        %v1083 = vsel %vm1069, %v1037, 0
        %v1086 = vsel %vm1069, %v1039, 0
        %v1089 = vsel %vm1069, %v1041, 0
        %v1092 = vsel %vm1069, %v1043, 0
        %v1095 = vsel %vm1069, %v1045, 0
        %v1098 = vsel %vm1069, %v1047, 0
        %v1101 = vsel %vm1069, %v1049, 0
        %v1104 = vsel %vm1069, %v1051, 0
        %v1107 = vsel %vm1069, %v1053, 0
        %v1110 = vsel %vm1069, %v1055, 0
        %v1113 = vsel %vm1069, %v1057, 0
        %v1116 = vsel %vm1069, %v1059, 0
        %v1119 = vsel %vm1069, %v1061, 0
        %v1122 = vsel %vm1069, %v1063, 0
        %1124 = vmatprep.subr.mxu0 0.0
        %v1125 = vand.u32 %v1077, 4294901760
        %1126 = vmatpush1.xpose.msra.mxu0 %v1125
        %1127 = vmatprep.subr.mxu0 0.0
        %v1128 = vand.u32 %v1080, 4294901760
        %1129 = vmatpush1.xpose.msra.mxu0 %v1128
        %1130 = vmatprep.subr.mxu0 0.0
        %v1131 = vand.u32 %v1083, 4294901760
        %1132 = vmatpush1.xpose.msra.mxu0 %v1131
        %1133 = vmatprep.subr.mxu0 0.0
        %v1134 = vand.u32 %v1086, 4294901760
        %1135 = vmatpush1.xpose.msra.mxu0 %v1134
        %1136 = vmatprep.subr.mxu0 0.0
        %v1137 = vand.u32 %v1089, 4294901760
        %1138 = vmatpush1.xpose.msra.mxu0 %v1137
        %1139 = vmatprep.subr.mxu0 0.0
        %v1140 = vand.u32 %v1092, 4294901760
        %1141 = vmatpush1.xpose.msra.mxu0 %v1140
        %1142 = vmatprep.subr.mxu0 0.0
        %v1143 = vand.u32 %v1095, 4294901760
        %1144 = vmatpush1.xpose.msra.mxu0 %v1143
        %1145 = vmatprep.subr.mxu0 0.0
        %v1146 = vand.u32 %v1098, 4294901760
        %1147 = vmatpush1.xpose.msra.mxu0 %v1146
        %1148 = vmatprep.subr.mxu0 0.0
        %v1149 = vand.u32 %v1101, 4294901760
        %1150 = vmatpush1.xpose.msra.mxu0 %v1149
        %1151 = vmatprep.subr.mxu0 0.0
        %v1152 = vand.u32 %v1104, 4294901760
        %1153 = vmatpush1.xpose.msra.mxu0 %v1152
        %1154 = vmatprep.subr.mxu0 0.0
        %v1155 = vand.u32 %v1107, 4294901760
        %1156 = vmatpush1.xpose.msra.mxu0 %v1155
        %1157 = vmatprep.subr.mxu0 0.0
        %v1158 = vand.u32 %v1110, 4294901760
        %1159 = vmatpush1.xpose.msra.mxu0 %v1158
        %1160 = vmatprep.subr.mxu0 0.0
        %v1161 = vand.u32 %v1113, 4294901760
        %1162 = vmatpush1.xpose.msra.mxu0 %v1161
        %1163 = vmatprep.subr.mxu0 0.0
        %v1164 = vand.u32 %v1116, 4294901760
        %1165 = vmatpush1.xpose.msra.mxu0 %v1164
        %1166 = vmatprep.subr.mxu0 0.0
        %v1167 = vand.u32 %v1119, 4294901760
        %1168 = vmatpush1.xpose.msra.mxu0 %v1167
        %1169 = vmatprep.subr.mxu0 0.0
        %v1170 = vand.u32 %v1122, 4294901760
        %1171 = vmatpush1.xpose.msra.mxu0 %v1170
        %1172 = vmatprep.subr.mxu0 0.0
        %1173 = vmatpush1.xpose.msra.mxu0 0.0
        %1174 = vmatprep.subr.mxu0 0.0
        %1175 = vmatpush1.xpose.msra.mxu0 0.0
        %1176 = vmatprep.subr.mxu0 0.0
        %1177 = vmatpush1.xpose.msra.mxu0 0.0
        %1178 = vmatprep.subr.mxu0 0.0
        %1179 = vmatpush1.xpose.msra.mxu0 0.0
        %1180 = vmatprep.subr.mxu0 0.0
        %1181 = vmatpush1.xpose.msra.mxu0 0.0
        %1182 = vmatprep.subr.mxu0 0.0
        %1183 = vmatpush1.xpose.msra.mxu0 0.0
        %1184 = vmatprep.subr.mxu0 0.0
        %1185 = vmatpush1.xpose.msra.mxu0 0.0
        %1186 = vmatprep.subr.mxu0 0.0
        %1187 = vmatpush1.xpose.msra.mxu0 0.0
        %1188 = vmatprep.subr.mxu0 0.0
        %1189 = vmatpush1.xpose.msra.mxu0 0.0
        %1190 = vmatprep.subr.mxu0 0.0
        %1191 = vmatpush1.xpose.msra.mxu0 0.0
        %1192 = vmatprep.subr.mxu0 0.0
        %1193 = vmatpush1.xpose.msra.mxu0 0.0
        %1194 = vmatprep.subr.mxu0 0.0
        %1195 = vmatpush1.xpose.msra.mxu0 0.0
        %1196 = vmatprep.subr.mxu0 0.0
        %1197 = vmatpush1.xpose.msra.mxu0 0.0
        %1198 = vmatprep.subr.mxu0 0.0
        %1199 = vmatpush1.xpose.msra.mxu0 0.0
        %1200 = vmatprep.subr.mxu0 0.0
        %1201 = vmatpush1.xpose.msra.mxu0 0.0
        %1202 = vmatprep.subr.mxu0 0.0
        %1203 = vmatpush1.xpose.msra.mxu0 0.0
        %1204 = vmatprep.mubr.f32.mxu0 0.0
        %v1205 = vand.u32 %v1071, 4294901760
        %v1206 = vsub.f32 %v1071, %v1205
        %v1207 = vand.u32 %v1206, 4294901760
        %v1208 = vsub.f32 %v1206, %v1207
        %v1209 = vand.u32 %v1208, 4294901760
        %1210 = vmatmul.mubr.f32.gmra.mrb[0].mxu0 %v1209
        %v1211 = vpop.f32.mrb[0].mxu0
        %v1212 = vadd.f32 0.0, %v1211
        %v1213 = vpop.f32.mrb[0].mxu0
        %1214 = vmatprep.mubr.f32.mxu0 0.0
        %v1215 = vand.u32 %v1074, 4294901760
        %v1216 = vsub.f32 %v1074, %v1215
        %v1217 = vand.u32 %v1216, 4294901760
        %v1218 = vsub.f32 %v1216, %v1217
        %v1219 = vand.u32 %v1218, 4294901760
        %1220 = vmatmul.mubr.f32.gmra.mrb[0].mxu0 %v1219
        %v1221 = vpop.f32.mrb[0].mxu0
        %v1222 = vadd.f32 0.0, %v1221
        %v1223 = vpop.f32.mrb[0].mxu0
        %1224 = vdwg.mxu0
        %1225 = vmatprep.subr.mxu0 0.0
        %v1226 = vand.u32 %v1077, 4294901760
        %v1227 = vsub.f32 %v1077, %v1226
        %v1228 = vand.u32 %v1227, 4294901760
        %v1229 = vsub.f32 %v1227, %v1228
        %v1230 = vand.u32 %v1229, 4294901760
        %1231 = vmatpush1.xpose.msra.mxu0 %v1230
        %1232 = vmatprep.subr.mxu0 0.0
        %v1233 = vand.u32 %v1080, 4294901760
        %v1234 = vsub.f32 %v1080, %v1233
        %v1235 = vand.u32 %v1234, 4294901760
        %v1236 = vsub.f32 %v1234, %v1235
        %v1237 = vand.u32 %v1236, 4294901760
        %1238 = vmatpush1.xpose.msra.mxu0 %v1237
        %1239 = vmatprep.subr.mxu0 0.0
        %v1240 = vand.u32 %v1083, 4294901760
        %v1241 = vsub.f32 %v1083, %v1240
        %v1242 = vand.u32 %v1241, 4294901760
        %v1243 = vsub.f32 %v1241, %v1242
        %v1244 = vand.u32 %v1243, 4294901760
        %1245 = vmatpush1.xpose.msra.mxu0 %v1244
        %1246 = vmatprep.subr.mxu0 0.0
        %v1247 = vand.u32 %v1086, 4294901760
        %v1248 = vsub.f32 %v1086, %v1247
        %v1249 = vand.u32 %v1248, 4294901760
        %v1250 = vsub.f32 %v1248, %v1249
        %v1251 = vand.u32 %v1250, 4294901760
        %1252 = vmatpush1.xpose.msra.mxu0 %v1251
        %1253 = vmatprep.subr.mxu0 0.0
        %v1254 = vand.u32 %v1089, 4294901760
        %v1255 = vsub.f32 %v1089, %v1254
        %v1256 = vand.u32 %v1255, 4294901760
        %v1257 = vsub.f32 %v1255, %v1256
        %v1258 = vand.u32 %v1257, 4294901760
        %1259 = vmatpush1.xpose.msra.mxu0 %v1258
        %1260 = vmatprep.subr.mxu0 0.0
        %v1261 = vand.u32 %v1092, 4294901760
        %v1262 = vsub.f32 %v1092, %v1261
        %v1263 = vand.u32 %v1262, 4294901760
        %v1264 = vsub.f32 %v1262, %v1263
        %v1265 = vand.u32 %v1264, 4294901760
        %1266 = vmatpush1.xpose.msra.mxu0 %v1265
        %1267 = vmatprep.subr.mxu0 0.0
        %v1268 = vand.u32 %v1095, 4294901760
        %v1269 = vsub.f32 %v1095, %v1268
        %v1270 = vand.u32 %v1269, 4294901760
        %v1271 = vsub.f32 %v1269, %v1270
        %v1272 = vand.u32 %v1271, 4294901760
        %1273 = vmatpush1.xpose.msra.mxu0 %v1272
        %1274 = vmatprep.subr.mxu0 0.0
        %v1275 = vand.u32 %v1098, 4294901760
        %v1276 = vsub.f32 %v1098, %v1275
        %v1277 = vand.u32 %v1276, 4294901760
        %v1278 = vsub.f32 %v1276, %v1277
        %v1279 = vand.u32 %v1278, 4294901760
        %1280 = vmatpush1.xpose.msra.mxu0 %v1279
        %1281 = vmatprep.subr.mxu0 0.0
        %v1282 = vand.u32 %v1101, 4294901760
        %v1283 = vsub.f32 %v1101, %v1282
        %v1284 = vand.u32 %v1283, 4294901760
        %v1285 = vsub.f32 %v1283, %v1284
        %v1286 = vand.u32 %v1285, 4294901760
        %1287 = vmatpush1.xpose.msra.mxu0 %v1286
        %1288 = vmatprep.subr.mxu0 0.0
        %v1289 = vand.u32 %v1104, 4294901760
        %v1290 = vsub.f32 %v1104, %v1289
        %v1291 = vand.u32 %v1290, 4294901760
        %v1292 = vsub.f32 %v1290, %v1291
        %v1293 = vand.u32 %v1292, 4294901760
        %1294 = vmatpush1.xpose.msra.mxu0 %v1293
        %1295 = vmatprep.subr.mxu0 0.0
        %v1296 = vand.u32 %v1107, 4294901760
        %v1297 = vsub.f32 %v1107, %v1296
        %v1298 = vand.u32 %v1297, 4294901760
        %v1299 = vsub.f32 %v1297, %v1298
        %v1300 = vand.u32 %v1299, 4294901760
        %1301 = vmatpush1.xpose.msra.mxu0 %v1300
        %1302 = vmatprep.subr.mxu0 0.0
        %v1303 = vand.u32 %v1110, 4294901760
        %v1304 = vsub.f32 %v1110, %v1303
        %v1305 = vand.u32 %v1304, 4294901760
        %v1306 = vsub.f32 %v1304, %v1305
        %v1307 = vand.u32 %v1306, 4294901760
        %1308 = vmatpush1.xpose.msra.mxu0 %v1307
        %1309 = vmatprep.subr.mxu0 0.0
        %v1310 = vand.u32 %v1113, 4294901760
        %v1311 = vsub.f32 %v1113, %v1310
        %v1312 = vand.u32 %v1311, 4294901760
        %v1313 = vsub.f32 %v1311, %v1312
        %v1314 = vand.u32 %v1313, 4294901760
        %1315 = vmatpush1.xpose.msra.mxu0 %v1314
        %1316 = vmatprep.subr.mxu0 0.0
        %v1317 = vand.u32 %v1116, 4294901760
        %v1318 = vsub.f32 %v1116, %v1317
        %v1319 = vand.u32 %v1318, 4294901760
        %v1320 = vsub.f32 %v1318, %v1319
        %v1321 = vand.u32 %v1320, 4294901760
        %1322 = vmatpush1.xpose.msra.mxu0 %v1321
        %1323 = vmatprep.subr.mxu0 0.0
        %v1324 = vand.u32 %v1119, 4294901760
        %v1325 = vsub.f32 %v1119, %v1324
        %v1326 = vand.u32 %v1325, 4294901760
        %v1327 = vsub.f32 %v1325, %v1326
        %v1328 = vand.u32 %v1327, 4294901760
        %1329 = vmatpush1.xpose.msra.mxu0 %v1328
        %1330 = vmatprep.subr.mxu0 0.0
        %v1331 = vand.u32 %v1122, 4294901760
        %v1332 = vsub.f32 %v1122, %v1331
        %v1333 = vand.u32 %v1332, 4294901760
        %v1334 = vsub.f32 %v1332, %v1333
        %v1335 = vand.u32 %v1334, 4294901760
        %1336 = vmatpush1.xpose.msra.mxu0 %v1335
        %1337 = vmatprep.subr.mxu0 0.0
        %1338 = vmatpush1.xpose.msra.mxu0 0.0
        %1339 = vmatprep.subr.mxu0 0.0
        %1340 = vmatpush1.xpose.msra.mxu0 0.0
        %1341 = vmatprep.subr.mxu0 0.0
        %1342 = vmatpush1.xpose.msra.mxu0 0.0
        %1343 = vmatprep.subr.mxu0 0.0
        %1344 = vmatpush1.xpose.msra.mxu0 0.0
        %1345 = vmatprep.subr.mxu0 0.0
        %1346 = vmatpush1.xpose.msra.mxu0 0.0
        %1347 = vmatprep.subr.mxu0 0.0
        %1348 = vmatpush1.xpose.msra.mxu0 0.0
        %1349 = vmatprep.subr.mxu0 0.0
        %1350 = vmatpush1.xpose.msra.mxu0 0.0
        %1351 = vmatprep.subr.mxu0 0.0
        %1352 = vmatpush1.xpose.msra.mxu0 0.0
        %1353 = vmatprep.subr.mxu0 0.0
        %1354 = vmatpush1.xpose.msra.mxu0 0.0
        %1355 = vmatprep.subr.mxu0 0.0
        %1356 = vmatpush1.xpose.msra.mxu0 0.0
        %1357 = vmatprep.subr.mxu0 0.0
        %1358 = vmatpush1.xpose.msra.mxu0 0.0
        %1359 = vmatprep.subr.mxu0 0.0
        %1360 = vmatpush1.xpose.msra.mxu0 0.0
        %1361 = vmatprep.subr.mxu0 0.0
        %1362 = vmatpush1.xpose.msra.mxu0 0.0
        %1363 = vmatprep.subr.mxu0 0.0
        %1364 = vmatpush1.xpose.msra.mxu0 0.0
        %1365 = vmatprep.subr.mxu0 0.0
        %1366 = vmatpush1.xpose.msra.mxu0 0.0
        %1367 = vmatprep.subr.mxu0 0.0
        %1368 = vmatpush1.xpose.msra.mxu0 0.0
        %1369 = vmatprep.mubr.f32.mxu0 0.0
        %v1370 = vand.u32 %v1071, 4294901760
        %1371 = vmatmul.mubr.f32.gmra.mrb[0].mxu0 %v1370
        %v1372 = vpop.f32.mrb[0].mxu0
        %v1373 = vadd.f32 %v1212, %v1372
        %v1374 = vpop.f32.mrb[0].mxu0
        %1375 = vmatprep.mubr.f32.mxu0 0.0
        %v1376 = vand.u32 %v1074, 4294901760
        %1377 = vmatmul.mubr.f32.gmra.mrb[0].mxu0 %v1376
        %v1378 = vpop.f32.mrb[0].mxu0
        %v1379 = vadd.f32 %v1222, %v1378
        %v1380 = vpop.f32.mrb[0].mxu0
        %1381 = vdwg.mxu0
        %1382 = vmatprep.subr.mxu0 0.0
        %v1383 = vand.u32 %v1077, 4294901760
        %v1384 = vsub.f32 %v1077, %v1383
        %1385 = vmatpush1.xpose.msra.mxu0 %v1384
        %1386 = vmatprep.subr.mxu0 0.0
        %v1387 = vand.u32 %v1080, 4294901760
        %v1388 = vsub.f32 %v1080, %v1387
        %1389 = vmatpush1.xpose.msra.mxu0 %v1388
        %1390 = vmatprep.subr.mxu0 0.0
        %v1391 = vand.u32 %v1083, 4294901760
        %v1392 = vsub.f32 %v1083, %v1391
        %1393 = vmatpush1.xpose.msra.mxu0 %v1392
        %1394 = vmatprep.subr.mxu0 0.0
        %v1395 = vand.u32 %v1086, 4294901760
        %v1396 = vsub.f32 %v1086, %v1395
        %1397 = vmatpush1.xpose.msra.mxu0 %v1396
        %1398 = vmatprep.subr.mxu0 0.0
        %v1399 = vand.u32 %v1089, 4294901760
        %v1400 = vsub.f32 %v1089, %v1399
        %1401 = vmatpush1.xpose.msra.mxu0 %v1400
        %1402 = vmatprep.subr.mxu0 0.0
        %v1403 = vand.u32 %v1092, 4294901760
        %v1404 = vsub.f32 %v1092, %v1403
        %1405 = vmatpush1.xpose.msra.mxu0 %v1404
        %1406 = vmatprep.subr.mxu0 0.0
        %v1407 = vand.u32 %v1095, 4294901760
        %v1408 = vsub.f32 %v1095, %v1407
        %1409 = vmatpush1.xpose.msra.mxu0 %v1408
        %1410 = vmatprep.subr.mxu0 0.0
        %v1411 = vand.u32 %v1098, 4294901760
        %v1412 = vsub.f32 %v1098, %v1411
        %1413 = vmatpush1.xpose.msra.mxu0 %v1412
        %1414 = vmatprep.subr.mxu0 0.0
        %v1415 = vand.u32 %v1101, 4294901760
        %v1416 = vsub.f32 %v1101, %v1415
        %1417 = vmatpush1.xpose.msra.mxu0 %v1416
        %1418 = vmatprep.subr.mxu0 0.0
        %v1419 = vand.u32 %v1104, 4294901760
        %v1420 = vsub.f32 %v1104, %v1419
        %1421 = vmatpush1.xpose.msra.mxu0 %v1420
        %1422 = vmatprep.subr.mxu0 0.0
        %v1423 = vand.u32 %v1107, 4294901760
        %v1424 = vsub.f32 %v1107, %v1423
        %1425 = vmatpush1.xpose.msra.mxu0 %v1424
        %1426 = vmatprep.subr.mxu0 0.0
        %v1427 = vand.u32 %v1110, 4294901760
        %v1428 = vsub.f32 %v1110, %v1427
        %1429 = vmatpush1.xpose.msra.mxu0 %v1428
        %1430 = vmatprep.subr.mxu0 0.0
        %v1431 = vand.u32 %v1113, 4294901760
        %v1432 = vsub.f32 %v1113, %v1431
        %1433 = vmatpush1.xpose.msra.mxu0 %v1432
        %1434 = vmatprep.subr.mxu0 0.0
        %v1435 = vand.u32 %v1116, 4294901760
        %v1436 = vsub.f32 %v1116, %v1435
        %1437 = vmatpush1.xpose.msra.mxu0 %v1436
        %1438 = vmatprep.subr.mxu0 0.0
        %v1439 = vand.u32 %v1119, 4294901760
        %v1440 = vsub.f32 %v1119, %v1439
        %1441 = vmatpush1.xpose.msra.mxu0 %v1440
        %1442 = vmatprep.subr.mxu0 0.0
        %v1443 = vand.u32 %v1122, 4294901760
        %v1444 = vsub.f32 %v1122, %v1443
        %1445 = vmatpush1.xpose.msra.mxu0 %v1444
        %1446 = vmatprep.subr.mxu0 0.0
        %1447 = vmatpush1.xpose.msra.mxu0 0.0
        %1448 = vmatprep.subr.mxu0 0.0
        %1449 = vmatpush1.xpose.msra.mxu0 0.0
        %1450 = vmatprep.subr.mxu0 0.0
        %1451 = vmatpush1.xpose.msra.mxu0 0.0
        %1452 = vmatprep.subr.mxu0 0.0
        %1453 = vmatpush1.xpose.msra.mxu0 0.0
        %1454 = vmatprep.subr.mxu0 0.0
        %1455 = vmatpush1.xpose.msra.mxu0 0.0
        %1456 = vmatprep.subr.mxu0 0.0
        %1457 = vmatpush1.xpose.msra.mxu0 0.0
        %1458 = vmatprep.subr.mxu0 0.0
        %1459 = vmatpush1.xpose.msra.mxu0 0.0
        %1460 = vmatprep.subr.mxu0 0.0
        %1461 = vmatpush1.xpose.msra.mxu0 0.0
        %1462 = vmatprep.subr.mxu0 0.0
        %1463 = vmatpush1.xpose.msra.mxu0 0.0
        %1464 = vmatprep.subr.mxu0 0.0
        %1465 = vmatpush1.xpose.msra.mxu0 0.0
        %1466 = vmatprep.subr.mxu0 0.0
        %1467 = vmatpush1.xpose.msra.mxu0 0.0
        %1468 = vmatprep.subr.mxu0 0.0
        %1469 = vmatpush1.xpose.msra.mxu0 0.0
        %1470 = vmatprep.subr.mxu0 0.0
        %1471 = vmatpush1.xpose.msra.mxu0 0.0
        %1472 = vmatprep.subr.mxu0 0.0
        %1473 = vmatpush1.xpose.msra.mxu0 0.0
        %1474 = vmatprep.subr.mxu0 0.0
        %1475 = vmatpush1.xpose.msra.mxu0 0.0
        %1476 = vmatprep.subr.mxu0 0.0
        %1477 = vmatpush1.xpose.msra.mxu0 0.0
        %1478 = vmatprep.mubr.f32.mxu0 0.0
        %v1479 = vand.u32 %v1071, 4294901760
        %v1480 = vsub.f32 %v1071, %v1479
        %1481 = vmatmul.mubr.f32.gmra.mrb[0].mxu0 %v1480
        %v1482 = vpop.f32.mrb[0].mxu0
        %v1483 = vadd.f32 %v1373, %v1482
        %v1484 = vpop.f32.mrb[0].mxu0
        %1485 = vmatprep.mubr.f32.mxu0 0.0
        %v1486 = vand.u32 %v1074, 4294901760
        %v1487 = vsub.f32 %v1074, %v1486
        %1488 = vmatmul.mubr.f32.gmra.mrb[0].mxu0 %v1487
        %v1489 = vpop.f32.mrb[0].mxu0
        %v1490 = vadd.f32 %v1379, %v1489
        %v1491 = vpop.f32.mrb[0].mxu0
        %1492 = vdwg.mxu0
        %1493 = vmatprep.subr.mxu0 0.0
        %v1494 = vand.u32 %v1077, 4294901760
        %1495 = vmatpush1.xpose.msra.mxu0 %v1494
        %1496 = vmatprep.subr.mxu0 0.0
        %v1497 = vand.u32 %v1080, 4294901760
        %1498 = vmatpush1.xpose.msra.mxu0 %v1497
        %1499 = vmatprep.subr.mxu0 0.0
        %v1500 = vand.u32 %v1083, 4294901760
        %1501 = vmatpush1.xpose.msra.mxu0 %v1500
        %1502 = vmatprep.subr.mxu0 0.0
        %v1503 = vand.u32 %v1086, 4294901760
        %1504 = vmatpush1.xpose.msra.mxu0 %v1503
        %1505 = vmatprep.subr.mxu0 0.0
        %v1506 = vand.u32 %v1089, 4294901760
        %1507 = vmatpush1.xpose.msra.mxu0 %v1506
        %1508 = vmatprep.subr.mxu0 0.0
        %v1509 = vand.u32 %v1092, 4294901760
        %1510 = vmatpush1.xpose.msra.mxu0 %v1509
        %1511 = vmatprep.subr.mxu0 0.0
        %v1512 = vand.u32 %v1095, 4294901760
        %1513 = vmatpush1.xpose.msra.mxu0 %v1512
        %1514 = vmatprep.subr.mxu0 0.0
        %v1515 = vand.u32 %v1098, 4294901760
        %1516 = vmatpush1.xpose.msra.mxu0 %v1515
        %1517 = vmatprep.subr.mxu0 0.0
        %v1518 = vand.u32 %v1101, 4294901760
        %1519 = vmatpush1.xpose.msra.mxu0 %v1518
        %1520 = vmatprep.subr.mxu0 0.0
        %v1521 = vand.u32 %v1104, 4294901760
        %1522 = vmatpush1.xpose.msra.mxu0 %v1521
        %1523 = vmatprep.subr.mxu0 0.0
        %v1524 = vand.u32 %v1107, 4294901760
        %1525 = vmatpush1.xpose.msra.mxu0 %v1524
        %1526 = vmatprep.subr.mxu0 0.0
        %v1527 = vand.u32 %v1110, 4294901760
        %1528 = vmatpush1.xpose.msra.mxu0 %v1527
        %1529 = vmatprep.subr.mxu0 0.0
        %v1530 = vand.u32 %v1113, 4294901760
        %1531 = vmatpush1.xpose.msra.mxu0 %v1530
        %1532 = vmatprep.subr.mxu0 0.0
        %v1533 = vand.u32 %v1116, 4294901760
        %1534 = vmatpush1.xpose.msra.mxu0 %v1533
        %1535 = vmatprep.subr.mxu0 0.0
        %v1536 = vand.u32 %v1119, 4294901760
        %1537 = vmatpush1.xpose.msra.mxu0 %v1536
        %1538 = vmatprep.subr.mxu0 0.0
        %v1539 = vand.u32 %v1122, 4294901760
        %1540 = vmatpush1.xpose.msra.mxu0 %v1539
        %1541 = vmatprep.subr.mxu0 0.0
        %1542 = vmatpush1.xpose.msra.mxu0 0.0
        %1543 = vmatprep.subr.mxu0 0.0
        %1544 = vmatpush1.xpose.msra.mxu0 0.0
        %1545 = vmatprep.subr.mxu0 0.0
        %1546 = vmatpush1.xpose.msra.mxu0 0.0
        %1547 = vmatprep.subr.mxu0 0.0
        %1548 = vmatpush1.xpose.msra.mxu0 0.0
        %1549 = vmatprep.subr.mxu0 0.0
        %1550 = vmatpush1.xpose.msra.mxu0 0.0
        %1551 = vmatprep.subr.mxu0 0.0
        %1552 = vmatpush1.xpose.msra.mxu0 0.0
        %1553 = vmatprep.subr.mxu0 0.0
        %1554 = vmatpush1.xpose.msra.mxu0 0.0
        %1555 = vmatprep.subr.mxu0 0.0
        %1556 = vmatpush1.xpose.msra.mxu0 0.0
        %1557 = vmatprep.subr.mxu0 0.0
        %1558 = vmatpush1.xpose.msra.mxu0 0.0
        %1559 = vmatprep.subr.mxu0 0.0
        %1560 = vmatpush1.xpose.msra.mxu0 0.0
        %1561 = vmatprep.subr.mxu0 0.0
        %1562 = vmatpush1.xpose.msra.mxu0 0.0
        %1563 = vmatprep.subr.mxu0 0.0
        %1564 = vmatpush1.xpose.msra.mxu0 0.0
        %1565 = vmatprep.subr.mxu0 0.0
        %1566 = vmatpush1.xpose.msra.mxu0 0.0
        %1567 = vmatprep.subr.mxu0 0.0
        %1568 = vmatpush1.xpose.msra.mxu0 0.0
        %1569 = vmatprep.subr.mxu0 0.0
        %1570 = vmatpush1.xpose.msra.mxu0 0.0
        %1571 = vmatprep.subr.mxu0 0.0
        %1572 = vmatpush1.xpose.msra.mxu0 0.0
        %1573 = vmatprep.mubr.f32.mxu0 0.0
        %v1574 = vand.u32 %v1071, 4294901760
        %v1575 = vsub.f32 %v1071, %v1574
        %v1576 = vand.u32 %v1575, 4294901760
        %1577 = vmatmul.mubr.f32.gmra.mrb[0].mxu0 %v1576
        %v1578 = vpop.f32.mrb[0].mxu0
        %v1579 = vadd.f32 %v1483, %v1578
        %v1580 = vpop.f32.mrb[0].mxu0
        %1581 = vmatprep.mubr.f32.mxu0 0.0
        %v1582 = vand.u32 %v1074, 4294901760
        %v1583 = vsub.f32 %v1074, %v1582
        %v1584 = vand.u32 %v1583, 4294901760
        %1585 = vmatmul.mubr.f32.gmra.mrb[0].mxu0 %v1584
        %v1586 = vpop.f32.mrb[0].mxu0
        %v1587 = vadd.f32 %v1490, %v1586
        %v1588 = vpop.f32.mrb[0].mxu0
        %1589 = vdwg.mxu0
        %1590 = vmatprep.subr.mxu0 0.0
        %v1591 = vand.u32 %v1077, 4294901760
        %v1592 = vsub.f32 %v1077, %v1591
        %v1593 = vand.u32 %v1592, 4294901760
        %1594 = vmatpush1.xpose.msra.mxu0 %v1593
        %1595 = vmatprep.subr.mxu0 0.0
        %v1596 = vand.u32 %v1080, 4294901760
        %v1597 = vsub.f32 %v1080, %v1596
        %v1598 = vand.u32 %v1597, 4294901760
        %1599 = vmatpush1.xpose.msra.mxu0 %v1598
        %1600 = vmatprep.subr.mxu0 0.0
        %v1601 = vand.u32 %v1083, 4294901760
        %v1602 = vsub.f32 %v1083, %v1601
        %v1603 = vand.u32 %v1602, 4294901760
        %1604 = vmatpush1.xpose.msra.mxu0 %v1603
        %1605 = vmatprep.subr.mxu0 0.0
        %v1606 = vand.u32 %v1086, 4294901760
        %v1607 = vsub.f32 %v1086, %v1606
        %v1608 = vand.u32 %v1607, 4294901760
        %1609 = vmatpush1.xpose.msra.mxu0 %v1608
        %1610 = vmatprep.subr.mxu0 0.0
        %v1611 = vand.u32 %v1089, 4294901760
        %v1612 = vsub.f32 %v1089, %v1611
        %v1613 = vand.u32 %v1612, 4294901760
        %1614 = vmatpush1.xpose.msra.mxu0 %v1613
        %1615 = vmatprep.subr.mxu0 0.0
        %v1616 = vand.u32 %v1092, 4294901760
        %v1617 = vsub.f32 %v1092, %v1616
        %v1618 = vand.u32 %v1617, 4294901760
        %1619 = vmatpush1.xpose.msra.mxu0 %v1618
        %1620 = vmatprep.subr.mxu0 0.0
        %v1621 = vand.u32 %v1095, 4294901760
        %v1622 = vsub.f32 %v1095, %v1621
        %v1623 = vand.u32 %v1622, 4294901760
        %1624 = vmatpush1.xpose.msra.mxu0 %v1623
        %1625 = vmatprep.subr.mxu0 0.0
        %v1626 = vand.u32 %v1098, 4294901760
        %v1627 = vsub.f32 %v1098, %v1626
        %v1628 = vand.u32 %v1627, 4294901760
        %1629 = vmatpush1.xpose.msra.mxu0 %v1628
        %1630 = vmatprep.subr.mxu0 0.0
        %v1631 = vand.u32 %v1101, 4294901760
        %v1632 = vsub.f32 %v1101, %v1631
        %v1633 = vand.u32 %v1632, 4294901760
        %1634 = vmatpush1.xpose.msra.mxu0 %v1633
        %1635 = vmatprep.subr.mxu0 0.0
        %v1636 = vand.u32 %v1104, 4294901760
        %v1637 = vsub.f32 %v1104, %v1636
        %v1638 = vand.u32 %v1637, 4294901760
        %1639 = vmatpush1.xpose.msra.mxu0 %v1638
        %1640 = vmatprep.subr.mxu0 0.0
        %v1641 = vand.u32 %v1107, 4294901760
        %v1642 = vsub.f32 %v1107, %v1641
        %v1643 = vand.u32 %v1642, 4294901760
        %1644 = vmatpush1.xpose.msra.mxu0 %v1643
        %1645 = vmatprep.subr.mxu0 0.0
        %v1646 = vand.u32 %v1110, 4294901760
        %v1647 = vsub.f32 %v1110, %v1646
        %v1648 = vand.u32 %v1647, 4294901760
        %1649 = vmatpush1.xpose.msra.mxu0 %v1648
        %1650 = vmatprep.subr.mxu0 0.0
        %v1651 = vand.u32 %v1113, 4294901760
        %v1652 = vsub.f32 %v1113, %v1651
        %v1653 = vand.u32 %v1652, 4294901760
        %1654 = vmatpush1.xpose.msra.mxu0 %v1653
        %1655 = vmatprep.subr.mxu0 0.0
        %v1656 = vand.u32 %v1116, 4294901760
        %v1657 = vsub.f32 %v1116, %v1656
        %v1658 = vand.u32 %v1657, 4294901760
        %1659 = vmatpush1.xpose.msra.mxu0 %v1658
        %1660 = vmatprep.subr.mxu0 0.0
        %v1661 = vand.u32 %v1119, 4294901760
        %v1662 = vsub.f32 %v1119, %v1661
        %v1663 = vand.u32 %v1662, 4294901760
        %1664 = vmatpush1.xpose.msra.mxu0 %v1663
        %1665 = vmatprep.subr.mxu0 0.0
        %v1666 = vand.u32 %v1122, 4294901760
        %v1667 = vsub.f32 %v1122, %v1666
        %v1668 = vand.u32 %v1667, 4294901760
        %1669 = vmatpush1.xpose.msra.mxu0 %v1668
        %1670 = vmatprep.subr.mxu0 0.0
        %1671 = vmatpush1.xpose.msra.mxu0 0.0
        %1672 = vmatprep.subr.mxu0 0.0
        %1673 = vmatpush1.xpose.msra.mxu0 0.0
        %1674 = vmatprep.subr.mxu0 0.0
        %1675 = vmatpush1.xpose.msra.mxu0 0.0
        %1676 = vmatprep.subr.mxu0 0.0
        %1677 = vmatpush1.xpose.msra.mxu0 0.0
        %1678 = vmatprep.subr.mxu0 0.0
        %1679 = vmatpush1.xpose.msra.mxu0 0.0
        %1680 = vmatprep.subr.mxu0 0.0
        %1681 = vmatpush1.xpose.msra.mxu0 0.0
        %1682 = vmatprep.subr.mxu0 0.0
        %1683 = vmatpush1.xpose.msra.mxu0 0.0
        %1684 = vmatprep.subr.mxu0 0.0
        %1685 = vmatpush1.xpose.msra.mxu0 0.0
        %1686 = vmatprep.subr.mxu0 0.0
        %1687 = vmatpush1.xpose.msra.mxu0 0.0
        %1688 = vmatprep.subr.mxu0 0.0
        %1689 = vmatpush1.xpose.msra.mxu0 0.0
        %1690 = vmatprep.subr.mxu0 0.0
        %1691 = vmatpush1.xpose.msra.mxu0 0.0
        %1692 = vmatprep.subr.mxu0 0.0
        %1693 = vmatpush1.xpose.msra.mxu0 0.0
        %1694 = vmatprep.subr.mxu0 0.0
        %1695 = vmatpush1.xpose.msra.mxu0 0.0
        %1696 = vmatprep.subr.mxu0 0.0
        %1697 = vmatpush1.xpose.msra.mxu0 0.0
        %1698 = vmatprep.subr.mxu0 0.0
        %1699 = vmatpush1.xpose.msra.mxu0 0.0
        %1700 = vmatprep.subr.mxu0 0.0
        %1701 = vmatpush1.xpose.msra.mxu0 0.0
        %1702 = vmatprep.mubr.f32.mxu0 0.0
        %v1703 = vand.u32 %v1071, 4294901760
        %1704 = vmatmul.mubr.f32.gmra.mrb[0].mxu0 %v1703
        %v1705 = vpop.f32.mrb[0].mxu0
        %v1706 = vadd.f32 %v1579, %v1705
        %v1707 = vpop.f32.mrb[0].mxu0
        %1708 = vmatprep.mubr.f32.mxu0 0.0
        %v1709 = vand.u32 %v1074, 4294901760
        %1710 = vmatmul.mubr.f32.gmra.mrb[0].mxu0 %v1709
        %v1711 = vpop.f32.mrb[0].mxu0
        %v1712 = vadd.f32 %v1587, %v1711
        %v1713 = vpop.f32.mrb[0].mxu0
        %1714 = vdwg.mxu0
        %1715 = vmatprep.subr.mxu0 0.0
        %v1716 = vand.u32 %v1077, 4294901760
        %1717 = vmatpush1.xpose.msra.mxu0 %v1716
        %1718 = vmatprep.subr.mxu0 0.0
        %v1719 = vand.u32 %v1080, 4294901760
        %1720 = vmatpush1.xpose.msra.mxu0 %v1719
        %1721 = vmatprep.subr.mxu0 0.0
        %v1722 = vand.u32 %v1083, 4294901760
        %1723 = vmatpush1.xpose.msra.mxu0 %v1722
        %1724 = vmatprep.subr.mxu0 0.0
        %v1725 = vand.u32 %v1086, 4294901760
        %1726 = vmatpush1.xpose.msra.mxu0 %v1725
        %1727 = vmatprep.subr.mxu0 0.0
        %v1728 = vand.u32 %v1089, 4294901760
        %1729 = vmatpush1.xpose.msra.mxu0 %v1728
        %1730 = vmatprep.subr.mxu0 0.0
        %v1731 = vand.u32 %v1092, 4294901760
        %1732 = vmatpush1.xpose.msra.mxu0 %v1731
        %1733 = vmatprep.subr.mxu0 0.0
        %v1734 = vand.u32 %v1095, 4294901760
        %1735 = vmatpush1.xpose.msra.mxu0 %v1734
        %1736 = vmatprep.subr.mxu0 0.0
        %v1737 = vand.u32 %v1098, 4294901760
        %1738 = vmatpush1.xpose.msra.mxu0 %v1737
        %1739 = vmatprep.subr.mxu0 0.0
        %v1740 = vand.u32 %v1101, 4294901760
        %1741 = vmatpush1.xpose.msra.mxu0 %v1740
        %1742 = vmatprep.subr.mxu0 0.0
        %v1743 = vand.u32 %v1104, 4294901760
        %1744 = vmatpush1.xpose.msra.mxu0 %v1743
        %1745 = vmatprep.subr.mxu0 0.0
        %v1746 = vand.u32 %v1107, 4294901760
        %1747 = vmatpush1.xpose.msra.mxu0 %v1746
        %1748 = vmatprep.subr.mxu0 0.0
        %v1749 = vand.u32 %v1110, 4294901760
        %1750 = vmatpush1.xpose.msra.mxu0 %v1749
        %1751 = vmatprep.subr.mxu0 0.0
        %v1752 = vand.u32 %v1113, 4294901760
        %1753 = vmatpush1.xpose.msra.mxu0 %v1752
        %1754 = vmatprep.subr.mxu0 0.0
        %v1755 = vand.u32 %v1116, 4294901760
        %1756 = vmatpush1.xpose.msra.mxu0 %v1755
        %1757 = vmatprep.subr.mxu0 0.0
        %v1758 = vand.u32 %v1119, 4294901760
        %1759 = vmatpush1.xpose.msra.mxu0 %v1758
        %1760 = vmatprep.subr.mxu0 0.0
        %v1761 = vand.u32 %v1122, 4294901760
        %1762 = vmatpush1.xpose.msra.mxu0 %v1761
        %1763 = vmatprep.subr.mxu0 0.0
        %1764 = vmatpush1.xpose.msra.mxu0 0.0
        %1765 = vmatprep.subr.mxu0 0.0
        %1766 = vmatpush1.xpose.msra.mxu0 0.0
        %1767 = vmatprep.subr.mxu0 0.0
        %1768 = vmatpush1.xpose.msra.mxu0 0.0
        %1769 = vmatprep.subr.mxu0 0.0
        %1770 = vmatpush1.xpose.msra.mxu0 0.0
        %1771 = vmatprep.subr.mxu0 0.0
        %1772 = vmatpush1.xpose.msra.mxu0 0.0
        %1773 = vmatprep.subr.mxu0 0.0
        %1774 = vmatpush1.xpose.msra.mxu0 0.0
        %1775 = vmatprep.subr.mxu0 0.0
        %1776 = vmatpush1.xpose.msra.mxu0 0.0
        %1777 = vmatprep.subr.mxu0 0.0
        %1778 = vmatpush1.xpose.msra.mxu0 0.0
        %1779 = vmatprep.subr.mxu0 0.0
        %1780 = vmatpush1.xpose.msra.mxu0 0.0
        %1781 = vmatprep.subr.mxu0 0.0
        %1782 = vmatpush1.xpose.msra.mxu0 0.0
        %1783 = vmatprep.subr.mxu0 0.0
        %1784 = vmatpush1.xpose.msra.mxu0 0.0
        %1785 = vmatprep.subr.mxu0 0.0
        %1786 = vmatpush1.xpose.msra.mxu0 0.0
        %1787 = vmatprep.subr.mxu0 0.0
        %1788 = vmatpush1.xpose.msra.mxu0 0.0
        %1789 = vmatprep.subr.mxu0 0.0
        %1790 = vmatpush1.xpose.msra.mxu0 0.0
        %1791 = vmatprep.subr.mxu0 0.0
        %1792 = vmatpush1.xpose.msra.mxu0 0.0
        %1793 = vmatprep.subr.mxu0 0.0
        %1794 = vmatpush1.xpose.msra.mxu0 0.0
        %1795 = vmatprep.mubr.f32.mxu0 0.0
        %v1796 = vand.u32 %v1071, 4294901760
        %1797 = vmatmul.mubr.f32.gmra.mrb[0].mxu0 %v1796
        %v1798 = vpop.f32.mrb[0].mxu0
        %v1799 = vadd.f32 %v1706, %v1798
        %v1800 = vpop.f32.mrb[0].mxu0
        %1801 = vmatprep.mubr.f32.mxu0 0.0
        %v1802 = vand.u32 %v1074, 4294901760
        %1803 = vmatmul.mubr.f32.gmra.mrb[0].mxu0 %v1802
        %v1804 = vpop.f32.mrb[0].mxu0
        %v1805 = vadd.f32 %v1712, %v1804
        %v1806 = vpop.f32.mrb[0].mxu0
        %1807 = vdwg.mxu0
        %v1808 = vld [vmem:[#allocation3] sm:$0xff]
        %v1809 = vld [vmem:[#allocation3 + $0x8] sm:$0xff]
        %1810 = vmax.xlane.f32.xlu0 %v1799
        %v1811 = vpop.xlane.xlu0 %1810
        %1812 = vmax.xlane.f32.xlu0 %v1805
        %v1813 = vpop.xlane.xlu0 %1812
        %v1814 = vmax.f32 %v1808, %v1811
        %v1815 = vmax.f32 %v1809, %v1813
        %v1816 = vsub.f32 %v1808, %v1814
        %v1817 = vsub.f32 %v1809, %v1815
        %v1818 = vmul.f32 %v1816, 1.442695
        %v1819 = vpow.pop %v1818
        %v1820 = vmul.f32 %v1817, 1.442695
        %v1821 = vpow.pop %v1820
        %1823 = vset.pattern.permute.xlu0 0
        %1824 = vperm.xlu0 %1823, %v1814
        %v1825 = vpop.permute.xlu0 %1824
        %1828 = vset.pattern.permute.xlu0 0
        %1829 = vperm.xlu0 %1828, %v1815
        %v1830 = vpop.permute.xlu0 %1829
        %v1832 = vsub.f32 %v1799, %v1825
        %v1833 = vsub.f32 %v1805, %v1830
        %v1834 = vmul.f32 %v1832, 1.442695
        %v1835 = vpow.pop %v1834
        %v1836 = vmul.f32 %v1833, 1.442695
        %v1837 = vpow.pop %v1836
        %v1838 = vmul.f32 %v1835, %v1031
        %v1839 = vmul.f32 %v1837, %v1032
        %v1840 = vld [vmem:[#allocation4] sm:$0xff]
        %v1841 = vld [vmem:[#allocation4 + $0x8] sm:$0xff]
        %v1842 = vmul.f32 %v1819, %v1840
        %v1843 = vmul.f32 %v1821, %v1841
        %1844 = vadd.xlane.f32.xlu0 %v1838
        %v1845 = vpop.xlane.xlu0 %1844
        %1846 = vadd.xlane.f32.xlu0 %v1839
        %v1847 = vpop.xlane.xlu0 %1846
        %v1848 = vadd.f32 %v1842, %v1845
        %v1849 = vadd.f32 %v1843, %v1847
        %vm1850 = vcmask 7168
        %1851 = vst.msk [vmem:[#allocation4] sm:$0xff] %vm1850, %v1848
        %1852 = vst.msk [vmem:[#allocation4 + $0x8] sm:$0xff] %vm1850, %v1849
        %v1853 = vld [vmem:[#allocation5] sm:$0xff]
        %v1854 = vld [vmem:[#allocation5 + $0x8] sm:$0xff]
        %1856 = vset.pattern.permute.xlu0 0
        %1857 = vperm.xlu0 %1856, %v1819
        %v1858 = vpop.permute.xlu0 %1857
        %1861 = vset.pattern.permute.xlu0 0
        %1862 = vperm.xlu0 %1861, %v1821
        %v1863 = vpop.permute.xlu0 %1862
        %v1865 = vmul.f32 %v1858, %v1853
        %v1866 = vmul.f32 %v1863, %v1854
        %1867 = vmatprep.subr.mxu0 0.0
        %v1868 = vand.u32 %v1034, 4294901760
        %1869 = vmatpush1.msra.mxu0 %v1868
        %1870 = vmatprep.subr.mxu0 0.0
        %v1871 = vand.u32 %v1036, 4294901760
        %1872 = vmatpush1.msra.mxu0 %v1871
        %1873 = vmatprep.subr.mxu0 0.0
        %v1874 = vand.u32 %v1038, 4294901760
        %1875 = vmatpush1.msra.mxu0 %v1874
        %1876 = vmatprep.subr.mxu0 0.0
        %v1877 = vand.u32 %v1040, 4294901760
        %1878 = vmatpush1.msra.mxu0 %v1877
        %1879 = vmatprep.subr.mxu0 0.0
        %v1880 = vand.u32 %v1042, 4294901760
        %1881 = vmatpush1.msra.mxu0 %v1880
        %1882 = vmatprep.subr.mxu0 0.0
        %v1883 = vand.u32 %v1044, 4294901760
        %1884 = vmatpush1.msra.mxu0 %v1883
        %1885 = vmatprep.subr.mxu0 0.0
        %v1886 = vand.u32 %v1046, 4294901760
        %1887 = vmatpush1.msra.mxu0 %v1886
        %1888 = vmatprep.subr.mxu0 0.0
        %v1889 = vand.u32 %v1048, 4294901760
        %1890 = vmatpush1.msra.mxu0 %v1889
        %1891 = vmatprep.subr.mxu0 0.0
        %v1892 = vand.u32 %v1050, 4294901760
        %1893 = vmatpush1.msra.mxu0 %v1892
        %1894 = vmatprep.subr.mxu0 0.0
        %v1895 = vand.u32 %v1052, 4294901760
        %1896 = vmatpush1.msra.mxu0 %v1895
        %1897 = vmatprep.subr.mxu0 0.0
        %v1898 = vand.u32 %v1054, 4294901760
        %1899 = vmatpush1.msra.mxu0 %v1898
        %1900 = vmatprep.subr.mxu0 0.0
        %v1901 = vand.u32 %v1056, 4294901760
        %1902 = vmatpush1.msra.mxu0 %v1901
        %1903 = vmatprep.subr.mxu0 0.0
        %v1904 = vand.u32 %v1058, 4294901760
        %1905 = vmatpush1.msra.mxu0 %v1904
        %1906 = vmatprep.subr.mxu0 0.0
        %v1907 = vand.u32 %v1060, 4294901760
        %1908 = vmatpush1.msra.mxu0 %v1907
        %1909 = vmatprep.subr.mxu0 0.0
        %v1910 = vand.u32 %v1062, 4294901760
        %1911 = vmatpush1.msra.mxu0 %v1910
        %1912 = vmatprep.subr.mxu0 0.0
        %v1913 = vand.u32 %v1064, 4294901760
        %1914 = vmatpush1.msra.mxu0 %v1913
        %1915 = vmatprep.subr.mxu0 0.0
        %1916 = vmatpush1.msra.mxu0 0.0
        %1917 = vmatprep.subr.mxu0 0.0
        %1918 = vmatpush1.msra.mxu0 0.0
        %1919 = vmatprep.subr.mxu0 0.0
        %1920 = vmatpush1.msra.mxu0 0.0
        %1921 = vmatprep.subr.mxu0 0.0
        %1922 = vmatpush1.msra.mxu0 0.0
        %1923 = vmatprep.subr.mxu0 0.0
        %1924 = vmatpush1.msra.mxu0 0.0
        %1925 = vmatprep.subr.mxu0 0.0
        %1926 = vmatpush1.msra.mxu0 0.0
        %1927 = vmatprep.subr.mxu0 0.0
        %1928 = vmatpush1.msra.mxu0 0.0
        %1929 = vmatprep.subr.mxu0 0.0
        %1930 = vmatpush1.msra.mxu0 0.0
        %1931 = vmatprep.subr.mxu0 0.0
        %1932 = vmatpush1.msra.mxu0 0.0
        %1933 = vmatprep.subr.mxu0 0.0
        %1934 = vmatpush1.msra.mxu0 0.0
        %1935 = vmatprep.subr.mxu0 0.0
        %1936 = vmatpush1.msra.mxu0 0.0
        %1937 = vmatprep.subr.mxu0 0.0
        %1938 = vmatpush1.msra.mxu0 0.0
        %1939 = vmatprep.subr.mxu0 0.0
        %1940 = vmatpush1.msra.mxu0 0.0
        %1941 = vmatprep.subr.mxu0 0.0
        %1942 = vmatpush1.msra.mxu0 0.0
        %1943 = vmatprep.subr.mxu0 0.0
        %1944 = vmatpush1.msra.mxu0 0.0
        %1945 = vmatprep.subr.mxu0 0.0
        %1946 = vmatpush1.msra.mxu0 0.0
        %1947 = vmatprep.mubr.f32.mxu0 0.0
        %v1948 = vand.u32 %v1838, 4294901760
        %v1949 = vsub.f32 %v1838, %v1948
        %v1950 = vand.u32 %v1949, 4294901760
        %v1951 = vsub.f32 %v1949, %v1950
        %v1952 = vand.u32 %v1951, 4294901760
        %1953 = vmatmul.mubr.f32.gmra.mrb[0].mxu0 %v1952
        %v1954 = vpop.f32.mrb[0].mxu0
        %v1955 = vadd.f32 0.0, %v1954
        %v1956 = vpop.f32.mrb[0].mxu0
        %1957 = vmatprep.mubr.f32.mxu0 0.0
        %v1958 = vand.u32 %v1839, 4294901760
        %v1959 = vsub.f32 %v1839, %v1958
        %v1960 = vand.u32 %v1959, 4294901760
        %v1961 = vsub.f32 %v1959, %v1960
        %v1962 = vand.u32 %v1961, 4294901760
        %1963 = vmatmul.mubr.f32.gmra.mrb[0].mxu0 %v1962
        %v1964 = vpop.f32.mrb[0].mxu0
        %v1965 = vadd.f32 0.0, %v1964
        %v1966 = vpop.f32.mrb[0].mxu0
        %1967 = vdwg.mxu0
        %1968 = vmatprep.subr.mxu0 0.0
        %v1969 = vand.u32 %v1034, 4294901760
        %v1970 = vsub.f32 %v1034, %v1969
        %v1971 = vand.u32 %v1970, 4294901760
        %v1972 = vsub.f32 %v1970, %v1971
        %v1973 = vand.u32 %v1972, 4294901760
        %1974 = vmatpush1.msra.mxu0 %v1973
        %1975 = vmatprep.subr.mxu0 0.0
        %v1976 = vand.u32 %v1036, 4294901760
        %v1977 = vsub.f32 %v1036, %v1976
        %v1978 = vand.u32 %v1977, 4294901760
        %v1979 = vsub.f32 %v1977, %v1978
        %v1980 = vand.u32 %v1979, 4294901760
        %1981 = vmatpush1.msra.mxu0 %v1980
        %1982 = vmatprep.subr.mxu0 0.0
        %v1983 = vand.u32 %v1038, 4294901760
        %v1984 = vsub.f32 %v1038, %v1983
        %v1985 = vand.u32 %v1984, 4294901760
        %v1986 = vsub.f32 %v1984, %v1985
        %v1987 = vand.u32 %v1986, 4294901760
        %1988 = vmatpush1.msra.mxu0 %v1987
        %1989 = vmatprep.subr.mxu0 0.0
        %v1990 = vand.u32 %v1040, 4294901760
        %v1991 = vsub.f32 %v1040, %v1990
        %v1992 = vand.u32 %v1991, 4294901760
        %v1993 = vsub.f32 %v1991, %v1992
        %v1994 = vand.u32 %v1993, 4294901760
        %1995 = vmatpush1.msra.mxu0 %v1994
        %1996 = vmatprep.subr.mxu0 0.0
        %v1997 = vand.u32 %v1042, 4294901760
        %v1998 = vsub.f32 %v1042, %v1997
        %v1999 = vand.u32 %v1998, 4294901760
        %v2000 = vsub.f32 %v1998, %v1999
        %v2001 = vand.u32 %v2000, 4294901760
        %2002 = vmatpush1.msra.mxu0 %v2001
        %2003 = vmatprep.subr.mxu0 0.0
        %v2004 = vand.u32 %v1044, 4294901760
        %v2005 = vsub.f32 %v1044, %v2004
        %v2006 = vand.u32 %v2005, 4294901760
        %v2007 = vsub.f32 %v2005, %v2006
        %v2008 = vand.u32 %v2007, 4294901760
        %2009 = vmatpush1.msra.mxu0 %v2008
        %2010 = vmatprep.subr.mxu0 0.0
        %v2011 = vand.u32 %v1046, 4294901760
        %v2012 = vsub.f32 %v1046, %v2011
        %v2013 = vand.u32 %v2012, 4294901760
        %v2014 = vsub.f32 %v2012, %v2013
        %v2015 = vand.u32 %v2014, 4294901760
        %2016 = vmatpush1.msra.mxu0 %v2015
        %2017 = vmatprep.subr.mxu0 0.0
        %v2018 = vand.u32 %v1048, 4294901760
        %v2019 = vsub.f32 %v1048, %v2018
        %v2020 = vand.u32 %v2019, 4294901760
        %v2021 = vsub.f32 %v2019, %v2020
        %v2022 = vand.u32 %v2021, 4294901760
        %2023 = vmatpush1.msra.mxu0 %v2022
        %2024 = vmatprep.subr.mxu0 0.0
        %v2025 = vand.u32 %v1050, 4294901760
        %v2026 = vsub.f32 %v1050, %v2025
        %v2027 = vand.u32 %v2026, 4294901760
        %v2028 = vsub.f32 %v2026, %v2027
        %v2029 = vand.u32 %v2028, 4294901760
        %2030 = vmatpush1.msra.mxu0 %v2029
        %2031 = vmatprep.subr.mxu0 0.0
        %v2032 = vand.u32 %v1052, 4294901760
        %v2033 = vsub.f32 %v1052, %v2032
        %v2034 = vand.u32 %v2033, 4294901760
        %v2035 = vsub.f32 %v2033, %v2034
        %v2036 = vand.u32 %v2035, 4294901760
        %2037 = vmatpush1.msra.mxu0 %v2036
        %2038 = vmatprep.subr.mxu0 0.0
        %v2039 = vand.u32 %v1054, 4294901760
        %v2040 = vsub.f32 %v1054, %v2039
        %v2041 = vand.u32 %v2040, 4294901760
        %v2042 = vsub.f32 %v2040, %v2041
        %v2043 = vand.u32 %v2042, 4294901760
        %2044 = vmatpush1.msra.mxu0 %v2043
        %2045 = vmatprep.subr.mxu0 0.0
        %v2046 = vand.u32 %v1056, 4294901760
        %v2047 = vsub.f32 %v1056, %v2046
        %v2048 = vand.u32 %v2047, 4294901760
        %v2049 = vsub.f32 %v2047, %v2048
        %v2050 = vand.u32 %v2049, 4294901760
        %2051 = vmatpush1.msra.mxu0 %v2050
        %2052 = vmatprep.subr.mxu0 0.0
        %v2053 = vand.u32 %v1058, 4294901760
        %v2054 = vsub.f32 %v1058, %v2053
        %v2055 = vand.u32 %v2054, 4294901760
        %v2056 = vsub.f32 %v2054, %v2055
        %v2057 = vand.u32 %v2056, 4294901760
        %2058 = vmatpush1.msra.mxu0 %v2057
        %2059 = vmatprep.subr.mxu0 0.0
        %v2060 = vand.u32 %v1060, 4294901760
        %v2061 = vsub.f32 %v1060, %v2060
        %v2062 = vand.u32 %v2061, 4294901760
        %v2063 = vsub.f32 %v2061, %v2062
        %v2064 = vand.u32 %v2063, 4294901760
        %2065 = vmatpush1.msra.mxu0 %v2064
        %2066 = vmatprep.subr.mxu0 0.0
        %v2067 = vand.u32 %v1062, 4294901760
        %v2068 = vsub.f32 %v1062, %v2067
        %v2069 = vand.u32 %v2068, 4294901760
        %v2070 = vsub.f32 %v2068, %v2069
        %v2071 = vand.u32 %v2070, 4294901760
        %2072 = vmatpush1.msra.mxu0 %v2071
        %2073 = vmatprep.subr.mxu0 0.0
        %v2074 = vand.u32 %v1064, 4294901760
        %v2075 = vsub.f32 %v1064, %v2074
        %v2076 = vand.u32 %v2075, 4294901760
        %v2077 = vsub.f32 %v2075, %v2076
        %v2078 = vand.u32 %v2077, 4294901760
        %2079 = vmatpush1.msra.mxu0 %v2078
        %2080 = vmatprep.subr.mxu0 0.0
        %2081 = vmatpush1.msra.mxu0 0.0
        %2082 = vmatprep.subr.mxu0 0.0
        %2083 = vmatpush1.msra.mxu0 0.0
        %2084 = vmatprep.subr.mxu0 0.0
        %2085 = vmatpush1.msra.mxu0 0.0
        %2086 = vmatprep.subr.mxu0 0.0
        %2087 = vmatpush1.msra.mxu0 0.0
        %2088 = vmatprep.subr.mxu0 0.0
        %2089 = vmatpush1.msra.mxu0 0.0
        %2090 = vmatprep.subr.mxu0 0.0
        %2091 = vmatpush1.msra.mxu0 0.0
        %2092 = vmatprep.subr.mxu0 0.0
        %2093 = vmatpush1.msra.mxu0 0.0
        %2094 = vmatprep.subr.mxu0 0.0
        %2095 = vmatpush1.msra.mxu0 0.0
        %2096 = vmatprep.subr.mxu0 0.0
        %2097 = vmatpush1.msra.mxu0 0.0
        %2098 = vmatprep.subr.mxu0 0.0
        %2099 = vmatpush1.msra.mxu0 0.0
        %2100 = vmatprep.subr.mxu0 0.0
        %2101 = vmatpush1.msra.mxu0 0.0
        %2102 = vmatprep.subr.mxu0 0.0
        %2103 = vmatpush1.msra.mxu0 0.0
        %2104 = vmatprep.subr.mxu0 0.0
        %2105 = vmatpush1.msra.mxu0 0.0
        %2106 = vmatprep.subr.mxu0 0.0
        %2107 = vmatpush1.msra.mxu0 0.0
        %2108 = vmatprep.subr.mxu0 0.0
        %2109 = vmatpush1.msra.mxu0 0.0
        %2110 = vmatprep.subr.mxu0 0.0
        %2111 = vmatpush1.msra.mxu0 0.0
        %2112 = vmatprep.mubr.f32.mxu0 0.0
        %v2113 = vand.u32 %v1838, 4294901760
        %2114 = vmatmul.mubr.f32.gmra.mrb[0].mxu0 %v2113
        %v2115 = vpop.f32.mrb[0].mxu0
        %v2116 = vadd.f32 %v1955, %v2115
        %v2117 = vpop.f32.mrb[0].mxu0
        %2118 = vmatprep.mubr.f32.mxu0 0.0
        %v2119 = vand.u32 %v1839, 4294901760
        %2120 = vmatmul.mubr.f32.gmra.mrb[0].mxu0 %v2119
        %v2121 = vpop.f32.mrb[0].mxu0
        %v2122 = vadd.f32 %v1965, %v2121
        %v2123 = vpop.f32.mrb[0].mxu0
        %2124 = vdwg.mxu0
        %2125 = vmatprep.subr.mxu0 0.0
        %v2126 = vand.u32 %v1034, 4294901760
        %v2127 = vsub.f32 %v1034, %v2126
        %2128 = vmatpush1.msra.mxu0 %v2127
        %2129 = vmatprep.subr.mxu0 0.0
        %v2130 = vand.u32 %v1036, 4294901760
        %v2131 = vsub.f32 %v1036, %v2130
        %2132 = vmatpush1.msra.mxu0 %v2131
        %2133 = vmatprep.subr.mxu0 0.0
        %v2134 = vand.u32 %v1038, 4294901760
        %v2135 = vsub.f32 %v1038, %v2134
        %2136 = vmatpush1.msra.mxu0 %v2135
        %2137 = vmatprep.subr.mxu0 0.0
        %v2138 = vand.u32 %v1040, 4294901760
        %v2139 = vsub.f32 %v1040, %v2138
        %2140 = vmatpush1.msra.mxu0 %v2139
        %2141 = vmatprep.subr.mxu0 0.0
        %v2142 = vand.u32 %v1042, 4294901760
        %v2143 = vsub.f32 %v1042, %v2142
        %2144 = vmatpush1.msra.mxu0 %v2143
        %2145 = vmatprep.subr.mxu0 0.0
        %v2146 = vand.u32 %v1044, 4294901760
        %v2147 = vsub.f32 %v1044, %v2146
        %2148 = vmatpush1.msra.mxu0 %v2147
        %2149 = vmatprep.subr.mxu0 0.0
        %v2150 = vand.u32 %v1046, 4294901760
        %v2151 = vsub.f32 %v1046, %v2150
        %2152 = vmatpush1.msra.mxu0 %v2151
        %2153 = vmatprep.subr.mxu0 0.0
        %v2154 = vand.u32 %v1048, 4294901760
        %v2155 = vsub.f32 %v1048, %v2154
        %2156 = vmatpush1.msra.mxu0 %v2155
        %2157 = vmatprep.subr.mxu0 0.0
        %v2158 = vand.u32 %v1050, 4294901760
        %v2159 = vsub.f32 %v1050, %v2158
        %2160 = vmatpush1.msra.mxu0 %v2159
        %2161 = vmatprep.subr.mxu0 0.0
        %v2162 = vand.u32 %v1052, 4294901760
        %v2163 = vsub.f32 %v1052, %v2162
        %2164 = vmatpush1.msra.mxu0 %v2163
        %2165 = vmatprep.subr.mxu0 0.0
        %v2166 = vand.u32 %v1054, 4294901760
        %v2167 = vsub.f32 %v1054, %v2166
        %2168 = vmatpush1.msra.mxu0 %v2167
        %2169 = vmatprep.subr.mxu0 0.0
        %v2170 = vand.u32 %v1056, 4294901760
        %v2171 = vsub.f32 %v1056, %v2170
        %2172 = vmatpush1.msra.mxu0 %v2171
        %2173 = vmatprep.subr.mxu0 0.0
        %v2174 = vand.u32 %v1058, 4294901760
        %v2175 = vsub.f32 %v1058, %v2174
        %2176 = vmatpush1.msra.mxu0 %v2175
        %2177 = vmatprep.subr.mxu0 0.0
        %v2178 = vand.u32 %v1060, 4294901760
        %v2179 = vsub.f32 %v1060, %v2178
        %2180 = vmatpush1.msra.mxu0 %v2179
        %2181 = vmatprep.subr.mxu0 0.0
        %v2182 = vand.u32 %v1062, 4294901760
        %v2183 = vsub.f32 %v1062, %v2182
        %2184 = vmatpush1.msra.mxu0 %v2183
        %2185 = vmatprep.subr.mxu0 0.0
        %v2186 = vand.u32 %v1064, 4294901760
        %v2187 = vsub.f32 %v1064, %v2186
        %2188 = vmatpush1.msra.mxu0 %v2187
        %2189 = vmatprep.subr.mxu0 0.0
        %2190 = vmatpush1.msra.mxu0 0.0
        %2191 = vmatprep.subr.mxu0 0.0
        %2192 = vmatpush1.msra.mxu0 0.0
        %2193 = vmatprep.subr.mxu0 0.0
        %2194 = vmatpush1.msra.mxu0 0.0
        %2195 = vmatprep.subr.mxu0 0.0
        %2196 = vmatpush1.msra.mxu0 0.0
        %2197 = vmatprep.subr.mxu0 0.0
        %2198 = vmatpush1.msra.mxu0 0.0
        %2199 = vmatprep.subr.mxu0 0.0
        %2200 = vmatpush1.msra.mxu0 0.0
        %2201 = vmatprep.subr.mxu0 0.0
        %2202 = vmatpush1.msra.mxu0 0.0
        %2203 = vmatprep.subr.mxu0 0.0
        %2204 = vmatpush1.msra.mxu0 0.0
        %2205 = vmatprep.subr.mxu0 0.0
        %2206 = vmatpush1.msra.mxu0 0.0
        %2207 = vmatprep.subr.mxu0 0.0
        %2208 = vmatpush1.msra.mxu0 0.0
        %2209 = vmatprep.subr.mxu0 0.0
        %2210 = vmatpush1.msra.mxu0 0.0
        %2211 = vmatprep.subr.mxu0 0.0
        %2212 = vmatpush1.msra.mxu0 0.0
        %2213 = vmatprep.subr.mxu0 0.0
        %2214 = vmatpush1.msra.mxu0 0.0
        %2215 = vmatprep.subr.mxu0 0.0
        %2216 = vmatpush1.msra.mxu0 0.0
        %2217 = vmatprep.subr.mxu0 0.0
        %2218 = vmatpush1.msra.mxu0 0.0
        %2219 = vmatprep.subr.mxu0 0.0
        %2220 = vmatpush1.msra.mxu0 0.0
        %2221 = vmatprep.mubr.f32.mxu0 0.0
        %v2222 = vand.u32 %v1838, 4294901760
        %v2223 = vsub.f32 %v1838, %v2222
        %2224 = vmatmul.mubr.f32.gmra.mrb[0].mxu0 %v2223
        %v2225 = vpop.f32.mrb[0].mxu0
        %v2226 = vadd.f32 %v2116, %v2225
        %v2227 = vpop.f32.mrb[0].mxu0
        %2228 = vmatprep.mubr.f32.mxu0 0.0
        %v2229 = vand.u32 %v1839, 4294901760
        %v2230 = vsub.f32 %v1839, %v2229
        %2231 = vmatmul.mubr.f32.gmra.mrb[0].mxu0 %v2230
        %v2232 = vpop.f32.mrb[0].mxu0
        %v2233 = vadd.f32 %v2122, %v2232
        %v2234 = vpop.f32.mrb[0].mxu0
        %2235 = vdwg.mxu0
        %2236 = vmatprep.subr.mxu0 0.0
        %v2237 = vand.u32 %v1034, 4294901760
        %2238 = vmatpush1.msra.mxu0 %v2237
        %2239 = vmatprep.subr.mxu0 0.0
        %v2240 = vand.u32 %v1036, 4294901760
        %2241 = vmatpush1.msra.mxu0 %v2240
        %2242 = vmatprep.subr.mxu0 0.0
        %v2243 = vand.u32 %v1038, 4294901760
        %2244 = vmatpush1.msra.mxu0 %v2243
        %2245 = vmatprep.subr.mxu0 0.0
        %v2246 = vand.u32 %v1040, 4294901760
        %2247 = vmatpush1.msra.mxu0 %v2246
        %2248 = vmatprep.subr.mxu0 0.0
        %v2249 = vand.u32 %v1042, 4294901760
        %2250 = vmatpush1.msra.mxu0 %v2249
        %2251 = vmatprep.subr.mxu0 0.0
        %v2252 = vand.u32 %v1044, 4294901760
        %2253 = vmatpush1.msra.mxu0 %v2252
        %2254 = vmatprep.subr.mxu0 0.0
        %v2255 = vand.u32 %v1046, 4294901760
        %2256 = vmatpush1.msra.mxu0 %v2255
        %2257 = vmatprep.subr.mxu0 0.0
        %v2258 = vand.u32 %v1048, 4294901760
        %2259 = vmatpush1.msra.mxu0 %v2258
        %2260 = vmatprep.subr.mxu0 0.0
        %v2261 = vand.u32 %v1050, 4294901760
        %2262 = vmatpush1.msra.mxu0 %v2261
        %2263 = vmatprep.subr.mxu0 0.0
        %v2264 = vand.u32 %v1052, 4294901760
        %2265 = vmatpush1.msra.mxu0 %v2264
        %2266 = vmatprep.subr.mxu0 0.0
        %v2267 = vand.u32 %v1054, 4294901760
        %2268 = vmatpush1.msra.mxu0 %v2267
        %2269 = vmatprep.subr.mxu0 0.0
        %v2270 = vand.u32 %v1056, 4294901760
        %2271 = vmatpush1.msra.mxu0 %v2270
        %2272 = vmatprep.subr.mxu0 0.0
        %v2273 = vand.u32 %v1058, 4294901760
        %2274 = vmatpush1.msra.mxu0 %v2273
        %2275 = vmatprep.subr.mxu0 0.0
        %v2276 = vand.u32 %v1060, 4294901760
        %2277 = vmatpush1.msra.mxu0 %v2276
        %2278 = vmatprep.subr.mxu0 0.0
        %v2279 = vand.u32 %v1062, 4294901760
        %2280 = vmatpush1.msra.mxu0 %v2279
        %2281 = vmatprep.subr.mxu0 0.0
        %v2282 = vand.u32 %v1064, 4294901760
        %2283 = vmatpush1.msra.mxu0 %v2282
        %2284 = vmatprep.subr.mxu0 0.0
        %2285 = vmatpush1.msra.mxu0 0.0
        %2286 = vmatprep.subr.mxu0 0.0
        %2287 = vmatpush1.msra.mxu0 0.0
        %2288 = vmatprep.subr.mxu0 0.0
        %2289 = vmatpush1.msra.mxu0 0.0
        %2290 = vmatprep.subr.mxu0 0.0
        %2291 = vmatpush1.msra.mxu0 0.0
        %2292 = vmatprep.subr.mxu0 0.0
        %2293 = vmatpush1.msra.mxu0 0.0
        %2294 = vmatprep.subr.mxu0 0.0
        %2295 = vmatpush1.msra.mxu0 0.0
        %2296 = vmatprep.subr.mxu0 0.0
        %2297 = vmatpush1.msra.mxu0 0.0
        %2298 = vmatprep.subr.mxu0 0.0
        %2299 = vmatpush1.msra.mxu0 0.0
        %2300 = vmatprep.subr.mxu0 0.0
        %2301 = vmatpush1.msra.mxu0 0.0
        %2302 = vmatprep.subr.mxu0 0.0
        %2303 = vmatpush1.msra.mxu0 0.0
        %2304 = vmatprep.subr.mxu0 0.0
        %2305 = vmatpush1.msra.mxu0 0.0
        %2306 = vmatprep.subr.mxu0 0.0
        %2307 = vmatpush1.msra.mxu0 0.0
        %2308 = vmatprep.subr.mxu0 0.0
        %2309 = vmatpush1.msra.mxu0 0.0
        %2310 = vmatprep.subr.mxu0 0.0
        %2311 = vmatpush1.msra.mxu0 0.0
        %2312 = vmatprep.subr.mxu0 0.0
        %2313 = vmatpush1.msra.mxu0 0.0
        %2314 = vmatprep.subr.mxu0 0.0
        %2315 = vmatpush1.msra.mxu0 0.0
        %2316 = vmatprep.mubr.f32.mxu0 0.0
        %v2317 = vand.u32 %v1838, 4294901760
        %v2318 = vsub.f32 %v1838, %v2317
        %v2319 = vand.u32 %v2318, 4294901760
        %2320 = vmatmul.mubr.f32.gmra.mrb[0].mxu0 %v2319
        %v2321 = vpop.f32.mrb[0].mxu0
        %v2322 = vadd.f32 %v2226, %v2321
        %v2323 = vpop.f32.mrb[0].mxu0
        %2324 = vmatprep.mubr.f32.mxu0 0.0
        %v2325 = vand.u32 %v1839, 4294901760
        %v2326 = vsub.f32 %v1839, %v2325
        %v2327 = vand.u32 %v2326, 4294901760
        %2328 = vmatmul.mubr.f32.gmra.mrb[0].mxu0 %v2327
        %v2329 = vpop.f32.mrb[0].mxu0
        %v2330 = vadd.f32 %v2233, %v2329
        %v2331 = vpop.f32.mrb[0].mxu0
        %2332 = vdwg.mxu0
        %2333 = vmatprep.subr.mxu0 0.0
        %v2334 = vand.u32 %v1034, 4294901760
        %v2335 = vsub.f32 %v1034, %v2334
        %v2336 = vand.u32 %v2335, 4294901760
        %2337 = vmatpush1.msra.mxu0 %v2336
        %2338 = vmatprep.subr.mxu0 0.0
        %v2339 = vand.u32 %v1036, 4294901760
        %v2340 = vsub.f32 %v1036, %v2339
        %v2341 = vand.u32 %v2340, 4294901760
        %2342 = vmatpush1.msra.mxu0 %v2341
        %2343 = vmatprep.subr.mxu0 0.0
        %v2344 = vand.u32 %v1038, 4294901760
        %v2345 = vsub.f32 %v1038, %v2344
        %v2346 = vand.u32 %v2345, 4294901760
        %2347 = vmatpush1.msra.mxu0 %v2346
        %2348 = vmatprep.subr.mxu0 0.0
        %v2349 = vand.u32 %v1040, 4294901760
        %v2350 = vsub.f32 %v1040, %v2349
        %v2351 = vand.u32 %v2350, 4294901760
        %2352 = vmatpush1.msra.mxu0 %v2351
        %2353 = vmatprep.subr.mxu0 0.0
        %v2354 = vand.u32 %v1042, 4294901760
        %v2355 = vsub.f32 %v1042, %v2354
        %v2356 = vand.u32 %v2355, 4294901760
        %2357 = vmatpush1.msra.mxu0 %v2356
        %2358 = vmatprep.subr.mxu0 0.0
        %v2359 = vand.u32 %v1044, 4294901760
        %v2360 = vsub.f32 %v1044, %v2359
        %v2361 = vand.u32 %v2360, 4294901760
        %2362 = vmatpush1.msra.mxu0 %v2361
        %2363 = vmatprep.subr.mxu0 0.0
        %v2364 = vand.u32 %v1046, 4294901760
        %v2365 = vsub.f32 %v1046, %v2364
        %v2366 = vand.u32 %v2365, 4294901760
        %2367 = vmatpush1.msra.mxu0 %v2366
        %2368 = vmatprep.subr.mxu0 0.0
        %v2369 = vand.u32 %v1048, 4294901760
        %v2370 = vsub.f32 %v1048, %v2369
        %v2371 = vand.u32 %v2370, 4294901760
        %2372 = vmatpush1.msra.mxu0 %v2371
        %2373 = vmatprep.subr.mxu0 0.0
        %v2374 = vand.u32 %v1050, 4294901760
        %v2375 = vsub.f32 %v1050, %v2374
        %v2376 = vand.u32 %v2375, 4294901760
        %2377 = vmatpush1.msra.mxu0 %v2376
        %2378 = vmatprep.subr.mxu0 0.0
        %v2379 = vand.u32 %v1052, 4294901760
        %v2380 = vsub.f32 %v1052, %v2379
        %v2381 = vand.u32 %v2380, 4294901760
        %2382 = vmatpush1.msra.mxu0 %v2381
        %2383 = vmatprep.subr.mxu0 0.0
        %v2384 = vand.u32 %v1054, 4294901760
        %v2385 = vsub.f32 %v1054, %v2384
        %v2386 = vand.u32 %v2385, 4294901760
        %2387 = vmatpush1.msra.mxu0 %v2386
        %2388 = vmatprep.subr.mxu0 0.0
        %v2389 = vand.u32 %v1056, 4294901760
        %v2390 = vsub.f32 %v1056, %v2389
        %v2391 = vand.u32 %v2390, 4294901760
        %2392 = vmatpush1.msra.mxu0 %v2391
        %2393 = vmatprep.subr.mxu0 0.0
        %v2394 = vand.u32 %v1058, 4294901760
        %v2395 = vsub.f32 %v1058, %v2394
        %v2396 = vand.u32 %v2395, 4294901760
        %2397 = vmatpush1.msra.mxu0 %v2396
        %2398 = vmatprep.subr.mxu0 0.0
        %v2399 = vand.u32 %v1060, 4294901760
        %v2400 = vsub.f32 %v1060, %v2399
        %v2401 = vand.u32 %v2400, 4294901760
        %2402 = vmatpush1.msra.mxu0 %v2401
        %2403 = vmatprep.subr.mxu0 0.0
        %v2404 = vand.u32 %v1062, 4294901760
        %v2405 = vsub.f32 %v1062, %v2404
        %v2406 = vand.u32 %v2405, 4294901760
        %2407 = vmatpush1.msra.mxu0 %v2406
        %2408 = vmatprep.subr.mxu0 0.0
        %v2409 = vand.u32 %v1064, 4294901760
        %v2410 = vsub.f32 %v1064, %v2409
        %v2411 = vand.u32 %v2410, 4294901760
        %2412 = vmatpush1.msra.mxu0 %v2411
        %2413 = vmatprep.subr.mxu0 0.0
        %2414 = vmatpush1.msra.mxu0 0.0
        %2415 = vmatprep.subr.mxu0 0.0
        %2416 = vmatpush1.msra.mxu0 0.0
        %2417 = vmatprep.subr.mxu0 0.0
        %2418 = vmatpush1.msra.mxu0 0.0
        %2419 = vmatprep.subr.mxu0 0.0
        %2420 = vmatpush1.msra.mxu0 0.0
        %2421 = vmatprep.subr.mxu0 0.0
        %2422 = vmatpush1.msra.mxu0 0.0
        %2423 = vmatprep.subr.mxu0 0.0
        %2424 = vmatpush1.msra.mxu0 0.0
        %2425 = vmatprep.subr.mxu0 0.0
        %2426 = vmatpush1.msra.mxu0 0.0
        %2427 = vmatprep.subr.mxu0 0.0
        %2428 = vmatpush1.msra.mxu0 0.0
        %2429 = vmatprep.subr.mxu0 0.0
        %2430 = vmatpush1.msra.mxu0 0.0
        %2431 = vmatprep.subr.mxu0 0.0
        %2432 = vmatpush1.msra.mxu0 0.0
        %2433 = vmatprep.subr.mxu0 0.0
        %2434 = vmatpush1.msra.mxu0 0.0
        %2435 = vmatprep.subr.mxu0 0.0
        %2436 = vmatpush1.msra.mxu0 0.0
        %2437 = vmatprep.subr.mxu0 0.0
        %2438 = vmatpush1.msra.mxu0 0.0
        %2439 = vmatprep.subr.mxu0 0.0
        %2440 = vmatpush1.msra.mxu0 0.0
        %2441 = vmatprep.subr.mxu0 0.0
        %2442 = vmatpush1.msra.mxu0 0.0
        %2443 = vmatprep.subr.mxu0 0.0
        %2444 = vmatpush1.msra.mxu0 0.0
        %2445 = vmatprep.mubr.f32.mxu0 0.0
        %v2446 = vand.u32 %v1838, 4294901760
        %2447 = vmatmul.mubr.f32.gmra.mrb[0].mxu0 %v2446
        %v2448 = vpop.f32.mrb[0].mxu0
        %v2449 = vadd.f32 %v2322, %v2448
        %v2450 = vpop.f32.mrb[0].mxu0
        %2451 = vmatprep.mubr.f32.mxu0 0.0
        %v2452 = vand.u32 %v1839, 4294901760
        %2453 = vmatmul.mubr.f32.gmra.mrb[0].mxu0 %v2452
        %v2454 = vpop.f32.mrb[0].mxu0
        %v2455 = vadd.f32 %v2330, %v2454
        %v2456 = vpop.f32.mrb[0].mxu0
        %2457 = vdwg.mxu0
        %2458 = vmatprep.subr.mxu0 0.0
        %v2459 = vand.u32 %v1034, 4294901760
        %2460 = vmatpush1.msra.mxu0 %v2459
        %2461 = vmatprep.subr.mxu0 0.0
        %v2462 = vand.u32 %v1036, 4294901760
        %2463 = vmatpush1.msra.mxu0 %v2462
        %2464 = vmatprep.subr.mxu0 0.0
        %v2465 = vand.u32 %v1038, 4294901760
        %2466 = vmatpush1.msra.mxu0 %v2465
        %2467 = vmatprep.subr.mxu0 0.0
        %v2468 = vand.u32 %v1040, 4294901760
        %2469 = vmatpush1.msra.mxu0 %v2468
        %2470 = vmatprep.subr.mxu0 0.0
        %v2471 = vand.u32 %v1042, 4294901760
        %2472 = vmatpush1.msra.mxu0 %v2471
        %2473 = vmatprep.subr.mxu0 0.0
        %v2474 = vand.u32 %v1044, 4294901760
        %2475 = vmatpush1.msra.mxu0 %v2474
        %2476 = vmatprep.subr.mxu0 0.0
        %v2477 = vand.u32 %v1046, 4294901760
        %2478 = vmatpush1.msra.mxu0 %v2477
        %2479 = vmatprep.subr.mxu0 0.0
        %v2480 = vand.u32 %v1048, 4294901760
        %2481 = vmatpush1.msra.mxu0 %v2480
        %2482 = vmatprep.subr.mxu0 0.0
        %v2483 = vand.u32 %v1050, 4294901760
        %2484 = vmatpush1.msra.mxu0 %v2483
        %2485 = vmatprep.subr.mxu0 0.0
        %v2486 = vand.u32 %v1052, 4294901760
        %2487 = vmatpush1.msra.mxu0 %v2486
        %2488 = vmatprep.subr.mxu0 0.0
        %v2489 = vand.u32 %v1054, 4294901760
        %2490 = vmatpush1.msra.mxu0 %v2489
        %2491 = vmatprep.subr.mxu0 0.0
        %v2492 = vand.u32 %v1056, 4294901760
        %2493 = vmatpush1.msra.mxu0 %v2492
        %2494 = vmatprep.subr.mxu0 0.0
        %v2495 = vand.u32 %v1058, 4294901760
        %2496 = vmatpush1.msra.mxu0 %v2495
        %2497 = vmatprep.subr.mxu0 0.0
        %v2498 = vand.u32 %v1060, 4294901760
        %2499 = vmatpush1.msra.mxu0 %v2498
        %2500 = vmatprep.subr.mxu0 0.0
        %v2501 = vand.u32 %v1062, 4294901760
        %2502 = vmatpush1.msra.mxu0 %v2501
        %2503 = vmatprep.subr.mxu0 0.0
        %v2504 = vand.u32 %v1064, 4294901760
        %2505 = vmatpush1.msra.mxu0 %v2504
        %2506 = vmatprep.subr.mxu0 0.0
        %2507 = vmatpush1.msra.mxu0 0.0
        %2508 = vmatprep.subr.mxu0 0.0
        %2509 = vmatpush1.msra.mxu0 0.0
        %2510 = vmatprep.subr.mxu0 0.0
        %2511 = vmatpush1.msra.mxu0 0.0
        %2512 = vmatprep.subr.mxu0 0.0
        %2513 = vmatpush1.msra.mxu0 0.0
        %2514 = vmatprep.subr.mxu0 0.0
        %2515 = vmatpush1.msra.mxu0 0.0
        %2516 = vmatprep.subr.mxu0 0.0
        %2517 = vmatpush1.msra.mxu0 0.0
        %2518 = vmatprep.subr.mxu0 0.0
        %2519 = vmatpush1.msra.mxu0 0.0
        %2520 = vmatprep.subr.mxu0 0.0
        %2521 = vmatpush1.msra.mxu0 0.0
        %2522 = vmatprep.subr.mxu0 0.0
        %2523 = vmatpush1.msra.mxu0 0.0
        %2524 = vmatprep.subr.mxu0 0.0
        %2525 = vmatpush1.msra.mxu0 0.0
        %2526 = vmatprep.subr.mxu0 0.0
        %2527 = vmatpush1.msra.mxu0 0.0
        %2528 = vmatprep.subr.mxu0 0.0
        %2529 = vmatpush1.msra.mxu0 0.0
        %2530 = vmatprep.subr.mxu0 0.0
        %2531 = vmatpush1.msra.mxu0 0.0
        %2532 = vmatprep.subr.mxu0 0.0
        %2533 = vmatpush1.msra.mxu0 0.0
        %2534 = vmatprep.subr.mxu0 0.0
        %2535 = vmatpush1.msra.mxu0 0.0
        %2536 = vmatprep.subr.mxu0 0.0
        %2537 = vmatpush1.msra.mxu0 0.0
        %2538 = vmatprep.mubr.f32.mxu0 0.0
        %v2539 = vand.u32 %v1838, 4294901760
        %2540 = vmatmul.mubr.f32.gmra.mrb[0].mxu0 %v2539
        %v2541 = vpop.f32.mrb[0].mxu0
        %v2542 = vadd.f32 %v2449, %v2541
        %v2543 = vpop.f32.mrb[0].mxu0
        %2544 = vmatprep.mubr.f32.mxu0 0.0
        %v2545 = vand.u32 %v1839, 4294901760
        %2546 = vmatmul.mubr.f32.gmra.mrb[0].mxu0 %v2545
        %v2547 = vpop.f32.mrb[0].mxu0
        %v2548 = vadd.f32 %v2455, %v2547
        %v2549 = vpop.f32.mrb[0].mxu0
        %2550 = vdwg.mxu0
        %v2551 = vadd.f32 %v1865, %v2542
        %v2552 = vadd.f32 %v1866, %v2548
        %2553 = vst.msk [vmem:[#allocation5] sm:$0xff] %vm1069, %v2551
        %2554 = vst.msk [vmem:[#allocation5 + $0x8] sm:$0xff] %vm1069, %v2552
        %2555 = vst.msk [vmem:[#allocation3] sm:$0xff] %vm1850, %v1814
        %2556 = vst.msk [vmem:[#allocation3 + $0x8] sm:$0xff] %vm1850, %v1815
        %2557 = vrot.lane.b32.xlu0 %v1065, 120
        %v2558 = vpop.permute.xlu0 %2557
        %2559 = vrot.lane.b32.xlu0 %v1067, 120
        %v2560 = vpop.permute.xlu0 %2559
        %2561 = vrot.lane.b32.xlu0 %v1033, 120
        %v2562 = vpop.permute.xlu0 %2561
        %2563 = vrot.lane.b32.xlu0 %v1035, 120
        %v2564 = vpop.permute.xlu0 %2563
        %2565 = vrot.lane.b32.xlu0 %v1037, 120
        %v2566 = vpop.permute.xlu0 %2565
        %2567 = vrot.lane.b32.xlu0 %v1039, 120
        %v2568 = vpop.permute.xlu0 %2567
        %2569 = vrot.lane.b32.xlu0 %v1041, 120
        %v2570 = vpop.permute.xlu0 %2569
        %2571 = vrot.lane.b32.xlu0 %v1043, 120
        %v2572 = vpop.permute.xlu0 %2571
        %2573 = vrot.lane.b32.xlu0 %v1045, 120
        %v2574 = vpop.permute.xlu0 %2573
        %2575 = vrot.lane.b32.xlu0 %v1047, 120
        %v2576 = vpop.permute.xlu0 %2575
        %2577 = vrot.lane.b32.xlu0 %v1049, 120
        %v2578 = vpop.permute.xlu0 %2577
        %2579 = vrot.lane.b32.xlu0 %v1051, 120
        %v2580 = vpop.permute.xlu0 %2579
        %2581 = vrot.lane.b32.xlu0 %v1053, 120
        %v2582 = vpop.permute.xlu0 %2581
        %2583 = vrot.lane.b32.xlu0 %v1055, 120
        %v2584 = vpop.permute.xlu0 %2583
        %2585 = vrot.lane.b32.xlu0 %v1057, 120
        %v2586 = vpop.permute.xlu0 %2585
        %2587 = vrot.lane.b32.xlu0 %v1059, 120
        %v2588 = vpop.permute.xlu0 %2587
        %2589 = vrot.lane.b32.xlu0 %v1061, 120
        %v2590 = vpop.permute.xlu0 %2589
        %2591 = vrot.lane.b32.xlu0 %v1063, 120
        %v2592 = vpop.permute.xlu0 %2591
        %v2593 = vsel %vm1069, %v2558, 0
        %v2595 = vsel %vm1069, %v2560, 0
        %v2597 = vsel %vm1069, %v2562, 0
        %v2599 = vsel %vm1069, %v2564, 0
        %v2601 = vsel %vm1069, %v2566, 0
        %v2603 = vsel %vm1069, %v2568, 0
        %v2605 = vsel %vm1069, %v2570, 0
        %v2607 = vsel %vm1069, %v2572, 0
        %v2609 = vsel %vm1069, %v2574, 0
        %v2611 = vsel %vm1069, %v2576, 0
        %v2613 = vsel %vm1069, %v2578, 0
        %v2615 = vsel %vm1069, %v2580, 0
        %v2617 = vsel %vm1069, %v2582, 0
        %v2619 = vsel %vm1069, %v2584, 0
        %v2621 = vsel %vm1069, %v2586, 0
        %v2623 = vsel %vm1069, %v2588, 0
        %v2625 = vsel %vm1069, %v2590, 0
        %v2627 = vsel %vm1069, %v2592, 0
        %2629 = vmatprep.subr.mxu0 0.0
        %v2630 = vand.u32 %v2597, 4294901760
        %2631 = vmatpush1.xpose.msra.mxu0 %v2630
        %2632 = vmatprep.subr.mxu0 0.0
        %v2633 = vand.u32 %v2599, 4294901760
        %2634 = vmatpush1.xpose.msra.mxu0 %v2633
        %2635 = vmatprep.subr.mxu0 0.0
        %v2636 = vand.u32 %v2601, 4294901760
        %2637 = vmatpush1.xpose.msra.mxu0 %v2636
        %2638 = vmatprep.subr.mxu0 0.0
        %v2639 = vand.u32 %v2603, 4294901760
        %2640 = vmatpush1.xpose.msra.mxu0 %v2639
        %2641 = vmatprep.subr.mxu0 0.0
        %v2642 = vand.u32 %v2605, 4294901760
        %2643 = vmatpush1.xpose.msra.mxu0 %v2642
        %2644 = vmatprep.subr.mxu0 0.0
        %v2645 = vand.u32 %v2607, 4294901760
        %2646 = vmatpush1.xpose.msra.mxu0 %v2645
        %2647 = vmatprep.subr.mxu0 0.0
        %v2648 = vand.u32 %v2609, 4294901760
        %2649 = vmatpush1.xpose.msra.mxu0 %v2648
        %2650 = vmatprep.subr.mxu0 0.0
        %v2651 = vand.u32 %v2611, 4294901760
        %2652 = vmatpush1.xpose.msra.mxu0 %v2651
        %2653 = vmatprep.subr.mxu0 0.0
        %v2654 = vand.u32 %v2613, 4294901760
        %2655 = vmatpush1.xpose.msra.mxu0 %v2654
        %2656 = vmatprep.subr.mxu0 0.0
        %v2657 = vand.u32 %v2615, 4294901760
        %2658 = vmatpush1.xpose.msra.mxu0 %v2657
        %2659 = vmatprep.subr.mxu0 0.0
        %v2660 = vand.u32 %v2617, 4294901760
        %2661 = vmatpush1.xpose.msra.mxu0 %v2660
        %2662 = vmatprep.subr.mxu0 0.0
        %v2663 = vand.u32 %v2619, 4294901760
        %2664 = vmatpush1.xpose.msra.mxu0 %v2663
        %2665 = vmatprep.subr.mxu0 0.0
        %v2666 = vand.u32 %v2621, 4294901760
        %2667 = vmatpush1.xpose.msra.mxu0 %v2666
        %2668 = vmatprep.subr.mxu0 0.0
        %v2669 = vand.u32 %v2623, 4294901760
        %2670 = vmatpush1.xpose.msra.mxu0 %v2669
        %2671 = vmatprep.subr.mxu0 0.0
        %v2672 = vand.u32 %v2625, 4294901760
        %2673 = vmatpush1.xpose.msra.mxu0 %v2672
        %2674 = vmatprep.subr.mxu0 0.0
        %v2675 = vand.u32 %v2627, 4294901760
        %2676 = vmatpush1.xpose.msra.mxu0 %v2675
        %2677 = vmatprep.subr.mxu0 0.0
        %2678 = vmatpush1.xpose.msra.mxu0 0.0
        %2679 = vmatprep.subr.mxu0 0.0
        %2680 = vmatpush1.xpose.msra.mxu0 0.0
        %2681 = vmatprep.subr.mxu0 0.0
        %2682 = vmatpush1.xpose.msra.mxu0 0.0
        %2683 = vmatprep.subr.mxu0 0.0
        %2684 = vmatpush1.xpose.msra.mxu0 0.0
        %2685 = vmatprep.subr.mxu0 0.0
        %2686 = vmatpush1.xpose.msra.mxu0 0.0
        %2687 = vmatprep.subr.mxu0 0.0
        %2688 = vmatpush1.xpose.msra.mxu0 0.0
        %2689 = vmatprep.subr.mxu0 0.0
        %2690 = vmatpush1.xpose.msra.mxu0 0.0
        %2691 = vmatprep.subr.mxu0 0.0
        %2692 = vmatpush1.xpose.msra.mxu0 0.0
        %2693 = vmatprep.subr.mxu0 0.0
        %2694 = vmatpush1.xpose.msra.mxu0 0.0
        %2695 = vmatprep.subr.mxu0 0.0
        %2696 = vmatpush1.xpose.msra.mxu0 0.0
        %2697 = vmatprep.subr.mxu0 0.0
        %2698 = vmatpush1.xpose.msra.mxu0 0.0
        %2699 = vmatprep.subr.mxu0 0.0
        %2700 = vmatpush1.xpose.msra.mxu0 0.0
        %2701 = vmatprep.subr.mxu0 0.0
        %2702 = vmatpush1.xpose.msra.mxu0 0.0
        %2703 = vmatprep.subr.mxu0 0.0
        %2704 = vmatpush1.xpose.msra.mxu0 0.0
        %2705 = vmatprep.subr.mxu0 0.0
        %2706 = vmatpush1.xpose.msra.mxu0 0.0
        %2707 = vmatprep.subr.mxu0 0.0
        %2708 = vmatpush1.xpose.msra.mxu0 0.0
        %2709 = vmatprep.mubr.f32.mxu0 0.0
        %v2710 = vand.u32 %v2593, 4294901760
        %v2711 = vsub.f32 %v2593, %v2710
        %v2712 = vand.u32 %v2711, 4294901760
        %v2713 = vsub.f32 %v2711, %v2712
        %v2714 = vand.u32 %v2713, 4294901760
        %2715 = vmatmul.mubr.f32.gmra.mrb[0].mxu0 %v2714
        %v2716 = vpop.f32.mrb[0].mxu0
        %v2717 = vadd.f32 0.0, %v2716
        %v2718 = vpop.f32.mrb[0].mxu0
        %2719 = vmatprep.mubr.f32.mxu0 0.0
        %v2720 = vand.u32 %v2595, 4294901760
        %v2721 = vsub.f32 %v2595, %v2720
        %v2722 = vand.u32 %v2721, 4294901760
        %v2723 = vsub.f32 %v2721, %v2722
        %v2724 = vand.u32 %v2723, 4294901760
        %2725 = vmatmul.mubr.f32.gmra.mrb[0].mxu0 %v2724
        %v2726 = vpop.f32.mrb[0].mxu0
        %v2727 = vadd.f32 0.0, %v2726
        %v2728 = vpop.f32.mrb[0].mxu0
        %2729 = vdwg.mxu0
        %2730 = vmatprep.subr.mxu0 0.0
        %v2731 = vand.u32 %v2597, 4294901760
        %v2732 = vsub.f32 %v2597, %v2731
        %v2733 = vand.u32 %v2732, 4294901760
        %v2734 = vsub.f32 %v2732, %v2733
        %v2735 = vand.u32 %v2734, 4294901760
        %2736 = vmatpush1.xpose.msra.mxu0 %v2735
        %2737 = vmatprep.subr.mxu0 0.0
        %v2738 = vand.u32 %v2599, 4294901760
        %v2739 = vsub.f32 %v2599, %v2738
        %v2740 = vand.u32 %v2739, 4294901760
        %v2741 = vsub.f32 %v2739, %v2740
        %v2742 = vand.u32 %v2741, 4294901760
        %2743 = vmatpush1.xpose.msra.mxu0 %v2742
        %2744 = vmatprep.subr.mxu0 0.0
        %v2745 = vand.u32 %v2601, 4294901760
        %v2746 = vsub.f32 %v2601, %v2745
        %v2747 = vand.u32 %v2746, 4294901760
        %v2748 = vsub.f32 %v2746, %v2747
        %v2749 = vand.u32 %v2748, 4294901760
        %2750 = vmatpush1.xpose.msra.mxu0 %v2749
        %2751 = vmatprep.subr.mxu0 0.0
        %v2752 = vand.u32 %v2603, 4294901760
        %v2753 = vsub.f32 %v2603, %v2752
        %v2754 = vand.u32 %v2753, 4294901760
        %v2755 = vsub.f32 %v2753, %v2754
        %v2756 = vand.u32 %v2755, 4294901760
        %2757 = vmatpush1.xpose.msra.mxu0 %v2756
        %2758 = vmatprep.subr.mxu0 0.0
        %v2759 = vand.u32 %v2605, 4294901760
        %v2760 = vsub.f32 %v2605, %v2759
        %v2761 = vand.u32 %v2760, 4294901760
        %v2762 = vsub.f32 %v2760, %v2761
        %v2763 = vand.u32 %v2762, 4294901760
        %2764 = vmatpush1.xpose.msra.mxu0 %v2763
        %2765 = vmatprep.subr.mxu0 0.0
        %v2766 = vand.u32 %v2607, 4294901760
        %v2767 = vsub.f32 %v2607, %v2766
        %v2768 = vand.u32 %v2767, 4294901760
        %v2769 = vsub.f32 %v2767, %v2768
        %v2770 = vand.u32 %v2769, 4294901760
        %2771 = vmatpush1.xpose.msra.mxu0 %v2770
        %2772 = vmatprep.subr.mxu0 0.0
        %v2773 = vand.u32 %v2609, 4294901760
        %v2774 = vsub.f32 %v2609, %v2773
        %v2775 = vand.u32 %v2774, 4294901760
        %v2776 = vsub.f32 %v2774, %v2775
        %v2777 = vand.u32 %v2776, 4294901760
        %2778 = vmatpush1.xpose.msra.mxu0 %v2777
        %2779 = vmatprep.subr.mxu0 0.0
        %v2780 = vand.u32 %v2611, 4294901760
        %v2781 = vsub.f32 %v2611, %v2780
        %v2782 = vand.u32 %v2781, 4294901760
        %v2783 = vsub.f32 %v2781, %v2782
        %v2784 = vand.u32 %v2783, 4294901760
        %2785 = vmatpush1.xpose.msra.mxu0 %v2784
        %2786 = vmatprep.subr.mxu0 0.0
        %v2787 = vand.u32 %v2613, 4294901760
        %v2788 = vsub.f32 %v2613, %v2787
        %v2789 = vand.u32 %v2788, 4294901760
        %v2790 = vsub.f32 %v2788, %v2789
        %v2791 = vand.u32 %v2790, 4294901760
        %2792 = vmatpush1.xpose.msra.mxu0 %v2791
        %2793 = vmatprep.subr.mxu0 0.0
        %v2794 = vand.u32 %v2615, 4294901760
        %v2795 = vsub.f32 %v2615, %v2794
        %v2796 = vand.u32 %v2795, 4294901760
        %v2797 = vsub.f32 %v2795, %v2796
        %v2798 = vand.u32 %v2797, 4294901760
        %2799 = vmatpush1.xpose.msra.mxu0 %v2798
        %2800 = vmatprep.subr.mxu0 0.0
        %v2801 = vand.u32 %v2617, 4294901760
        %v2802 = vsub.f32 %v2617, %v2801
        %v2803 = vand.u32 %v2802, 4294901760
        %v2804 = vsub.f32 %v2802, %v2803
        %v2805 = vand.u32 %v2804, 4294901760
        %2806 = vmatpush1.xpose.msra.mxu0 %v2805
        %2807 = vmatprep.subr.mxu0 0.0
        %v2808 = vand.u32 %v2619, 4294901760
        %v2809 = vsub.f32 %v2619, %v2808
        %v2810 = vand.u32 %v2809, 4294901760
        %v2811 = vsub.f32 %v2809, %v2810
        %v2812 = vand.u32 %v2811, 4294901760
        %2813 = vmatpush1.xpose.msra.mxu0 %v2812
        %2814 = vmatprep.subr.mxu0 0.0
        %v2815 = vand.u32 %v2621, 4294901760
        %v2816 = vsub.f32 %v2621, %v2815
        %v2817 = vand.u32 %v2816, 4294901760
        %v2818 = vsub.f32 %v2816, %v2817
        %v2819 = vand.u32 %v2818, 4294901760
        %2820 = vmatpush1.xpose.msra.mxu0 %v2819
        %2821 = vmatprep.subr.mxu0 0.0
        %v2822 = vand.u32 %v2623, 4294901760
        %v2823 = vsub.f32 %v2623, %v2822
        %v2824 = vand.u32 %v2823, 4294901760
        %v2825 = vsub.f32 %v2823, %v2824
        %v2826 = vand.u32 %v2825, 4294901760
        %2827 = vmatpush1.xpose.msra.mxu0 %v2826
        %2828 = vmatprep.subr.mxu0 0.0
        %v2829 = vand.u32 %v2625, 4294901760
        %v2830 = vsub.f32 %v2625, %v2829
        %v2831 = vand.u32 %v2830, 4294901760
        %v2832 = vsub.f32 %v2830, %v2831
        %v2833 = vand.u32 %v2832, 4294901760
        %2834 = vmatpush1.xpose.msra.mxu0 %v2833
        %2835 = vmatprep.subr.mxu0 0.0
        %v2836 = vand.u32 %v2627, 4294901760
        %v2837 = vsub.f32 %v2627, %v2836
        %v2838 = vand.u32 %v2837, 4294901760
        %v2839 = vsub.f32 %v2837, %v2838
        %v2840 = vand.u32 %v2839, 4294901760
        %2841 = vmatpush1.xpose.msra.mxu0 %v2840
        %2842 = vmatprep.subr.mxu0 0.0
        %2843 = vmatpush1.xpose.msra.mxu0 0.0
        %2844 = vmatprep.subr.mxu0 0.0
        %2845 = vmatpush1.xpose.msra.mxu0 0.0
        %2846 = vmatprep.subr.mxu0 0.0
        %2847 = vmatpush1.xpose.msra.mxu0 0.0
        %2848 = vmatprep.subr.mxu0 0.0
        %2849 = vmatpush1.xpose.msra.mxu0 0.0
        %2850 = vmatprep.subr.mxu0 0.0
        %2851 = vmatpush1.xpose.msra.mxu0 0.0
        %2852 = vmatprep.subr.mxu0 0.0
        %2853 = vmatpush1.xpose.msra.mxu0 0.0
        %2854 = vmatprep.subr.mxu0 0.0
        %2855 = vmatpush1.xpose.msra.mxu0 0.0
        %2856 = vmatprep.subr.mxu0 0.0
        %2857 = vmatpush1.xpose.msra.mxu0 0.0
        %2858 = vmatprep.subr.mxu0 0.0
        %2859 = vmatpush1.xpose.msra.mxu0 0.0
        %2860 = vmatprep.subr.mxu0 0.0
        %2861 = vmatpush1.xpose.msra.mxu0 0.0
        %2862 = vmatprep.subr.mxu0 0.0
        %2863 = vmatpush1.xpose.msra.mxu0 0.0
        %2864 = vmatprep.subr.mxu0 0.0
        %2865 = vmatpush1.xpose.msra.mxu0 0.0
        %2866 = vmatprep.subr.mxu0 0.0
        %2867 = vmatpush1.xpose.msra.mxu0 0.0
        %2868 = vmatprep.subr.mxu0 0.0
        %2869 = vmatpush1.xpose.msra.mxu0 0.0
        %2870 = vmatprep.subr.mxu0 0.0
        %2871 = vmatpush1.xpose.msra.mxu0 0.0
        %2872 = vmatprep.subr.mxu0 0.0
        %2873 = vmatpush1.xpose.msra.mxu0 0.0
        %2874 = vmatprep.mubr.f32.mxu0 0.0
        %v2875 = vand.u32 %v2593, 4294901760
        %2876 = vmatmul.mubr.f32.gmra.mrb[0].mxu0 %v2875
        %v2877 = vpop.f32.mrb[0].mxu0
        %v2878 = vadd.f32 %v2717, %v2877
        %v2879 = vpop.f32.mrb[0].mxu0
        %2880 = vmatprep.mubr.f32.mxu0 0.0
        %v2881 = vand.u32 %v2595, 4294901760
        %2882 = vmatmul.mubr.f32.gmra.mrb[0].mxu0 %v2881
        %v2883 = vpop.f32.mrb[0].mxu0
        %v2884 = vadd.f32 %v2727, %v2883
        %v2885 = vpop.f32.mrb[0].mxu0
        %2886 = vdwg.mxu0
        %2887 = vmatprep.subr.mxu0 0.0
        %v2888 = vand.u32 %v2597, 4294901760
        %v2889 = vsub.f32 %v2597, %v2888
        %2890 = vmatpush1.xpose.msra.mxu0 %v2889
        %2891 = vmatprep.subr.mxu0 0.0
        %v2892 = vand.u32 %v2599, 4294901760
        %v2893 = vsub.f32 %v2599, %v2892
        %2894 = vmatpush1.xpose.msra.mxu0 %v2893
        %2895 = vmatprep.subr.mxu0 0.0
        %v2896 = vand.u32 %v2601, 4294901760
        %v2897 = vsub.f32 %v2601, %v2896
        %2898 = vmatpush1.xpose.msra.mxu0 %v2897
        %2899 = vmatprep.subr.mxu0 0.0
        %v2900 = vand.u32 %v2603, 4294901760
        %v2901 = vsub.f32 %v2603, %v2900
        %2902 = vmatpush1.xpose.msra.mxu0 %v2901
        %2903 = vmatprep.subr.mxu0 0.0
        %v2904 = vand.u32 %v2605, 4294901760
        %v2905 = vsub.f32 %v2605, %v2904
        %2906 = vmatpush1.xpose.msra.mxu0 %v2905
        %2907 = vmatprep.subr.mxu0 0.0
        %v2908 = vand.u32 %v2607, 4294901760
        %v2909 = vsub.f32 %v2607, %v2908
        %2910 = vmatpush1.xpose.msra.mxu0 %v2909
        %2911 = vmatprep.subr.mxu0 0.0
        %v2912 = vand.u32 %v2609, 4294901760
        %v2913 = vsub.f32 %v2609, %v2912
        %2914 = vmatpush1.xpose.msra.mxu0 %v2913
        %2915 = vmatprep.subr.mxu0 0.0
        %v2916 = vand.u32 %v2611, 4294901760
        %v2917 = vsub.f32 %v2611, %v2916
        %2918 = vmatpush1.xpose.msra.mxu0 %v2917
        %2919 = vmatprep.subr.mxu0 0.0
        %v2920 = vand.u32 %v2613, 4294901760
        %v2921 = vsub.f32 %v2613, %v2920
        %2922 = vmatpush1.xpose.msra.mxu0 %v2921
        %2923 = vmatprep.subr.mxu0 0.0
        %v2924 = vand.u32 %v2615, 4294901760
        %v2925 = vsub.f32 %v2615, %v2924
        %2926 = vmatpush1.xpose.msra.mxu0 %v2925
        %2927 = vmatprep.subr.mxu0 0.0
        %v2928 = vand.u32 %v2617, 4294901760
        %v2929 = vsub.f32 %v2617, %v2928
        %2930 = vmatpush1.xpose.msra.mxu0 %v2929
        %2931 = vmatprep.subr.mxu0 0.0
        %v2932 = vand.u32 %v2619, 4294901760
        %v2933 = vsub.f32 %v2619, %v2932
        %2934 = vmatpush1.xpose.msra.mxu0 %v2933
        %2935 = vmatprep.subr.mxu0 0.0
        %v2936 = vand.u32 %v2621, 4294901760
        %v2937 = vsub.f32 %v2621, %v2936
        %2938 = vmatpush1.xpose.msra.mxu0 %v2937
        %2939 = vmatprep.subr.mxu0 0.0
        %v2940 = vand.u32 %v2623, 4294901760
        %v2941 = vsub.f32 %v2623, %v2940
        %2942 = vmatpush1.xpose.msra.mxu0 %v2941
        %2943 = vmatprep.subr.mxu0 0.0
        %v2944 = vand.u32 %v2625, 4294901760
        %v2945 = vsub.f32 %v2625, %v2944
        %2946 = vmatpush1.xpose.msra.mxu0 %v2945
        %2947 = vmatprep.subr.mxu0 0.0
        %v2948 = vand.u32 %v2627, 4294901760
        %v2949 = vsub.f32 %v2627, %v2948
        %2950 = vmatpush1.xpose.msra.mxu0 %v2949
        %2951 = vmatprep.subr.mxu0 0.0
        %2952 = vmatpush1.xpose.msra.mxu0 0.0
        %2953 = vmatprep.subr.mxu0 0.0
        %2954 = vmatpush1.xpose.msra.mxu0 0.0
        %2955 = vmatprep.subr.mxu0 0.0
        %2956 = vmatpush1.xpose.msra.mxu0 0.0
        %2957 = vmatprep.subr.mxu0 0.0
        %2958 = vmatpush1.xpose.msra.mxu0 0.0
        %2959 = vmatprep.subr.mxu0 0.0
        %2960 = vmatpush1.xpose.msra.mxu0 0.0
        %2961 = vmatprep.subr.mxu0 0.0
        %2962 = vmatpush1.xpose.msra.mxu0 0.0
        %2963 = vmatprep.subr.mxu0 0.0
        %2964 = vmatpush1.xpose.msra.mxu0 0.0
        %2965 = vmatprep.subr.mxu0 0.0
        %2966 = vmatpush1.xpose.msra.mxu0 0.0
        %2967 = vmatprep.subr.mxu0 0.0
        %2968 = vmatpush1.xpose.msra.mxu0 0.0
        %2969 = vmatprep.subr.mxu0 0.0
        %2970 = vmatpush1.xpose.msra.mxu0 0.0
        %2971 = vmatprep.subr.mxu0 0.0
        %2972 = vmatpush1.xpose.msra.mxu0 0.0
        %2973 = vmatprep.subr.mxu0 0.0
        %2974 = vmatpush1.xpose.msra.mxu0 0.0
        %2975 = vmatprep.subr.mxu0 0.0
        %2976 = vmatpush1.xpose.msra.mxu0 0.0
        %2977 = vmatprep.subr.mxu0 0.0
        %2978 = vmatpush1.xpose.msra.mxu0 0.0
        %2979 = vmatprep.subr.mxu0 0.0
        %2980 = vmatpush1.xpose.msra.mxu0 0.0
        %2981 = vmatprep.subr.mxu0 0.0
        %2982 = vmatpush1.xpose.msra.mxu0 0.0
        %2983 = vmatprep.mubr.f32.mxu0 0.0
        %v2984 = vand.u32 %v2593, 4294901760
        %v2985 = vsub.f32 %v2593, %v2984
        %2986 = vmatmul.mubr.f32.gmra.mrb[0].mxu0 %v2985
        %v2987 = vpop.f32.mrb[0].mxu0
        %v2988 = vadd.f32 %v2878, %v2987
        %v2989 = vpop.f32.mrb[0].mxu0
        %2990 = vmatprep.mubr.f32.mxu0 0.0
        %v2991 = vand.u32 %v2595, 4294901760
        %v2992 = vsub.f32 %v2595, %v2991
        %2993 = vmatmul.mubr.f32.gmra.mrb[0].mxu0 %v2992
        %v2994 = vpop.f32.mrb[0].mxu0
        %v2995 = vadd.f32 %v2884, %v2994
        %v2996 = vpop.f32.mrb[0].mxu0
        %2997 = vdwg.mxu0
        %2998 = vmatprep.subr.mxu0 0.0
        %v2999 = vand.u32 %v2597, 4294901760
        %3000 = vmatpush1.xpose.msra.mxu0 %v2999
        %3001 = vmatprep.subr.mxu0 0.0
        %v3002 = vand.u32 %v2599, 4294901760
        %3003 = vmatpush1.xpose.msra.mxu0 %v3002
        %3004 = vmatprep.subr.mxu0 0.0
        %v3005 = vand.u32 %v2601, 4294901760
        %3006 = vmatpush1.xpose.msra.mxu0 %v3005
        %3007 = vmatprep.subr.mxu0 0.0
        %v3008 = vand.u32 %v2603, 4294901760
        %3009 = vmatpush1.xpose.msra.mxu0 %v3008
        %3010 = vmatprep.subr.mxu0 0.0
        %v3011 = vand.u32 %v2605, 4294901760
        %3012 = vmatpush1.xpose.msra.mxu0 %v3011
        %3013 = vmatprep.subr.mxu0 0.0
        %v3014 = vand.u32 %v2607, 4294901760
        %3015 = vmatpush1.xpose.msra.mxu0 %v3014
        %3016 = vmatprep.subr.mxu0 0.0
        %v3017 = vand.u32 %v2609, 4294901760
        %3018 = vmatpush1.xpose.msra.mxu0 %v3017
        %3019 = vmatprep.subr.mxu0 0.0
        %v3020 = vand.u32 %v2611, 4294901760
        %3021 = vmatpush1.xpose.msra.mxu0 %v3020
        %3022 = vmatprep.subr.mxu0 0.0
        %v3023 = vand.u32 %v2613, 4294901760
        %3024 = vmatpush1.xpose.msra.mxu0 %v3023
        %3025 = vmatprep.subr.mxu0 0.0
        %v3026 = vand.u32 %v2615, 4294901760
        %3027 = vmatpush1.xpose.msra.mxu0 %v3026
        %3028 = vmatprep.subr.mxu0 0.0
        %v3029 = vand.u32 %v2617, 4294901760
        %3030 = vmatpush1.xpose.msra.mxu0 %v3029
        %3031 = vmatprep.subr.mxu0 0.0
        %v3032 = vand.u32 %v2619, 4294901760
        %3033 = vmatpush1.xpose.msra.mxu0 %v3032
        %3034 = vmatprep.subr.mxu0 0.0
        %v3035 = vand.u32 %v2621, 4294901760
        %3036 = vmatpush1.xpose.msra.mxu0 %v3035
        %3037 = vmatprep.subr.mxu0 0.0
        %v3038 = vand.u32 %v2623, 4294901760
        %3039 = vmatpush1.xpose.msra.mxu0 %v3038
        %3040 = vmatprep.subr.mxu0 0.0
        %v3041 = vand.u32 %v2625, 4294901760
        %3042 = vmatpush1.xpose.msra.mxu0 %v3041
        %3043 = vmatprep.subr.mxu0 0.0
        %v3044 = vand.u32 %v2627, 4294901760
        %3045 = vmatpush1.xpose.msra.mxu0 %v3044
        %3046 = vmatprep.subr.mxu0 0.0
        %3047 = vmatpush1.xpose.msra.mxu0 0.0
        %3048 = vmatprep.subr.mxu0 0.0
        %3049 = vmatpush1.xpose.msra.mxu0 0.0
        %3050 = vmatprep.subr.mxu0 0.0
        %3051 = vmatpush1.xpose.msra.mxu0 0.0
        %3052 = vmatprep.subr.mxu0 0.0
        %3053 = vmatpush1.xpose.msra.mxu0 0.0
        %3054 = vmatprep.subr.mxu0 0.0
        %3055 = vmatpush1.xpose.msra.mxu0 0.0
        %3056 = vmatprep.subr.mxu0 0.0
        %3057 = vmatpush1.xpose.msra.mxu0 0.0
        %3058 = vmatprep.subr.mxu0 0.0
        %3059 = vmatpush1.xpose.msra.mxu0 0.0
        %3060 = vmatprep.subr.mxu0 0.0
        %3061 = vmatpush1.xpose.msra.mxu0 0.0
        %3062 = vmatprep.subr.mxu0 0.0
        %3063 = vmatpush1.xpose.msra.mxu0 0.0
        %3064 = vmatprep.subr.mxu0 0.0
        %3065 = vmatpush1.xpose.msra.mxu0 0.0
        %3066 = vmatprep.subr.mxu0 0.0
        %3067 = vmatpush1.xpose.msra.mxu0 0.0
        %3068 = vmatprep.subr.mxu0 0.0
        %3069 = vmatpush1.xpose.msra.mxu0 0.0
        %3070 = vmatprep.subr.mxu0 0.0
        %3071 = vmatpush1.xpose.msra.mxu0 0.0
        %3072 = vmatprep.subr.mxu0 0.0
        %3073 = vmatpush1.xpose.msra.mxu0 0.0
        %3074 = vmatprep.subr.mxu0 0.0
        %3075 = vmatpush1.xpose.msra.mxu0 0.0
        %3076 = vmatprep.subr.mxu0 0.0
        %3077 = vmatpush1.xpose.msra.mxu0 0.0
        %3078 = vmatprep.mubr.f32.mxu0 0.0
        %v3079 = vand.u32 %v2593, 4294901760
        %v3080 = vsub.f32 %v2593, %v3079
        %v3081 = vand.u32 %v3080, 4294901760
        %3082 = vmatmul.mubr.f32.gmra.mrb[0].mxu0 %v3081
        %v3083 = vpop.f32.mrb[0].mxu0
        %v3084 = vadd.f32 %v2988, %v3083
        %v3085 = vpop.f32.mrb[0].mxu0
        %3086 = vmatprep.mubr.f32.mxu0 0.0
        %v3087 = vand.u32 %v2595, 4294901760
        %v3088 = vsub.f32 %v2595, %v3087
        %v3089 = vand.u32 %v3088, 4294901760
        %3090 = vmatmul.mubr.f32.gmra.mrb[0].mxu0 %v3089
        %v3091 = vpop.f32.mrb[0].mxu0
        %v3092 = vadd.f32 %v2995, %v3091
        %v3093 = vpop.f32.mrb[0].mxu0
        %3094 = vdwg.mxu0
        %3095 = vmatprep.subr.mxu0 0.0
        %v3096 = vand.u32 %v2597, 4294901760
        %v3097 = vsub.f32 %v2597, %v3096
        %v3098 = vand.u32 %v3097, 4294901760
        %3099 = vmatpush1.xpose.msra.mxu0 %v3098
        %3100 = vmatprep.subr.mxu0 0.0
        %v3101 = vand.u32 %v2599, 4294901760
        %v3102 = vsub.f32 %v2599, %v3101
        %v3103 = vand.u32 %v3102, 4294901760
        %3104 = vmatpush1.xpose.msra.mxu0 %v3103
        %3105 = vmatprep.subr.mxu0 0.0
        %v3106 = vand.u32 %v2601, 4294901760
        %v3107 = vsub.f32 %v2601, %v3106
        %v3108 = vand.u32 %v3107, 4294901760
        %3109 = vmatpush1.xpose.msra.mxu0 %v3108
        %3110 = vmatprep.subr.mxu0 0.0
        %v3111 = vand.u32 %v2603, 4294901760
        %v3112 = vsub.f32 %v2603, %v3111
        %v3113 = vand.u32 %v3112, 4294901760
        %3114 = vmatpush1.xpose.msra.mxu0 %v3113
        %3115 = vmatprep.subr.mxu0 0.0
        %v3116 = vand.u32 %v2605, 4294901760
        %v3117 = vsub.f32 %v2605, %v3116
        %v3118 = vand.u32 %v3117, 4294901760
        %3119 = vmatpush1.xpose.msra.mxu0 %v3118
        %3120 = vmatprep.subr.mxu0 0.0
        %v3121 = vand.u32 %v2607, 4294901760
        %v3122 = vsub.f32 %v2607, %v3121
        %v3123 = vand.u32 %v3122, 4294901760
        %3124 = vmatpush1.xpose.msra.mxu0 %v3123
        %3125 = vmatprep.subr.mxu0 0.0
        %v3126 = vand.u32 %v2609, 4294901760
        %v3127 = vsub.f32 %v2609, %v3126
        %v3128 = vand.u32 %v3127, 4294901760
        %3129 = vmatpush1.xpose.msra.mxu0 %v3128
        %3130 = vmatprep.subr.mxu0 0.0
        %v3131 = vand.u32 %v2611, 4294901760
        %v3132 = vsub.f32 %v2611, %v3131
        %v3133 = vand.u32 %v3132, 4294901760
        %3134 = vmatpush1.xpose.msra.mxu0 %v3133
        %3135 = vmatprep.subr.mxu0 0.0
        %v3136 = vand.u32 %v2613, 4294901760
        %v3137 = vsub.f32 %v2613, %v3136
        %v3138 = vand.u32 %v3137, 4294901760
        %3139 = vmatpush1.xpose.msra.mxu0 %v3138
        %3140 = vmatprep.subr.mxu0 0.0
        %v3141 = vand.u32 %v2615, 4294901760
        %v3142 = vsub.f32 %v2615, %v3141
        %v3143 = vand.u32 %v3142, 4294901760
        %3144 = vmatpush1.xpose.msra.mxu0 %v3143
        %3145 = vmatprep.subr.mxu0 0.0
        %v3146 = vand.u32 %v2617, 4294901760
        %v3147 = vsub.f32 %v2617, %v3146
        %v3148 = vand.u32 %v3147, 4294901760
        %3149 = vmatpush1.xpose.msra.mxu0 %v3148
        %3150 = vmatprep.subr.mxu0 0.0
        %v3151 = vand.u32 %v2619, 4294901760
        %v3152 = vsub.f32 %v2619, %v3151
        %v3153 = vand.u32 %v3152, 4294901760
        %3154 = vmatpush1.xpose.msra.mxu0 %v3153
        %3155 = vmatprep.subr.mxu0 0.0
        %v3156 = vand.u32 %v2621, 4294901760
        %v3157 = vsub.f32 %v2621, %v3156
        %v3158 = vand.u32 %v3157, 4294901760
        %3159 = vmatpush1.xpose.msra.mxu0 %v3158
        %3160 = vmatprep.subr.mxu0 0.0
        %v3161 = vand.u32 %v2623, 4294901760
        %v3162 = vsub.f32 %v2623, %v3161
        %v3163 = vand.u32 %v3162, 4294901760
        %3164 = vmatpush1.xpose.msra.mxu0 %v3163
        %3165 = vmatprep.subr.mxu0 0.0
        %v3166 = vand.u32 %v2625, 4294901760
        %v3167 = vsub.f32 %v2625, %v3166
        %v3168 = vand.u32 %v3167, 4294901760
        %3169 = vmatpush1.xpose.msra.mxu0 %v3168
        %3170 = vmatprep.subr.mxu0 0.0
        %v3171 = vand.u32 %v2627, 4294901760
        %v3172 = vsub.f32 %v2627, %v3171
        %v3173 = vand.u32 %v3172, 4294901760
        %3174 = vmatpush1.xpose.msra.mxu0 %v3173
        %3175 = vmatprep.subr.mxu0 0.0
        %3176 = vmatpush1.xpose.msra.mxu0 0.0
        %3177 = vmatprep.subr.mxu0 0.0
        %3178 = vmatpush1.xpose.msra.mxu0 0.0
        %3179 = vmatprep.subr.mxu0 0.0
        %3180 = vmatpush1.xpose.msra.mxu0 0.0
        %3181 = vmatprep.subr.mxu0 0.0
        %3182 = vmatpush1.xpose.msra.mxu0 0.0
        %3183 = vmatprep.subr.mxu0 0.0
        %3184 = vmatpush1.xpose.msra.mxu0 0.0
        %3185 = vmatprep.subr.mxu0 0.0
        %3186 = vmatpush1.xpose.msra.mxu0 0.0
        %3187 = vmatprep.subr.mxu0 0.0
        %3188 = vmatpush1.xpose.msra.mxu0 0.0
        %3189 = vmatprep.subr.mxu0 0.0
        %3190 = vmatpush1.xpose.msra.mxu0 0.0
        %3191 = vmatprep.subr.mxu0 0.0
        %3192 = vmatpush1.xpose.msra.mxu0 0.0
        %3193 = vmatprep.subr.mxu0 0.0
        %3194 = vmatpush1.xpose.msra.mxu0 0.0
        %3195 = vmatprep.subr.mxu0 0.0
        %3196 = vmatpush1.xpose.msra.mxu0 0.0
        %3197 = vmatprep.subr.mxu0 0.0
        %3198 = vmatpush1.xpose.msra.mxu0 0.0
        %3199 = vmatprep.subr.mxu0 0.0
        %3200 = vmatpush1.xpose.msra.mxu0 0.0
        %3201 = vmatprep.subr.mxu0 0.0
        %3202 = vmatpush1.xpose.msra.mxu0 0.0
        %3203 = vmatprep.subr.mxu0 0.0
        %3204 = vmatpush1.xpose.msra.mxu0 0.0
        %3205 = vmatprep.subr.mxu0 0.0
        %3206 = vmatpush1.xpose.msra.mxu0 0.0
        %3207 = vmatprep.mubr.f32.mxu0 0.0
        %v3208 = vand.u32 %v2593, 4294901760
        %3209 = vmatmul.mubr.f32.gmra.mrb[0].mxu0 %v3208
        %v3210 = vpop.f32.mrb[0].mxu0
        %v3211 = vadd.f32 %v3084, %v3210
        %v3212 = vpop.f32.mrb[0].mxu0
        %3213 = vmatprep.mubr.f32.mxu0 0.0
        %v3214 = vand.u32 %v2595, 4294901760
        %3215 = vmatmul.mubr.f32.gmra.mrb[0].mxu0 %v3214
        %v3216 = vpop.f32.mrb[0].mxu0
        %v3217 = vadd.f32 %v3092, %v3216
        %v3218 = vpop.f32.mrb[0].mxu0
        %3219 = vdwg.mxu0
        %3220 = vmatprep.subr.mxu0 0.0
        %v3221 = vand.u32 %v2597, 4294901760
        %3222 = vmatpush1.xpose.msra.mxu0 %v3221
        %3223 = vmatprep.subr.mxu0 0.0
        %v3224 = vand.u32 %v2599, 4294901760
        %3225 = vmatpush1.xpose.msra.mxu0 %v3224
        %3226 = vmatprep.subr.mxu0 0.0
        %v3227 = vand.u32 %v2601, 4294901760
        %3228 = vmatpush1.xpose.msra.mxu0 %v3227
        %3229 = vmatprep.subr.mxu0 0.0
        %v3230 = vand.u32 %v2603, 4294901760
        %3231 = vmatpush1.xpose.msra.mxu0 %v3230
        %3232 = vmatprep.subr.mxu0 0.0
        %v3233 = vand.u32 %v2605, 4294901760
        %3234 = vmatpush1.xpose.msra.mxu0 %v3233
        %3235 = vmatprep.subr.mxu0 0.0
        %v3236 = vand.u32 %v2607, 4294901760
        %3237 = vmatpush1.xpose.msra.mxu0 %v3236
        %3238 = vmatprep.subr.mxu0 0.0
        %v3239 = vand.u32 %v2609, 4294901760
        %3240 = vmatpush1.xpose.msra.mxu0 %v3239
        %3241 = vmatprep.subr.mxu0 0.0
        %v3242 = vand.u32 %v2611, 4294901760
        %3243 = vmatpush1.xpose.msra.mxu0 %v3242
        %3244 = vmatprep.subr.mxu0 0.0
        %v3245 = vand.u32 %v2613, 4294901760
        %3246 = vmatpush1.xpose.msra.mxu0 %v3245
        %3247 = vmatprep.subr.mxu0 0.0
        %v3248 = vand.u32 %v2615, 4294901760
        %3249 = vmatpush1.xpose.msra.mxu0 %v3248
        %3250 = vmatprep.subr.mxu0 0.0
        %v3251 = vand.u32 %v2617, 4294901760
        %3252 = vmatpush1.xpose.msra.mxu0 %v3251
        %3253 = vmatprep.subr.mxu0 0.0
        %v3254 = vand.u32 %v2619, 4294901760
        %3255 = vmatpush1.xpose.msra.mxu0 %v3254
        %3256 = vmatprep.subr.mxu0 0.0
        %v3257 = vand.u32 %v2621, 4294901760
        %3258 = vmatpush1.xpose.msra.mxu0 %v3257
        %3259 = vmatprep.subr.mxu0 0.0
        %v3260 = vand.u32 %v2623, 4294901760
        %3261 = vmatpush1.xpose.msra.mxu0 %v3260
        %3262 = vmatprep.subr.mxu0 0.0
        %v3263 = vand.u32 %v2625, 4294901760
        %3264 = vmatpush1.xpose.msra.mxu0 %v3263
        %3265 = vmatprep.subr.mxu0 0.0
        %v3266 = vand.u32 %v2627, 4294901760
        %3267 = vmatpush1.xpose.msra.mxu0 %v3266
        %3268 = vmatprep.subr.mxu0 0.0
        %3269 = vmatpush1.xpose.msra.mxu0 0.0
        %3270 = vmatprep.subr.mxu0 0.0
        %3271 = vmatpush1.xpose.msra.mxu0 0.0
        %3272 = vmatprep.subr.mxu0 0.0
        %3273 = vmatpush1.xpose.msra.mxu0 0.0
        %3274 = vmatprep.subr.mxu0 0.0
        %3275 = vmatpush1.xpose.msra.mxu0 0.0
        %3276 = vmatprep.subr.mxu0 0.0
        %3277 = vmatpush1.xpose.msra.mxu0 0.0
        %3278 = vmatprep.subr.mxu0 0.0
        %3279 = vmatpush1.xpose.msra.mxu0 0.0
        %3280 = vmatprep.subr.mxu0 0.0
        %3281 = vmatpush1.xpose.msra.mxu0 0.0
        %3282 = vmatprep.subr.mxu0 0.0
        %3283 = vmatpush1.xpose.msra.mxu0 0.0
        %3284 = vmatprep.subr.mxu0 0.0
        %3285 = vmatpush1.xpose.msra.mxu0 0.0
        %3286 = vmatprep.subr.mxu0 0.0
        %3287 = vmatpush1.xpose.msra.mxu0 0.0
        %3288 = vmatprep.subr.mxu0 0.0
        %3289 = vmatpush1.xpose.msra.mxu0 0.0
        %3290 = vmatprep.subr.mxu0 0.0
        %3291 = vmatpush1.xpose.msra.mxu0 0.0
        %3292 = vmatprep.subr.mxu0 0.0
        %3293 = vmatpush1.xpose.msra.mxu0 0.0
        %3294 = vmatprep.subr.mxu0 0.0
        %3295 = vmatpush1.xpose.msra.mxu0 0.0
        %3296 = vmatprep.subr.mxu0 0.0
        %3297 = vmatpush1.xpose.msra.mxu0 0.0
        %3298 = vmatprep.subr.mxu0 0.0
        %3299 = vmatpush1.xpose.msra.mxu0 0.0
        %3300 = vmatprep.mubr.f32.mxu0 0.0
        %v3301 = vand.u32 %v2593, 4294901760
        %3302 = vmatmul.mubr.f32.gmra.mrb[0].mxu0 %v3301
        %v3303 = vpop.f32.mrb[0].mxu0
        %v3304 = vadd.f32 %v3211, %v3303
        %v3305 = vpop.f32.mrb[0].mxu0
        %3306 = vmatprep.mubr.f32.mxu0 0.0
        %v3307 = vand.u32 %v2595, 4294901760
        %3308 = vmatmul.mubr.f32.gmra.mrb[0].mxu0 %v3307
        %v3309 = vpop.f32.mrb[0].mxu0
        %v3310 = vadd.f32 %v3217, %v3309
        %v3311 = vpop.f32.mrb[0].mxu0
        %3312 = vdwg.mxu0
        %s3313 = scalar_lea.vmem [#allocation3], 16
        %v3314 = vld [vmem:[%s3313] sm:$0xff]
        %v3315 = vld [vmem:[%s3313 + $0x8] sm:$0xff]
        %3316 = vmax.xlane.f32.xlu0 %v3304
        %v3317 = vpop.xlane.xlu0 %3316
        %3318 = vmax.xlane.f32.xlu0 %v3310
        %v3319 = vpop.xlane.xlu0 %3318
        %v3320 = vmax.f32 %v3314, %v3317
        %v3321 = vmax.f32 %v3315, %v3319
        %v3322 = vsub.f32 %v3314, %v3320
        %v3323 = vsub.f32 %v3315, %v3321
        %v3324 = vmul.f32 %v3322, 1.442695
        %v3325 = vpow.pop %v3324
        %v3326 = vmul.f32 %v3323, 1.442695
        %v3327 = vpow.pop %v3326
        %3329 = vset.pattern.permute.xlu0 0
        %3330 = vperm.xlu0 %3329, %v3320
        %v3331 = vpop.permute.xlu0 %3330
        %3334 = vset.pattern.permute.xlu0 0
        %3335 = vperm.xlu0 %3334, %v3321
        %v3336 = vpop.permute.xlu0 %3335
        %v3338 = vsub.f32 %v3304, %v3331
        %v3339 = vsub.f32 %v3310, %v3336
        %v3340 = vmul.f32 %v3338, 1.442695
        %v3341 = vpow.pop %v3340
        %v3342 = vmul.f32 %v3339, 1.442695
        %v3343 = vpow.pop %v3342
        %v3344 = vmul.f32 %v3341, %v1031
        %v3345 = vmul.f32 %v3343, %v1032
        %s3346 = scalar_lea.vmem [#allocation4], 16
        %v3347 = vld [vmem:[%s3346] sm:$0xff]
        %v3348 = vld [vmem:[%s3346 + $0x8] sm:$0xff]
        %v3349 = vmul.f32 %v3325, %v3347
        %v3350 = vmul.f32 %v3327, %v3348
        %3351 = vadd.xlane.f32.xlu0 %v3344
        %v3352 = vpop.xlane.xlu0 %3351
        %3353 = vadd.xlane.f32.xlu0 %v3345
        %v3354 = vpop.xlane.xlu0 %3353
        %v3355 = vadd.f32 %v3349, %v3352
        %v3356 = vadd.f32 %v3350, %v3354
        %3357 = vst.msk [vmem:[%s3346] sm:$0xff] %vm1850, %v3355
        %3358 = vst.msk [vmem:[%s3346 + $0x8] sm:$0xff] %vm1850, %v3356
        %s3359 = scalar_lea.vmem [#allocation5], 16
        %v3360 = vld [vmem:[%s3359] sm:$0xff]
        %v3361 = vld [vmem:[%s3359 + $0x8] sm:$0xff]
        %3363 = vset.pattern.permute.xlu0 0
        %3364 = vperm.xlu0 %3363, %v3325
        %v3365 = vpop.permute.xlu0 %3364
        %3368 = vset.pattern.permute.xlu0 0
        %3369 = vperm.xlu0 %3368, %v3327
        %v3370 = vpop.permute.xlu0 %3369
        %v3372 = vmul.f32 %v3365, %v3360
        %v3373 = vmul.f32 %v3370, %v3361
        %3390 = vrot.lane.b32.xlu0 %v1034, 120
        %v3391 = vpop.permute.xlu0 %3390
        %3392 = vrot.lane.b32.xlu0 %v1036, 120
        %v3393 = vpop.permute.xlu0 %3392
        %3394 = vrot.lane.b32.xlu0 %v1038, 120
        %v3395 = vpop.permute.xlu0 %3394
        %3396 = vrot.lane.b32.xlu0 %v1040, 120
        %v3397 = vpop.permute.xlu0 %3396
        %3398 = vrot.lane.b32.xlu0 %v1042, 120
        %v3399 = vpop.permute.xlu0 %3398
        %3400 = vrot.lane.b32.xlu0 %v1044, 120
        %v3401 = vpop.permute.xlu0 %3400
        %3402 = vrot.lane.b32.xlu0 %v1046, 120
        %v3403 = vpop.permute.xlu0 %3402
        %3404 = vrot.lane.b32.xlu0 %v1048, 120
        %v3405 = vpop.permute.xlu0 %3404
        %3406 = vrot.lane.b32.xlu0 %v1050, 120
        %v3407 = vpop.permute.xlu0 %3406
        %3408 = vrot.lane.b32.xlu0 %v1052, 120
        %v3409 = vpop.permute.xlu0 %3408
        %3410 = vrot.lane.b32.xlu0 %v1054, 120
        %v3411 = vpop.permute.xlu0 %3410
        %3412 = vrot.lane.b32.xlu0 %v1056, 120
        %v3413 = vpop.permute.xlu0 %3412
        %3414 = vrot.lane.b32.xlu0 %v1058, 120
        %v3415 = vpop.permute.xlu0 %3414
        %3416 = vrot.lane.b32.xlu0 %v1060, 120
        %v3417 = vpop.permute.xlu0 %3416
        %3418 = vrot.lane.b32.xlu0 %v1062, 120
        %v3419 = vpop.permute.xlu0 %3418
        %3420 = vrot.lane.b32.xlu0 %v1064, 120
        %v3421 = vpop.permute.xlu0 %3420
        %3438 = vmatprep.subr.mxu0 0.0
        %v3439 = vand.u32 %v3391, 4294901760
        %3440 = vmatpush1.msra.mxu0 %v3439
        %3441 = vmatprep.subr.mxu0 0.0
        %v3442 = vand.u32 %v3393, 4294901760
        %3443 = vmatpush1.msra.mxu0 %v3442
        %3444 = vmatprep.subr.mxu0 0.0
        %v3445 = vand.u32 %v3395, 4294901760
        %3446 = vmatpush1.msra.mxu0 %v3445
        %3447 = vmatprep.subr.mxu0 0.0
        %v3448 = vand.u32 %v3397, 4294901760
        %3449 = vmatpush1.msra.mxu0 %v3448
        %3450 = vmatprep.subr.mxu0 0.0
        %v3451 = vand.u32 %v3399, 4294901760
        %3452 = vmatpush1.msra.mxu0 %v3451
        %3453 = vmatprep.subr.mxu0 0.0
        %v3454 = vand.u32 %v3401, 4294901760
        %3455 = vmatpush1.msra.mxu0 %v3454
        %3456 = vmatprep.subr.mxu0 0.0
        %v3457 = vand.u32 %v3403, 4294901760
        %3458 = vmatpush1.msra.mxu0 %v3457
        %3459 = vmatprep.subr.mxu0 0.0
        %v3460 = vand.u32 %v3405, 4294901760
        %3461 = vmatpush1.msra.mxu0 %v3460
        %3462 = vmatprep.subr.mxu0 0.0
        %v3463 = vand.u32 %v3407, 4294901760
        %3464 = vmatpush1.msra.mxu0 %v3463
        %3465 = vmatprep.subr.mxu0 0.0
        %v3466 = vand.u32 %v3409, 4294901760
        %3467 = vmatpush1.msra.mxu0 %v3466
        %3468 = vmatprep.subr.mxu0 0.0
        %v3469 = vand.u32 %v3411, 4294901760
        %3470 = vmatpush1.msra.mxu0 %v3469
        %3471 = vmatprep.subr.mxu0 0.0
        %v3472 = vand.u32 %v3413, 4294901760
        %3473 = vmatpush1.msra.mxu0 %v3472
        %3474 = vmatprep.subr.mxu0 0.0
        %v3475 = vand.u32 %v3415, 4294901760
        %3476 = vmatpush1.msra.mxu0 %v3475
        %3477 = vmatprep.subr.mxu0 0.0
        %v3478 = vand.u32 %v3417, 4294901760
        %3479 = vmatpush1.msra.mxu0 %v3478
        %3480 = vmatprep.subr.mxu0 0.0
        %v3481 = vand.u32 %v3419, 4294901760
        %3482 = vmatpush1.msra.mxu0 %v3481
        %3483 = vmatprep.subr.mxu0 0.0
        %v3484 = vand.u32 %v3421, 4294901760
        %3485 = vmatpush1.msra.mxu0 %v3484
        %3486 = vmatprep.subr.mxu0 0.0
        %3487 = vmatpush1.msra.mxu0 0.0
        %3488 = vmatprep.subr.mxu0 0.0
        %3489 = vmatpush1.msra.mxu0 0.0
        %3490 = vmatprep.subr.mxu0 0.0
        %3491 = vmatpush1.msra.mxu0 0.0
        %3492 = vmatprep.subr.mxu0 0.0
        %3493 = vmatpush1.msra.mxu0 0.0
        %3494 = vmatprep.subr.mxu0 0.0
        %3495 = vmatpush1.msra.mxu0 0.0
        %3496 = vmatprep.subr.mxu0 0.0
        %3497 = vmatpush1.msra.mxu0 0.0
        %3498 = vmatprep.subr.mxu0 0.0
        %3499 = vmatpush1.msra.mxu0 0.0
        %3500 = vmatprep.subr.mxu0 0.0
        %3501 = vmatpush1.msra.mxu0 0.0
        %3502 = vmatprep.subr.mxu0 0.0
        %3503 = vmatpush1.msra.mxu0 0.0
        %3504 = vmatprep.subr.mxu0 0.0
        %3505 = vmatpush1.msra.mxu0 0.0
        %3506 = vmatprep.subr.mxu0 0.0
        %3507 = vmatpush1.msra.mxu0 0.0
        %3508 = vmatprep.subr.mxu0 0.0
        %3509 = vmatpush1.msra.mxu0 0.0
        %3510 = vmatprep.subr.mxu0 0.0
        %3511 = vmatpush1.msra.mxu0 0.0
        %3512 = vmatprep.subr.mxu0 0.0
        %3513 = vmatpush1.msra.mxu0 0.0
        %3514 = vmatprep.subr.mxu0 0.0
        %3515 = vmatpush1.msra.mxu0 0.0
        %3516 = vmatprep.subr.mxu0 0.0
        %3517 = vmatpush1.msra.mxu0 0.0
        %3518 = vmatprep.mubr.f32.mxu0 0.0
        %v3519 = vand.u32 %v3344, 4294901760
        %v3520 = vsub.f32 %v3344, %v3519
        %v3521 = vand.u32 %v3520, 4294901760
        %v3522 = vsub.f32 %v3520, %v3521
        %v3523 = vand.u32 %v3522, 4294901760
        %3524 = vmatmul.mubr.f32.gmra.mrb[0].mxu0 %v3523
        %v3525 = vpop.f32.mrb[0].mxu0
        %v3526 = vadd.f32 0.0, %v3525
        %v3527 = vpop.f32.mrb[0].mxu0
        %3528 = vmatprep.mubr.f32.mxu0 0.0
        %v3529 = vand.u32 %v3345, 4294901760
        %v3530 = vsub.f32 %v3345, %v3529
        %v3531 = vand.u32 %v3530, 4294901760
        %v3532 = vsub.f32 %v3530, %v3531
        %v3533 = vand.u32 %v3532, 4294901760
        %3534 = vmatmul.mubr.f32.gmra.mrb[0].mxu0 %v3533
        %v3535 = vpop.f32.mrb[0].mxu0
        %v3536 = vadd.f32 0.0, %v3535
        %v3537 = vpop.f32.mrb[0].mxu0
        %3538 = vdwg.mxu0
        %3539 = vmatprep.subr.mxu0 0.0
        %v3540 = vand.u32 %v3391, 4294901760
        %v3541 = vsub.f32 %v3391, %v3540
        %v3542 = vand.u32 %v3541, 4294901760
        %v3543 = vsub.f32 %v3541, %v3542
        %v3544 = vand.u32 %v3543, 4294901760
        %3545 = vmatpush1.msra.mxu0 %v3544
        %3546 = vmatprep.subr.mxu0 0.0
        %v3547 = vand.u32 %v3393, 4294901760
        %v3548 = vsub.f32 %v3393, %v3547
        %v3549 = vand.u32 %v3548, 4294901760
        %v3550 = vsub.f32 %v3548, %v3549
        %v3551 = vand.u32 %v3550, 4294901760
        %3552 = vmatpush1.msra.mxu0 %v3551
        %3553 = vmatprep.subr.mxu0 0.0
        %v3554 = vand.u32 %v3395, 4294901760
        %v3555 = vsub.f32 %v3395, %v3554
        %v3556 = vand.u32 %v3555, 4294901760
        %v3557 = vsub.f32 %v3555, %v3556
        %v3558 = vand.u32 %v3557, 4294901760
        %3559 = vmatpush1.msra.mxu0 %v3558
        %3560 = vmatprep.subr.mxu0 0.0
        %v3561 = vand.u32 %v3397, 4294901760
        %v3562 = vsub.f32 %v3397, %v3561
        %v3563 = vand.u32 %v3562, 4294901760
        %v3564 = vsub.f32 %v3562, %v3563
        %v3565 = vand.u32 %v3564, 4294901760
        %3566 = vmatpush1.msra.mxu0 %v3565
        %3567 = vmatprep.subr.mxu0 0.0
        %v3568 = vand.u32 %v3399, 4294901760
        %v3569 = vsub.f32 %v3399, %v3568
        %v3570 = vand.u32 %v3569, 4294901760
        %v3571 = vsub.f32 %v3569, %v3570
        %v3572 = vand.u32 %v3571, 4294901760
        %3573 = vmatpush1.msra.mxu0 %v3572
        %3574 = vmatprep.subr.mxu0 0.0
        %v3575 = vand.u32 %v3401, 4294901760
        %v3576 = vsub.f32 %v3401, %v3575
        %v3577 = vand.u32 %v3576, 4294901760
        %v3578 = vsub.f32 %v3576, %v3577
        %v3579 = vand.u32 %v3578, 4294901760
        %3580 = vmatpush1.msra.mxu0 %v3579
        %3581 = vmatprep.subr.mxu0 0.0
        %v3582 = vand.u32 %v3403, 4294901760
        %v3583 = vsub.f32 %v3403, %v3582
        %v3584 = vand.u32 %v3583, 4294901760
        %v3585 = vsub.f32 %v3583, %v3584
        %v3586 = vand.u32 %v3585, 4294901760
        %3587 = vmatpush1.msra.mxu0 %v3586
        %3588 = vmatprep.subr.mxu0 0.0
        %v3589 = vand.u32 %v3405, 4294901760
        %v3590 = vsub.f32 %v3405, %v3589
        %v3591 = vand.u32 %v3590, 4294901760
        %v3592 = vsub.f32 %v3590, %v3591
        %v3593 = vand.u32 %v3592, 4294901760
        %3594 = vmatpush1.msra.mxu0 %v3593
        %3595 = vmatprep.subr.mxu0 0.0
        %v3596 = vand.u32 %v3407, 4294901760
        %v3597 = vsub.f32 %v3407, %v3596
        %v3598 = vand.u32 %v3597, 4294901760
        %v3599 = vsub.f32 %v3597, %v3598
        %v3600 = vand.u32 %v3599, 4294901760
        %3601 = vmatpush1.msra.mxu0 %v3600
        %3602 = vmatprep.subr.mxu0 0.0
        %v3603 = vand.u32 %v3409, 4294901760
        %v3604 = vsub.f32 %v3409, %v3603
        %v3605 = vand.u32 %v3604, 4294901760
        %v3606 = vsub.f32 %v3604, %v3605
        %v3607 = vand.u32 %v3606, 4294901760
        %3608 = vmatpush1.msra.mxu0 %v3607
        %3609 = vmatprep.subr.mxu0 0.0
        %v3610 = vand.u32 %v3411, 4294901760
        %v3611 = vsub.f32 %v3411, %v3610
        %v3612 = vand.u32 %v3611, 4294901760
        %v3613 = vsub.f32 %v3611, %v3612
        %v3614 = vand.u32 %v3613, 4294901760
        %3615 = vmatpush1.msra.mxu0 %v3614
        %3616 = vmatprep.subr.mxu0 0.0
        %v3617 = vand.u32 %v3413, 4294901760
        %v3618 = vsub.f32 %v3413, %v3617
        %v3619 = vand.u32 %v3618, 4294901760
        %v3620 = vsub.f32 %v3618, %v3619
        %v3621 = vand.u32 %v3620, 4294901760
        %3622 = vmatpush1.msra.mxu0 %v3621
        %3623 = vmatprep.subr.mxu0 0.0
        %v3624 = vand.u32 %v3415, 4294901760
        %v3625 = vsub.f32 %v3415, %v3624
        %v3626 = vand.u32 %v3625, 4294901760
        %v3627 = vsub.f32 %v3625, %v3626
        %v3628 = vand.u32 %v3627, 4294901760
        %3629 = vmatpush1.msra.mxu0 %v3628
        %3630 = vmatprep.subr.mxu0 0.0
        %v3631 = vand.u32 %v3417, 4294901760
        %v3632 = vsub.f32 %v3417, %v3631
        %v3633 = vand.u32 %v3632, 4294901760
        %v3634 = vsub.f32 %v3632, %v3633
        %v3635 = vand.u32 %v3634, 4294901760
        %3636 = vmatpush1.msra.mxu0 %v3635
        %3637 = vmatprep.subr.mxu0 0.0
        %v3638 = vand.u32 %v3419, 4294901760
        %v3639 = vsub.f32 %v3419, %v3638
        %v3640 = vand.u32 %v3639, 4294901760
        %v3641 = vsub.f32 %v3639, %v3640
        %v3642 = vand.u32 %v3641, 4294901760
        %3643 = vmatpush1.msra.mxu0 %v3642
        %3644 = vmatprep.subr.mxu0 0.0
        %v3645 = vand.u32 %v3421, 4294901760
        %v3646 = vsub.f32 %v3421, %v3645
        %v3647 = vand.u32 %v3646, 4294901760
        %v3648 = vsub.f32 %v3646, %v3647
        %v3649 = vand.u32 %v3648, 4294901760
        %3650 = vmatpush1.msra.mxu0 %v3649
        %3651 = vmatprep.subr.mxu0 0.0
        %3652 = vmatpush1.msra.mxu0 0.0
        %3653 = vmatprep.subr.mxu0 0.0
        %3654 = vmatpush1.msra.mxu0 0.0
        %3655 = vmatprep.subr.mxu0 0.0
        %3656 = vmatpush1.msra.mxu0 0.0
        %3657 = vmatprep.subr.mxu0 0.0
        %3658 = vmatpush1.msra.mxu0 0.0
        %3659 = vmatprep.subr.mxu0 0.0
        %3660 = vmatpush1.msra.mxu0 0.0
        %3661 = vmatprep.subr.mxu0 0.0
        %3662 = vmatpush1.msra.mxu0 0.0
        %3663 = vmatprep.subr.mxu0 0.0
        %3664 = vmatpush1.msra.mxu0 0.0
        %3665 = vmatprep.subr.mxu0 0.0
        %3666 = vmatpush1.msra.mxu0 0.0
        %3667 = vmatprep.subr.mxu0 0.0
        %3668 = vmatpush1.msra.mxu0 0.0
        %3669 = vmatprep.subr.mxu0 0.0
        %3670 = vmatpush1.msra.mxu0 0.0
        %3671 = vmatprep.subr.mxu0 0.0
        %3672 = vmatpush1.msra.mxu0 0.0
        %3673 = vmatprep.subr.mxu0 0.0
        %3674 = vmatpush1.msra.mxu0 0.0
        %3675 = vmatprep.subr.mxu0 0.0
        %3676 = vmatpush1.msra.mxu0 0.0
        %3677 = vmatprep.subr.mxu0 0.0
        %3678 = vmatpush1.msra.mxu0 0.0
        %3679 = vmatprep.subr.mxu0 0.0
        %3680 = vmatpush1.msra.mxu0 0.0
        %3681 = vmatprep.subr.mxu0 0.0
        %3682 = vmatpush1.msra.mxu0 0.0
        %3683 = vmatprep.mubr.f32.mxu0 0.0
        %v3684 = vand.u32 %v3344, 4294901760
        %3685 = vmatmul.mubr.f32.gmra.mrb[0].mxu0 %v3684
        %v3686 = vpop.f32.mrb[0].mxu0
        %v3687 = vadd.f32 %v3526, %v3686
        %v3688 = vpop.f32.mrb[0].mxu0
        %3689 = vmatprep.mubr.f32.mxu0 0.0
        %v3690 = vand.u32 %v3345, 4294901760
        %3691 = vmatmul.mubr.f32.gmra.mrb[0].mxu0 %v3690
        %v3692 = vpop.f32.mrb[0].mxu0
        %v3693 = vadd.f32 %v3536, %v3692
        %v3694 = vpop.f32.mrb[0].mxu0
        %3695 = vdwg.mxu0
        %3696 = vmatprep.subr.mxu0 0.0
        %v3697 = vand.u32 %v3391, 4294901760
        %v3698 = vsub.f32 %v3391, %v3697
        %3699 = vmatpush1.msra.mxu0 %v3698
        %3700 = vmatprep.subr.mxu0 0.0
        %v3701 = vand.u32 %v3393, 4294901760
        %v3702 = vsub.f32 %v3393, %v3701
        %3703 = vmatpush1.msra.mxu0 %v3702
        %3704 = vmatprep.subr.mxu0 0.0
        %v3705 = vand.u32 %v3395, 4294901760
        %v3706 = vsub.f32 %v3395, %v3705
        %3707 = vmatpush1.msra.mxu0 %v3706
        %3708 = vmatprep.subr.mxu0 0.0
        %v3709 = vand.u32 %v3397, 4294901760
        %v3710 = vsub.f32 %v3397, %v3709
        %3711 = vmatpush1.msra.mxu0 %v3710
        %3712 = vmatprep.subr.mxu0 0.0
        %v3713 = vand.u32 %v3399, 4294901760
        %v3714 = vsub.f32 %v3399, %v3713
        %3715 = vmatpush1.msra.mxu0 %v3714
        %3716 = vmatprep.subr.mxu0 0.0
        %v3717 = vand.u32 %v3401, 4294901760
        %v3718 = vsub.f32 %v3401, %v3717
        %3719 = vmatpush1.msra.mxu0 %v3718
        %3720 = vmatprep.subr.mxu0 0.0
        %v3721 = vand.u32 %v3403, 4294901760
        %v3722 = vsub.f32 %v3403, %v3721
        %3723 = vmatpush1.msra.mxu0 %v3722
        %3724 = vmatprep.subr.mxu0 0.0
        %v3725 = vand.u32 %v3405, 4294901760
        %v3726 = vsub.f32 %v3405, %v3725
        %3727 = vmatpush1.msra.mxu0 %v3726
        %3728 = vmatprep.subr.mxu0 0.0
        %v3729 = vand.u32 %v3407, 4294901760
        %v3730 = vsub.f32 %v3407, %v3729
        %3731 = vmatpush1.msra.mxu0 %v3730
        %3732 = vmatprep.subr.mxu0 0.0
        %v3733 = vand.u32 %v3409, 4294901760
        %v3734 = vsub.f32 %v3409, %v3733
        %3735 = vmatpush1.msra.mxu0 %v3734
        %3736 = vmatprep.subr.mxu0 0.0
        %v3737 = vand.u32 %v3411, 4294901760
        %v3738 = vsub.f32 %v3411, %v3737
        %3739 = vmatpush1.msra.mxu0 %v3738
        %3740 = vmatprep.subr.mxu0 0.0
        %v3741 = vand.u32 %v3413, 4294901760
        %v3742 = vsub.f32 %v3413, %v3741
        %3743 = vmatpush1.msra.mxu0 %v3742
        %3744 = vmatprep.subr.mxu0 0.0
        %v3745 = vand.u32 %v3415, 4294901760
        %v3746 = vsub.f32 %v3415, %v3745
        %3747 = vmatpush1.msra.mxu0 %v3746
        %3748 = vmatprep.subr.mxu0 0.0
        %v3749 = vand.u32 %v3417, 4294901760
        %v3750 = vsub.f32 %v3417, %v3749
        %3751 = vmatpush1.msra.mxu0 %v3750
        %3752 = vmatprep.subr.mxu0 0.0
        %v3753 = vand.u32 %v3419, 4294901760
        %v3754 = vsub.f32 %v3419, %v3753
        %3755 = vmatpush1.msra.mxu0 %v3754
        %3756 = vmatprep.subr.mxu0 0.0
        %v3757 = vand.u32 %v3421, 4294901760
        %v3758 = vsub.f32 %v3421, %v3757
        %3759 = vmatpush1.msra.mxu0 %v3758
        %3760 = vmatprep.subr.mxu0 0.0
        %3761 = vmatpush1.msra.mxu0 0.0
        %3762 = vmatprep.subr.mxu0 0.0
        %3763 = vmatpush1.msra.mxu0 0.0
        %3764 = vmatprep.subr.mxu0 0.0
        %3765 = vmatpush1.msra.mxu0 0.0
        %3766 = vmatprep.subr.mxu0 0.0
        %3767 = vmatpush1.msra.mxu0 0.0
        %3768 = vmatprep.subr.mxu0 0.0
        %3769 = vmatpush1.msra.mxu0 0.0
        %3770 = vmatprep.subr.mxu0 0.0
        %3771 = vmatpush1.msra.mxu0 0.0
        %3772 = vmatprep.subr.mxu0 0.0
        %3773 = vmatpush1.msra.mxu0 0.0
        %3774 = vmatprep.subr.mxu0 0.0
        %3775 = vmatpush1.msra.mxu0 0.0
        %3776 = vmatprep.subr.mxu0 0.0
        %3777 = vmatpush1.msra.mxu0 0.0
        %3778 = vmatprep.subr.mxu0 0.0
        %3779 = vmatpush1.msra.mxu0 0.0
        %3780 = vmatprep.subr.mxu0 0.0
        %3781 = vmatpush1.msra.mxu0 0.0
        %3782 = vmatprep.subr.mxu0 0.0
        %3783 = vmatpush1.msra.mxu0 0.0
        %3784 = vmatprep.subr.mxu0 0.0
        %3785 = vmatpush1.msra.mxu0 0.0
        %3786 = vmatprep.subr.mxu0 0.0
        %3787 = vmatpush1.msra.mxu0 0.0
        %3788 = vmatprep.subr.mxu0 0.0
        %3789 = vmatpush1.msra.mxu0 0.0
        %3790 = vmatprep.subr.mxu0 0.0
        %3791 = vmatpush1.msra.mxu0 0.0
        %3792 = vmatprep.mubr.f32.mxu0 0.0
        %v3793 = vand.u32 %v3344, 4294901760
        %v3794 = vsub.f32 %v3344, %v3793
        %3795 = vmatmul.mubr.f32.gmra.mrb[0].mxu0 %v3794
        %v3796 = vpop.f32.mrb[0].mxu0
        %v3797 = vadd.f32 %v3687, %v3796
        %v3798 = vpop.f32.mrb[0].mxu0
        %3799 = vmatprep.mubr.f32.mxu0 0.0
        %v3800 = vand.u32 %v3345, 4294901760
        %v3801 = vsub.f32 %v3345, %v3800
        %3802 = vmatmul.mubr.f32.gmra.mrb[0].mxu0 %v3801
        %v3803 = vpop.f32.mrb[0].mxu0
        %v3804 = vadd.f32 %v3693, %v3803
        %v3805 = vpop.f32.mrb[0].mxu0
        %3806 = vdwg.mxu0
        %3807 = vmatprep.subr.mxu0 0.0
        %v3808 = vand.u32 %v3391, 4294901760
        %3809 = vmatpush1.msra.mxu0 %v3808
        %3810 = vmatprep.subr.mxu0 0.0
        %v3811 = vand.u32 %v3393, 4294901760
        %3812 = vmatpush1.msra.mxu0 %v3811
        %3813 = vmatprep.subr.mxu0 0.0
        %v3814 = vand.u32 %v3395, 4294901760
        %3815 = vmatpush1.msra.mxu0 %v3814
        %3816 = vmatprep.subr.mxu0 0.0
        %v3817 = vand.u32 %v3397, 4294901760
        %3818 = vmatpush1.msra.mxu0 %v3817
        %3819 = vmatprep.subr.mxu0 0.0
        %v3820 = vand.u32 %v3399, 4294901760
        %3821 = vmatpush1.msra.mxu0 %v3820
        %3822 = vmatprep.subr.mxu0 0.0
        %v3823 = vand.u32 %v3401, 4294901760
        %3824 = vmatpush1.msra.mxu0 %v3823
        %3825 = vmatprep.subr.mxu0 0.0
        %v3826 = vand.u32 %v3403, 4294901760
        %3827 = vmatpush1.msra.mxu0 %v3826
        %3828 = vmatprep.subr.mxu0 0.0
        %v3829 = vand.u32 %v3405, 4294901760
        %3830 = vmatpush1.msra.mxu0 %v3829
        %3831 = vmatprep.subr.mxu0 0.0
        %v3832 = vand.u32 %v3407, 4294901760
        %3833 = vmatpush1.msra.mxu0 %v3832
        %3834 = vmatprep.subr.mxu0 0.0
        %v3835 = vand.u32 %v3409, 4294901760
        %3836 = vmatpush1.msra.mxu0 %v3835
        %3837 = vmatprep.subr.mxu0 0.0
        %v3838 = vand.u32 %v3411, 4294901760
        %3839 = vmatpush1.msra.mxu0 %v3838
        %3840 = vmatprep.subr.mxu0 0.0
        %v3841 = vand.u32 %v3413, 4294901760
        %3842 = vmatpush1.msra.mxu0 %v3841
        %3843 = vmatprep.subr.mxu0 0.0
        %v3844 = vand.u32 %v3415, 4294901760
        %3845 = vmatpush1.msra.mxu0 %v3844
        %3846 = vmatprep.subr.mxu0 0.0
        %v3847 = vand.u32 %v3417, 4294901760
        %3848 = vmatpush1.msra.mxu0 %v3847
        %3849 = vmatprep.subr.mxu0 0.0
        %v3850 = vand.u32 %v3419, 4294901760
        %3851 = vmatpush1.msra.mxu0 %v3850
        %3852 = vmatprep.subr.mxu0 0.0
        %v3853 = vand.u32 %v3421, 4294901760
        %3854 = vmatpush1.msra.mxu0 %v3853
        %3855 = vmatprep.subr.mxu0 0.0
        %3856 = vmatpush1.msra.mxu0 0.0
        %3857 = vmatprep.subr.mxu0 0.0
        %3858 = vmatpush1.msra.mxu0 0.0
        %3859 = vmatprep.subr.mxu0 0.0
        %3860 = vmatpush1.msra.mxu0 0.0
        %3861 = vmatprep.subr.mxu0 0.0
        %3862 = vmatpush1.msra.mxu0 0.0
        %3863 = vmatprep.subr.mxu0 0.0
        %3864 = vmatpush1.msra.mxu0 0.0
        %3865 = vmatprep.subr.mxu0 0.0
        %3866 = vmatpush1.msra.mxu0 0.0
        %3867 = vmatprep.subr.mxu0 0.0
        %3868 = vmatpush1.msra.mxu0 0.0
        %3869 = vmatprep.subr.mxu0 0.0
        %3870 = vmatpush1.msra.mxu0 0.0
        %3871 = vmatprep.subr.mxu0 0.0
        %3872 = vmatpush1.msra.mxu0 0.0
        %3873 = vmatprep.subr.mxu0 0.0
        %3874 = vmatpush1.msra.mxu0 0.0
        %3875 = vmatprep.subr.mxu0 0.0
        %3876 = vmatpush1.msra.mxu0 0.0
        %3877 = vmatprep.subr.mxu0 0.0
        %3878 = vmatpush1.msra.mxu0 0.0
        %3879 = vmatprep.subr.mxu0 0.0
        %3880 = vmatpush1.msra.mxu0 0.0
        %3881 = vmatprep.subr.mxu0 0.0
        %3882 = vmatpush1.msra.mxu0 0.0
        %3883 = vmatprep.subr.mxu0 0.0
        %3884 = vmatpush1.msra.mxu0 0.0
        %3885 = vmatprep.subr.mxu0 0.0
        %3886 = vmatpush1.msra.mxu0 0.0
        %3887 = vmatprep.mubr.f32.mxu0 0.0
        %v3888 = vand.u32 %v3344, 4294901760
        %v3889 = vsub.f32 %v3344, %v3888
        %v3890 = vand.u32 %v3889, 4294901760
        %3891 = vmatmul.mubr.f32.gmra.mrb[0].mxu0 %v3890
        %v3892 = vpop.f32.mrb[0].mxu0
        %v3893 = vadd.f32 %v3797, %v3892
        %v3894 = vpop.f32.mrb[0].mxu0
        %3895 = vmatprep.mubr.f32.mxu0 0.0
        %v3896 = vand.u32 %v3345, 4294901760
        %v3897 = vsub.f32 %v3345, %v3896
        %v3898 = vand.u32 %v3897, 4294901760
        %3899 = vmatmul.mubr.f32.gmra.mrb[0].mxu0 %v3898
        %v3900 = vpop.f32.mrb[0].mxu0
        %v3901 = vadd.f32 %v3804, %v3900
        %v3902 = vpop.f32.mrb[0].mxu0
        %3903 = vdwg.mxu0
        %3904 = vmatprep.subr.mxu0 0.0
        %v3905 = vand.u32 %v3391, 4294901760
        %v3906 = vsub.f32 %v3391, %v3905
        %v3907 = vand.u32 %v3906, 4294901760
        %3908 = vmatpush1.msra.mxu0 %v3907
        %3909 = vmatprep.subr.mxu0 0.0
        %v3910 = vand.u32 %v3393, 4294901760
        %v3911 = vsub.f32 %v3393, %v3910
        %v3912 = vand.u32 %v3911, 4294901760
        %3913 = vmatpush1.msra.mxu0 %v3912
        %3914 = vmatprep.subr.mxu0 0.0
        %v3915 = vand.u32 %v3395, 4294901760
        %v3916 = vsub.f32 %v3395, %v3915
        %v3917 = vand.u32 %v3916, 4294901760
        %3918 = vmatpush1.msra.mxu0 %v3917
        %3919 = vmatprep.subr.mxu0 0.0
        %v3920 = vand.u32 %v3397, 4294901760
        %v3921 = vsub.f32 %v3397, %v3920
        %v3922 = vand.u32 %v3921, 4294901760
        %3923 = vmatpush1.msra.mxu0 %v3922
        %3924 = vmatprep.subr.mxu0 0.0
        %v3925 = vand.u32 %v3399, 4294901760
        %v3926 = vsub.f32 %v3399, %v3925
        %v3927 = vand.u32 %v3926, 4294901760
        %3928 = vmatpush1.msra.mxu0 %v3927
        %3929 = vmatprep.subr.mxu0 0.0
        %v3930 = vand.u32 %v3401, 4294901760
        %v3931 = vsub.f32 %v3401, %v3930
        %v3932 = vand.u32 %v3931, 4294901760
        %3933 = vmatpush1.msra.mxu0 %v3932
        %3934 = vmatprep.subr.mxu0 0.0
        %v3935 = vand.u32 %v3403, 4294901760
        %v3936 = vsub.f32 %v3403, %v3935
        %v3937 = vand.u32 %v3936, 4294901760
        %3938 = vmatpush1.msra.mxu0 %v3937
        %3939 = vmatprep.subr.mxu0 0.0
        %v3940 = vand.u32 %v3405, 4294901760
        %v3941 = vsub.f32 %v3405, %v3940
        %v3942 = vand.u32 %v3941, 4294901760
        %3943 = vmatpush1.msra.mxu0 %v3942
        %3944 = vmatprep.subr.mxu0 0.0
        %v3945 = vand.u32 %v3407, 4294901760
        %v3946 = vsub.f32 %v3407, %v3945
        %v3947 = vand.u32 %v3946, 4294901760
        %3948 = vmatpush1.msra.mxu0 %v3947
        %3949 = vmatprep.subr.mxu0 0.0
        %v3950 = vand.u32 %v3409, 4294901760
        %v3951 = vsub.f32 %v3409, %v3950
        %v3952 = vand.u32 %v3951, 4294901760
        %3953 = vmatpush1.msra.mxu0 %v3952
        %3954 = vmatprep.subr.mxu0 0.0
        %v3955 = vand.u32 %v3411, 4294901760
        %v3956 = vsub.f32 %v3411, %v3955
        %v3957 = vand.u32 %v3956, 4294901760
        %3958 = vmatpush1.msra.mxu0 %v3957
        %3959 = vmatprep.subr.mxu0 0.0
        %v3960 = vand.u32 %v3413, 4294901760
        %v3961 = vsub.f32 %v3413, %v3960
        %v3962 = vand.u32 %v3961, 4294901760
        %3963 = vmatpush1.msra.mxu0 %v3962
        %3964 = vmatprep.subr.mxu0 0.0
        %v3965 = vand.u32 %v3415, 4294901760
        %v3966 = vsub.f32 %v3415, %v3965
        %v3967 = vand.u32 %v3966, 4294901760
        %3968 = vmatpush1.msra.mxu0 %v3967
        %3969 = vmatprep.subr.mxu0 0.0
        %v3970 = vand.u32 %v3417, 4294901760
        %v3971 = vsub.f32 %v3417, %v3970
        %v3972 = vand.u32 %v3971, 4294901760
        %3973 = vmatpush1.msra.mxu0 %v3972
        %3974 = vmatprep.subr.mxu0 0.0
        %v3975 = vand.u32 %v3419, 4294901760
        %v3976 = vsub.f32 %v3419, %v3975
        %v3977 = vand.u32 %v3976, 4294901760
        %3978 = vmatpush1.msra.mxu0 %v3977
        %3979 = vmatprep.subr.mxu0 0.0
        %v3980 = vand.u32 %v3421, 4294901760
        %v3981 = vsub.f32 %v3421, %v3980
        %v3982 = vand.u32 %v3981, 4294901760
        %3983 = vmatpush1.msra.mxu0 %v3982
        %3984 = vmatprep.subr.mxu0 0.0
        %3985 = vmatpush1.msra.mxu0 0.0
        %3986 = vmatprep.subr.mxu0 0.0
        %3987 = vmatpush1.msra.mxu0 0.0
        %3988 = vmatprep.subr.mxu0 0.0
        %3989 = vmatpush1.msra.mxu0 0.0
        %3990 = vmatprep.subr.mxu0 0.0
        %3991 = vmatpush1.msra.mxu0 0.0
        %3992 = vmatprep.subr.mxu0 0.0
        %3993 = vmatpush1.msra.mxu0 0.0
        %3994 = vmatprep.subr.mxu0 0.0
        %3995 = vmatpush1.msra.mxu0 0.0
        %3996 = vmatprep.subr.mxu0 0.0
        %3997 = vmatpush1.msra.mxu0 0.0
        %3998 = vmatprep.subr.mxu0 0.0
        %3999 = vmatpush1.msra.mxu0 0.0
        %4000 = vmatprep.subr.mxu0 0.0
        %4001 = vmatpush1.msra.mxu0 0.0
        %4002 = vmatprep.subr.mxu0 0.0
        %4003 = vmatpush1.msra.mxu0 0.0
        %4004 = vmatprep.subr.mxu0 0.0
        %4005 = vmatpush1.msra.mxu0 0.0
        %4006 = vmatprep.subr.mxu0 0.0
        %4007 = vmatpush1.msra.mxu0 0.0
        %4008 = vmatprep.subr.mxu0 0.0
        %4009 = vmatpush1.msra.mxu0 0.0
        %4010 = vmatprep.subr.mxu0 0.0
        %4011 = vmatpush1.msra.mxu0 0.0
        %4012 = vmatprep.subr.mxu0 0.0
        %4013 = vmatpush1.msra.mxu0 0.0
        %4014 = vmatprep.subr.mxu0 0.0
        %4015 = vmatpush1.msra.mxu0 0.0
        %4016 = vmatprep.mubr.f32.mxu0 0.0
        %v4017 = vand.u32 %v3344, 4294901760
        %4018 = vmatmul.mubr.f32.gmra.mrb[0].mxu0 %v4017
        %v4019 = vpop.f32.mrb[0].mxu0
        %v4020 = vadd.f32 %v3893, %v4019
        %v4021 = vpop.f32.mrb[0].mxu0
        %4022 = vmatprep.mubr.f32.mxu0 0.0
        %v4023 = vand.u32 %v3345, 4294901760
        %4024 = vmatmul.mubr.f32.gmra.mrb[0].mxu0 %v4023
        %v4025 = vpop.f32.mrb[0].mxu0
        %v4026 = vadd.f32 %v3901, %v4025
        %v4027 = vpop.f32.mrb[0].mxu0
        %4028 = vdwg.mxu0
        %4029 = vmatprep.subr.mxu0 0.0
        %v4030 = vand.u32 %v3391, 4294901760
        %4031 = vmatpush1.msra.mxu0 %v4030
        %4032 = vmatprep.subr.mxu0 0.0
        %v4033 = vand.u32 %v3393, 4294901760
        %4034 = vmatpush1.msra.mxu0 %v4033
        %4035 = vmatprep.subr.mxu0 0.0
        %v4036 = vand.u32 %v3395, 4294901760
        %4037 = vmatpush1.msra.mxu0 %v4036
        %4038 = vmatprep.subr.mxu0 0.0
        %v4039 = vand.u32 %v3397, 4294901760
        %4040 = vmatpush1.msra.mxu0 %v4039
        %4041 = vmatprep.subr.mxu0 0.0
        %v4042 = vand.u32 %v3399, 4294901760
        %4043 = vmatpush1.msra.mxu0 %v4042
        %4044 = vmatprep.subr.mxu0 0.0
        %v4045 = vand.u32 %v3401, 4294901760
        %4046 = vmatpush1.msra.mxu0 %v4045
        %4047 = vmatprep.subr.mxu0 0.0
        %v4048 = vand.u32 %v3403, 4294901760
        %4049 = vmatpush1.msra.mxu0 %v4048
        %4050 = vmatprep.subr.mxu0 0.0
        %v4051 = vand.u32 %v3405, 4294901760
        %4052 = vmatpush1.msra.mxu0 %v4051
        %4053 = vmatprep.subr.mxu0 0.0
        %v4054 = vand.u32 %v3407, 4294901760
        %4055 = vmatpush1.msra.mxu0 %v4054
        %4056 = vmatprep.subr.mxu0 0.0
        %v4057 = vand.u32 %v3409, 4294901760
        %4058 = vmatpush1.msra.mxu0 %v4057
        %4059 = vmatprep.subr.mxu0 0.0
        %v4060 = vand.u32 %v3411, 4294901760
        %4061 = vmatpush1.msra.mxu0 %v4060
        %4062 = vmatprep.subr.mxu0 0.0
        %v4063 = vand.u32 %v3413, 4294901760
        %4064 = vmatpush1.msra.mxu0 %v4063
        %4065 = vmatprep.subr.mxu0 0.0
        %v4066 = vand.u32 %v3415, 4294901760
        %4067 = vmatpush1.msra.mxu0 %v4066
        %4068 = vmatprep.subr.mxu0 0.0
        %v4069 = vand.u32 %v3417, 4294901760
        %4070 = vmatpush1.msra.mxu0 %v4069
        %4071 = vmatprep.subr.mxu0 0.0
        %v4072 = vand.u32 %v3419, 4294901760
        %4073 = vmatpush1.msra.mxu0 %v4072
        %4074 = vmatprep.subr.mxu0 0.0
        %v4075 = vand.u32 %v3421, 4294901760
        %4076 = vmatpush1.msra.mxu0 %v4075
        %4077 = vmatprep.subr.mxu0 0.0
        %4078 = vmatpush1.msra.mxu0 0.0
        %4079 = vmatprep.subr.mxu0 0.0
        %4080 = vmatpush1.msra.mxu0 0.0
        %4081 = vmatprep.subr.mxu0 0.0
        %4082 = vmatpush1.msra.mxu0 0.0
        %4083 = vmatprep.subr.mxu0 0.0
        %4084 = vmatpush1.msra.mxu0 0.0
        %4085 = vmatprep.subr.mxu0 0.0
        %4086 = vmatpush1.msra.mxu0 0.0
        %4087 = vmatprep.subr.mxu0 0.0
        %4088 = vmatpush1.msra.mxu0 0.0
        %4089 = vmatprep.subr.mxu0 0.0
        %4090 = vmatpush1.msra.mxu0 0.0
        %4091 = vmatprep.subr.mxu0 0.0
        %4092 = vmatpush1.msra.mxu0 0.0
        %4093 = vmatprep.subr.mxu0 0.0
        %4094 = vmatpush1.msra.mxu0 0.0
        %4095 = vmatprep.subr.mxu0 0.0
        %4096 = vmatpush1.msra.mxu0 0.0
        %4097 = vmatprep.subr.mxu0 0.0
        %4098 = vmatpush1.msra.mxu0 0.0
        %4099 = vmatprep.subr.mxu0 0.0
        %4100 = vmatpush1.msra.mxu0 0.0
        %4101 = vmatprep.subr.mxu0 0.0
        %4102 = vmatpush1.msra.mxu0 0.0
        %4103 = vmatprep.subr.mxu0 0.0
        %4104 = vmatpush1.msra.mxu0 0.0
        %4105 = vmatprep.subr.mxu0 0.0
        %4106 = vmatpush1.msra.mxu0 0.0
        %4107 = vmatprep.subr.mxu0 0.0
        %4108 = vmatpush1.msra.mxu0 0.0
        %4109 = vmatprep.mubr.f32.mxu0 0.0
        %v4110 = vand.u32 %v3344, 4294901760
        %4111 = vmatmul.mubr.f32.gmra.mrb[0].mxu0 %v4110
        %v4112 = vpop.f32.mrb[0].mxu0
        %v4113 = vadd.f32 %v4020, %v4112
        %v4114 = vpop.f32.mrb[0].mxu0
        %4115 = vmatprep.mubr.f32.mxu0 0.0
        %v4116 = vand.u32 %v3345, 4294901760
        %4117 = vmatmul.mubr.f32.gmra.mrb[0].mxu0 %v4116
        %v4118 = vpop.f32.mrb[0].mxu0
        %v4119 = vadd.f32 %v4026, %v4118
        %v4120 = vpop.f32.mrb[0].mxu0
        %4121 = vdwg.mxu0
        %v4122 = vadd.f32 %v3372, %v4113
        %v4123 = vadd.f32 %v3373, %v4119
        %4124 = vst.msk [vmem:[%s3359] sm:$0xff] %vm1069, %v4122
        %4125 = vst.msk [vmem:[%s3359 + $0x8] sm:$0xff] %vm1069, %v4123
        %4126 = vst.msk [vmem:[%s3313] sm:$0xff] %vm1850, %v3320
        %4127 = vst.msk [vmem:[%s3313 + $0x8] sm:$0xff] %vm1850, %v3321
        %4128 = vrot.lane.b32.xlu0 %v1065, 112
        %v4129 = vpop.permute.xlu0 %4128
        %4130 = vrot.lane.b32.xlu0 %v1067, 112
        %v4131 = vpop.permute.xlu0 %4130
        %4132 = vrot.lane.b32.xlu0 %v1033, 112
        %v4133 = vpop.permute.xlu0 %4132
        %4134 = vrot.lane.b32.xlu0 %v1035, 112
        %v4135 = vpop.permute.xlu0 %4134
        %4136 = vrot.lane.b32.xlu0 %v1037, 112
        %v4137 = vpop.permute.xlu0 %4136
        %4138 = vrot.lane.b32.xlu0 %v1039, 112
        %v4139 = vpop.permute.xlu0 %4138
        %4140 = vrot.lane.b32.xlu0 %v1041, 112
        %v4141 = vpop.permute.xlu0 %4140
        %4142 = vrot.lane.b32.xlu0 %v1043, 112
        %v4143 = vpop.permute.xlu0 %4142
        %4144 = vrot.lane.b32.xlu0 %v1045, 112
        %v4145 = vpop.permute.xlu0 %4144
        %4146 = vrot.lane.b32.xlu0 %v1047, 112
        %v4147 = vpop.permute.xlu0 %4146
        %4148 = vrot.lane.b32.xlu0 %v1049, 112
        %v4149 = vpop.permute.xlu0 %4148
        %4150 = vrot.lane.b32.xlu0 %v1051, 112
        %v4151 = vpop.permute.xlu0 %4150
        %4152 = vrot.lane.b32.xlu0 %v1053, 112
        %v4153 = vpop.permute.xlu0 %4152
        %4154 = vrot.lane.b32.xlu0 %v1055, 112
        %v4155 = vpop.permute.xlu0 %4154
        %4156 = vrot.lane.b32.xlu0 %v1057, 112
        %v4157 = vpop.permute.xlu0 %4156
        %4158 = vrot.lane.b32.xlu0 %v1059, 112
        %v4159 = vpop.permute.xlu0 %4158
        %4160 = vrot.lane.b32.xlu0 %v1061, 112
        %v4161 = vpop.permute.xlu0 %4160
        %4162 = vrot.lane.b32.xlu0 %v1063, 112
        %v4163 = vpop.permute.xlu0 %4162
        %v4164 = vsel %vm1069, %v4129, 0
        %v4166 = vsel %vm1069, %v4131, 0
        %v4168 = vsel %vm1069, %v4133, 0
        %v4170 = vsel %vm1069, %v4135, 0
        %v4172 = vsel %vm1069, %v4137, 0
        %v4174 = vsel %vm1069, %v4139, 0
        %v4176 = vsel %vm1069, %v4141, 0
        %v4178 = vsel %vm1069, %v4143, 0
        %v4180 = vsel %vm1069, %v4145, 0
        %v4182 = vsel %vm1069, %v4147, 0
        %v4184 = vsel %vm1069, %v4149, 0
        %v4186 = vsel %vm1069, %v4151, 0
        %v4188 = vsel %vm1069, %v4153, 0
        %v4190 = vsel %vm1069, %v4155, 0
        %v4192 = vsel %vm1069, %v4157, 0
        %v4194 = vsel %vm1069, %v4159, 0
        %v4196 = vsel %vm1069, %v4161, 0
        %v4198 = vsel %vm1069, %v4163, 0
        %4200 = vmatprep.subr.mxu0 0.0
        %v4201 = vand.u32 %v4168, 4294901760
        %4202 = vmatpush1.xpose.msra.mxu0 %v4201
        %4203 = vmatprep.subr.mxu0 0.0
        %v4204 = vand.u32 %v4170, 4294901760
        %4205 = vmatpush1.xpose.msra.mxu0 %v4204
        %4206 = vmatprep.subr.mxu0 0.0
        %v4207 = vand.u32 %v4172, 4294901760
        %4208 = vmatpush1.xpose.msra.mxu0 %v4207
        %4209 = vmatprep.subr.mxu0 0.0
        %v4210 = vand.u32 %v4174, 4294901760
        %4211 = vmatpush1.xpose.msra.mxu0 %v4210
        %4212 = vmatprep.subr.mxu0 0.0
        %v4213 = vand.u32 %v4176, 4294901760
        %4214 = vmatpush1.xpose.msra.mxu0 %v4213
        %4215 = vmatprep.subr.mxu0 0.0
        %v4216 = vand.u32 %v4178, 4294901760
        %4217 = vmatpush1.xpose.msra.mxu0 %v4216
        %4218 = vmatprep.subr.mxu0 0.0
        %v4219 = vand.u32 %v4180, 4294901760
        %4220 = vmatpush1.xpose.msra.mxu0 %v4219
        %4221 = vmatprep.subr.mxu0 0.0
        %v4222 = vand.u32 %v4182, 4294901760
        %4223 = vmatpush1.xpose.msra.mxu0 %v4222
        %4224 = vmatprep.subr.mxu0 0.0
        %v4225 = vand.u32 %v4184, 4294901760
        %4226 = vmatpush1.xpose.msra.mxu0 %v4225
        %4227 = vmatprep.subr.mxu0 0.0
        %v4228 = vand.u32 %v4186, 4294901760
        %4229 = vmatpush1.xpose.msra.mxu0 %v4228
        %4230 = vmatprep.subr.mxu0 0.0
        %v4231 = vand.u32 %v4188, 4294901760
        %4232 = vmatpush1.xpose.msra.mxu0 %v4231
        %4233 = vmatprep.subr.mxu0 0.0
        %v4234 = vand.u32 %v4190, 4294901760
        %4235 = vmatpush1.xpose.msra.mxu0 %v4234
        %4236 = vmatprep.subr.mxu0 0.0
        %v4237 = vand.u32 %v4192, 4294901760
        %4238 = vmatpush1.xpose.msra.mxu0 %v4237
        %4239 = vmatprep.subr.mxu0 0.0
        %v4240 = vand.u32 %v4194, 4294901760
        %4241 = vmatpush1.xpose.msra.mxu0 %v4240
        %4242 = vmatprep.subr.mxu0 0.0
        %v4243 = vand.u32 %v4196, 4294901760
        %4244 = vmatpush1.xpose.msra.mxu0 %v4243
        %4245 = vmatprep.subr.mxu0 0.0
        %v4246 = vand.u32 %v4198, 4294901760
        %4247 = vmatpush1.xpose.msra.mxu0 %v4246
        %4248 = vmatprep.subr.mxu0 0.0
        %4249 = vmatpush1.xpose.msra.mxu0 0.0
        %4250 = vmatprep.subr.mxu0 0.0
        %4251 = vmatpush1.xpose.msra.mxu0 0.0
        %4252 = vmatprep.subr.mxu0 0.0
        %4253 = vmatpush1.xpose.msra.mxu0 0.0
        %4254 = vmatprep.subr.mxu0 0.0
        %4255 = vmatpush1.xpose.msra.mxu0 0.0
        %4256 = vmatprep.subr.mxu0 0.0
        %4257 = vmatpush1.xpose.msra.mxu0 0.0
        %4258 = vmatprep.subr.mxu0 0.0
        %4259 = vmatpush1.xpose.msra.mxu0 0.0
        %4260 = vmatprep.subr.mxu0 0.0
        %4261 = vmatpush1.xpose.msra.mxu0 0.0
        %4262 = vmatprep.subr.mxu0 0.0
        %4263 = vmatpush1.xpose.msra.mxu0 0.0
        %4264 = vmatprep.subr.mxu0 0.0
        %4265 = vmatpush1.xpose.msra.mxu0 0.0
        %4266 = vmatprep.subr.mxu0 0.0
        %4267 = vmatpush1.xpose.msra.mxu0 0.0
        %4268 = vmatprep.subr.mxu0 0.0
        %4269 = vmatpush1.xpose.msra.mxu0 0.0
        %4270 = vmatprep.subr.mxu0 0.0
        %4271 = vmatpush1.xpose.msra.mxu0 0.0
        %4272 = vmatprep.subr.mxu0 0.0
        %4273 = vmatpush1.xpose.msra.mxu0 0.0
        %4274 = vmatprep.subr.mxu0 0.0
        %4275 = vmatpush1.xpose.msra.mxu0 0.0
        %4276 = vmatprep.subr.mxu0 0.0
        %4277 = vmatpush1.xpose.msra.mxu0 0.0
        %4278 = vmatprep.subr.mxu0 0.0
        %4279 = vmatpush1.xpose.msra.mxu0 0.0
        %4280 = vmatprep.mubr.f32.mxu0 0.0
        %v4281 = vand.u32 %v4164, 4294901760
        %v4282 = vsub.f32 %v4164, %v4281
        %v4283 = vand.u32 %v4282, 4294901760
        %v4284 = vsub.f32 %v4282, %v4283
        %v4285 = vand.u32 %v4284, 4294901760
        %4286 = vmatmul.mubr.f32.gmra.mrb[0].mxu0 %v4285
        %v4287 = vpop.f32.mrb[0].mxu0
        %v4288 = vadd.f32 0.0, %v4287
        %v4289 = vpop.f32.mrb[0].mxu0
        %4290 = vmatprep.mubr.f32.mxu0 0.0
        %v4291 = vand.u32 %v4166, 4294901760
        %v4292 = vsub.f32 %v4166, %v4291
        %v4293 = vand.u32 %v4292, 4294901760
        %v4294 = vsub.f32 %v4292, %v4293
        %v4295 = vand.u32 %v4294, 4294901760
        %4296 = vmatmul.mubr.f32.gmra.mrb[0].mxu0 %v4295
        %v4297 = vpop.f32.mrb[0].mxu0
        %v4298 = vadd.f32 0.0, %v4297
        %v4299 = vpop.f32.mrb[0].mxu0
        %4300 = vdwg.mxu0
        %4301 = vmatprep.subr.mxu0 0.0
        %v4302 = vand.u32 %v4168, 4294901760
        %v4303 = vsub.f32 %v4168, %v4302
        %v4304 = vand.u32 %v4303, 4294901760
        %v4305 = vsub.f32 %v4303, %v4304
        %v4306 = vand.u32 %v4305, 4294901760
        %4307 = vmatpush1.xpose.msra.mxu0 %v4306
        %4308 = vmatprep.subr.mxu0 0.0
        %v4309 = vand.u32 %v4170, 4294901760
        %v4310 = vsub.f32 %v4170, %v4309
        %v4311 = vand.u32 %v4310, 4294901760
        %v4312 = vsub.f32 %v4310, %v4311
        %v4313 = vand.u32 %v4312, 4294901760
        %4314 = vmatpush1.xpose.msra.mxu0 %v4313
        %4315 = vmatprep.subr.mxu0 0.0
        %v4316 = vand.u32 %v4172, 4294901760
        %v4317 = vsub.f32 %v4172, %v4316
        %v4318 = vand.u32 %v4317, 4294901760
        %v4319 = vsub.f32 %v4317, %v4318
        %v4320 = vand.u32 %v4319, 4294901760
        %4321 = vmatpush1.xpose.msra.mxu0 %v4320
        %4322 = vmatprep.subr.mxu0 0.0
        %v4323 = vand.u32 %v4174, 4294901760
        %v4324 = vsub.f32 %v4174, %v4323
        %v4325 = vand.u32 %v4324, 4294901760
        %v4326 = vsub.f32 %v4324, %v4325
        %v4327 = vand.u32 %v4326, 4294901760
        %4328 = vmatpush1.xpose.msra.mxu0 %v4327
        %4329 = vmatprep.subr.mxu0 0.0
        %v4330 = vand.u32 %v4176, 4294901760
        %v4331 = vsub.f32 %v4176, %v4330
        %v4332 = vand.u32 %v4331, 4294901760
        %v4333 = vsub.f32 %v4331, %v4332
        %v4334 = vand.u32 %v4333, 4294901760
        %4335 = vmatpush1.xpose.msra.mxu0 %v4334
        %4336 = vmatprep.subr.mxu0 0.0
        %v4337 = vand.u32 %v4178, 4294901760
        %v4338 = vsub.f32 %v4178, %v4337
        %v4339 = vand.u32 %v4338, 4294901760
        %v4340 = vsub.f32 %v4338, %v4339
        %v4341 = vand.u32 %v4340, 4294901760
        %4342 = vmatpush1.xpose.msra.mxu0 %v4341
        %4343 = vmatprep.subr.mxu0 0.0
        %v4344 = vand.u32 %v4180, 4294901760
        %v4345 = vsub.f32 %v4180, %v4344
        %v4346 = vand.u32 %v4345, 4294901760
        %v4347 = vsub.f32 %v4345, %v4346
        %v4348 = vand.u32 %v4347, 4294901760
        %4349 = vmatpush1.xpose.msra.mxu0 %v4348
        %4350 = vmatprep.subr.mxu0 0.0
        %v4351 = vand.u32 %v4182, 4294901760
        %v4352 = vsub.f32 %v4182, %v4351
        %v4353 = vand.u32 %v4352, 4294901760
        %v4354 = vsub.f32 %v4352, %v4353
        %v4355 = vand.u32 %v4354, 4294901760
        %4356 = vmatpush1.xpose.msra.mxu0 %v4355
        %4357 = vmatprep.subr.mxu0 0.0
        %v4358 = vand.u32 %v4184, 4294901760
        %v4359 = vsub.f32 %v4184, %v4358
        %v4360 = vand.u32 %v4359, 4294901760
        %v4361 = vsub.f32 %v4359, %v4360
        %v4362 = vand.u32 %v4361, 4294901760
        %4363 = vmatpush1.xpose.msra.mxu0 %v4362
        %4364 = vmatprep.subr.mxu0 0.0
        %v4365 = vand.u32 %v4186, 4294901760
        %v4366 = vsub.f32 %v4186, %v4365
        %v4367 = vand.u32 %v4366, 4294901760
        %v4368 = vsub.f32 %v4366, %v4367
        %v4369 = vand.u32 %v4368, 4294901760
        %4370 = vmatpush1.xpose.msra.mxu0 %v4369
        %4371 = vmatprep.subr.mxu0 0.0
        %v4372 = vand.u32 %v4188, 4294901760
        %v4373 = vsub.f32 %v4188, %v4372
        %v4374 = vand.u32 %v4373, 4294901760
        %v4375 = vsub.f32 %v4373, %v4374
        %v4376 = vand.u32 %v4375, 4294901760
        %4377 = vmatpush1.xpose.msra.mxu0 %v4376
        %4378 = vmatprep.subr.mxu0 0.0
        %v4379 = vand.u32 %v4190, 4294901760
        %v4380 = vsub.f32 %v4190, %v4379
        %v4381 = vand.u32 %v4380, 4294901760
        %v4382 = vsub.f32 %v4380, %v4381
        %v4383 = vand.u32 %v4382, 4294901760
        %4384 = vmatpush1.xpose.msra.mxu0 %v4383
        %4385 = vmatprep.subr.mxu0 0.0
        %v4386 = vand.u32 %v4192, 4294901760
        %v4387 = vsub.f32 %v4192, %v4386
        %v4388 = vand.u32 %v4387, 4294901760
        %v4389 = vsub.f32 %v4387, %v4388
        %v4390 = vand.u32 %v4389, 4294901760
        %4391 = vmatpush1.xpose.msra.mxu0 %v4390
        %4392 = vmatprep.subr.mxu0 0.0
        %v4393 = vand.u32 %v4194, 4294901760
        %v4394 = vsub.f32 %v4194, %v4393
        %v4395 = vand.u32 %v4394, 4294901760
        %v4396 = vsub.f32 %v4394, %v4395
        %v4397 = vand.u32 %v4396, 4294901760
        %4398 = vmatpush1.xpose.msra.mxu0 %v4397
        %4399 = vmatprep.subr.mxu0 0.0
        %v4400 = vand.u32 %v4196, 4294901760
        %v4401 = vsub.f32 %v4196, %v4400
        %v4402 = vand.u32 %v4401, 4294901760
        %v4403 = vsub.f32 %v4401, %v4402
        %v4404 = vand.u32 %v4403, 4294901760
        %4405 = vmatpush1.xpose.msra.mxu0 %v4404
        %4406 = vmatprep.subr.mxu0 0.0
        %v4407 = vand.u32 %v4198, 4294901760
        %v4408 = vsub.f32 %v4198, %v4407
        %v4409 = vand.u32 %v4408, 4294901760
        %v4410 = vsub.f32 %v4408, %v4409
        %v4411 = vand.u32 %v4410, 4294901760
        %4412 = vmatpush1.xpose.msra.mxu0 %v4411
        %4413 = vmatprep.subr.mxu0 0.0
        %4414 = vmatpush1.xpose.msra.mxu0 0.0
        %4415 = vmatprep.subr.mxu0 0.0
        %4416 = vmatpush1.xpose.msra.mxu0 0.0
        %4417 = vmatprep.subr.mxu0 0.0
        %4418 = vmatpush1.xpose.msra.mxu0 0.0
        %4419 = vmatprep.subr.mxu0 0.0
        %4420 = vmatpush1.xpose.msra.mxu0 0.0
        %4421 = vmatprep.subr.mxu0 0.0
        %4422 = vmatpush1.xpose.msra.mxu0 0.0
        %4423 = vmatprep.subr.mxu0 0.0
        %4424 = vmatpush1.xpose.msra.mxu0 0.0
        %4425 = vmatprep.subr.mxu0 0.0
        %4426 = vmatpush1.xpose.msra.mxu0 0.0
        %4427 = vmatprep.subr.mxu0 0.0
        %4428 = vmatpush1.xpose.msra.mxu0 0.0
        %4429 = vmatprep.subr.mxu0 0.0
        %4430 = vmatpush1.xpose.msra.mxu0 0.0
        %4431 = vmatprep.subr.mxu0 0.0
        %4432 = vmatpush1.xpose.msra.mxu0 0.0
        %4433 = vmatprep.subr.mxu0 0.0
        %4434 = vmatpush1.xpose.msra.mxu0 0.0
        %4435 = vmatprep.subr.mxu0 0.0
        %4436 = vmatpush1.xpose.msra.mxu0 0.0
        %4437 = vmatprep.subr.mxu0 0.0
        %4438 = vmatpush1.xpose.msra.mxu0 0.0
        %4439 = vmatprep.subr.mxu0 0.0
        %4440 = vmatpush1.xpose.msra.mxu0 0.0
        %4441 = vmatprep.subr.mxu0 0.0
        %4442 = vmatpush1.xpose.msra.mxu0 0.0
        %4443 = vmatprep.subr.mxu0 0.0
        %4444 = vmatpush1.xpose.msra.mxu0 0.0
        %4445 = vmatprep.mubr.f32.mxu0 0.0
        %v4446 = vand.u32 %v4164, 4294901760
        %4447 = vmatmul.mubr.f32.gmra.mrb[0].mxu0 %v4446
        %v4448 = vpop.f32.mrb[0].mxu0
        %v4449 = vadd.f32 %v4288, %v4448
        %v4450 = vpop.f32.mrb[0].mxu0
        %4451 = vmatprep.mubr.f32.mxu0 0.0
        %v4452 = vand.u32 %v4166, 4294901760
        %4453 = vmatmul.mubr.f32.gmra.mrb[0].mxu0 %v4452
        %v4454 = vpop.f32.mrb[0].mxu0
        %v4455 = vadd.f32 %v4298, %v4454
        %v4456 = vpop.f32.mrb[0].mxu0
        %4457 = vdwg.mxu0
        %4458 = vmatprep.subr.mxu0 0.0
        %v4459 = vand.u32 %v4168, 4294901760
        %v4460 = vsub.f32 %v4168, %v4459
        %4461 = vmatpush1.xpose.msra.mxu0 %v4460
        %4462 = vmatprep.subr.mxu0 0.0
        %v4463 = vand.u32 %v4170, 4294901760
        %v4464 = vsub.f32 %v4170, %v4463
        %4465 = vmatpush1.xpose.msra.mxu0 %v4464
        %4466 = vmatprep.subr.mxu0 0.0
        %v4467 = vand.u32 %v4172, 4294901760
        %v4468 = vsub.f32 %v4172, %v4467
        %4469 = vmatpush1.xpose.msra.mxu0 %v4468
        %4470 = vmatprep.subr.mxu0 0.0
        %v4471 = vand.u32 %v4174, 4294901760
        %v4472 = vsub.f32 %v4174, %v4471
        %4473 = vmatpush1.xpose.msra.mxu0 %v4472
        %4474 = vmatprep.subr.mxu0 0.0
        %v4475 = vand.u32 %v4176, 4294901760
        %v4476 = vsub.f32 %v4176, %v4475
        %4477 = vmatpush1.xpose.msra.mxu0 %v4476
        %4478 = vmatprep.subr.mxu0 0.0
        %v4479 = vand.u32 %v4178, 4294901760
        %v4480 = vsub.f32 %v4178, %v4479
        %4481 = vmatpush1.xpose.msra.mxu0 %v4480
        %4482 = vmatprep.subr.mxu0 0.0
        %v4483 = vand.u32 %v4180, 4294901760
        %v4484 = vsub.f32 %v4180, %v4483
        %4485 = vmatpush1.xpose.msra.mxu0 %v4484
        %4486 = vmatprep.subr.mxu0 0.0
        %v4487 = vand.u32 %v4182, 4294901760
        %v4488 = vsub.f32 %v4182, %v4487
        %4489 = vmatpush1.xpose.msra.mxu0 %v4488
        %4490 = vmatprep.subr.mxu0 0.0
        %v4491 = vand.u32 %v4184, 4294901760
        %v4492 = vsub.f32 %v4184, %v4491
        %4493 = vmatpush1.xpose.msra.mxu0 %v4492
        %4494 = vmatprep.subr.mxu0 0.0
        %v4495 = vand.u32 %v4186, 4294901760
        %v4496 = vsub.f32 %v4186, %v4495
        %4497 = vmatpush1.xpose.msra.mxu0 %v4496
        %4498 = vmatprep.subr.mxu0 0.0
        %v4499 = vand.u32 %v4188, 4294901760
        %v4500 = vsub.f32 %v4188, %v4499
        %4501 = vmatpush1.xpose.msra.mxu0 %v4500
        %4502 = vmatprep.subr.mxu0 0.0
        %v4503 = vand.u32 %v4190, 4294901760
        %v4504 = vsub.f32 %v4190, %v4503
        %4505 = vmatpush1.xpose.msra.mxu0 %v4504
        %4506 = vmatprep.subr.mxu0 0.0
        %v4507 = vand.u32 %v4192, 4294901760
        %v4508 = vsub.f32 %v4192, %v4507
        %4509 = vmatpush1.xpose.msra.mxu0 %v4508
        %4510 = vmatprep.subr.mxu0 0.0
        %v4511 = vand.u32 %v4194, 4294901760
        %v4512 = vsub.f32 %v4194, %v4511
        %4513 = vmatpush1.xpose.msra.mxu0 %v4512
        %4514 = vmatprep.subr.mxu0 0.0
        %v4515 = vand.u32 %v4196, 4294901760
        %v4516 = vsub.f32 %v4196, %v4515
        %4517 = vmatpush1.xpose.msra.mxu0 %v4516
        %4518 = vmatprep.subr.mxu0 0.0
        %v4519 = vand.u32 %v4198, 4294901760
        %v4520 = vsub.f32 %v4198, %v4519
        %4521 = vmatpush1.xpose.msra.mxu0 %v4520
        %4522 = vmatprep.subr.mxu0 0.0
        %4523 = vmatpush1.xpose.msra.mxu0 0.0
        %4524 = vmatprep.subr.mxu0 0.0
        %4525 = vmatpush1.xpose.msra.mxu0 0.0
        %4526 = vmatprep.subr.mxu0 0.0
        %4527 = vmatpush1.xpose.msra.mxu0 0.0
        %4528 = vmatprep.subr.mxu0 0.0
        %4529 = vmatpush1.xpose.msra.mxu0 0.0
        %4530 = vmatprep.subr.mxu0 0.0
        %4531 = vmatpush1.xpose.msra.mxu0 0.0
        %4532 = vmatprep.subr.mxu0 0.0
        %4533 = vmatpush1.xpose.msra.mxu0 0.0
        %4534 = vmatprep.subr.mxu0 0.0
        %4535 = vmatpush1.xpose.msra.mxu0 0.0
        %4536 = vmatprep.subr.mxu0 0.0
        %4537 = vmatpush1.xpose.msra.mxu0 0.0
        %4538 = vmatprep.subr.mxu0 0.0
        %4539 = vmatpush1.xpose.msra.mxu0 0.0
        %4540 = vmatprep.subr.mxu0 0.0
        %4541 = vmatpush1.xpose.msra.mxu0 0.0
        %4542 = vmatprep.subr.mxu0 0.0
        %4543 = vmatpush1.xpose.msra.mxu0 0.0
        %4544 = vmatprep.subr.mxu0 0.0
        %4545 = vmatpush1.xpose.msra.mxu0 0.0
        %4546 = vmatprep.subr.mxu0 0.0
        %4547 = vmatpush1.xpose.msra.mxu0 0.0
        %4548 = vmatprep.subr.mxu0 0.0
        %4549 = vmatpush1.xpose.msra.mxu0 0.0
        %4550 = vmatprep.subr.mxu0 0.0
        %4551 = vmatpush1.xpose.msra.mxu0 0.0
        %4552 = vmatprep.subr.mxu0 0.0
        %4553 = vmatpush1.xpose.msra.mxu0 0.0
        %4554 = vmatprep.mubr.f32.mxu0 0.0
        %v4555 = vand.u32 %v4164, 4294901760
        %v4556 = vsub.f32 %v4164, %v4555
        %4557 = vmatmul.mubr.f32.gmra.mrb[0].mxu0 %v4556
        %v4558 = vpop.f32.mrb[0].mxu0
        %v4559 = vadd.f32 %v4449, %v4558
        %v4560 = vpop.f32.mrb[0].mxu0
        %4561 = vmatprep.mubr.f32.mxu0 0.0
        %v4562 = vand.u32 %v4166, 4294901760
        %v4563 = vsub.f32 %v4166, %v4562
        %4564 = vmatmul.mubr.f32.gmra.mrb[0].mxu0 %v4563
        %v4565 = vpop.f32.mrb[0].mxu0
        %v4566 = vadd.f32 %v4455, %v4565
        %v4567 = vpop.f32.mrb[0].mxu0
        %4568 = vdwg.mxu0
        %4569 = vmatprep.subr.mxu0 0.0
        %v4570 = vand.u32 %v4168, 4294901760
        %4571 = vmatpush1.xpose.msra.mxu0 %v4570
        %4572 = vmatprep.subr.mxu0 0.0
        %v4573 = vand.u32 %v4170, 4294901760
        %4574 = vmatpush1.xpose.msra.mxu0 %v4573
        %4575 = vmatprep.subr.mxu0 0.0
        %v4576 = vand.u32 %v4172, 4294901760
        %4577 = vmatpush1.xpose.msra.mxu0 %v4576
        %4578 = vmatprep.subr.mxu0 0.0
        %v4579 = vand.u32 %v4174, 4294901760
        %4580 = vmatpush1.xpose.msra.mxu0 %v4579
        %4581 = vmatprep.subr.mxu0 0.0
        %v4582 = vand.u32 %v4176, 4294901760
        %4583 = vmatpush1.xpose.msra.mxu0 %v4582
        %4584 = vmatprep.subr.mxu0 0.0
        %v4585 = vand.u32 %v4178, 4294901760
        %4586 = vmatpush1.xpose.msra.mxu0 %v4585
        %4587 = vmatprep.subr.mxu0 0.0
        %v4588 = vand.u32 %v4180, 4294901760
        %4589 = vmatpush1.xpose.msra.mxu0 %v4588
        %4590 = vmatprep.subr.mxu0 0.0
        %v4591 = vand.u32 %v4182, 4294901760
        %4592 = vmatpush1.xpose.msra.mxu0 %v4591
        %4593 = vmatprep.subr.mxu0 0.0
        %v4594 = vand.u32 %v4184, 4294901760
        %4595 = vmatpush1.xpose.msra.mxu0 %v4594
        %4596 = vmatprep.subr.mxu0 0.0
        %v4597 = vand.u32 %v4186, 4294901760
        %4598 = vmatpush1.xpose.msra.mxu0 %v4597
        %4599 = vmatprep.subr.mxu0 0.0
        %v4600 = vand.u32 %v4188, 4294901760
        %4601 = vmatpush1.xpose.msra.mxu0 %v4600
        %4602 = vmatprep.subr.mxu0 0.0
        %v4603 = vand.u32 %v4190, 4294901760
        %4604 = vmatpush1.xpose.msra.mxu0 %v4603
        %4605 = vmatprep.subr.mxu0 0.0
        %v4606 = vand.u32 %v4192, 4294901760
        %4607 = vmatpush1.xpose.msra.mxu0 %v4606
        %4608 = vmatprep.subr.mxu0 0.0
        %v4609 = vand.u32 %v4194, 4294901760
        %4610 = vmatpush1.xpose.msra.mxu0 %v4609
        %4611 = vmatprep.subr.mxu0 0.0
        %v4612 = vand.u32 %v4196, 4294901760
        %4613 = vmatpush1.xpose.msra.mxu0 %v4612
        %4614 = vmatprep.subr.mxu0 0.0
        %v4615 = vand.u32 %v4198, 4294901760
        %4616 = vmatpush1.xpose.msra.mxu0 %v4615
        %4617 = vmatprep.subr.mxu0 0.0
        %4618 = vmatpush1.xpose.msra.mxu0 0.0
        %4619 = vmatprep.subr.mxu0 0.0
        %4620 = vmatpush1.xpose.msra.mxu0 0.0
        %4621 = vmatprep.subr.mxu0 0.0
        %4622 = vmatpush1.xpose.msra.mxu0 0.0
        %4623 = vmatprep.subr.mxu0 0.0
        %4624 = vmatpush1.xpose.msra.mxu0 0.0
        %4625 = vmatprep.subr.mxu0 0.0
        %4626 = vmatpush1.xpose.msra.mxu0 0.0
        %4627 = vmatprep.subr.mxu0 0.0
        %4628 = vmatpush1.xpose.msra.mxu0 0.0
        %4629 = vmatprep.subr.mxu0 0.0
        %4630 = vmatpush1.xpose.msra.mxu0 0.0
        %4631 = vmatprep.subr.mxu0 0.0
        %4632 = vmatpush1.xpose.msra.mxu0 0.0
        %4633 = vmatprep.subr.mxu0 0.0
        %4634 = vmatpush1.xpose.msra.mxu0 0.0
        %4635 = vmatprep.subr.mxu0 0.0
        %4636 = vmatpush1.xpose.msra.mxu0 0.0
        %4637 = vmatprep.subr.mxu0 0.0
        %4638 = vmatpush1.xpose.msra.mxu0 0.0
        %4639 = vmatprep.subr.mxu0 0.0
        %4640 = vmatpush1.xpose.msra.mxu0 0.0
        %4641 = vmatprep.subr.mxu0 0.0
        %4642 = vmatpush1.xpose.msra.mxu0 0.0
        %4643 = vmatprep.subr.mxu0 0.0
        %4644 = vmatpush1.xpose.msra.mxu0 0.0
        %4645 = vmatprep.subr.mxu0 0.0
        %4646 = vmatpush1.xpose.msra.mxu0 0.0
        %4647 = vmatprep.subr.mxu0 0.0
        %4648 = vmatpush1.xpose.msra.mxu0 0.0
        %4649 = vmatprep.mubr.f32.mxu0 0.0
        %v4650 = vand.u32 %v4164, 4294901760
        %v4651 = vsub.f32 %v4164, %v4650
        %v4652 = vand.u32 %v4651, 4294901760
        %4653 = vmatmul.mubr.f32.gmra.mrb[0].mxu0 %v4652
        %v4654 = vpop.f32.mrb[0].mxu0
        %v4655 = vadd.f32 %v4559, %v4654
        %v4656 = vpop.f32.mrb[0].mxu0
        %4657 = vmatprep.mubr.f32.mxu0 0.0
        %v4658 = vand.u32 %v4166, 4294901760
        %v4659 = vsub.f32 %v4166, %v4658
        %v4660 = vand.u32 %v4659, 4294901760
        %4661 = vmatmul.mubr.f32.gmra.mrb[0].mxu0 %v4660
        %v4662 = vpop.f32.mrb[0].mxu0
        %v4663 = vadd.f32 %v4566, %v4662
        %v4664 = vpop.f32.mrb[0].mxu0
        %4665 = vdwg.mxu0
        %4666 = vmatprep.subr.mxu0 0.0
        %v4667 = vand.u32 %v4168, 4294901760
        %v4668 = vsub.f32 %v4168, %v4667
        %v4669 = vand.u32 %v4668, 4294901760
        %4670 = vmatpush1.xpose.msra.mxu0 %v4669
        %4671 = vmatprep.subr.mxu0 0.0
        %v4672 = vand.u32 %v4170, 4294901760
        %v4673 = vsub.f32 %v4170, %v4672
        %v4674 = vand.u32 %v4673, 4294901760
        %4675 = vmatpush1.xpose.msra.mxu0 %v4674
        %4676 = vmatprep.subr.mxu0 0.0
        %v4677 = vand.u32 %v4172, 4294901760
        %v4678 = vsub.f32 %v4172, %v4677
        %v4679 = vand.u32 %v4678, 4294901760
        %4680 = vmatpush1.xpose.msra.mxu0 %v4679
        %4681 = vmatprep.subr.mxu0 0.0
        %v4682 = vand.u32 %v4174, 4294901760
        %v4683 = vsub.f32 %v4174, %v4682
        %v4684 = vand.u32 %v4683, 4294901760
        %4685 = vmatpush1.xpose.msra.mxu0 %v4684
        %4686 = vmatprep.subr.mxu0 0.0
        %v4687 = vand.u32 %v4176, 4294901760
        %v4688 = vsub.f32 %v4176, %v4687
        %v4689 = vand.u32 %v4688, 4294901760
        %4690 = vmatpush1.xpose.msra.mxu0 %v4689
        %4691 = vmatprep.subr.mxu0 0.0
        %v4692 = vand.u32 %v4178, 4294901760
        %v4693 = vsub.f32 %v4178, %v4692
        %v4694 = vand.u32 %v4693, 4294901760
        %4695 = vmatpush1.xpose.msra.mxu0 %v4694
        %4696 = vmatprep.subr.mxu0 0.0
        %v4697 = vand.u32 %v4180, 4294901760
        %v4698 = vsub.f32 %v4180, %v4697
        %v4699 = vand.u32 %v4698, 4294901760
        %4700 = vmatpush1.xpose.msra.mxu0 %v4699
        %4701 = vmatprep.subr.mxu0 0.0
        %v4702 = vand.u32 %v4182, 4294901760
        %v4703 = vsub.f32 %v4182, %v4702
        %v4704 = vand.u32 %v4703, 4294901760
        %4705 = vmatpush1.xpose.msra.mxu0 %v4704
        %4706 = vmatprep.subr.mxu0 0.0
        %v4707 = vand.u32 %v4184, 4294901760
        %v4708 = vsub.f32 %v4184, %v4707
        %v4709 = vand.u32 %v4708, 4294901760
        %4710 = vmatpush1.xpose.msra.mxu0 %v4709
        %4711 = vmatprep.subr.mxu0 0.0
        %v4712 = vand.u32 %v4186, 4294901760
        %v4713 = vsub.f32 %v4186, %v4712
        %v4714 = vand.u32 %v4713, 4294901760
        %4715 = vmatpush1.xpose.msra.mxu0 %v4714
        %4716 = vmatprep.subr.mxu0 0.0
        %v4717 = vand.u32 %v4188, 4294901760
        %v4718 = vsub.f32 %v4188, %v4717
        %v4719 = vand.u32 %v4718, 4294901760
        %4720 = vmatpush1.xpose.msra.mxu0 %v4719
        %4721 = vmatprep.subr.mxu0 0.0
        %v4722 = vand.u32 %v4190, 4294901760
        %v4723 = vsub.f32 %v4190, %v4722
        %v4724 = vand.u32 %v4723, 4294901760
        %4725 = vmatpush1.xpose.msra.mxu0 %v4724
        %4726 = vmatprep.subr.mxu0 0.0
        %v4727 = vand.u32 %v4192, 4294901760
        %v4728 = vsub.f32 %v4192, %v4727
        %v4729 = vand.u32 %v4728, 4294901760
        %4730 = vmatpush1.xpose.msra.mxu0 %v4729
        %4731 = vmatprep.subr.mxu0 0.0
        %v4732 = vand.u32 %v4194, 4294901760
        %v4733 = vsub.f32 %v4194, %v4732
        %v4734 = vand.u32 %v4733, 4294901760
        %4735 = vmatpush1.xpose.msra.mxu0 %v4734
        %4736 = vmatprep.subr.mxu0 0.0
        %v4737 = vand.u32 %v4196, 4294901760
        %v4738 = vsub.f32 %v4196, %v4737
        %v4739 = vand.u32 %v4738, 4294901760
        %4740 = vmatpush1.xpose.msra.mxu0 %v4739
        %4741 = vmatprep.subr.mxu0 0.0
        %v4742 = vand.u32 %v4198, 4294901760
        %v4743 = vsub.f32 %v4198, %v4742
        %v4744 = vand.u32 %v4743, 4294901760
        %4745 = vmatpush1.xpose.msra.mxu0 %v4744
        %4746 = vmatprep.subr.mxu0 0.0
        %4747 = vmatpush1.xpose.msra.mxu0 0.0
        %4748 = vmatprep.subr.mxu0 0.0
        %4749 = vmatpush1.xpose.msra.mxu0 0.0
        %4750 = vmatprep.subr.mxu0 0.0
        %4751 = vmatpush1.xpose.msra.mxu0 0.0
        %4752 = vmatprep.subr.mxu0 0.0
        %4753 = vmatpush1.xpose.msra.mxu0 0.0
        %4754 = vmatprep.subr.mxu0 0.0
        %4755 = vmatpush1.xpose.msra.mxu0 0.0
        %4756 = vmatprep.subr.mxu0 0.0
        %4757 = vmatpush1.xpose.msra.mxu0 0.0
        %4758 = vmatprep.subr.mxu0 0.0
        %4759 = vmatpush1.xpose.msra.mxu0 0.0
        %4760 = vmatprep.subr.mxu0 0.0
        %4761 = vmatpush1.xpose.msra.mxu0 0.0
        %4762 = vmatprep.subr.mxu0 0.0
        %4763 = vmatpush1.xpose.msra.mxu0 0.0
        %4764 = vmatprep.subr.mxu0 0.0
        %4765 = vmatpush1.xpose.msra.mxu0 0.0
        %4766 = vmatprep.subr.mxu0 0.0
        %4767 = vmatpush1.xpose.msra.mxu0 0.0
        %4768 = vmatprep.subr.mxu0 0.0
        %4769 = vmatpush1.xpose.msra.mxu0 0.0
        %4770 = vmatprep.subr.mxu0 0.0
        %4771 = vmatpush1.xpose.msra.mxu0 0.0
        %4772 = vmatprep.subr.mxu0 0.0
        %4773 = vmatpush1.xpose.msra.mxu0 0.0
        %4774 = vmatprep.subr.mxu0 0.0
        %4775 = vmatpush1.xpose.msra.mxu0 0.0
        %4776 = vmatprep.subr.mxu0 0.0
        %4777 = vmatpush1.xpose.msra.mxu0 0.0
        %4778 = vmatprep.mubr.f32.mxu0 0.0
        %v4779 = vand.u32 %v4164, 4294901760
        %4780 = vmatmul.mubr.f32.gmra.mrb[0].mxu0 %v4779
        %v4781 = vpop.f32.mrb[0].mxu0
        %v4782 = vadd.f32 %v4655, %v4781
        %v4783 = vpop.f32.mrb[0].mxu0
        %4784 = vmatprep.mubr.f32.mxu0 0.0
        %v4785 = vand.u32 %v4166, 4294901760
        %4786 = vmatmul.mubr.f32.gmra.mrb[0].mxu0 %v4785
        %v4787 = vpop.f32.mrb[0].mxu0
        %v4788 = vadd.f32 %v4663, %v4787
        %v4789 = vpop.f32.mrb[0].mxu0
        %4790 = vdwg.mxu0
        %4791 = vmatprep.subr.mxu0 0.0
        %v4792 = vand.u32 %v4168, 4294901760
        %4793 = vmatpush1.xpose.msra.mxu0 %v4792
        %4794 = vmatprep.subr.mxu0 0.0
        %v4795 = vand.u32 %v4170, 4294901760
        %4796 = vmatpush1.xpose.msra.mxu0 %v4795
        %4797 = vmatprep.subr.mxu0 0.0
        %v4798 = vand.u32 %v4172, 4294901760
        %4799 = vmatpush1.xpose.msra.mxu0 %v4798
        %4800 = vmatprep.subr.mxu0 0.0
        %v4801 = vand.u32 %v4174, 4294901760
        %4802 = vmatpush1.xpose.msra.mxu0 %v4801
        %4803 = vmatprep.subr.mxu0 0.0
        %v4804 = vand.u32 %v4176, 4294901760
        %4805 = vmatpush1.xpose.msra.mxu0 %v4804
        %4806 = vmatprep.subr.mxu0 0.0
        %v4807 = vand.u32 %v4178, 4294901760
        %4808 = vmatpush1.xpose.msra.mxu0 %v4807
        %4809 = vmatprep.subr.mxu0 0.0
        %v4810 = vand.u32 %v4180, 4294901760
        %4811 = vmatpush1.xpose.msra.mxu0 %v4810
        %4812 = vmatprep.subr.mxu0 0.0
        %v4813 = vand.u32 %v4182, 4294901760
        %4814 = vmatpush1.xpose.msra.mxu0 %v4813
        %4815 = vmatprep.subr.mxu0 0.0
        %v4816 = vand.u32 %v4184, 4294901760
        %4817 = vmatpush1.xpose.msra.mxu0 %v4816
        %4818 = vmatprep.subr.mxu0 0.0
        %v4819 = vand.u32 %v4186, 4294901760
        %4820 = vmatpush1.xpose.msra.mxu0 %v4819
        %4821 = vmatprep.subr.mxu0 0.0
        %v4822 = vand.u32 %v4188, 4294901760
        %4823 = vmatpush1.xpose.msra.mxu0 %v4822
        %4824 = vmatprep.subr.mxu0 0.0
        %v4825 = vand.u32 %v4190, 4294901760
        %4826 = vmatpush1.xpose.msra.mxu0 %v4825
        %4827 = vmatprep.subr.mxu0 0.0
        %v4828 = vand.u32 %v4192, 4294901760
        %4829 = vmatpush1.xpose.msra.mxu0 %v4828
        %4830 = vmatprep.subr.mxu0 0.0
        %v4831 = vand.u32 %v4194, 4294901760
        %4832 = vmatpush1.xpose.msra.mxu0 %v4831
        %4833 = vmatprep.subr.mxu0 0.0
        %v4834 = vand.u32 %v4196, 4294901760
        %4835 = vmatpush1.xpose.msra.mxu0 %v4834
        %4836 = vmatprep.subr.mxu0 0.0
        %v4837 = vand.u32 %v4198, 4294901760
        %4838 = vmatpush1.xpose.msra.mxu0 %v4837
        %4839 = vmatprep.subr.mxu0 0.0
        %4840 = vmatpush1.xpose.msra.mxu0 0.0
        %4841 = vmatprep.subr.mxu0 0.0
        %4842 = vmatpush1.xpose.msra.mxu0 0.0
        %4843 = vmatprep.subr.mxu0 0.0
        %4844 = vmatpush1.xpose.msra.mxu0 0.0
        %4845 = vmatprep.subr.mxu0 0.0
        %4846 = vmatpush1.xpose.msra.mxu0 0.0
        %4847 = vmatprep.subr.mxu0 0.0
        %4848 = vmatpush1.xpose.msra.mxu0 0.0
        %4849 = vmatprep.subr.mxu0 0.0
        %4850 = vmatpush1.xpose.msra.mxu0 0.0
        %4851 = vmatprep.subr.mxu0 0.0
        %4852 = vmatpush1.xpose.msra.mxu0 0.0
        %4853 = vmatprep.subr.mxu0 0.0
        %4854 = vmatpush1.xpose.msra.mxu0 0.0
        %4855 = vmatprep.subr.mxu0 0.0
        %4856 = vmatpush1.xpose.msra.mxu0 0.0
        %4857 = vmatprep.subr.mxu0 0.0
        %4858 = vmatpush1.xpose.msra.mxu0 0.0
        %4859 = vmatprep.subr.mxu0 0.0
        %4860 = vmatpush1.xpose.msra.mxu0 0.0
        %4861 = vmatprep.subr.mxu0 0.0
        %4862 = vmatpush1.xpose.msra.mxu0 0.0
        %4863 = vmatprep.subr.mxu0 0.0
        %4864 = vmatpush1.xpose.msra.mxu0 0.0
        %4865 = vmatprep.subr.mxu0 0.0
        %4866 = vmatpush1.xpose.msra.mxu0 0.0
        %4867 = vmatprep.subr.mxu0 0.0
        %4868 = vmatpush1.xpose.msra.mxu0 0.0
        %4869 = vmatprep.subr.mxu0 0.0
        %4870 = vmatpush1.xpose.msra.mxu0 0.0
        %4871 = vmatprep.mubr.f32.mxu0 0.0
        %v4872 = vand.u32 %v4164, 4294901760
        %4873 = vmatmul.mubr.f32.gmra.mrb[0].mxu0 %v4872
        %v4874 = vpop.f32.mrb[0].mxu0
        %v4875 = vadd.f32 %v4782, %v4874
        %v4876 = vpop.f32.mrb[0].mxu0
        %4877 = vmatprep.mubr.f32.mxu0 0.0
        %v4878 = vand.u32 %v4166, 4294901760
        %4879 = vmatmul.mubr.f32.gmra.mrb[0].mxu0 %v4878
        %v4880 = vpop.f32.mrb[0].mxu0
        %v4881 = vadd.f32 %v4788, %v4880
        %v4882 = vpop.f32.mrb[0].mxu0
        %4883 = vdwg.mxu0
        %s4884 = scalar_lea.vmem [#allocation3], 32
        %v4885 = vld [vmem:[%s4884] sm:$0xff]
        %v4886 = vld [vmem:[%s4884 + $0x8] sm:$0xff]
        %4887 = vmax.xlane.f32.xlu0 %v4875
        %v4888 = vpop.xlane.xlu0 %4887
        %4889 = vmax.xlane.f32.xlu0 %v4881
        %v4890 = vpop.xlane.xlu0 %4889
        %v4891 = vmax.f32 %v4885, %v4888
        %v4892 = vmax.f32 %v4886, %v4890
        %v4893 = vsub.f32 %v4885, %v4891
        %v4894 = vsub.f32 %v4886, %v4892
        %v4895 = vmul.f32 %v4893, 1.442695
        %v4896 = vpow.pop %v4895
        %v4897 = vmul.f32 %v4894, 1.442695
        %v4898 = vpow.pop %v4897
        %4900 = vset.pattern.permute.xlu0 0
        %4901 = vperm.xlu0 %4900, %v4891
        %v4902 = vpop.permute.xlu0 %4901
        %4905 = vset.pattern.permute.xlu0 0
        %4906 = vperm.xlu0 %4905, %v4892
        %v4907 = vpop.permute.xlu0 %4906
        %v4909 = vsub.f32 %v4875, %v4902
        %v4910 = vsub.f32 %v4881, %v4907
        %v4911 = vmul.f32 %v4909, 1.442695
        %v4912 = vpow.pop %v4911
        %v4913 = vmul.f32 %v4910, 1.442695
        %v4914 = vpow.pop %v4913
        %v4915 = vmul.f32 %v4912, %v1031
        %v4916 = vmul.f32 %v4914, %v1032
        %s4917 = scalar_lea.vmem [#allocation4], 32
        %v4918 = vld [vmem:[%s4917] sm:$0xff]
        %v4919 = vld [vmem:[%s4917 + $0x8] sm:$0xff]
        %v4920 = vmul.f32 %v4896, %v4918
        %v4921 = vmul.f32 %v4898, %v4919
        %4922 = vadd.xlane.f32.xlu0 %v4915
        %v4923 = vpop.xlane.xlu0 %4922
        %4924 = vadd.xlane.f32.xlu0 %v4916
        %v4925 = vpop.xlane.xlu0 %4924
        %v4926 = vadd.f32 %v4920, %v4923
        %v4927 = vadd.f32 %v4921, %v4925
        %4928 = vst.msk [vmem:[%s4917] sm:$0xff] %vm1850, %v4926
        %4929 = vst.msk [vmem:[%s4917 + $0x8] sm:$0xff] %vm1850, %v4927
        %s4930 = scalar_lea.vmem [#allocation5], 32
        %v4931 = vld [vmem:[%s4930] sm:$0xff]
        %v4932 = vld [vmem:[%s4930 + $0x8] sm:$0xff]
        %4934 = vset.pattern.permute.xlu0 0
        %4935 = vperm.xlu0 %4934, %v4896
        %v4936 = vpop.permute.xlu0 %4935
        %4939 = vset.pattern.permute.xlu0 0
        %4940 = vperm.xlu0 %4939, %v4898
        %v4941 = vpop.permute.xlu0 %4940
        %v4943 = vmul.f32 %v4936, %v4931
        %v4944 = vmul.f32 %v4941, %v4932
        %4945 = vrot.lane.b32.xlu0 %v1034, 112
        %v4946 = vpop.permute.xlu0 %4945
        %4947 = vrot.lane.b32.xlu0 %v1036, 112
        %v4948 = vpop.permute.xlu0 %4947
        %4949 = vrot.lane.b32.xlu0 %v1038, 112
        %v4950 = vpop.permute.xlu0 %4949
        %4951 = vrot.lane.b32.xlu0 %v1040, 112
        %v4952 = vpop.permute.xlu0 %4951
        %4953 = vrot.lane.b32.xlu0 %v1042, 112
        %v4954 = vpop.permute.xlu0 %4953
        %4955 = vrot.lane.b32.xlu0 %v1044, 112
        %v4956 = vpop.permute.xlu0 %4955
        %4957 = vrot.lane.b32.xlu0 %v1046, 112
        %v4958 = vpop.permute.xlu0 %4957
        %4959 = vrot.lane.b32.xlu0 %v1048, 112
        %v4960 = vpop.permute.xlu0 %4959
        %4961 = vrot.lane.b32.xlu0 %v1050, 112
        %v4962 = vpop.permute.xlu0 %4961
        %4963 = vrot.lane.b32.xlu0 %v1052, 112
        %v4964 = vpop.permute.xlu0 %4963
        %4965 = vrot.lane.b32.xlu0 %v1054, 112
        %v4966 = vpop.permute.xlu0 %4965
        %4967 = vrot.lane.b32.xlu0 %v1056, 112
        %v4968 = vpop.permute.xlu0 %4967
        %4969 = vrot.lane.b32.xlu0 %v1058, 112
        %v4970 = vpop.permute.xlu0 %4969
        %4971 = vrot.lane.b32.xlu0 %v1060, 112
        %v4972 = vpop.permute.xlu0 %4971
        %4973 = vrot.lane.b32.xlu0 %v1062, 112
        %v4974 = vpop.permute.xlu0 %4973
        %4975 = vrot.lane.b32.xlu0 %v1064, 112
        %v4976 = vpop.permute.xlu0 %4975
        %4993 = vmatprep.subr.mxu0 0.0
        %v4994 = vand.u32 %v4946, 4294901760
        %4995 = vmatpush1.msra.mxu0 %v4994
        %4996 = vmatprep.subr.mxu0 0.0
        %v4997 = vand.u32 %v4948, 4294901760
        %4998 = vmatpush1.msra.mxu0 %v4997
        %4999 = vmatprep.subr.mxu0 0.0
        %v5000 = vand.u32 %v4950, 4294901760
        %5001 = vmatpush1.msra.mxu0 %v5000
        %5002 = vmatprep.subr.mxu0 0.0
        %v5003 = vand.u32 %v4952, 4294901760
        %5004 = vmatpush1.msra.mxu0 %v5003
        %5005 = vmatprep.subr.mxu0 0.0
        %v5006 = vand.u32 %v4954, 4294901760
        %5007 = vmatpush1.msra.mxu0 %v5006
        %5008 = vmatprep.subr.mxu0 0.0
        %v5009 = vand.u32 %v4956, 4294901760
        %5010 = vmatpush1.msra.mxu0 %v5009
        %5011 = vmatprep.subr.mxu0 0.0
        %v5012 = vand.u32 %v4958, 4294901760
        %5013 = vmatpush1.msra.mxu0 %v5012
        %5014 = vmatprep.subr.mxu0 0.0
        %v5015 = vand.u32 %v4960, 4294901760
        %5016 = vmatpush1.msra.mxu0 %v5015
        %5017 = vmatprep.subr.mxu0 0.0
        %v5018 = vand.u32 %v4962, 4294901760
        %5019 = vmatpush1.msra.mxu0 %v5018
        %5020 = vmatprep.subr.mxu0 0.0
        %v5021 = vand.u32 %v4964, 4294901760
        %5022 = vmatpush1.msra.mxu0 %v5021
        %5023 = vmatprep.subr.mxu0 0.0
        %v5024 = vand.u32 %v4966, 4294901760
        %5025 = vmatpush1.msra.mxu0 %v5024
        %5026 = vmatprep.subr.mxu0 0.0
        %v5027 = vand.u32 %v4968, 4294901760
        %5028 = vmatpush1.msra.mxu0 %v5027
        %5029 = vmatprep.subr.mxu0 0.0
        %v5030 = vand.u32 %v4970, 4294901760
        %5031 = vmatpush1.msra.mxu0 %v5030
        %5032 = vmatprep.subr.mxu0 0.0
        %v5033 = vand.u32 %v4972, 4294901760
        %5034 = vmatpush1.msra.mxu0 %v5033
        %5035 = vmatprep.subr.mxu0 0.0
        %v5036 = vand.u32 %v4974, 4294901760
        %5037 = vmatpush1.msra.mxu0 %v5036
        %5038 = vmatprep.subr.mxu0 0.0
        %v5039 = vand.u32 %v4976, 4294901760
        %5040 = vmatpush1.msra.mxu0 %v5039
        %5041 = vmatprep.subr.mxu0 0.0
        %5042 = vmatpush1.msra.mxu0 0.0
        %5043 = vmatprep.subr.mxu0 0.0
        %5044 = vmatpush1.msra.mxu0 0.0
        %5045 = vmatprep.subr.mxu0 0.0
        %5046 = vmatpush1.msra.mxu0 0.0
        %5047 = vmatprep.subr.mxu0 0.0
        %5048 = vmatpush1.msra.mxu0 0.0
        %5049 = vmatprep.subr.mxu0 0.0
        %5050 = vmatpush1.msra.mxu0 0.0
        %5051 = vmatprep.subr.mxu0 0.0
        %5052 = vmatpush1.msra.mxu0 0.0
        %5053 = vmatprep.subr.mxu0 0.0
        %5054 = vmatpush1.msra.mxu0 0.0
        %5055 = vmatprep.subr.mxu0 0.0
        %5056 = vmatpush1.msra.mxu0 0.0
        %5057 = vmatprep.subr.mxu0 0.0
        %5058 = vmatpush1.msra.mxu0 0.0
        %5059 = vmatprep.subr.mxu0 0.0
        %5060 = vmatpush1.msra.mxu0 0.0
        %5061 = vmatprep.subr.mxu0 0.0
        %5062 = vmatpush1.msra.mxu0 0.0
        %5063 = vmatprep.subr.mxu0 0.0
        %5064 = vmatpush1.msra.mxu0 0.0
        %5065 = vmatprep.subr.mxu0 0.0
        %5066 = vmatpush1.msra.mxu0 0.0
        %5067 = vmatprep.subr.mxu0 0.0
        %5068 = vmatpush1.msra.mxu0 0.0
        %5069 = vmatprep.subr.mxu0 0.0
        %5070 = vmatpush1.msra.mxu0 0.0
        %5071 = vmatprep.subr.mxu0 0.0
        %5072 = vmatpush1.msra.mxu0 0.0
        %5073 = vmatprep.mubr.f32.mxu0 0.0
        %v5074 = vand.u32 %v4915, 4294901760
        %v5075 = vsub.f32 %v4915, %v5074
        %v5076 = vand.u32 %v5075, 4294901760
        %v5077 = vsub.f32 %v5075, %v5076
        %v5078 = vand.u32 %v5077, 4294901760
        %5079 = vmatmul.mubr.f32.gmra.mrb[0].mxu0 %v5078
        %v5080 = vpop.f32.mrb[0].mxu0
        %v5081 = vadd.f32 0.0, %v5080
        %v5082 = vpop.f32.mrb[0].mxu0
        %5083 = vmatprep.mubr.f32.mxu0 0.0
        %v5084 = vand.u32 %v4916, 4294901760
        %v5085 = vsub.f32 %v4916, %v5084
        %v5086 = vand.u32 %v5085, 4294901760
        %v5087 = vsub.f32 %v5085, %v5086
        %v5088 = vand.u32 %v5087, 4294901760
        %5089 = vmatmul.mubr.f32.gmra.mrb[0].mxu0 %v5088
        %v5090 = vpop.f32.mrb[0].mxu0
        %v5091 = vadd.f32 0.0, %v5090
        %v5092 = vpop.f32.mrb[0].mxu0
        %5093 = vdwg.mxu0
        %5094 = vmatprep.subr.mxu0 0.0
        %v5095 = vand.u32 %v4946, 4294901760
        %v5096 = vsub.f32 %v4946, %v5095
        %v5097 = vand.u32 %v5096, 4294901760
        %v5098 = vsub.f32 %v5096, %v5097
        %v5099 = vand.u32 %v5098, 4294901760
        %5100 = vmatpush1.msra.mxu0 %v5099
        %5101 = vmatprep.subr.mxu0 0.0
        %v5102 = vand.u32 %v4948, 4294901760
        %v5103 = vsub.f32 %v4948, %v5102
        %v5104 = vand.u32 %v5103, 4294901760
        %v5105 = vsub.f32 %v5103, %v5104
        %v5106 = vand.u32 %v5105, 4294901760
        %5107 = vmatpush1.msra.mxu0 %v5106
        %5108 = vmatprep.subr.mxu0 0.0
        %v5109 = vand.u32 %v4950, 4294901760
        %v5110 = vsub.f32 %v4950, %v5109
        %v5111 = vand.u32 %v5110, 4294901760
        %v5112 = vsub.f32 %v5110, %v5111
        %v5113 = vand.u32 %v5112, 4294901760
        %5114 = vmatpush1.msra.mxu0 %v5113
        %5115 = vmatprep.subr.mxu0 0.0
        %v5116 = vand.u32 %v4952, 4294901760
        %v5117 = vsub.f32 %v4952, %v5116
        %v5118 = vand.u32 %v5117, 4294901760
        %v5119 = vsub.f32 %v5117, %v5118
        %v5120 = vand.u32 %v5119, 4294901760
        %5121 = vmatpush1.msra.mxu0 %v5120
        %5122 = vmatprep.subr.mxu0 0.0
        %v5123 = vand.u32 %v4954, 4294901760
        %v5124 = vsub.f32 %v4954, %v5123
        %v5125 = vand.u32 %v5124, 4294901760
        %v5126 = vsub.f32 %v5124, %v5125
        %v5127 = vand.u32 %v5126, 4294901760
        %5128 = vmatpush1.msra.mxu0 %v5127
        %5129 = vmatprep.subr.mxu0 0.0
        %v5130 = vand.u32 %v4956, 4294901760
        %v5131 = vsub.f32 %v4956, %v5130
        %v5132 = vand.u32 %v5131, 4294901760
        %v5133 = vsub.f32 %v5131, %v5132
        %v5134 = vand.u32 %v5133, 4294901760
        %5135 = vmatpush1.msra.mxu0 %v5134
        %5136 = vmatprep.subr.mxu0 0.0
        %v5137 = vand.u32 %v4958, 4294901760
        %v5138 = vsub.f32 %v4958, %v5137
        %v5139 = vand.u32 %v5138, 4294901760
        %v5140 = vsub.f32 %v5138, %v5139
        %v5141 = vand.u32 %v5140, 4294901760
        %5142 = vmatpush1.msra.mxu0 %v5141
        %5143 = vmatprep.subr.mxu0 0.0
        %v5144 = vand.u32 %v4960, 4294901760
        %v5145 = vsub.f32 %v4960, %v5144
        %v5146 = vand.u32 %v5145, 4294901760
        %v5147 = vsub.f32 %v5145, %v5146
        %v5148 = vand.u32 %v5147, 4294901760
        %5149 = vmatpush1.msra.mxu0 %v5148
        %5150 = vmatprep.subr.mxu0 0.0
        %v5151 = vand.u32 %v4962, 4294901760
        %v5152 = vsub.f32 %v4962, %v5151
        %v5153 = vand.u32 %v5152, 4294901760
        %v5154 = vsub.f32 %v5152, %v5153
        %v5155 = vand.u32 %v5154, 4294901760
        %5156 = vmatpush1.msra.mxu0 %v5155
        %5157 = vmatprep.subr.mxu0 0.0
        %v5158 = vand.u32 %v4964, 4294901760
        %v5159 = vsub.f32 %v4964, %v5158
        %v5160 = vand.u32 %v5159, 4294901760
        %v5161 = vsub.f32 %v5159, %v5160
        %v5162 = vand.u32 %v5161, 4294901760
        %5163 = vmatpush1.msra.mxu0 %v5162
        %5164 = vmatprep.subr.mxu0 0.0
        %v5165 = vand.u32 %v4966, 4294901760
        %v5166 = vsub.f32 %v4966, %v5165
        %v5167 = vand.u32 %v5166, 4294901760
        %v5168 = vsub.f32 %v5166, %v5167
        %v5169 = vand.u32 %v5168, 4294901760
        %5170 = vmatpush1.msra.mxu0 %v5169
        %5171 = vmatprep.subr.mxu0 0.0
        %v5172 = vand.u32 %v4968, 4294901760
        %v5173 = vsub.f32 %v4968, %v5172
        %v5174 = vand.u32 %v5173, 4294901760
        %v5175 = vsub.f32 %v5173, %v5174
        %v5176 = vand.u32 %v5175, 4294901760
        %5177 = vmatpush1.msra.mxu0 %v5176
        %5178 = vmatprep.subr.mxu0 0.0
        %v5179 = vand.u32 %v4970, 4294901760
        %v5180 = vsub.f32 %v4970, %v5179
        %v5181 = vand.u32 %v5180, 4294901760
        %v5182 = vsub.f32 %v5180, %v5181
        %v5183 = vand.u32 %v5182, 4294901760
        %5184 = vmatpush1.msra.mxu0 %v5183
        %5185 = vmatprep.subr.mxu0 0.0
        %v5186 = vand.u32 %v4972, 4294901760
        %v5187 = vsub.f32 %v4972, %v5186
        %v5188 = vand.u32 %v5187, 4294901760
        %v5189 = vsub.f32 %v5187, %v5188
        %v5190 = vand.u32 %v5189, 4294901760
        %5191 = vmatpush1.msra.mxu0 %v5190
        %5192 = vmatprep.subr.mxu0 0.0
        %v5193 = vand.u32 %v4974, 4294901760
        %v5194 = vsub.f32 %v4974, %v5193
        %v5195 = vand.u32 %v5194, 4294901760
        %v5196 = vsub.f32 %v5194, %v5195
        %v5197 = vand.u32 %v5196, 4294901760
        %5198 = vmatpush1.msra.mxu0 %v5197
        %5199 = vmatprep.subr.mxu0 0.0
        %v5200 = vand.u32 %v4976, 4294901760
        %v5201 = vsub.f32 %v4976, %v5200
        %v5202 = vand.u32 %v5201, 4294901760
        %v5203 = vsub.f32 %v5201, %v5202
        %v5204 = vand.u32 %v5203, 4294901760
        %5205 = vmatpush1.msra.mxu0 %v5204
        %5206 = vmatprep.subr.mxu0 0.0
        %5207 = vmatpush1.msra.mxu0 0.0
        %5208 = vmatprep.subr.mxu0 0.0
        %5209 = vmatpush1.msra.mxu0 0.0
        %5210 = vmatprep.subr.mxu0 0.0
        %5211 = vmatpush1.msra.mxu0 0.0
        %5212 = vmatprep.subr.mxu0 0.0
        %5213 = vmatpush1.msra.mxu0 0.0
        %5214 = vmatprep.subr.mxu0 0.0
        %5215 = vmatpush1.msra.mxu0 0.0
        %5216 = vmatprep.subr.mxu0 0.0
        %5217 = vmatpush1.msra.mxu0 0.0
        %5218 = vmatprep.subr.mxu0 0.0
        %5219 = vmatpush1.msra.mxu0 0.0
        %5220 = vmatprep.subr.mxu0 0.0
        %5221 = vmatpush1.msra.mxu0 0.0
        %5222 = vmatprep.subr.mxu0 0.0
        %5223 = vmatpush1.msra.mxu0 0.0
        %5224 = vmatprep.subr.mxu0 0.0
        %5225 = vmatpush1.msra.mxu0 0.0
        %5226 = vmatprep.subr.mxu0 0.0
        %5227 = vmatpush1.msra.mxu0 0.0
        %5228 = vmatprep.subr.mxu0 0.0
        %5229 = vmatpush1.msra.mxu0 0.0
        %5230 = vmatprep.subr.mxu0 0.0
        %5231 = vmatpush1.msra.mxu0 0.0
        %5232 = vmatprep.subr.mxu0 0.0
        %5233 = vmatpush1.msra.mxu0 0.0
        %5234 = vmatprep.subr.mxu0 0.0
        %5235 = vmatpush1.msra.mxu0 0.0
        %5236 = vmatprep.subr.mxu0 0.0
        %5237 = vmatpush1.msra.mxu0 0.0
        %5238 = vmatprep.mubr.f32.mxu0 0.0
        %v5239 = vand.u32 %v4915, 4294901760
        %5240 = vmatmul.mubr.f32.gmra.mrb[0].mxu0 %v5239
        %v5241 = vpop.f32.mrb[0].mxu0
        %v5242 = vadd.f32 %v5081, %v5241
        %v5243 = vpop.f32.mrb[0].mxu0
        %5244 = vmatprep.mubr.f32.mxu0 0.0
        %v5245 = vand.u32 %v4916, 4294901760
        %5246 = vmatmul.mubr.f32.gmra.mrb[0].mxu0 %v5245
        %v5247 = vpop.f32.mrb[0].mxu0
        %v5248 = vadd.f32 %v5091, %v5247
        %v5249 = vpop.f32.mrb[0].mxu0
        %5250 = vdwg.mxu0
        %5251 = vmatprep.subr.mxu0 0.0
        %v5252 = vand.u32 %v4946, 4294901760
        %v5253 = vsub.f32 %v4946, %v5252
        %5254 = vmatpush1.msra.mxu0 %v5253
        %5255 = vmatprep.subr.mxu0 0.0
        %v5256 = vand.u32 %v4948, 4294901760
        %v5257 = vsub.f32 %v4948, %v5256
        %5258 = vmatpush1.msra.mxu0 %v5257
        %5259 = vmatprep.subr.mxu0 0.0
        %v5260 = vand.u32 %v4950, 4294901760
        %v5261 = vsub.f32 %v4950, %v5260
        %5262 = vmatpush1.msra.mxu0 %v5261
        %5263 = vmatprep.subr.mxu0 0.0
        %v5264 = vand.u32 %v4952, 4294901760
        %v5265 = vsub.f32 %v4952, %v5264
        %5266 = vmatpush1.msra.mxu0 %v5265
        %5267 = vmatprep.subr.mxu0 0.0
        %v5268 = vand.u32 %v4954, 4294901760
        %v5269 = vsub.f32 %v4954, %v5268
        %5270 = vmatpush1.msra.mxu0 %v5269
        %5271 = vmatprep.subr.mxu0 0.0
        %v5272 = vand.u32 %v4956, 4294901760
        %v5273 = vsub.f32 %v4956, %v5272
        %5274 = vmatpush1.msra.mxu0 %v5273
        %5275 = vmatprep.subr.mxu0 0.0
        %v5276 = vand.u32 %v4958, 4294901760
        %v5277 = vsub.f32 %v4958, %v5276
        %5278 = vmatpush1.msra.mxu0 %v5277
        %5279 = vmatprep.subr.mxu0 0.0
        %v5280 = vand.u32 %v4960, 4294901760
        %v5281 = vsub.f32 %v4960, %v5280
        %5282 = vmatpush1.msra.mxu0 %v5281
        %5283 = vmatprep.subr.mxu0 0.0
        %v5284 = vand.u32 %v4962, 4294901760
        %v5285 = vsub.f32 %v4962, %v5284
        %5286 = vmatpush1.msra.mxu0 %v5285
        %5287 = vmatprep.subr.mxu0 0.0
        %v5288 = vand.u32 %v4964, 4294901760
        %v5289 = vsub.f32 %v4964, %v5288
        %5290 = vmatpush1.msra.mxu0 %v5289
        %5291 = vmatprep.subr.mxu0 0.0
        %v5292 = vand.u32 %v4966, 4294901760
        %v5293 = vsub.f32 %v4966, %v5292
        %5294 = vmatpush1.msra.mxu0 %v5293
        %5295 = vmatprep.subr.mxu0 0.0
        %v5296 = vand.u32 %v4968, 4294901760
        %v5297 = vsub.f32 %v4968, %v5296
        %5298 = vmatpush1.msra.mxu0 %v5297
        %5299 = vmatprep.subr.mxu0 0.0
        %v5300 = vand.u32 %v4970, 4294901760
        %v5301 = vsub.f32 %v4970, %v5300
        %5302 = vmatpush1.msra.mxu0 %v5301
        %5303 = vmatprep.subr.mxu0 0.0
        %v5304 = vand.u32 %v4972, 4294901760
        %v5305 = vsub.f32 %v4972, %v5304
        %5306 = vmatpush1.msra.mxu0 %v5305
        %5307 = vmatprep.subr.mxu0 0.0
        %v5308 = vand.u32 %v4974, 4294901760
        %v5309 = vsub.f32 %v4974, %v5308
        %5310 = vmatpush1.msra.mxu0 %v5309
        %5311 = vmatprep.subr.mxu0 0.0
        %v5312 = vand.u32 %v4976, 4294901760
        %v5313 = vsub.f32 %v4976, %v5312
        %5314 = vmatpush1.msra.mxu0 %v5313
        %5315 = vmatprep.subr.mxu0 0.0
        %5316 = vmatpush1.msra.mxu0 0.0
        %5317 = vmatprep.subr.mxu0 0.0
        %5318 = vmatpush1.msra.mxu0 0.0
        %5319 = vmatprep.subr.mxu0 0.0
        %5320 = vmatpush1.msra.mxu0 0.0
        %5321 = vmatprep.subr.mxu0 0.0
        %5322 = vmatpush1.msra.mxu0 0.0
        %5323 = vmatprep.subr.mxu0 0.0
        %5324 = vmatpush1.msra.mxu0 0.0
        %5325 = vmatprep.subr.mxu0 0.0
        %5326 = vmatpush1.msra.mxu0 0.0
        %5327 = vmatprep.subr.mxu0 0.0
        %5328 = vmatpush1.msra.mxu0 0.0
        %5329 = vmatprep.subr.mxu0 0.0
        %5330 = vmatpush1.msra.mxu0 0.0
        %5331 = vmatprep.subr.mxu0 0.0
        %5332 = vmatpush1.msra.mxu0 0.0
        %5333 = vmatprep.subr.mxu0 0.0
        %5334 = vmatpush1.msra.mxu0 0.0
        %5335 = vmatprep.subr.mxu0 0.0
        %5336 = vmatpush1.msra.mxu0 0.0
        %5337 = vmatprep.subr.mxu0 0.0
        %5338 = vmatpush1.msra.mxu0 0.0
        %5339 = vmatprep.subr.mxu0 0.0
        %5340 = vmatpush1.msra.mxu0 0.0
        %5341 = vmatprep.subr.mxu0 0.0
        %5342 = vmatpush1.msra.mxu0 0.0
        %5343 = vmatprep.subr.mxu0 0.0
        %5344 = vmatpush1.msra.mxu0 0.0
        %5345 = vmatprep.subr.mxu0 0.0
        %5346 = vmatpush1.msra.mxu0 0.0
        %5347 = vmatprep.mubr.f32.mxu0 0.0
        %v5348 = vand.u32 %v4915, 4294901760
        %v5349 = vsub.f32 %v4915, %v5348
        %5350 = vmatmul.mubr.f32.gmra.mrb[0].mxu0 %v5349
        %v5351 = vpop.f32.mrb[0].mxu0
        %v5352 = vadd.f32 %v5242, %v5351
        %v5353 = vpop.f32.mrb[0].mxu0
        %5354 = vmatprep.mubr.f32.mxu0 0.0
        %v5355 = vand.u32 %v4916, 4294901760
        %v5356 = vsub.f32 %v4916, %v5355
        %5357 = vmatmul.mubr.f32.gmra.mrb[0].mxu0 %v5356
        %v5358 = vpop.f32.mrb[0].mxu0
        %v5359 = vadd.f32 %v5248, %v5358
        %v5360 = vpop.f32.mrb[0].mxu0
        %5361 = vdwg.mxu0
        %5362 = vmatprep.subr.mxu0 0.0
        %v5363 = vand.u32 %v4946, 4294901760
        %5364 = vmatpush1.msra.mxu0 %v5363
        %5365 = vmatprep.subr.mxu0 0.0
        %v5366 = vand.u32 %v4948, 4294901760
        %5367 = vmatpush1.msra.mxu0 %v5366
        %5368 = vmatprep.subr.mxu0 0.0
        %v5369 = vand.u32 %v4950, 4294901760
        %5370 = vmatpush1.msra.mxu0 %v5369
        %5371 = vmatprep.subr.mxu0 0.0
        %v5372 = vand.u32 %v4952, 4294901760
        %5373 = vmatpush1.msra.mxu0 %v5372
        %5374 = vmatprep.subr.mxu0 0.0
        %v5375 = vand.u32 %v4954, 4294901760
        %5376 = vmatpush1.msra.mxu0 %v5375
        %5377 = vmatprep.subr.mxu0 0.0
        %v5378 = vand.u32 %v4956, 4294901760
        %5379 = vmatpush1.msra.mxu0 %v5378
        %5380 = vmatprep.subr.mxu0 0.0
        %v5381 = vand.u32 %v4958, 4294901760
        %5382 = vmatpush1.msra.mxu0 %v5381
        %5383 = vmatprep.subr.mxu0 0.0
        %v5384 = vand.u32 %v4960, 4294901760
        %5385 = vmatpush1.msra.mxu0 %v5384
        %5386 = vmatprep.subr.mxu0 0.0
        %v5387 = vand.u32 %v4962, 4294901760
        %5388 = vmatpush1.msra.mxu0 %v5387
        %5389 = vmatprep.subr.mxu0 0.0
        %v5390 = vand.u32 %v4964, 4294901760
        %5391 = vmatpush1.msra.mxu0 %v5390
        %5392 = vmatprep.subr.mxu0 0.0
        %v5393 = vand.u32 %v4966, 4294901760
        %5394 = vmatpush1.msra.mxu0 %v5393
        %5395 = vmatprep.subr.mxu0 0.0
        %v5396 = vand.u32 %v4968, 4294901760
        %5397 = vmatpush1.msra.mxu0 %v5396
        %5398 = vmatprep.subr.mxu0 0.0
        %v5399 = vand.u32 %v4970, 4294901760
        %5400 = vmatpush1.msra.mxu0 %v5399
        %5401 = vmatprep.subr.mxu0 0.0
        %v5402 = vand.u32 %v4972, 4294901760
        %5403 = vmatpush1.msra.mxu0 %v5402
        %5404 = vmatprep.subr.mxu0 0.0
        %v5405 = vand.u32 %v4974, 4294901760
        %5406 = vmatpush1.msra.mxu0 %v5405
        %5407 = vmatprep.subr.mxu0 0.0
        %v5408 = vand.u32 %v4976, 4294901760
        %5409 = vmatpush1.msra.mxu0 %v5408
        %5410 = vmatprep.subr.mxu0 0.0
        %5411 = vmatpush1.msra.mxu0 0.0
        %5412 = vmatprep.subr.mxu0 0.0
        %5413 = vmatpush1.msra.mxu0 0.0
        %5414 = vmatprep.subr.mxu0 0.0
        %5415 = vmatpush1.msra.mxu0 0.0
        %5416 = vmatprep.subr.mxu0 0.0
        %5417 = vmatpush1.msra.mxu0 0.0
        %5418 = vmatprep.subr.mxu0 0.0
        %5419 = vmatpush1.msra.mxu0 0.0
        %5420 = vmatprep.subr.mxu0 0.0
        %5421 = vmatpush1.msra.mxu0 0.0
        %5422 = vmatprep.subr.mxu0 0.0
        %5423 = vmatpush1.msra.mxu0 0.0
        %5424 = vmatprep.subr.mxu0 0.0
        %5425 = vmatpush1.msra.mxu0 0.0
        %5426 = vmatprep.subr.mxu0 0.0
        %5427 = vmatpush1.msra.mxu0 0.0
        %5428 = vmatprep.subr.mxu0 0.0
        %5429 = vmatpush1.msra.mxu0 0.0
        %5430 = vmatprep.subr.mxu0 0.0
        %5431 = vmatpush1.msra.mxu0 0.0
        %5432 = vmatprep.subr.mxu0 0.0
        %5433 = vmatpush1.msra.mxu0 0.0
        %5434 = vmatprep.subr.mxu0 0.0
        %5435 = vmatpush1.msra.mxu0 0.0
        %5436 = vmatprep.subr.mxu0 0.0
        %5437 = vmatpush1.msra.mxu0 0.0
        %5438 = vmatprep.subr.mxu0 0.0
        %5439 = vmatpush1.msra.mxu0 0.0
        %5440 = vmatprep.subr.mxu0 0.0
        %5441 = vmatpush1.msra.mxu0 0.0
        %5442 = vmatprep.mubr.f32.mxu0 0.0
        %v5443 = vand.u32 %v4915, 4294901760
        %v5444 = vsub.f32 %v4915, %v5443
        %v5445 = vand.u32 %v5444, 4294901760
        %5446 = vmatmul.mubr.f32.gmra.mrb[0].mxu0 %v5445
        %v5447 = vpop.f32.mrb[0].mxu0
        %v5448 = vadd.f32 %v5352, %v5447
        %v5449 = vpop.f32.mrb[0].mxu0
        %5450 = vmatprep.mubr.f32.mxu0 0.0
        %v5451 = vand.u32 %v4916, 4294901760
        %v5452 = vsub.f32 %v4916, %v5451
        %v5453 = vand.u32 %v5452, 4294901760
        %5454 = vmatmul.mubr.f32.gmra.mrb[0].mxu0 %v5453
        %v5455 = vpop.f32.mrb[0].mxu0
        %v5456 = vadd.f32 %v5359, %v5455
        %v5457 = vpop.f32.mrb[0].mxu0
        %5458 = vdwg.mxu0
        %5459 = vmatprep.subr.mxu0 0.0
        %v5460 = vand.u32 %v4946, 4294901760
        %v5461 = vsub.f32 %v4946, %v5460
        %v5462 = vand.u32 %v5461, 4294901760
        %5463 = vmatpush1.msra.mxu0 %v5462
        %5464 = vmatprep.subr.mxu0 0.0
        %v5465 = vand.u32 %v4948, 4294901760
        %v5466 = vsub.f32 %v4948, %v5465
        %v5467 = vand.u32 %v5466, 4294901760
        %5468 = vmatpush1.msra.mxu0 %v5467
        %5469 = vmatprep.subr.mxu0 0.0
        %v5470 = vand.u32 %v4950, 4294901760
        %v5471 = vsub.f32 %v4950, %v5470
        %v5472 = vand.u32 %v5471, 4294901760
        %5473 = vmatpush1.msra.mxu0 %v5472
        %5474 = vmatprep.subr.mxu0 0.0
        %v5475 = vand.u32 %v4952, 4294901760
        %v5476 = vsub.f32 %v4952, %v5475
        %v5477 = vand.u32 %v5476, 4294901760
        %5478 = vmatpush1.msra.mxu0 %v5477
        %5479 = vmatprep.subr.mxu0 0.0
        %v5480 = vand.u32 %v4954, 4294901760
        %v5481 = vsub.f32 %v4954, %v5480
        %v5482 = vand.u32 %v5481, 4294901760
        %5483 = vmatpush1.msra.mxu0 %v5482
        %5484 = vmatprep.subr.mxu0 0.0
        %v5485 = vand.u32 %v4956, 4294901760
        %v5486 = vsub.f32 %v4956, %v5485
        %v5487 = vand.u32 %v5486, 4294901760
        %5488 = vmatpush1.msra.mxu0 %v5487
        %5489 = vmatprep.subr.mxu0 0.0
        %v5490 = vand.u32 %v4958, 4294901760
        %v5491 = vsub.f32 %v4958, %v5490
        %v5492 = vand.u32 %v5491, 4294901760
        %5493 = vmatpush1.msra.mxu0 %v5492
        %5494 = vmatprep.subr.mxu0 0.0
        %v5495 = vand.u32 %v4960, 4294901760
        %v5496 = vsub.f32 %v4960, %v5495
        %v5497 = vand.u32 %v5496, 4294901760
        %5498 = vmatpush1.msra.mxu0 %v5497
        %5499 = vmatprep.subr.mxu0 0.0
        %v5500 = vand.u32 %v4962, 4294901760
        %v5501 = vsub.f32 %v4962, %v5500
        %v5502 = vand.u32 %v5501, 4294901760
        %5503 = vmatpush1.msra.mxu0 %v5502
        %5504 = vmatprep.subr.mxu0 0.0
        %v5505 = vand.u32 %v4964, 4294901760
        %v5506 = vsub.f32 %v4964, %v5505
        %v5507 = vand.u32 %v5506, 4294901760
        %5508 = vmatpush1.msra.mxu0 %v5507
        %5509 = vmatprep.subr.mxu0 0.0
        %v5510 = vand.u32 %v4966, 4294901760
        %v5511 = vsub.f32 %v4966, %v5510
        %v5512 = vand.u32 %v5511, 4294901760
        %5513 = vmatpush1.msra.mxu0 %v5512
        %5514 = vmatprep.subr.mxu0 0.0
        %v5515 = vand.u32 %v4968, 4294901760
        %v5516 = vsub.f32 %v4968, %v5515
        %v5517 = vand.u32 %v5516, 4294901760
        %5518 = vmatpush1.msra.mxu0 %v5517
        %5519 = vmatprep.subr.mxu0 0.0
        %v5520 = vand.u32 %v4970, 4294901760
        %v5521 = vsub.f32 %v4970, %v5520
        %v5522 = vand.u32 %v5521, 4294901760
        %5523 = vmatpush1.msra.mxu0 %v5522
        %5524 = vmatprep.subr.mxu0 0.0
        %v5525 = vand.u32 %v4972, 4294901760
        %v5526 = vsub.f32 %v4972, %v5525
        %v5527 = vand.u32 %v5526, 4294901760
        %5528 = vmatpush1.msra.mxu0 %v5527
        %5529 = vmatprep.subr.mxu0 0.0
        %v5530 = vand.u32 %v4974, 4294901760
        %v5531 = vsub.f32 %v4974, %v5530
        %v5532 = vand.u32 %v5531, 4294901760
        %5533 = vmatpush1.msra.mxu0 %v5532
        %5534 = vmatprep.subr.mxu0 0.0
        %v5535 = vand.u32 %v4976, 4294901760
        %v5536 = vsub.f32 %v4976, %v5535
        %v5537 = vand.u32 %v5536, 4294901760
        %5538 = vmatpush1.msra.mxu0 %v5537
        %5539 = vmatprep.subr.mxu0 0.0
        %5540 = vmatpush1.msra.mxu0 0.0
        %5541 = vmatprep.subr.mxu0 0.0
        %5542 = vmatpush1.msra.mxu0 0.0
        %5543 = vmatprep.subr.mxu0 0.0
        %5544 = vmatpush1.msra.mxu0 0.0
        %5545 = vmatprep.subr.mxu0 0.0
        %5546 = vmatpush1.msra.mxu0 0.0
        %5547 = vmatprep.subr.mxu0 0.0
        %5548 = vmatpush1.msra.mxu0 0.0
        %5549 = vmatprep.subr.mxu0 0.0
        %5550 = vmatpush1.msra.mxu0 0.0
        %5551 = vmatprep.subr.mxu0 0.0
        %5552 = vmatpush1.msra.mxu0 0.0
        %5553 = vmatprep.subr.mxu0 0.0
        %5554 = vmatpush1.msra.mxu0 0.0
        %5555 = vmatprep.subr.mxu0 0.0
        %5556 = vmatpush1.msra.mxu0 0.0
        %5557 = vmatprep.subr.mxu0 0.0
        %5558 = vmatpush1.msra.mxu0 0.0
        %5559 = vmatprep.subr.mxu0 0.0
        %5560 = vmatpush1.msra.mxu0 0.0
        %5561 = vmatprep.subr.mxu0 0.0
        %5562 = vmatpush1.msra.mxu0 0.0
        %5563 = vmatprep.subr.mxu0 0.0
        %5564 = vmatpush1.msra.mxu0 0.0
        %5565 = vmatprep.subr.mxu0 0.0
        %5566 = vmatpush1.msra.mxu0 0.0
        %5567 = vmatprep.subr.mxu0 0.0
        %5568 = vmatpush1.msra.mxu0 0.0
        %5569 = vmatprep.subr.mxu0 0.0
        %5570 = vmatpush1.msra.mxu0 0.0
        %5571 = vmatprep.mubr.f32.mxu0 0.0
        %v5572 = vand.u32 %v4915, 4294901760
        %5573 = vmatmul.mubr.f32.gmra.mrb[0].mxu0 %v5572
        %v5574 = vpop.f32.mrb[0].mxu0
        %v5575 = vadd.f32 %v5448, %v5574
        %v5576 = vpop.f32.mrb[0].mxu0
        %5577 = vmatprep.mubr.f32.mxu0 0.0
        %v5578 = vand.u32 %v4916, 4294901760
        %5579 = vmatmul.mubr.f32.gmra.mrb[0].mxu0 %v5578
        %v5580 = vpop.f32.mrb[0].mxu0
        %v5581 = vadd.f32 %v5456, %v5580
        %v5582 = vpop.f32.mrb[0].mxu0
        %5583 = vdwg.mxu0
        %5584 = vmatprep.subr.mxu0 0.0
        %v5585 = vand.u32 %v4946, 4294901760
        %5586 = vmatpush1.msra.mxu0 %v5585
        %5587 = vmatprep.subr.mxu0 0.0
        %v5588 = vand.u32 %v4948, 4294901760
        %5589 = vmatpush1.msra.mxu0 %v5588
        %5590 = vmatprep.subr.mxu0 0.0
        %v5591 = vand.u32 %v4950, 4294901760
        %5592 = vmatpush1.msra.mxu0 %v5591
        %5593 = vmatprep.subr.mxu0 0.0
        %v5594 = vand.u32 %v4952, 4294901760
        %5595 = vmatpush1.msra.mxu0 %v5594
        %5596 = vmatprep.subr.mxu0 0.0
        %v5597 = vand.u32 %v4954, 4294901760
        %5598 = vmatpush1.msra.mxu0 %v5597
        %5599 = vmatprep.subr.mxu0 0.0
        %v5600 = vand.u32 %v4956, 4294901760
        %5601 = vmatpush1.msra.mxu0 %v5600
        %5602 = vmatprep.subr.mxu0 0.0
        %v5603 = vand.u32 %v4958, 4294901760
        %5604 = vmatpush1.msra.mxu0 %v5603
        %5605 = vmatprep.subr.mxu0 0.0
        %v5606 = vand.u32 %v4960, 4294901760
        %5607 = vmatpush1.msra.mxu0 %v5606
        %5608 = vmatprep.subr.mxu0 0.0
        %v5609 = vand.u32 %v4962, 4294901760
        %5610 = vmatpush1.msra.mxu0 %v5609
        %5611 = vmatprep.subr.mxu0 0.0
        %v5612 = vand.u32 %v4964, 4294901760
        %5613 = vmatpush1.msra.mxu0 %v5612
        %5614 = vmatprep.subr.mxu0 0.0
        %v5615 = vand.u32 %v4966, 4294901760
        %5616 = vmatpush1.msra.mxu0 %v5615
        %5617 = vmatprep.subr.mxu0 0.0
        %v5618 = vand.u32 %v4968, 4294901760
        %5619 = vmatpush1.msra.mxu0 %v5618
        %5620 = vmatprep.subr.mxu0 0.0
        %v5621 = vand.u32 %v4970, 4294901760
        %5622 = vmatpush1.msra.mxu0 %v5621
        %5623 = vmatprep.subr.mxu0 0.0
        %v5624 = vand.u32 %v4972, 4294901760
        %5625 = vmatpush1.msra.mxu0 %v5624
        %5626 = vmatprep.subr.mxu0 0.0
        %v5627 = vand.u32 %v4974, 4294901760
        %5628 = vmatpush1.msra.mxu0 %v5627
        %5629 = vmatprep.subr.mxu0 0.0
        %v5630 = vand.u32 %v4976, 4294901760
        %5631 = vmatpush1.msra.mxu0 %v5630
        %5632 = vmatprep.subr.mxu0 0.0
        %5633 = vmatpush1.msra.mxu0 0.0
        %5634 = vmatprep.subr.mxu0 0.0
        %5635 = vmatpush1.msra.mxu0 0.0
        %5636 = vmatprep.subr.mxu0 0.0
        %5637 = vmatpush1.msra.mxu0 0.0
        %5638 = vmatprep.subr.mxu0 0.0
        %5639 = vmatpush1.msra.mxu0 0.0
        %5640 = vmatprep.subr.mxu0 0.0
        %5641 = vmatpush1.msra.mxu0 0.0
        %5642 = vmatprep.subr.mxu0 0.0
        %5643 = vmatpush1.msra.mxu0 0.0
        %5644 = vmatprep.subr.mxu0 0.0
        %5645 = vmatpush1.msra.mxu0 0.0
        %5646 = vmatprep.subr.mxu0 0.0
        %5647 = vmatpush1.msra.mxu0 0.0
        %5648 = vmatprep.subr.mxu0 0.0
        %5649 = vmatpush1.msra.mxu0 0.0
        %5650 = vmatprep.subr.mxu0 0.0
        %5651 = vmatpush1.msra.mxu0 0.0
        %5652 = vmatprep.subr.mxu0 0.0
        %5653 = vmatpush1.msra.mxu0 0.0
        %5654 = vmatprep.subr.mxu0 0.0
        %5655 = vmatpush1.msra.mxu0 0.0
        %5656 = vmatprep.subr.mxu0 0.0
        %5657 = vmatpush1.msra.mxu0 0.0
        %5658 = vmatprep.subr.mxu0 0.0
        %5659 = vmatpush1.msra.mxu0 0.0
        %5660 = vmatprep.subr.mxu0 0.0
        %5661 = vmatpush1.msra.mxu0 0.0
        %5662 = vmatprep.subr.mxu0 0.0
        %5663 = vmatpush1.msra.mxu0 0.0
        %5664 = vmatprep.mubr.f32.mxu0 0.0
        %v5665 = vand.u32 %v4915, 4294901760
        %5666 = vmatmul.mubr.f32.gmra.mrb[0].mxu0 %v5665
        %v5667 = vpop.f32.mrb[0].mxu0
        %v5668 = vadd.f32 %v5575, %v5667
        %v5669 = vpop.f32.mrb[0].mxu0
        %5670 = vmatprep.mubr.f32.mxu0 0.0
        %v5671 = vand.u32 %v4916, 4294901760
        %5672 = vmatmul.mubr.f32.gmra.mrb[0].mxu0 %v5671
        %v5673 = vpop.f32.mrb[0].mxu0
        %v5674 = vadd.f32 %v5581, %v5673
        %v5675 = vpop.f32.mrb[0].mxu0
        %5676 = vdwg.mxu0
        %v5677 = vadd.f32 %v4943, %v5668
        %v5678 = vadd.f32 %v4944, %v5674
        %5679 = vst.msk [vmem:[%s4930] sm:$0xff] %vm1069, %v5677
        %5680 = vst.msk [vmem:[%s4930 + $0x8] sm:$0xff] %vm1069, %v5678
        %5681 = vst.msk [vmem:[%s4884] sm:$0xff] %vm1850, %v4891
        %5682 = vst.msk [vmem:[%s4884 + $0x8] sm:$0xff] %vm1850, %v4892
        %5683 = vrot.lane.b32.xlu0 %v1065, 104
        %v5684 = vpop.permute.xlu0 %5683
        %5685 = vrot.lane.b32.xlu0 %v1067, 104
        %v5686 = vpop.permute.xlu0 %5685
        %5687 = vrot.lane.b32.xlu0 %v1033, 104
        %v5688 = vpop.permute.xlu0 %5687
        %5689 = vrot.lane.b32.xlu0 %v1035, 104
        %v5690 = vpop.permute.xlu0 %5689
        %5691 = vrot.lane.b32.xlu0 %v1037, 104
        %v5692 = vpop.permute.xlu0 %5691
        %5693 = vrot.lane.b32.xlu0 %v1039, 104
        %v5694 = vpop.permute.xlu0 %5693
        %5695 = vrot.lane.b32.xlu0 %v1041, 104
        %v5696 = vpop.permute.xlu0 %5695
        %5697 = vrot.lane.b32.xlu0 %v1043, 104
        %v5698 = vpop.permute.xlu0 %5697
        %5699 = vrot.lane.b32.xlu0 %v1045, 104
        %v5700 = vpop.permute.xlu0 %5699
        %5701 = vrot.lane.b32.xlu0 %v1047, 104
        %v5702 = vpop.permute.xlu0 %5701
        %5703 = vrot.lane.b32.xlu0 %v1049, 104
        %v5704 = vpop.permute.xlu0 %5703
        %5705 = vrot.lane.b32.xlu0 %v1051, 104
        %v5706 = vpop.permute.xlu0 %5705
        %5707 = vrot.lane.b32.xlu0 %v1053, 104
        %v5708 = vpop.permute.xlu0 %5707
        %5709 = vrot.lane.b32.xlu0 %v1055, 104
        %v5710 = vpop.permute.xlu0 %5709
        %5711 = vrot.lane.b32.xlu0 %v1057, 104
        %v5712 = vpop.permute.xlu0 %5711
        %5713 = vrot.lane.b32.xlu0 %v1059, 104
        %v5714 = vpop.permute.xlu0 %5713
        %5715 = vrot.lane.b32.xlu0 %v1061, 104
        %v5716 = vpop.permute.xlu0 %5715
        %5717 = vrot.lane.b32.xlu0 %v1063, 104
        %v5718 = vpop.permute.xlu0 %5717
        %v5719 = vsel %vm1069, %v5684, 0
        %v5721 = vsel %vm1069, %v5686, 0
        %v5723 = vsel %vm1069, %v5688, 0
        %v5725 = vsel %vm1069, %v5690, 0
        %v5727 = vsel %vm1069, %v5692, 0
        %v5729 = vsel %vm1069, %v5694, 0
        %v5731 = vsel %vm1069, %v5696, 0
        %v5733 = vsel %vm1069, %v5698, 0
        %v5735 = vsel %vm1069, %v5700, 0
        %v5737 = vsel %vm1069, %v5702, 0
        %v5739 = vsel %vm1069, %v5704, 0
        %v5741 = vsel %vm1069, %v5706, 0
        %v5743 = vsel %vm1069, %v5708, 0
        %v5745 = vsel %vm1069, %v5710, 0
        %v5747 = vsel %vm1069, %v5712, 0
        %v5749 = vsel %vm1069, %v5714, 0
        %v5751 = vsel %vm1069, %v5716, 0
        %v5753 = vsel %vm1069, %v5718, 0
        %5755 = vmatprep.subr.mxu0 0.0
        %v5756 = vand.u32 %v5723, 4294901760
        %5757 = vmatpush1.xpose.msra.mxu0 %v5756
        %5758 = vmatprep.subr.mxu0 0.0
        %v5759 = vand.u32 %v5725, 4294901760
        %5760 = vmatpush1.xpose.msra.mxu0 %v5759
        %5761 = vmatprep.subr.mxu0 0.0
        %v5762 = vand.u32 %v5727, 4294901760
        %5763 = vmatpush1.xpose.msra.mxu0 %v5762
        %5764 = vmatprep.subr.mxu0 0.0
        %v5765 = vand.u32 %v5729, 4294901760
        %5766 = vmatpush1.xpose.msra.mxu0 %v5765
        %5767 = vmatprep.subr.mxu0 0.0
        %v5768 = vand.u32 %v5731, 4294901760
        %5769 = vmatpush1.xpose.msra.mxu0 %v5768
        %5770 = vmatprep.subr.mxu0 0.0
        %v5771 = vand.u32 %v5733, 4294901760
        %5772 = vmatpush1.xpose.msra.mxu0 %v5771
        %5773 = vmatprep.subr.mxu0 0.0
        %v5774 = vand.u32 %v5735, 4294901760
        %5775 = vmatpush1.xpose.msra.mxu0 %v5774
        %5776 = vmatprep.subr.mxu0 0.0
        %v5777 = vand.u32 %v5737, 4294901760
        %5778 = vmatpush1.xpose.msra.mxu0 %v5777
        %5779 = vmatprep.subr.mxu0 0.0
        %v5780 = vand.u32 %v5739, 4294901760
        %5781 = vmatpush1.xpose.msra.mxu0 %v5780
        %5782 = vmatprep.subr.mxu0 0.0
        %v5783 = vand.u32 %v5741, 4294901760
        %5784 = vmatpush1.xpose.msra.mxu0 %v5783
        %5785 = vmatprep.subr.mxu0 0.0
        %v5786 = vand.u32 %v5743, 4294901760
        %5787 = vmatpush1.xpose.msra.mxu0 %v5786
        %5788 = vmatprep.subr.mxu0 0.0
        %v5789 = vand.u32 %v5745, 4294901760
        %5790 = vmatpush1.xpose.msra.mxu0 %v5789
        %5791 = vmatprep.subr.mxu0 0.0
        %v5792 = vand.u32 %v5747, 4294901760
        %5793 = vmatpush1.xpose.msra.mxu0 %v5792
        %5794 = vmatprep.subr.mxu0 0.0
        %v5795 = vand.u32 %v5749, 4294901760
        %5796 = vmatpush1.xpose.msra.mxu0 %v5795
        %5797 = vmatprep.subr.mxu0 0.0
        %v5798 = vand.u32 %v5751, 4294901760
        %5799 = vmatpush1.xpose.msra.mxu0 %v5798
        %5800 = vmatprep.subr.mxu0 0.0
        %v5801 = vand.u32 %v5753, 4294901760
        %5802 = vmatpush1.xpose.msra.mxu0 %v5801
        %5803 = vmatprep.subr.mxu0 0.0
        %5804 = vmatpush1.xpose.msra.mxu0 0.0
        %5805 = vmatprep.subr.mxu0 0.0
        %5806 = vmatpush1.xpose.msra.mxu0 0.0
        %5807 = vmatprep.subr.mxu0 0.0
        %5808 = vmatpush1.xpose.msra.mxu0 0.0
        %5809 = vmatprep.subr.mxu0 0.0
        %5810 = vmatpush1.xpose.msra.mxu0 0.0
        %5811 = vmatprep.subr.mxu0 0.0
        %5812 = vmatpush1.xpose.msra.mxu0 0.0
        %5813 = vmatprep.subr.mxu0 0.0
        %5814 = vmatpush1.xpose.msra.mxu0 0.0
        %5815 = vmatprep.subr.mxu0 0.0
        %5816 = vmatpush1.xpose.msra.mxu0 0.0
        %5817 = vmatprep.subr.mxu0 0.0
        %5818 = vmatpush1.xpose.msra.mxu0 0.0
        %5819 = vmatprep.subr.mxu0 0.0
        %5820 = vmatpush1.xpose.msra.mxu0 0.0
        %5821 = vmatprep.subr.mxu0 0.0
        %5822 = vmatpush1.xpose.msra.mxu0 0.0
        %5823 = vmatprep.subr.mxu0 0.0
        %5824 = vmatpush1.xpose.msra.mxu0 0.0
        %5825 = vmatprep.subr.mxu0 0.0
        %5826 = vmatpush1.xpose.msra.mxu0 0.0
        %5827 = vmatprep.subr.mxu0 0.0
        %5828 = vmatpush1.xpose.msra.mxu0 0.0
        %5829 = vmatprep.subr.mxu0 0.0
        %5830 = vmatpush1.xpose.msra.mxu0 0.0
        %5831 = vmatprep.subr.mxu0 0.0
        %5832 = vmatpush1.xpose.msra.mxu0 0.0
        %5833 = vmatprep.subr.mxu0 0.0
        %5834 = vmatpush1.xpose.msra.mxu0 0.0
        %5835 = vmatprep.mubr.f32.mxu0 0.0
        %v5836 = vand.u32 %v5719, 4294901760
        %v5837 = vsub.f32 %v5719, %v5836
        %v5838 = vand.u32 %v5837, 4294901760
        %v5839 = vsub.f32 %v5837, %v5838
        %v5840 = vand.u32 %v5839, 4294901760
        %5841 = vmatmul.mubr.f32.gmra.mrb[0].mxu0 %v5840
        %v5842 = vpop.f32.mrb[0].mxu0
        %v5843 = vadd.f32 0.0, %v5842
        %v5844 = vpop.f32.mrb[0].mxu0
        %5845 = vmatprep.mubr.f32.mxu0 0.0
        %v5846 = vand.u32 %v5721, 4294901760
        %v5847 = vsub.f32 %v5721, %v5846
        %v5848 = vand.u32 %v5847, 4294901760
        %v5849 = vsub.f32 %v5847, %v5848
        %v5850 = vand.u32 %v5849, 4294901760
        %5851 = vmatmul.mubr.f32.gmra.mrb[0].mxu0 %v5850
        %v5852 = vpop.f32.mrb[0].mxu0
        %v5853 = vadd.f32 0.0, %v5852
        %v5854 = vpop.f32.mrb[0].mxu0
        %5855 = vdwg.mxu0
        %5856 = vmatprep.subr.mxu0 0.0
        %v5857 = vand.u32 %v5723, 4294901760
        %v5858 = vsub.f32 %v5723, %v5857
        %v5859 = vand.u32 %v5858, 4294901760
        %v5860 = vsub.f32 %v5858, %v5859
        %v5861 = vand.u32 %v5860, 4294901760
        %5862 = vmatpush1.xpose.msra.mxu0 %v5861
        %5863 = vmatprep.subr.mxu0 0.0
        %v5864 = vand.u32 %v5725, 4294901760
        %v5865 = vsub.f32 %v5725, %v5864
        %v5866 = vand.u32 %v5865, 4294901760
        %v5867 = vsub.f32 %v5865, %v5866
        %v5868 = vand.u32 %v5867, 4294901760
        %5869 = vmatpush1.xpose.msra.mxu0 %v5868
        %5870 = vmatprep.subr.mxu0 0.0
        %v5871 = vand.u32 %v5727, 4294901760
        %v5872 = vsub.f32 %v5727, %v5871
        %v5873 = vand.u32 %v5872, 4294901760
        %v5874 = vsub.f32 %v5872, %v5873
        %v5875 = vand.u32 %v5874, 4294901760
        %5876 = vmatpush1.xpose.msra.mxu0 %v5875
        %5877 = vmatprep.subr.mxu0 0.0
        %v5878 = vand.u32 %v5729, 4294901760
        %v5879 = vsub.f32 %v5729, %v5878
        %v5880 = vand.u32 %v5879, 4294901760
        %v5881 = vsub.f32 %v5879, %v5880
        %v5882 = vand.u32 %v5881, 4294901760
        %5883 = vmatpush1.xpose.msra.mxu0 %v5882
        %5884 = vmatprep.subr.mxu0 0.0
        %v5885 = vand.u32 %v5731, 4294901760
        %v5886 = vsub.f32 %v5731, %v5885
        %v5887 = vand.u32 %v5886, 4294901760
        %v5888 = vsub.f32 %v5886, %v5887
        %v5889 = vand.u32 %v5888, 4294901760
        %5890 = vmatpush1.xpose.msra.mxu0 %v5889
        %5891 = vmatprep.subr.mxu0 0.0
        %v5892 = vand.u32 %v5733, 4294901760
        %v5893 = vsub.f32 %v5733, %v5892
        %v5894 = vand.u32 %v5893, 4294901760
        %v5895 = vsub.f32 %v5893, %v5894
        %v5896 = vand.u32 %v5895, 4294901760
        %5897 = vmatpush1.xpose.msra.mxu0 %v5896
        %5898 = vmatprep.subr.mxu0 0.0
        %v5899 = vand.u32 %v5735, 4294901760
        %v5900 = vsub.f32 %v5735, %v5899
        %v5901 = vand.u32 %v5900, 4294901760
        %v5902 = vsub.f32 %v5900, %v5901
        %v5903 = vand.u32 %v5902, 4294901760
        %5904 = vmatpush1.xpose.msra.mxu0 %v5903
        %5905 = vmatprep.subr.mxu0 0.0
        %v5906 = vand.u32 %v5737, 4294901760
        %v5907 = vsub.f32 %v5737, %v5906
        %v5908 = vand.u32 %v5907, 4294901760
        %v5909 = vsub.f32 %v5907, %v5908
        %v5910 = vand.u32 %v5909, 4294901760
        %5911 = vmatpush1.xpose.msra.mxu0 %v5910
        %5912 = vmatprep.subr.mxu0 0.0
        %v5913 = vand.u32 %v5739, 4294901760
        %v5914 = vsub.f32 %v5739, %v5913
        %v5915 = vand.u32 %v5914, 4294901760
        %v5916 = vsub.f32 %v5914, %v5915
        %v5917 = vand.u32 %v5916, 4294901760
        %5918 = vmatpush1.xpose.msra.mxu0 %v5917
        %5919 = vmatprep.subr.mxu0 0.0
        %v5920 = vand.u32 %v5741, 4294901760
        %v5921 = vsub.f32 %v5741, %v5920
        %v5922 = vand.u32 %v5921, 4294901760
        %v5923 = vsub.f32 %v5921, %v5922
        %v5924 = vand.u32 %v5923, 4294901760
        %5925 = vmatpush1.xpose.msra.mxu0 %v5924
        %5926 = vmatprep.subr.mxu0 0.0
        %v5927 = vand.u32 %v5743, 4294901760
        %v5928 = vsub.f32 %v5743, %v5927
        %v5929 = vand.u32 %v5928, 4294901760
        %v5930 = vsub.f32 %v5928, %v5929
        %v5931 = vand.u32 %v5930, 4294901760
        %5932 = vmatpush1.xpose.msra.mxu0 %v5931
        %5933 = vmatprep.subr.mxu0 0.0
        %v5934 = vand.u32 %v5745, 4294901760
        %v5935 = vsub.f32 %v5745, %v5934
        %v5936 = vand.u32 %v5935, 4294901760
        %v5937 = vsub.f32 %v5935, %v5936
        %v5938 = vand.u32 %v5937, 4294901760
        %5939 = vmatpush1.xpose.msra.mxu0 %v5938
        %5940 = vmatprep.subr.mxu0 0.0
        %v5941 = vand.u32 %v5747, 4294901760
        %v5942 = vsub.f32 %v5747, %v5941
        %v5943 = vand.u32 %v5942, 4294901760
        %v5944 = vsub.f32 %v5942, %v5943
        %v5945 = vand.u32 %v5944, 4294901760
        %5946 = vmatpush1.xpose.msra.mxu0 %v5945
        %5947 = vmatprep.subr.mxu0 0.0
        %v5948 = vand.u32 %v5749, 4294901760
        %v5949 = vsub.f32 %v5749, %v5948
        %v5950 = vand.u32 %v5949, 4294901760
        %v5951 = vsub.f32 %v5949, %v5950
        %v5952 = vand.u32 %v5951, 4294901760
        %5953 = vmatpush1.xpose.msra.mxu0 %v5952
        %5954 = vmatprep.subr.mxu0 0.0
        %v5955 = vand.u32 %v5751, 4294901760
        %v5956 = vsub.f32 %v5751, %v5955
        %v5957 = vand.u32 %v5956, 4294901760
        %v5958 = vsub.f32 %v5956, %v5957
        %v5959 = vand.u32 %v5958, 4294901760
        %5960 = vmatpush1.xpose.msra.mxu0 %v5959
        %5961 = vmatprep.subr.mxu0 0.0
        %v5962 = vand.u32 %v5753, 4294901760
        %v5963 = vsub.f32 %v5753, %v5962
        %v5964 = vand.u32 %v5963, 4294901760
        %v5965 = vsub.f32 %v5963, %v5964
        %v5966 = vand.u32 %v5965, 4294901760
        %5967 = vmatpush1.xpose.msra.mxu0 %v5966
        %5968 = vmatprep.subr.mxu0 0.0
        %5969 = vmatpush1.xpose.msra.mxu0 0.0
        %5970 = vmatprep.subr.mxu0 0.0
        %5971 = vmatpush1.xpose.msra.mxu0 0.0
        %5972 = vmatprep.subr.mxu0 0.0
        %5973 = vmatpush1.xpose.msra.mxu0 0.0
        %5974 = vmatprep.subr.mxu0 0.0
        %5975 = vmatpush1.xpose.msra.mxu0 0.0
        %5976 = vmatprep.subr.mxu0 0.0
        %5977 = vmatpush1.xpose.msra.mxu0 0.0
        %5978 = vmatprep.subr.mxu0 0.0
        %5979 = vmatpush1.xpose.msra.mxu0 0.0
        %5980 = vmatprep.subr.mxu0 0.0
        %5981 = vmatpush1.xpose.msra.mxu0 0.0
        %5982 = vmatprep.subr.mxu0 0.0
        %5983 = vmatpush1.xpose.msra.mxu0 0.0
        %5984 = vmatprep.subr.mxu0 0.0
        %5985 = vmatpush1.xpose.msra.mxu0 0.0
        %5986 = vmatprep.subr.mxu0 0.0
        %5987 = vmatpush1.xpose.msra.mxu0 0.0
        %5988 = vmatprep.subr.mxu0 0.0
        %5989 = vmatpush1.xpose.msra.mxu0 0.0
        %5990 = vmatprep.subr.mxu0 0.0
        %5991 = vmatpush1.xpose.msra.mxu0 0.0
        %5992 = vmatprep.subr.mxu0 0.0
        %5993 = vmatpush1.xpose.msra.mxu0 0.0
        %5994 = vmatprep.subr.mxu0 0.0
        %5995 = vmatpush1.xpose.msra.mxu0 0.0
        %5996 = vmatprep.subr.mxu0 0.0
        %5997 = vmatpush1.xpose.msra.mxu0 0.0
        %5998 = vmatprep.subr.mxu0 0.0
        %5999 = vmatpush1.xpose.msra.mxu0 0.0
        %6000 = vmatprep.mubr.f32.mxu0 0.0
        %v6001 = vand.u32 %v5719, 4294901760
        %6002 = vmatmul.mubr.f32.gmra.mrb[0].mxu0 %v6001
        %v6003 = vpop.f32.mrb[0].mxu0
        %v6004 = vadd.f32 %v5843, %v6003
        %v6005 = vpop.f32.mrb[0].mxu0
        %6006 = vmatprep.mubr.f32.mxu0 0.0
        %v6007 = vand.u32 %v5721, 4294901760
        %6008 = vmatmul.mubr.f32.gmra.mrb[0].mxu0 %v6007
        %v6009 = vpop.f32.mrb[0].mxu0
        %v6010 = vadd.f32 %v5853, %v6009
        %v6011 = vpop.f32.mrb[0].mxu0
        %6012 = vdwg.mxu0
        %6013 = vmatprep.subr.mxu0 0.0
        %v6014 = vand.u32 %v5723, 4294901760
        %v6015 = vsub.f32 %v5723, %v6014
        %6016 = vmatpush1.xpose.msra.mxu0 %v6015
        %6017 = vmatprep.subr.mxu0 0.0
        %v6018 = vand.u32 %v5725, 4294901760
        %v6019 = vsub.f32 %v5725, %v6018
        %6020 = vmatpush1.xpose.msra.mxu0 %v6019
        %6021 = vmatprep.subr.mxu0 0.0
        %v6022 = vand.u32 %v5727, 4294901760
        %v6023 = vsub.f32 %v5727, %v6022
        %6024 = vmatpush1.xpose.msra.mxu0 %v6023
        %6025 = vmatprep.subr.mxu0 0.0
        %v6026 = vand.u32 %v5729, 4294901760
        %v6027 = vsub.f32 %v5729, %v6026
        %6028 = vmatpush1.xpose.msra.mxu0 %v6027
        %6029 = vmatprep.subr.mxu0 0.0
        %v6030 = vand.u32 %v5731, 4294901760
        %v6031 = vsub.f32 %v5731, %v6030
        %6032 = vmatpush1.xpose.msra.mxu0 %v6031
        %6033 = vmatprep.subr.mxu0 0.0
        %v6034 = vand.u32 %v5733, 4294901760
        %v6035 = vsub.f32 %v5733, %v6034
        %6036 = vmatpush1.xpose.msra.mxu0 %v6035
        %6037 = vmatprep.subr.mxu0 0.0
        %v6038 = vand.u32 %v5735, 4294901760
        %v6039 = vsub.f32 %v5735, %v6038
        %6040 = vmatpush1.xpose.msra.mxu0 %v6039
        %6041 = vmatprep.subr.mxu0 0.0
        %v6042 = vand.u32 %v5737, 4294901760
        %v6043 = vsub.f32 %v5737, %v6042
        %6044 = vmatpush1.xpose.msra.mxu0 %v6043
        %6045 = vmatprep.subr.mxu0 0.0
        %v6046 = vand.u32 %v5739, 4294901760
        %v6047 = vsub.f32 %v5739, %v6046
        %6048 = vmatpush1.xpose.msra.mxu0 %v6047
        %6049 = vmatprep.subr.mxu0 0.0
        %v6050 = vand.u32 %v5741, 4294901760
        %v6051 = vsub.f32 %v5741, %v6050
        %6052 = vmatpush1.xpose.msra.mxu0 %v6051
        %6053 = vmatprep.subr.mxu0 0.0
        %v6054 = vand.u32 %v5743, 4294901760
        %v6055 = vsub.f32 %v5743, %v6054
        %6056 = vmatpush1.xpose.msra.mxu0 %v6055
        %6057 = vmatprep.subr.mxu0 0.0
        %v6058 = vand.u32 %v5745, 4294901760
        %v6059 = vsub.f32 %v5745, %v6058
        %6060 = vmatpush1.xpose.msra.mxu0 %v6059
        %6061 = vmatprep.subr.mxu0 0.0
        %v6062 = vand.u32 %v5747, 4294901760
        %v6063 = vsub.f32 %v5747, %v6062
        %6064 = vmatpush1.xpose.msra.mxu0 %v6063
        %6065 = vmatprep.subr.mxu0 0.0
        %v6066 = vand.u32 %v5749, 4294901760
        %v6067 = vsub.f32 %v5749, %v6066
        %6068 = vmatpush1.xpose.msra.mxu0 %v6067
        %6069 = vmatprep.subr.mxu0 0.0
        %v6070 = vand.u32 %v5751, 4294901760
        %v6071 = vsub.f32 %v5751, %v6070
        %6072 = vmatpush1.xpose.msra.mxu0 %v6071
        %6073 = vmatprep.subr.mxu0 0.0
        %v6074 = vand.u32 %v5753, 4294901760
        %v6075 = vsub.f32 %v5753, %v6074
        %6076 = vmatpush1.xpose.msra.mxu0 %v6075
        %6077 = vmatprep.subr.mxu0 0.0
        %6078 = vmatpush1.xpose.msra.mxu0 0.0
        %6079 = vmatprep.subr.mxu0 0.0
        %6080 = vmatpush1.xpose.msra.mxu0 0.0
        %6081 = vmatprep.subr.mxu0 0.0
        %6082 = vmatpush1.xpose.msra.mxu0 0.0
        %6083 = vmatprep.subr.mxu0 0.0
        %6084 = vmatpush1.xpose.msra.mxu0 0.0
        %6085 = vmatprep.subr.mxu0 0.0
        %6086 = vmatpush1.xpose.msra.mxu0 0.0
        %6087 = vmatprep.subr.mxu0 0.0
        %6088 = vmatpush1.xpose.msra.mxu0 0.0
        %6089 = vmatprep.subr.mxu0 0.0
        %6090 = vmatpush1.xpose.msra.mxu0 0.0
        %6091 = vmatprep.subr.mxu0 0.0
        %6092 = vmatpush1.xpose.msra.mxu0 0.0
        %6093 = vmatprep.subr.mxu0 0.0
        %6094 = vmatpush1.xpose.msra.mxu0 0.0
        %6095 = vmatprep.subr.mxu0 0.0
        %6096 = vmatpush1.xpose.msra.mxu0 0.0
        %6097 = vmatprep.subr.mxu0 0.0
        %6098 = vmatpush1.xpose.msra.mxu0 0.0
        %6099 = vmatprep.subr.mxu0 0.0
        %6100 = vmatpush1.xpose.msra.mxu0 0.0
        %6101 = vmatprep.subr.mxu0 0.0
        %6102 = vmatpush1.xpose.msra.mxu0 0.0
        %6103 = vmatprep.subr.mxu0 0.0
        %6104 = vmatpush1.xpose.msra.mxu0 0.0
        %6105 = vmatprep.subr.mxu0 0.0
        %6106 = vmatpush1.xpose.msra.mxu0 0.0
        %6107 = vmatprep.subr.mxu0 0.0
        %6108 = vmatpush1.xpose.msra.mxu0 0.0
        %6109 = vmatprep.mubr.f32.mxu0 0.0
        %v6110 = vand.u32 %v5719, 4294901760
        %v6111 = vsub.f32 %v5719, %v6110
        %6112 = vmatmul.mubr.f32.gmra.mrb[0].mxu0 %v6111
        %v6113 = vpop.f32.mrb[0].mxu0
        %v6114 = vadd.f32 %v6004, %v6113
        %v6115 = vpop.f32.mrb[0].mxu0
        %6116 = vmatprep.mubr.f32.mxu0 0.0
        %v6117 = vand.u32 %v5721, 4294901760
        %v6118 = vsub.f32 %v5721, %v6117
        %6119 = vmatmul.mubr.f32.gmra.mrb[0].mxu0 %v6118
        %v6120 = vpop.f32.mrb[0].mxu0
        %v6121 = vadd.f32 %v6010, %v6120
        %v6122 = vpop.f32.mrb[0].mxu0
        %6123 = vdwg.mxu0
        %6124 = vmatprep.subr.mxu0 0.0
        %v6125 = vand.u32 %v5723, 4294901760
        %6126 = vmatpush1.xpose.msra.mxu0 %v6125
        %6127 = vmatprep.subr.mxu0 0.0
        %v6128 = vand.u32 %v5725, 4294901760
        %6129 = vmatpush1.xpose.msra.mxu0 %v6128
        %6130 = vmatprep.subr.mxu0 0.0
        %v6131 = vand.u32 %v5727, 4294901760
        %6132 = vmatpush1.xpose.msra.mxu0 %v6131
        %6133 = vmatprep.subr.mxu0 0.0
        %v6134 = vand.u32 %v5729, 4294901760
        %6135 = vmatpush1.xpose.msra.mxu0 %v6134
        %6136 = vmatprep.subr.mxu0 0.0
        %v6137 = vand.u32 %v5731, 4294901760
        %6138 = vmatpush1.xpose.msra.mxu0 %v6137
        %6139 = vmatprep.subr.mxu0 0.0
        %v6140 = vand.u32 %v5733, 4294901760
        %6141 = vmatpush1.xpose.msra.mxu0 %v6140
        %6142 = vmatprep.subr.mxu0 0.0
        %v6143 = vand.u32 %v5735, 4294901760
        %6144 = vmatpush1.xpose.msra.mxu0 %v6143
        %6145 = vmatprep.subr.mxu0 0.0
        %v6146 = vand.u32 %v5737, 4294901760
        %6147 = vmatpush1.xpose.msra.mxu0 %v6146
        %6148 = vmatprep.subr.mxu0 0.0
        %v6149 = vand.u32 %v5739, 4294901760
        %6150 = vmatpush1.xpose.msra.mxu0 %v6149
        %6151 = vmatprep.subr.mxu0 0.0
        %v6152 = vand.u32 %v5741, 4294901760
        %6153 = vmatpush1.xpose.msra.mxu0 %v6152
        %6154 = vmatprep.subr.mxu0 0.0
        %v6155 = vand.u32 %v5743, 4294901760
        %6156 = vmatpush1.xpose.msra.mxu0 %v6155
        %6157 = vmatprep.subr.mxu0 0.0
        %v6158 = vand.u32 %v5745, 4294901760
        %6159 = vmatpush1.xpose.msra.mxu0 %v6158
        %6160 = vmatprep.subr.mxu0 0.0
        %v6161 = vand.u32 %v5747, 4294901760
        %6162 = vmatpush1.xpose.msra.mxu0 %v6161
        %6163 = vmatprep.subr.mxu0 0.0
        %v6164 = vand.u32 %v5749, 4294901760
        %6165 = vmatpush1.xpose.msra.mxu0 %v6164
        %6166 = vmatprep.subr.mxu0 0.0
        %v6167 = vand.u32 %v5751, 4294901760
        %6168 = vmatpush1.xpose.msra.mxu0 %v6167
        %6169 = vmatprep.subr.mxu0 0.0
        %v6170 = vand.u32 %v5753, 4294901760
        %6171 = vmatpush1.xpose.msra.mxu0 %v6170
        %6172 = vmatprep.subr.mxu0 0.0
        %6173 = vmatpush1.xpose.msra.mxu0 0.0
        %6174 = vmatprep.subr.mxu0 0.0
        %6175 = vmatpush1.xpose.msra.mxu0 0.0
        %6176 = vmatprep.subr.mxu0 0.0
        %6177 = vmatpush1.xpose.msra.mxu0 0.0
        %6178 = vmatprep.subr.mxu0 0.0
        %6179 = vmatpush1.xpose.msra.mxu0 0.0
        %6180 = vmatprep.subr.mxu0 0.0
        %6181 = vmatpush1.xpose.msra.mxu0 0.0
        %6182 = vmatprep.subr.mxu0 0.0
        %6183 = vmatpush1.xpose.msra.mxu0 0.0
        %6184 = vmatprep.subr.mxu0 0.0
        %6185 = vmatpush1.xpose.msra.mxu0 0.0
        %6186 = vmatprep.subr.mxu0 0.0
        %6187 = vmatpush1.xpose.msra.mxu0 0.0
        %6188 = vmatprep.subr.mxu0 0.0
        %6189 = vmatpush1.xpose.msra.mxu0 0.0
        %6190 = vmatprep.subr.mxu0 0.0
        %6191 = vmatpush1.xpose.msra.mxu0 0.0
        %6192 = vmatprep.subr.mxu0 0.0
        %6193 = vmatpush1.xpose.msra.mxu0 0.0
        %6194 = vmatprep.subr.mxu0 0.0
        %6195 = vmatpush1.xpose.msra.mxu0 0.0
        %6196 = vmatprep.subr.mxu0 0.0
        %6197 = vmatpush1.xpose.msra.mxu0 0.0
        %6198 = vmatprep.subr.mxu0 0.0
        %6199 = vmatpush1.xpose.msra.mxu0 0.0
        %6200 = vmatprep.subr.mxu0 0.0
        %6201 = vmatpush1.xpose.msra.mxu0 0.0
        %6202 = vmatprep.subr.mxu0 0.0
        %6203 = vmatpush1.xpose.msra.mxu0 0.0
        %6204 = vmatprep.mubr.f32.mxu0 0.0
        %v6205 = vand.u32 %v5719, 4294901760
        %v6206 = vsub.f32 %v5719, %v6205
        %v6207 = vand.u32 %v6206, 4294901760
        %6208 = vmatmul.mubr.f32.gmra.mrb[0].mxu0 %v6207
        %v6209 = vpop.f32.mrb[0].mxu0
        %v6210 = vadd.f32 %v6114, %v6209
        %v6211 = vpop.f32.mrb[0].mxu0
        %6212 = vmatprep.mubr.f32.mxu0 0.0
        %v6213 = vand.u32 %v5721, 4294901760
        %v6214 = vsub.f32 %v5721, %v6213
        %v6215 = vand.u32 %v6214, 4294901760
        %6216 = vmatmul.mubr.f32.gmra.mrb[0].mxu0 %v6215
        %v6217 = vpop.f32.mrb[0].mxu0
        %v6218 = vadd.f32 %v6121, %v6217
        %v6219 = vpop.f32.mrb[0].mxu0
        %6220 = vdwg.mxu0
        %6221 = vmatprep.subr.mxu0 0.0
        %v6222 = vand.u32 %v5723, 4294901760
        %v6223 = vsub.f32 %v5723, %v6222
        %v6224 = vand.u32 %v6223, 4294901760
        %6225 = vmatpush1.xpose.msra.mxu0 %v6224
        %6226 = vmatprep.subr.mxu0 0.0
        %v6227 = vand.u32 %v5725, 4294901760
        %v6228 = vsub.f32 %v5725, %v6227
        %v6229 = vand.u32 %v6228, 4294901760
        %6230 = vmatpush1.xpose.msra.mxu0 %v6229
        %6231 = vmatprep.subr.mxu0 0.0
        %v6232 = vand.u32 %v5727, 4294901760
        %v6233 = vsub.f32 %v5727, %v6232
        %v6234 = vand.u32 %v6233, 4294901760
        %6235 = vmatpush1.xpose.msra.mxu0 %v6234
        %6236 = vmatprep.subr.mxu0 0.0
        %v6237 = vand.u32 %v5729, 4294901760
        %v6238 = vsub.f32 %v5729, %v6237
        %v6239 = vand.u32 %v6238, 4294901760
        %6240 = vmatpush1.xpose.msra.mxu0 %v6239
        %6241 = vmatprep.subr.mxu0 0.0
        %v6242 = vand.u32 %v5731, 4294901760
        %v6243 = vsub.f32 %v5731, %v6242
        %v6244 = vand.u32 %v6243, 4294901760
        %6245 = vmatpush1.xpose.msra.mxu0 %v6244
        %6246 = vmatprep.subr.mxu0 0.0
        %v6247 = vand.u32 %v5733, 4294901760
        %v6248 = vsub.f32 %v5733, %v6247
        %v6249 = vand.u32 %v6248, 4294901760
        %6250 = vmatpush1.xpose.msra.mxu0 %v6249
        %6251 = vmatprep.subr.mxu0 0.0
        %v6252 = vand.u32 %v5735, 4294901760
        %v6253 = vsub.f32 %v5735, %v6252
        %v6254 = vand.u32 %v6253, 4294901760
        %6255 = vmatpush1.xpose.msra.mxu0 %v6254
        %6256 = vmatprep.subr.mxu0 0.0
        %v6257 = vand.u32 %v5737, 4294901760
        %v6258 = vsub.f32 %v5737, %v6257
        %v6259 = vand.u32 %v6258, 4294901760
        %6260 = vmatpush1.xpose.msra.mxu0 %v6259
        %6261 = vmatprep.subr.mxu0 0.0
        %v6262 = vand.u32 %v5739, 4294901760
        %v6263 = vsub.f32 %v5739, %v6262
        %v6264 = vand.u32 %v6263, 4294901760
        %6265 = vmatpush1.xpose.msra.mxu0 %v6264
        %6266 = vmatprep.subr.mxu0 0.0
        %v6267 = vand.u32 %v5741, 4294901760
        %v6268 = vsub.f32 %v5741, %v6267
        %v6269 = vand.u32 %v6268, 4294901760
        %6270 = vmatpush1.xpose.msra.mxu0 %v6269
        %6271 = vmatprep.subr.mxu0 0.0
        %v6272 = vand.u32 %v5743, 4294901760
        %v6273 = vsub.f32 %v5743, %v6272
        %v6274 = vand.u32 %v6273, 4294901760
        %6275 = vmatpush1.xpose.msra.mxu0 %v6274
        %6276 = vmatprep.subr.mxu0 0.0
        %v6277 = vand.u32 %v5745, 4294901760
        %v6278 = vsub.f32 %v5745, %v6277
        %v6279 = vand.u32 %v6278, 4294901760
        %6280 = vmatpush1.xpose.msra.mxu0 %v6279
        %6281 = vmatprep.subr.mxu0 0.0
        %v6282 = vand.u32 %v5747, 4294901760
        %v6283 = vsub.f32 %v5747, %v6282
        %v6284 = vand.u32 %v6283, 4294901760
        %6285 = vmatpush1.xpose.msra.mxu0 %v6284
        %6286 = vmatprep.subr.mxu0 0.0
        %v6287 = vand.u32 %v5749, 4294901760
        %v6288 = vsub.f32 %v5749, %v6287
        %v6289 = vand.u32 %v6288, 4294901760
        %6290 = vmatpush1.xpose.msra.mxu0 %v6289
        %6291 = vmatprep.subr.mxu0 0.0
        %v6292 = vand.u32 %v5751, 4294901760
        %v6293 = vsub.f32 %v5751, %v6292
        %v6294 = vand.u32 %v6293, 4294901760
        %6295 = vmatpush1.xpose.msra.mxu0 %v6294
        %6296 = vmatprep.subr.mxu0 0.0
        %v6297 = vand.u32 %v5753, 4294901760
        %v6298 = vsub.f32 %v5753, %v6297
        %v6299 = vand.u32 %v6298, 4294901760
        %6300 = vmatpush1.xpose.msra.mxu0 %v6299
        %6301 = vmatprep.subr.mxu0 0.0
        %6302 = vmatpush1.xpose.msra.mxu0 0.0
        %6303 = vmatprep.subr.mxu0 0.0
        %6304 = vmatpush1.xpose.msra.mxu0 0.0
        %6305 = vmatprep.subr.mxu0 0.0
        %6306 = vmatpush1.xpose.msra.mxu0 0.0
        %6307 = vmatprep.subr.mxu0 0.0
        %6308 = vmatpush1.xpose.msra.mxu0 0.0
        %6309 = vmatprep.subr.mxu0 0.0
        %6310 = vmatpush1.xpose.msra.mxu0 0.0
        %6311 = vmatprep.subr.mxu0 0.0
        %6312 = vmatpush1.xpose.msra.mxu0 0.0
        %6313 = vmatprep.subr.mxu0 0.0
        %6314 = vmatpush1.xpose.msra.mxu0 0.0
        %6315 = vmatprep.subr.mxu0 0.0
        %6316 = vmatpush1.xpose.msra.mxu0 0.0
        %6317 = vmatprep.subr.mxu0 0.0
        %6318 = vmatpush1.xpose.msra.mxu0 0.0
        %6319 = vmatprep.subr.mxu0 0.0
        %6320 = vmatpush1.xpose.msra.mxu0 0.0
        %6321 = vmatprep.subr.mxu0 0.0
        %6322 = vmatpush1.xpose.msra.mxu0 0.0
        %6323 = vmatprep.subr.mxu0 0.0
        %6324 = vmatpush1.xpose.msra.mxu0 0.0
        %6325 = vmatprep.subr.mxu0 0.0
        %6326 = vmatpush1.xpose.msra.mxu0 0.0
        %6327 = vmatprep.subr.mxu0 0.0
        %6328 = vmatpush1.xpose.msra.mxu0 0.0
        %6329 = vmatprep.subr.mxu0 0.0
        %6330 = vmatpush1.xpose.msra.mxu0 0.0
        %6331 = vmatprep.subr.mxu0 0.0
        %6332 = vmatpush1.xpose.msra.mxu0 0.0
        %6333 = vmatprep.mubr.f32.mxu0 0.0
        %v6334 = vand.u32 %v5719, 4294901760
        %6335 = vmatmul.mubr.f32.gmra.mrb[0].mxu0 %v6334
        %v6336 = vpop.f32.mrb[0].mxu0
        %v6337 = vadd.f32 %v6210, %v6336
        %v6338 = vpop.f32.mrb[0].mxu0
        %6339 = vmatprep.mubr.f32.mxu0 0.0
        %v6340 = vand.u32 %v5721, 4294901760
        %6341 = vmatmul.mubr.f32.gmra.mrb[0].mxu0 %v6340
        %v6342 = vpop.f32.mrb[0].mxu0
        %v6343 = vadd.f32 %v6218, %v6342
        %v6344 = vpop.f32.mrb[0].mxu0
        %6345 = vdwg.mxu0
        %6346 = vmatprep.subr.mxu0 0.0
        %v6347 = vand.u32 %v5723, 4294901760
        %6348 = vmatpush1.xpose.msra.mxu0 %v6347
        %6349 = vmatprep.subr.mxu0 0.0
        %v6350 = vand.u32 %v5725, 4294901760
        %6351 = vmatpush1.xpose.msra.mxu0 %v6350
        %6352 = vmatprep.subr.mxu0 0.0
        %v6353 = vand.u32 %v5727, 4294901760
        %6354 = vmatpush1.xpose.msra.mxu0 %v6353
        %6355 = vmatprep.subr.mxu0 0.0
        %v6356 = vand.u32 %v5729, 4294901760
        %6357 = vmatpush1.xpose.msra.mxu0 %v6356
        %6358 = vmatprep.subr.mxu0 0.0
        %v6359 = vand.u32 %v5731, 4294901760
        %6360 = vmatpush1.xpose.msra.mxu0 %v6359
        %6361 = vmatprep.subr.mxu0 0.0
        %v6362 = vand.u32 %v5733, 4294901760
        %6363 = vmatpush1.xpose.msra.mxu0 %v6362
        %6364 = vmatprep.subr.mxu0 0.0
        %v6365 = vand.u32 %v5735, 4294901760
        %6366 = vmatpush1.xpose.msra.mxu0 %v6365
        %6367 = vmatprep.subr.mxu0 0.0
        %v6368 = vand.u32 %v5737, 4294901760
        %6369 = vmatpush1.xpose.msra.mxu0 %v6368
        %6370 = vmatprep.subr.mxu0 0.0
        %v6371 = vand.u32 %v5739, 4294901760
        %6372 = vmatpush1.xpose.msra.mxu0 %v6371
        %6373 = vmatprep.subr.mxu0 0.0
        %v6374 = vand.u32 %v5741, 4294901760
        %6375 = vmatpush1.xpose.msra.mxu0 %v6374
        %6376 = vmatprep.subr.mxu0 0.0
        %v6377 = vand.u32 %v5743, 4294901760
        %6378 = vmatpush1.xpose.msra.mxu0 %v6377
        %6379 = vmatprep.subr.mxu0 0.0
        %v6380 = vand.u32 %v5745, 4294901760
        %6381 = vmatpush1.xpose.msra.mxu0 %v6380
        %6382 = vmatprep.subr.mxu0 0.0
        %v6383 = vand.u32 %v5747, 4294901760
        %6384 = vmatpush1.xpose.msra.mxu0 %v6383
        %6385 = vmatprep.subr.mxu0 0.0
        %v6386 = vand.u32 %v5749, 4294901760
        %6387 = vmatpush1.xpose.msra.mxu0 %v6386
        %6388 = vmatprep.subr.mxu0 0.0
        %v6389 = vand.u32 %v5751, 4294901760
        %6390 = vmatpush1.xpose.msra.mxu0 %v6389
        %6391 = vmatprep.subr.mxu0 0.0
        %v6392 = vand.u32 %v5753, 4294901760
        %6393 = vmatpush1.xpose.msra.mxu0 %v6392
        %6394 = vmatprep.subr.mxu0 0.0
        %6395 = vmatpush1.xpose.msra.mxu0 0.0
        %6396 = vmatprep.subr.mxu0 0.0
        %6397 = vmatpush1.xpose.msra.mxu0 0.0
        %6398 = vmatprep.subr.mxu0 0.0
        %6399 = vmatpush1.xpose.msra.mxu0 0.0
        %6400 = vmatprep.subr.mxu0 0.0
        %6401 = vmatpush1.xpose.msra.mxu0 0.0
        %6402 = vmatprep.subr.mxu0 0.0
        %6403 = vmatpush1.xpose.msra.mxu0 0.0
        %6404 = vmatprep.subr.mxu0 0.0
        %6405 = vmatpush1.xpose.msra.mxu0 0.0
        %6406 = vmatprep.subr.mxu0 0.0
        %6407 = vmatpush1.xpose.msra.mxu0 0.0
        %6408 = vmatprep.subr.mxu0 0.0
        %6409 = vmatpush1.xpose.msra.mxu0 0.0
        %6410 = vmatprep.subr.mxu0 0.0
        %6411 = vmatpush1.xpose.msra.mxu0 0.0
        %6412 = vmatprep.subr.mxu0 0.0
        %6413 = vmatpush1.xpose.msra.mxu0 0.0
        %6414 = vmatprep.subr.mxu0 0.0
        %6415 = vmatpush1.xpose.msra.mxu0 0.0
        %6416 = vmatprep.subr.mxu0 0.0
        %6417 = vmatpush1.xpose.msra.mxu0 0.0
        %6418 = vmatprep.subr.mxu0 0.0
        %6419 = vmatpush1.xpose.msra.mxu0 0.0
        %6420 = vmatprep.subr.mxu0 0.0
        %6421 = vmatpush1.xpose.msra.mxu0 0.0
        %6422 = vmatprep.subr.mxu0 0.0
        %6423 = vmatpush1.xpose.msra.mxu0 0.0
        %6424 = vmatprep.subr.mxu0 0.0
        %6425 = vmatpush1.xpose.msra.mxu0 0.0
        %6426 = vmatprep.mubr.f32.mxu0 0.0
        %v6427 = vand.u32 %v5719, 4294901760
        %6428 = vmatmul.mubr.f32.gmra.mrb[0].mxu0 %v6427
        %v6429 = vpop.f32.mrb[0].mxu0
        %v6430 = vadd.f32 %v6337, %v6429
        %v6431 = vpop.f32.mrb[0].mxu0
        %6432 = vmatprep.mubr.f32.mxu0 0.0
        %v6433 = vand.u32 %v5721, 4294901760
        %6434 = vmatmul.mubr.f32.gmra.mrb[0].mxu0 %v6433
        %v6435 = vpop.f32.mrb[0].mxu0
        %v6436 = vadd.f32 %v6343, %v6435
        %v6437 = vpop.f32.mrb[0].mxu0
        %6438 = vdwg.mxu0
        %s6439 = scalar_lea.vmem [#allocation3], 48
        %v6440 = vld [vmem:[%s6439] sm:$0xff]
        %v6441 = vld [vmem:[%s6439 + $0x8] sm:$0xff]
        %6442 = vmax.xlane.f32.xlu0 %v6430
        %v6443 = vpop.xlane.xlu0 %6442
        %6444 = vmax.xlane.f32.xlu0 %v6436
        %v6445 = vpop.xlane.xlu0 %6444
        %v6446 = vmax.f32 %v6440, %v6443
        %v6447 = vmax.f32 %v6441, %v6445
        %v6448 = vsub.f32 %v6440, %v6446
        %v6449 = vsub.f32 %v6441, %v6447
        %v6450 = vmul.f32 %v6448, 1.442695
        %v6451 = vpow.pop %v6450
        %v6452 = vmul.f32 %v6449, 1.442695
        %v6453 = vpow.pop %v6452
        %6455 = vset.pattern.permute.xlu0 0
        %6456 = vperm.xlu0 %6455, %v6446
        %v6457 = vpop.permute.xlu0 %6456
        %6460 = vset.pattern.permute.xlu0 0
        %6461 = vperm.xlu0 %6460, %v6447
        %v6462 = vpop.permute.xlu0 %6461
        %v6464 = vsub.f32 %v6430, %v6457
        %v6465 = vsub.f32 %v6436, %v6462
        %v6466 = vmul.f32 %v6464, 1.442695
        %v6467 = vpow.pop %v6466
        %v6468 = vmul.f32 %v6465, 1.442695
        %v6469 = vpow.pop %v6468
        %v6470 = vmul.f32 %v6467, %v1031
        %v6471 = vmul.f32 %v6469, %v1032
        %s6472 = scalar_lea.vmem [#allocation4], 48
        %v6473 = vld [vmem:[%s6472] sm:$0xff]
        %v6474 = vld [vmem:[%s6472 + $0x8] sm:$0xff]
        %v6475 = vmul.f32 %v6451, %v6473
        %v6476 = vmul.f32 %v6453, %v6474
        %6477 = vadd.xlane.f32.xlu0 %v6470
        %v6478 = vpop.xlane.xlu0 %6477
        %6479 = vadd.xlane.f32.xlu0 %v6471
        %v6480 = vpop.xlane.xlu0 %6479
        %v6481 = vadd.f32 %v6475, %v6478
        %v6482 = vadd.f32 %v6476, %v6480
        %6483 = vst.msk [vmem:[%s6472] sm:$0xff] %vm1850, %v6481
        %6484 = vst.msk [vmem:[%s6472 + $0x8] sm:$0xff] %vm1850, %v6482
        %s6485 = scalar_lea.vmem [#allocation5], 48
        %v6486 = vld [vmem:[%s6485] sm:$0xff]
        %v6487 = vld [vmem:[%s6485 + $0x8] sm:$0xff]
        %6489 = vset.pattern.permute.xlu0 0
        %6490 = vperm.xlu0 %6489, %v6451
        %v6491 = vpop.permute.xlu0 %6490
        %6494 = vset.pattern.permute.xlu0 0
        %6495 = vperm.xlu0 %6494, %v6453
        %v6496 = vpop.permute.xlu0 %6495
        %v6498 = vmul.f32 %v6491, %v6486
        %v6499 = vmul.f32 %v6496, %v6487
        %6500 = vrot.lane.b32.xlu0 %v1034, 104
        %v6501 = vpop.permute.xlu0 %6500
        %6502 = vrot.lane.b32.xlu0 %v1036, 104
        %v6503 = vpop.permute.xlu0 %6502
        %6504 = vrot.lane.b32.xlu0 %v1038, 104
        %v6505 = vpop.permute.xlu0 %6504
        %6506 = vrot.lane.b32.xlu0 %v1040, 104
        %v6507 = vpop.permute.xlu0 %6506
        %6508 = vrot.lane.b32.xlu0 %v1042, 104
        %v6509 = vpop.permute.xlu0 %6508
        %6510 = vrot.lane.b32.xlu0 %v1044, 104
        %v6511 = vpop.permute.xlu0 %6510
        %6512 = vrot.lane.b32.xlu0 %v1046, 104
        %v6513 = vpop.permute.xlu0 %6512
        %6514 = vrot.lane.b32.xlu0 %v1048, 104
        %v6515 = vpop.permute.xlu0 %6514
        %6516 = vrot.lane.b32.xlu0 %v1050, 104
        %v6517 = vpop.permute.xlu0 %6516
        %6518 = vrot.lane.b32.xlu0 %v1052, 104
        %v6519 = vpop.permute.xlu0 %6518
        %6520 = vrot.lane.b32.xlu0 %v1054, 104
        %v6521 = vpop.permute.xlu0 %6520
        %6522 = vrot.lane.b32.xlu0 %v1056, 104
        %v6523 = vpop.permute.xlu0 %6522
        %6524 = vrot.lane.b32.xlu0 %v1058, 104
        %v6525 = vpop.permute.xlu0 %6524
        %6526 = vrot.lane.b32.xlu0 %v1060, 104
        %v6527 = vpop.permute.xlu0 %6526
        %6528 = vrot.lane.b32.xlu0 %v1062, 104
        %v6529 = vpop.permute.xlu0 %6528
        %6530 = vrot.lane.b32.xlu0 %v1064, 104
        %v6531 = vpop.permute.xlu0 %6530
        %6548 = vmatprep.subr.mxu0 0.0
        %v6549 = vand.u32 %v6501, 4294901760
        %6550 = vmatpush1.msra.mxu0 %v6549
        %6551 = vmatprep.subr.mxu0 0.0
        %v6552 = vand.u32 %v6503, 4294901760
        %6553 = vmatpush1.msra.mxu0 %v6552
        %6554 = vmatprep.subr.mxu0 0.0
        %v6555 = vand.u32 %v6505, 4294901760
        %6556 = vmatpush1.msra.mxu0 %v6555
        %6557 = vmatprep.subr.mxu0 0.0
        %v6558 = vand.u32 %v6507, 4294901760
        %6559 = vmatpush1.msra.mxu0 %v6558
        %6560 = vmatprep.subr.mxu0 0.0
        %v6561 = vand.u32 %v6509, 4294901760
        %6562 = vmatpush1.msra.mxu0 %v6561
        %6563 = vmatprep.subr.mxu0 0.0
        %v6564 = vand.u32 %v6511, 4294901760
        %6565 = vmatpush1.msra.mxu0 %v6564
        %6566 = vmatprep.subr.mxu0 0.0
        %v6567 = vand.u32 %v6513, 4294901760
        %6568 = vmatpush1.msra.mxu0 %v6567
        %6569 = vmatprep.subr.mxu0 0.0
        %v6570 = vand.u32 %v6515, 4294901760
        %6571 = vmatpush1.msra.mxu0 %v6570
        %6572 = vmatprep.subr.mxu0 0.0
        %v6573 = vand.u32 %v6517, 4294901760
        %6574 = vmatpush1.msra.mxu0 %v6573
        %6575 = vmatprep.subr.mxu0 0.0
        %v6576 = vand.u32 %v6519, 4294901760
        %6577 = vmatpush1.msra.mxu0 %v6576
        %6578 = vmatprep.subr.mxu0 0.0
        %v6579 = vand.u32 %v6521, 4294901760
        %6580 = vmatpush1.msra.mxu0 %v6579
        %6581 = vmatprep.subr.mxu0 0.0
        %v6582 = vand.u32 %v6523, 4294901760
        %6583 = vmatpush1.msra.mxu0 %v6582
        %6584 = vmatprep.subr.mxu0 0.0
        %v6585 = vand.u32 %v6525, 4294901760
        %6586 = vmatpush1.msra.mxu0 %v6585
        %6587 = vmatprep.subr.mxu0 0.0
        %v6588 = vand.u32 %v6527, 4294901760
        %6589 = vmatpush1.msra.mxu0 %v6588
        %6590 = vmatprep.subr.mxu0 0.0
        %v6591 = vand.u32 %v6529, 4294901760
        %6592 = vmatpush1.msra.mxu0 %v6591
        %6593 = vmatprep.subr.mxu0 0.0
        %v6594 = vand.u32 %v6531, 4294901760
        %6595 = vmatpush1.msra.mxu0 %v6594
        %6596 = vmatprep.subr.mxu0 0.0
        %6597 = vmatpush1.msra.mxu0 0.0
        %6598 = vmatprep.subr.mxu0 0.0
        %6599 = vmatpush1.msra.mxu0 0.0
        %6600 = vmatprep.subr.mxu0 0.0
        %6601 = vmatpush1.msra.mxu0 0.0
        %6602 = vmatprep.subr.mxu0 0.0
        %6603 = vmatpush1.msra.mxu0 0.0
        %6604 = vmatprep.subr.mxu0 0.0
        %6605 = vmatpush1.msra.mxu0 0.0
        %6606 = vmatprep.subr.mxu0 0.0
        %6607 = vmatpush1.msra.mxu0 0.0
        %6608 = vmatprep.subr.mxu0 0.0
        %6609 = vmatpush1.msra.mxu0 0.0
        %6610 = vmatprep.subr.mxu0 0.0
        %6611 = vmatpush1.msra.mxu0 0.0
        %6612 = vmatprep.subr.mxu0 0.0
        %6613 = vmatpush1.msra.mxu0 0.0
        %6614 = vmatprep.subr.mxu0 0.0
        %6615 = vmatpush1.msra.mxu0 0.0
        %6616 = vmatprep.subr.mxu0 0.0
        %6617 = vmatpush1.msra.mxu0 0.0
        %6618 = vmatprep.subr.mxu0 0.0
        %6619 = vmatpush1.msra.mxu0 0.0
        %6620 = vmatprep.subr.mxu0 0.0
        %6621 = vmatpush1.msra.mxu0 0.0
        %6622 = vmatprep.subr.mxu0 0.0
        %6623 = vmatpush1.msra.mxu0 0.0
        %6624 = vmatprep.subr.mxu0 0.0
        %6625 = vmatpush1.msra.mxu0 0.0
        %6626 = vmatprep.subr.mxu0 0.0
        %6627 = vmatpush1.msra.mxu0 0.0
        %6628 = vmatprep.mubr.f32.mxu0 0.0
        %v6629 = vand.u32 %v6470, 4294901760
        %v6630 = vsub.f32 %v6470, %v6629
        %v6631 = vand.u32 %v6630, 4294901760
        %v6632 = vsub.f32 %v6630, %v6631
        %v6633 = vand.u32 %v6632, 4294901760
        %6634 = vmatmul.mubr.f32.gmra.mrb[0].mxu0 %v6633
        %v6635 = vpop.f32.mrb[0].mxu0
        %v6636 = vadd.f32 0.0, %v6635
        %v6637 = vpop.f32.mrb[0].mxu0
        %6638 = vmatprep.mubr.f32.mxu0 0.0
        %v6639 = vand.u32 %v6471, 4294901760
        %v6640 = vsub.f32 %v6471, %v6639
        %v6641 = vand.u32 %v6640, 4294901760
        %v6642 = vsub.f32 %v6640, %v6641
        %v6643 = vand.u32 %v6642, 4294901760
        %6644 = vmatmul.mubr.f32.gmra.mrb[0].mxu0 %v6643
        %v6645 = vpop.f32.mrb[0].mxu0
        %v6646 = vadd.f32 0.0, %v6645
        %v6647 = vpop.f32.mrb[0].mxu0
        %6648 = vdwg.mxu0
        %6649 = vmatprep.subr.mxu0 0.0
        %v6650 = vand.u32 %v6501, 4294901760
        %v6651 = vsub.f32 %v6501, %v6650
        %v6652 = vand.u32 %v6651, 4294901760
        %v6653 = vsub.f32 %v6651, %v6652
        %v6654 = vand.u32 %v6653, 4294901760
        %6655 = vmatpush1.msra.mxu0 %v6654
        %6656 = vmatprep.subr.mxu0 0.0
        %v6657 = vand.u32 %v6503, 4294901760
        %v6658 = vsub.f32 %v6503, %v6657
        %v6659 = vand.u32 %v6658, 4294901760
        %v6660 = vsub.f32 %v6658, %v6659
        %v6661 = vand.u32 %v6660, 4294901760
        %6662 = vmatpush1.msra.mxu0 %v6661
        %6663 = vmatprep.subr.mxu0 0.0
        %v6664 = vand.u32 %v6505, 4294901760
        %v6665 = vsub.f32 %v6505, %v6664
        %v6666 = vand.u32 %v6665, 4294901760
        %v6667 = vsub.f32 %v6665, %v6666
        %v6668 = vand.u32 %v6667, 4294901760
        %6669 = vmatpush1.msra.mxu0 %v6668
        %6670 = vmatprep.subr.mxu0 0.0
        %v6671 = vand.u32 %v6507, 4294901760
        %v6672 = vsub.f32 %v6507, %v6671
        %v6673 = vand.u32 %v6672, 4294901760
        %v6674 = vsub.f32 %v6672, %v6673
        %v6675 = vand.u32 %v6674, 4294901760
        %6676 = vmatpush1.msra.mxu0 %v6675
        %6677 = vmatprep.subr.mxu0 0.0
        %v6678 = vand.u32 %v6509, 4294901760
        %v6679 = vsub.f32 %v6509, %v6678
        %v6680 = vand.u32 %v6679, 4294901760
        %v6681 = vsub.f32 %v6679, %v6680
        %v6682 = vand.u32 %v6681, 4294901760
        %6683 = vmatpush1.msra.mxu0 %v6682
        %6684 = vmatprep.subr.mxu0 0.0
        %v6685 = vand.u32 %v6511, 4294901760
        %v6686 = vsub.f32 %v6511, %v6685
        %v6687 = vand.u32 %v6686, 4294901760
        %v6688 = vsub.f32 %v6686, %v6687
        %v6689 = vand.u32 %v6688, 4294901760
        %6690 = vmatpush1.msra.mxu0 %v6689
        %6691 = vmatprep.subr.mxu0 0.0
        %v6692 = vand.u32 %v6513, 4294901760
        %v6693 = vsub.f32 %v6513, %v6692
        %v6694 = vand.u32 %v6693, 4294901760
        %v6695 = vsub.f32 %v6693, %v6694
        %v6696 = vand.u32 %v6695, 4294901760
        %6697 = vmatpush1.msra.mxu0 %v6696
        %6698 = vmatprep.subr.mxu0 0.0
        %v6699 = vand.u32 %v6515, 4294901760
        %v6700 = vsub.f32 %v6515, %v6699
        %v6701 = vand.u32 %v6700, 4294901760
        %v6702 = vsub.f32 %v6700, %v6701
        %v6703 = vand.u32 %v6702, 4294901760
        %6704 = vmatpush1.msra.mxu0 %v6703
        %6705 = vmatprep.subr.mxu0 0.0
        %v6706 = vand.u32 %v6517, 4294901760
        %v6707 = vsub.f32 %v6517, %v6706
        %v6708 = vand.u32 %v6707, 4294901760
        %v6709 = vsub.f32 %v6707, %v6708
        %v6710 = vand.u32 %v6709, 4294901760
        %6711 = vmatpush1.msra.mxu0 %v6710
        %6712 = vmatprep.subr.mxu0 0.0
        %v6713 = vand.u32 %v6519, 4294901760
        %v6714 = vsub.f32 %v6519, %v6713
        %v6715 = vand.u32 %v6714, 4294901760
        %v6716 = vsub.f32 %v6714, %v6715
        %v6717 = vand.u32 %v6716, 4294901760
        %6718 = vmatpush1.msra.mxu0 %v6717
        %6719 = vmatprep.subr.mxu0 0.0
        %v6720 = vand.u32 %v6521, 4294901760
        %v6721 = vsub.f32 %v6521, %v6720
        %v6722 = vand.u32 %v6721, 4294901760
        %v6723 = vsub.f32 %v6721, %v6722
        %v6724 = vand.u32 %v6723, 4294901760
        %6725 = vmatpush1.msra.mxu0 %v6724
        %6726 = vmatprep.subr.mxu0 0.0
        %v6727 = vand.u32 %v6523, 4294901760
        %v6728 = vsub.f32 %v6523, %v6727
        %v6729 = vand.u32 %v6728, 4294901760
        %v6730 = vsub.f32 %v6728, %v6729
        %v6731 = vand.u32 %v6730, 4294901760
        %6732 = vmatpush1.msra.mxu0 %v6731
        %6733 = vmatprep.subr.mxu0 0.0
        %v6734 = vand.u32 %v6525, 4294901760
        %v6735 = vsub.f32 %v6525, %v6734
        %v6736 = vand.u32 %v6735, 4294901760
        %v6737 = vsub.f32 %v6735, %v6736
        %v6738 = vand.u32 %v6737, 4294901760
        %6739 = vmatpush1.msra.mxu0 %v6738
        %6740 = vmatprep.subr.mxu0 0.0
        %v6741 = vand.u32 %v6527, 4294901760
        %v6742 = vsub.f32 %v6527, %v6741
        %v6743 = vand.u32 %v6742, 4294901760
        %v6744 = vsub.f32 %v6742, %v6743
        %v6745 = vand.u32 %v6744, 4294901760
        %6746 = vmatpush1.msra.mxu0 %v6745
        %6747 = vmatprep.subr.mxu0 0.0
        %v6748 = vand.u32 %v6529, 4294901760
        %v6749 = vsub.f32 %v6529, %v6748
        %v6750 = vand.u32 %v6749, 4294901760
        %v6751 = vsub.f32 %v6749, %v6750
        %v6752 = vand.u32 %v6751, 4294901760
        %6753 = vmatpush1.msra.mxu0 %v6752
        %6754 = vmatprep.subr.mxu0 0.0
        %v6755 = vand.u32 %v6531, 4294901760
        %v6756 = vsub.f32 %v6531, %v6755
        %v6757 = vand.u32 %v6756, 4294901760
        %v6758 = vsub.f32 %v6756, %v6757
        %v6759 = vand.u32 %v6758, 4294901760
        %6760 = vmatpush1.msra.mxu0 %v6759
        %6761 = vmatprep.subr.mxu0 0.0
        %6762 = vmatpush1.msra.mxu0 0.0
        %6763 = vmatprep.subr.mxu0 0.0
        %6764 = vmatpush1.msra.mxu0 0.0
        %6765 = vmatprep.subr.mxu0 0.0
        %6766 = vmatpush1.msra.mxu0 0.0
        %6767 = vmatprep.subr.mxu0 0.0
        %6768 = vmatpush1.msra.mxu0 0.0
        %6769 = vmatprep.subr.mxu0 0.0
        %6770 = vmatpush1.msra.mxu0 0.0
        %6771 = vmatprep.subr.mxu0 0.0
        %6772 = vmatpush1.msra.mxu0 0.0
        %6773 = vmatprep.subr.mxu0 0.0
        %6774 = vmatpush1.msra.mxu0 0.0
        %6775 = vmatprep.subr.mxu0 0.0
        %6776 = vmatpush1.msra.mxu0 0.0
        %6777 = vmatprep.subr.mxu0 0.0
        %6778 = vmatpush1.msra.mxu0 0.0
        %6779 = vmatprep.subr.mxu0 0.0
        %6780 = vmatpush1.msra.mxu0 0.0
        %6781 = vmatprep.subr.mxu0 0.0
        %6782 = vmatpush1.msra.mxu0 0.0
        %6783 = vmatprep.subr.mxu0 0.0
        %6784 = vmatpush1.msra.mxu0 0.0
        %6785 = vmatprep.subr.mxu0 0.0
        %6786 = vmatpush1.msra.mxu0 0.0
        %6787 = vmatprep.subr.mxu0 0.0
        %6788 = vmatpush1.msra.mxu0 0.0
        %6789 = vmatprep.subr.mxu0 0.0
        %6790 = vmatpush1.msra.mxu0 0.0
        %6791 = vmatprep.subr.mxu0 0.0
        %6792 = vmatpush1.msra.mxu0 0.0
        %6793 = vmatprep.mubr.f32.mxu0 0.0
        %v6794 = vand.u32 %v6470, 4294901760
        %6795 = vmatmul.mubr.f32.gmra.mrb[0].mxu0 %v6794
        %v6796 = vpop.f32.mrb[0].mxu0
        %v6797 = vadd.f32 %v6636, %v6796
        %v6798 = vpop.f32.mrb[0].mxu0
        %6799 = vmatprep.mubr.f32.mxu0 0.0
        %v6800 = vand.u32 %v6471, 4294901760
        %6801 = vmatmul.mubr.f32.gmra.mrb[0].mxu0 %v6800
        %v6802 = vpop.f32.mrb[0].mxu0
        %v6803 = vadd.f32 %v6646, %v6802
        %v6804 = vpop.f32.mrb[0].mxu0
        %6805 = vdwg.mxu0
        %6806 = vmatprep.subr.mxu0 0.0
        %v6807 = vand.u32 %v6501, 4294901760
        %v6808 = vsub.f32 %v6501, %v6807
        %6809 = vmatpush1.msra.mxu0 %v6808
        %6810 = vmatprep.subr.mxu0 0.0
        %v6811 = vand.u32 %v6503, 4294901760
        %v6812 = vsub.f32 %v6503, %v6811
        %6813 = vmatpush1.msra.mxu0 %v6812
        %6814 = vmatprep.subr.mxu0 0.0
        %v6815 = vand.u32 %v6505, 4294901760
        %v6816 = vsub.f32 %v6505, %v6815
        %6817 = vmatpush1.msra.mxu0 %v6816
        %6818 = vmatprep.subr.mxu0 0.0
        %v6819 = vand.u32 %v6507, 4294901760
        %v6820 = vsub.f32 %v6507, %v6819
        %6821 = vmatpush1.msra.mxu0 %v6820
        %6822 = vmatprep.subr.mxu0 0.0
        %v6823 = vand.u32 %v6509, 4294901760
        %v6824 = vsub.f32 %v6509, %v6823
        %6825 = vmatpush1.msra.mxu0 %v6824
        %6826 = vmatprep.subr.mxu0 0.0
        %v6827 = vand.u32 %v6511, 4294901760
        %v6828 = vsub.f32 %v6511, %v6827
        %6829 = vmatpush1.msra.mxu0 %v6828
        %6830 = vmatprep.subr.mxu0 0.0
        %v6831 = vand.u32 %v6513, 4294901760
        %v6832 = vsub.f32 %v6513, %v6831
        %6833 = vmatpush1.msra.mxu0 %v6832
        %6834 = vmatprep.subr.mxu0 0.0
        %v6835 = vand.u32 %v6515, 4294901760
        %v6836 = vsub.f32 %v6515, %v6835
        %6837 = vmatpush1.msra.mxu0 %v6836
        %6838 = vmatprep.subr.mxu0 0.0
        %v6839 = vand.u32 %v6517, 4294901760
        %v6840 = vsub.f32 %v6517, %v6839
        %6841 = vmatpush1.msra.mxu0 %v6840
        %6842 = vmatprep.subr.mxu0 0.0
        %v6843 = vand.u32 %v6519, 4294901760
        %v6844 = vsub.f32 %v6519, %v6843
        %6845 = vmatpush1.msra.mxu0 %v6844
        %6846 = vmatprep.subr.mxu0 0.0
        %v6847 = vand.u32 %v6521, 4294901760
        %v6848 = vsub.f32 %v6521, %v6847
        %6849 = vmatpush1.msra.mxu0 %v6848
        %6850 = vmatprep.subr.mxu0 0.0
        %v6851 = vand.u32 %v6523, 4294901760
        %v6852 = vsub.f32 %v6523, %v6851
        %6853 = vmatpush1.msra.mxu0 %v6852
        %6854 = vmatprep.subr.mxu0 0.0
        %v6855 = vand.u32 %v6525, 4294901760
        %v6856 = vsub.f32 %v6525, %v6855
        %6857 = vmatpush1.msra.mxu0 %v6856
        %6858 = vmatprep.subr.mxu0 0.0
        %v6859 = vand.u32 %v6527, 4294901760
        %v6860 = vsub.f32 %v6527, %v6859
        %6861 = vmatpush1.msra.mxu0 %v6860
        %6862 = vmatprep.subr.mxu0 0.0
        %v6863 = vand.u32 %v6529, 4294901760
        %v6864 = vsub.f32 %v6529, %v6863
        %6865 = vmatpush1.msra.mxu0 %v6864
        %6866 = vmatprep.subr.mxu0 0.0
        %v6867 = vand.u32 %v6531, 4294901760
        %v6868 = vsub.f32 %v6531, %v6867
        %6869 = vmatpush1.msra.mxu0 %v6868
        %6870 = vmatprep.subr.mxu0 0.0
        %6871 = vmatpush1.msra.mxu0 0.0
        %6872 = vmatprep.subr.mxu0 0.0
        %6873 = vmatpush1.msra.mxu0 0.0
        %6874 = vmatprep.subr.mxu0 0.0
        %6875 = vmatpush1.msra.mxu0 0.0
        %6876 = vmatprep.subr.mxu0 0.0
        %6877 = vmatpush1.msra.mxu0 0.0
        %6878 = vmatprep.subr.mxu0 0.0
        %6879 = vmatpush1.msra.mxu0 0.0
        %6880 = vmatprep.subr.mxu0 0.0
        %6881 = vmatpush1.msra.mxu0 0.0
        %6882 = vmatprep.subr.mxu0 0.0
        %6883 = vmatpush1.msra.mxu0 0.0
        %6884 = vmatprep.subr.mxu0 0.0
        %6885 = vmatpush1.msra.mxu0 0.0
        %6886 = vmatprep.subr.mxu0 0.0
        %6887 = vmatpush1.msra.mxu0 0.0
        %6888 = vmatprep.subr.mxu0 0.0
        %6889 = vmatpush1.msra.mxu0 0.0
        %6890 = vmatprep.subr.mxu0 0.0
        %6891 = vmatpush1.msra.mxu0 0.0
        %6892 = vmatprep.subr.mxu0 0.0
        %6893 = vmatpush1.msra.mxu0 0.0
        %6894 = vmatprep.subr.mxu0 0.0
        %6895 = vmatpush1.msra.mxu0 0.0
        %6896 = vmatprep.subr.mxu0 0.0
        %6897 = vmatpush1.msra.mxu0 0.0
        %6898 = vmatprep.subr.mxu0 0.0
        %6899 = vmatpush1.msra.mxu0 0.0
        %6900 = vmatprep.subr.mxu0 0.0
        %6901 = vmatpush1.msra.mxu0 0.0
        %6902 = vmatprep.mubr.f32.mxu0 0.0
        %v6903 = vand.u32 %v6470, 4294901760
        %v6904 = vsub.f32 %v6470, %v6903
        %6905 = vmatmul.mubr.f32.gmra.mrb[0].mxu0 %v6904
        %v6906 = vpop.f32.mrb[0].mxu0
        %v6907 = vadd.f32 %v6797, %v6906
        %v6908 = vpop.f32.mrb[0].mxu0
        %6909 = vmatprep.mubr.f32.mxu0 0.0
        %v6910 = vand.u32 %v6471, 4294901760
        %v6911 = vsub.f32 %v6471, %v6910
        %6912 = vmatmul.mubr.f32.gmra.mrb[0].mxu0 %v6911
        %v6913 = vpop.f32.mrb[0].mxu0
        %v6914 = vadd.f32 %v6803, %v6913
        %v6915 = vpop.f32.mrb[0].mxu0
        %6916 = vdwg.mxu0
        %6917 = vmatprep.subr.mxu0 0.0
        %v6918 = vand.u32 %v6501, 4294901760
        %6919 = vmatpush1.msra.mxu0 %v6918
        %6920 = vmatprep.subr.mxu0 0.0
        %v6921 = vand.u32 %v6503, 4294901760
        %6922 = vmatpush1.msra.mxu0 %v6921
        %6923 = vmatprep.subr.mxu0 0.0
        %v6924 = vand.u32 %v6505, 4294901760
        %6925 = vmatpush1.msra.mxu0 %v6924
        %6926 = vmatprep.subr.mxu0 0.0
        %v6927 = vand.u32 %v6507, 4294901760
        %6928 = vmatpush1.msra.mxu0 %v6927
        %6929 = vmatprep.subr.mxu0 0.0
        %v6930 = vand.u32 %v6509, 4294901760
        %6931 = vmatpush1.msra.mxu0 %v6930
        %6932 = vmatprep.subr.mxu0 0.0
        %v6933 = vand.u32 %v6511, 4294901760
        %6934 = vmatpush1.msra.mxu0 %v6933
        %6935 = vmatprep.subr.mxu0 0.0
        %v6936 = vand.u32 %v6513, 4294901760
        %6937 = vmatpush1.msra.mxu0 %v6936
        %6938 = vmatprep.subr.mxu0 0.0
        %v6939 = vand.u32 %v6515, 4294901760
        %6940 = vmatpush1.msra.mxu0 %v6939
        %6941 = vmatprep.subr.mxu0 0.0
        %v6942 = vand.u32 %v6517, 4294901760
        %6943 = vmatpush1.msra.mxu0 %v6942
        %6944 = vmatprep.subr.mxu0 0.0
        %v6945 = vand.u32 %v6519, 4294901760
        %6946 = vmatpush1.msra.mxu0 %v6945
        %6947 = vmatprep.subr.mxu0 0.0
        %v6948 = vand.u32 %v6521, 4294901760
        %6949 = vmatpush1.msra.mxu0 %v6948
        %6950 = vmatprep.subr.mxu0 0.0
        %v6951 = vand.u32 %v6523, 4294901760
        %6952 = vmatpush1.msra.mxu0 %v6951
        %6953 = vmatprep.subr.mxu0 0.0
        %v6954 = vand.u32 %v6525, 4294901760
        %6955 = vmatpush1.msra.mxu0 %v6954
        %6956 = vmatprep.subr.mxu0 0.0
        %v6957 = vand.u32 %v6527, 4294901760
        %6958 = vmatpush1.msra.mxu0 %v6957
        %6959 = vmatprep.subr.mxu0 0.0
        %v6960 = vand.u32 %v6529, 4294901760
        %6961 = vmatpush1.msra.mxu0 %v6960
        %6962 = vmatprep.subr.mxu0 0.0
        %v6963 = vand.u32 %v6531, 4294901760
        %6964 = vmatpush1.msra.mxu0 %v6963
        %6965 = vmatprep.subr.mxu0 0.0
        %6966 = vmatpush1.msra.mxu0 0.0
        %6967 = vmatprep.subr.mxu0 0.0
        %6968 = vmatpush1.msra.mxu0 0.0
        %6969 = vmatprep.subr.mxu0 0.0
        %6970 = vmatpush1.msra.mxu0 0.0
        %6971 = vmatprep.subr.mxu0 0.0
        %6972 = vmatpush1.msra.mxu0 0.0
        %6973 = vmatprep.subr.mxu0 0.0
        %6974 = vmatpush1.msra.mxu0 0.0
        %6975 = vmatprep.subr.mxu0 0.0
        %6976 = vmatpush1.msra.mxu0 0.0
        %6977 = vmatprep.subr.mxu0 0.0
        %6978 = vmatpush1.msra.mxu0 0.0
        %6979 = vmatprep.subr.mxu0 0.0
        %6980 = vmatpush1.msra.mxu0 0.0
        %6981 = vmatprep.subr.mxu0 0.0
        %6982 = vmatpush1.msra.mxu0 0.0
        %6983 = vmatprep.subr.mxu0 0.0
        %6984 = vmatpush1.msra.mxu0 0.0
        %6985 = vmatprep.subr.mxu0 0.0
        %6986 = vmatpush1.msra.mxu0 0.0
        %6987 = vmatprep.subr.mxu0 0.0
        %6988 = vmatpush1.msra.mxu0 0.0
        %6989 = vmatprep.subr.mxu0 0.0
        %6990 = vmatpush1.msra.mxu0 0.0
        %6991 = vmatprep.subr.mxu0 0.0
        %6992 = vmatpush1.msra.mxu0 0.0
        %6993 = vmatprep.subr.mxu0 0.0
        %6994 = vmatpush1.msra.mxu0 0.0
        %6995 = vmatprep.subr.mxu0 0.0
        %6996 = vmatpush1.msra.mxu0 0.0
        %6997 = vmatprep.mubr.f32.mxu0 0.0
        %v6998 = vand.u32 %v6470, 4294901760
        %v6999 = vsub.f32 %v6470, %v6998
        %v7000 = vand.u32 %v6999, 4294901760
        %7001 = vmatmul.mubr.f32.gmra.mrb[0].mxu0 %v7000
        %v7002 = vpop.f32.mrb[0].mxu0
        %v7003 = vadd.f32 %v6907, %v7002
        %v7004 = vpop.f32.mrb[0].mxu0
        %7005 = vmatprep.mubr.f32.mxu0 0.0
        %v7006 = vand.u32 %v6471, 4294901760
        %v7007 = vsub.f32 %v6471, %v7006
        %v7008 = vand.u32 %v7007, 4294901760
        %7009 = vmatmul.mubr.f32.gmra.mrb[0].mxu0 %v7008
        %v7010 = vpop.f32.mrb[0].mxu0
        %v7011 = vadd.f32 %v6914, %v7010
        %v7012 = vpop.f32.mrb[0].mxu0
        %7013 = vdwg.mxu0
        %7014 = vmatprep.subr.mxu0 0.0
        %v7015 = vand.u32 %v6501, 4294901760
        %v7016 = vsub.f32 %v6501, %v7015
        %v7017 = vand.u32 %v7016, 4294901760
        %7018 = vmatpush1.msra.mxu0 %v7017
        %7019 = vmatprep.subr.mxu0 0.0
        %v7020 = vand.u32 %v6503, 4294901760
        %v7021 = vsub.f32 %v6503, %v7020
        %v7022 = vand.u32 %v7021, 4294901760
        %7023 = vmatpush1.msra.mxu0 %v7022
        %7024 = vmatprep.subr.mxu0 0.0
        %v7025 = vand.u32 %v6505, 4294901760
        %v7026 = vsub.f32 %v6505, %v7025
        %v7027 = vand.u32 %v7026, 4294901760
        %7028 = vmatpush1.msra.mxu0 %v7027
        %7029 = vmatprep.subr.mxu0 0.0
        %v7030 = vand.u32 %v6507, 4294901760
        %v7031 = vsub.f32 %v6507, %v7030
        %v7032 = vand.u32 %v7031, 4294901760
        %7033 = vmatpush1.msra.mxu0 %v7032
        %7034 = vmatprep.subr.mxu0 0.0
        %v7035 = vand.u32 %v6509, 4294901760
        %v7036 = vsub.f32 %v6509, %v7035
        %v7037 = vand.u32 %v7036, 4294901760
        %7038 = vmatpush1.msra.mxu0 %v7037
        %7039 = vmatprep.subr.mxu0 0.0
        %v7040 = vand.u32 %v6511, 4294901760
        %v7041 = vsub.f32 %v6511, %v7040
        %v7042 = vand.u32 %v7041, 4294901760
        %7043 = vmatpush1.msra.mxu0 %v7042
        %7044 = vmatprep.subr.mxu0 0.0
        %v7045 = vand.u32 %v6513, 4294901760
        %v7046 = vsub.f32 %v6513, %v7045
        %v7047 = vand.u32 %v7046, 4294901760
        %7048 = vmatpush1.msra.mxu0 %v7047
        %7049 = vmatprep.subr.mxu0 0.0
        %v7050 = vand.u32 %v6515, 4294901760
        %v7051 = vsub.f32 %v6515, %v7050
        %v7052 = vand.u32 %v7051, 4294901760
        %7053 = vmatpush1.msra.mxu0 %v7052
        %7054 = vmatprep.subr.mxu0 0.0
        %v7055 = vand.u32 %v6517, 4294901760
        %v7056 = vsub.f32 %v6517, %v7055
        %v7057 = vand.u32 %v7056, 4294901760
        %7058 = vmatpush1.msra.mxu0 %v7057
        %7059 = vmatprep.subr.mxu0 0.0
        %v7060 = vand.u32 %v6519, 4294901760
        %v7061 = vsub.f32 %v6519, %v7060
        %v7062 = vand.u32 %v7061, 4294901760
        %7063 = vmatpush1.msra.mxu0 %v7062
        %7064 = vmatprep.subr.mxu0 0.0
        %v7065 = vand.u32 %v6521, 4294901760
        %v7066 = vsub.f32 %v6521, %v7065
        %v7067 = vand.u32 %v7066, 4294901760
        %7068 = vmatpush1.msra.mxu0 %v7067
        %7069 = vmatprep.subr.mxu0 0.0
        %v7070 = vand.u32 %v6523, 4294901760
        %v7071 = vsub.f32 %v6523, %v7070
        %v7072 = vand.u32 %v7071, 4294901760
        %7073 = vmatpush1.msra.mxu0 %v7072
        %7074 = vmatprep.subr.mxu0 0.0
        %v7075 = vand.u32 %v6525, 4294901760
        %v7076 = vsub.f32 %v6525, %v7075
        %v7077 = vand.u32 %v7076, 4294901760
        %7078 = vmatpush1.msra.mxu0 %v7077
        %7079 = vmatprep.subr.mxu0 0.0
        %v7080 = vand.u32 %v6527, 4294901760
        %v7081 = vsub.f32 %v6527, %v7080
        %v7082 = vand.u32 %v7081, 4294901760
        %7083 = vmatpush1.msra.mxu0 %v7082
        %7084 = vmatprep.subr.mxu0 0.0
        %v7085 = vand.u32 %v6529, 4294901760
        %v7086 = vsub.f32 %v6529, %v7085
        %v7087 = vand.u32 %v7086, 4294901760
        %7088 = vmatpush1.msra.mxu0 %v7087
        %7089 = vmatprep.subr.mxu0 0.0
        %v7090 = vand.u32 %v6531, 4294901760
        %v7091 = vsub.f32 %v6531, %v7090
        %v7092 = vand.u32 %v7091, 4294901760
        %7093 = vmatpush1.msra.mxu0 %v7092
        %7094 = vmatprep.subr.mxu0 0.0
        %7095 = vmatpush1.msra.mxu0 0.0
        %7096 = vmatprep.subr.mxu0 0.0
        %7097 = vmatpush1.msra.mxu0 0.0
        %7098 = vmatprep.subr.mxu0 0.0
        %7099 = vmatpush1.msra.mxu0 0.0
        %7100 = vmatprep.subr.mxu0 0.0
        %7101 = vmatpush1.msra.mxu0 0.0
        %7102 = vmatprep.subr.mxu0 0.0
        %7103 = vmatpush1.msra.mxu0 0.0
        %7104 = vmatprep.subr.mxu0 0.0
        %7105 = vmatpush1.msra.mxu0 0.0
        %7106 = vmatprep.subr.mxu0 0.0
        %7107 = vmatpush1.msra.mxu0 0.0
        %7108 = vmatprep.subr.mxu0 0.0
        %7109 = vmatpush1.msra.mxu0 0.0
        %7110 = vmatprep.subr.mxu0 0.0
        %7111 = vmatpush1.msra.mxu0 0.0
        %7112 = vmatprep.subr.mxu0 0.0
        %7113 = vmatpush1.msra.mxu0 0.0
        %7114 = vmatprep.subr.mxu0 0.0
        %7115 = vmatpush1.msra.mxu0 0.0
        %7116 = vmatprep.subr.mxu0 0.0
        %7117 = vmatpush1.msra.mxu0 0.0
        %7118 = vmatprep.subr.mxu0 0.0
        %7119 = vmatpush1.msra.mxu0 0.0
        %7120 = vmatprep.subr.mxu0 0.0
        %7121 = vmatpush1.msra.mxu0 0.0
        %7122 = vmatprep.subr.mxu0 0.0
        %7123 = vmatpush1.msra.mxu0 0.0
        %7124 = vmatprep.subr.mxu0 0.0
        %7125 = vmatpush1.msra.mxu0 0.0
        %7126 = vmatprep.mubr.f32.mxu0 0.0
        %v7127 = vand.u32 %v6470, 4294901760
        %7128 = vmatmul.mubr.f32.gmra.mrb[0].mxu0 %v7127
        %v7129 = vpop.f32.mrb[0].mxu0
        %v7130 = vadd.f32 %v7003, %v7129
        %v7131 = vpop.f32.mrb[0].mxu0
        %7132 = vmatprep.mubr.f32.mxu0 0.0
        %v7133 = vand.u32 %v6471, 4294901760
        %7134 = vmatmul.mubr.f32.gmra.mrb[0].mxu0 %v7133
        %v7135 = vpop.f32.mrb[0].mxu0
        %v7136 = vadd.f32 %v7011, %v7135
        %v7137 = vpop.f32.mrb[0].mxu0
        %7138 = vdwg.mxu0
        %7139 = vmatprep.subr.mxu0 0.0
        %v7140 = vand.u32 %v6501, 4294901760
        %7141 = vmatpush1.msra.mxu0 %v7140
        %7142 = vmatprep.subr.mxu0 0.0
        %v7143 = vand.u32 %v6503, 4294901760
        %7144 = vmatpush1.msra.mxu0 %v7143
        %7145 = vmatprep.subr.mxu0 0.0
        %v7146 = vand.u32 %v6505, 4294901760
        %7147 = vmatpush1.msra.mxu0 %v7146
        %7148 = vmatprep.subr.mxu0 0.0
        %v7149 = vand.u32 %v6507, 4294901760
        %7150 = vmatpush1.msra.mxu0 %v7149
        %7151 = vmatprep.subr.mxu0 0.0
        %v7152 = vand.u32 %v6509, 4294901760
        %7153 = vmatpush1.msra.mxu0 %v7152
        %7154 = vmatprep.subr.mxu0 0.0
        %v7155 = vand.u32 %v6511, 4294901760
        %7156 = vmatpush1.msra.mxu0 %v7155
        %7157 = vmatprep.subr.mxu0 0.0
        %v7158 = vand.u32 %v6513, 4294901760
        %7159 = vmatpush1.msra.mxu0 %v7158
        %7160 = vmatprep.subr.mxu0 0.0
        %v7161 = vand.u32 %v6515, 4294901760
        %7162 = vmatpush1.msra.mxu0 %v7161
        %7163 = vmatprep.subr.mxu0 0.0
        %v7164 = vand.u32 %v6517, 4294901760
        %7165 = vmatpush1.msra.mxu0 %v7164
        %7166 = vmatprep.subr.mxu0 0.0
        %v7167 = vand.u32 %v6519, 4294901760
        %7168 = vmatpush1.msra.mxu0 %v7167
        %7169 = vmatprep.subr.mxu0 0.0
        %v7170 = vand.u32 %v6521, 4294901760
        %7171 = vmatpush1.msra.mxu0 %v7170
        %7172 = vmatprep.subr.mxu0 0.0
        %v7173 = vand.u32 %v6523, 4294901760
        %7174 = vmatpush1.msra.mxu0 %v7173
        %7175 = vmatprep.subr.mxu0 0.0
        %v7176 = vand.u32 %v6525, 4294901760
        %7177 = vmatpush1.msra.mxu0 %v7176
        %7178 = vmatprep.subr.mxu0 0.0
        %v7179 = vand.u32 %v6527, 4294901760
        %7180 = vmatpush1.msra.mxu0 %v7179
        %7181 = vmatprep.subr.mxu0 0.0
        %v7182 = vand.u32 %v6529, 4294901760
        %7183 = vmatpush1.msra.mxu0 %v7182
        %7184 = vmatprep.subr.mxu0 0.0
        %v7185 = vand.u32 %v6531, 4294901760
        %7186 = vmatpush1.msra.mxu0 %v7185
        %7187 = vmatprep.subr.mxu0 0.0
        %7188 = vmatpush1.msra.mxu0 0.0
        %7189 = vmatprep.subr.mxu0 0.0
        %7190 = vmatpush1.msra.mxu0 0.0
        %7191 = vmatprep.subr.mxu0 0.0
        %7192 = vmatpush1.msra.mxu0 0.0
        %7193 = vmatprep.subr.mxu0 0.0
        %7194 = vmatpush1.msra.mxu0 0.0
        %7195 = vmatprep.subr.mxu0 0.0
        %7196 = vmatpush1.msra.mxu0 0.0
        %7197 = vmatprep.subr.mxu0 0.0
        %7198 = vmatpush1.msra.mxu0 0.0
        %7199 = vmatprep.subr.mxu0 0.0
        %7200 = vmatpush1.msra.mxu0 0.0
        %7201 = vmatprep.subr.mxu0 0.0
        %7202 = vmatpush1.msra.mxu0 0.0
        %7203 = vmatprep.subr.mxu0 0.0
        %7204 = vmatpush1.msra.mxu0 0.0
        %7205 = vmatprep.subr.mxu0 0.0
        %7206 = vmatpush1.msra.mxu0 0.0
        %7207 = vmatprep.subr.mxu0 0.0
        %7208 = vmatpush1.msra.mxu0 0.0
        %7209 = vmatprep.subr.mxu0 0.0
        %7210 = vmatpush1.msra.mxu0 0.0
        %7211 = vmatprep.subr.mxu0 0.0
        %7212 = vmatpush1.msra.mxu0 0.0
        %7213 = vmatprep.subr.mxu0 0.0
        %7214 = vmatpush1.msra.mxu0 0.0
        %7215 = vmatprep.subr.mxu0 0.0
        %7216 = vmatpush1.msra.mxu0 0.0
        %7217 = vmatprep.subr.mxu0 0.0
        %7218 = vmatpush1.msra.mxu0 0.0
        %7219 = vmatprep.mubr.f32.mxu0 0.0
        %v7220 = vand.u32 %v6470, 4294901760
        %7221 = vmatmul.mubr.f32.gmra.mrb[0].mxu0 %v7220
        %v7222 = vpop.f32.mrb[0].mxu0
        %v7223 = vadd.f32 %v7130, %v7222
        %v7224 = vpop.f32.mrb[0].mxu0
        %7225 = vmatprep.mubr.f32.mxu0 0.0
        %v7226 = vand.u32 %v6471, 4294901760
        %7227 = vmatmul.mubr.f32.gmra.mrb[0].mxu0 %v7226
        %v7228 = vpop.f32.mrb[0].mxu0
        %v7229 = vadd.f32 %v7136, %v7228
        %v7230 = vpop.f32.mrb[0].mxu0
        %7231 = vdwg.mxu0
        %v7232 = vadd.f32 %v6498, %v7223
        %v7233 = vadd.f32 %v6499, %v7229
        %7234 = vst.msk [vmem:[%s6485] sm:$0xff] %vm1069, %v7232
        %7235 = vst.msk [vmem:[%s6485 + $0x8] sm:$0xff] %vm1069, %v7233
        %7236 = vst.msk [vmem:[%s6439] sm:$0xff] %vm1850, %v6446
        %7237 = vst.msk [vmem:[%s6439 + $0x8] sm:$0xff] %vm1850, %v6447
        %p7238 = scmp.eq.s32.totalorder %s31, 1
        // Predicated region
        $region106: #{tpu_custom_call.1} parent=92 // pred_check
          %p7239 = pneg %p7238
        $region107: #{tpu_custom_call.1} parent=92 // pred_check_branch
          %7241 = sbr.rel (%p7239) target = $region109
        $region108: #{tpu_custom_call.1} parent=92 // pred_region
          %v7242 = vld [vmem:[#allocation4] sm:$0xff]
          %v7243 = vld [vmem:[#allocation4 + $0x8] sm:$0xff]
          %vm7244 = vcmp.eq.f32.partialorder %v7242, 0.0
          %vm7245 = vcmp.eq.f32.partialorder %v7243, 0.0
          %v7246 = vsel %vm7244, 1.0, %v7242
          %v7247 = vsel %vm7245, 1.0, %v7243
          %v7248 = vrcp.pop %v7246
          %v7249 = vmul.f32 1.0, %v7248
          %v7250 = vrcp.pop %v7247
          %v7251 = vmul.f32 1.0, %v7250
          %v7252 = vld [vmem:[#allocation5] sm:$0xff]
          %v7253 = vld [vmem:[#allocation5 + $0x8] sm:$0xff]
          %7255 = vset.pattern.permute.xlu0 0
          %7256 = vperm.xlu0 %7255, %v7249
          %v7257 = vpop.permute.xlu0 %7256
          %7260 = vset.pattern.permute.xlu0 0
          %7261 = vperm.xlu0 %7260, %v7251
          %v7262 = vpop.permute.xlu0 %7261
          %v7264 = vmul.f32 %v7252, %v7257
          %v7265 = vmul.f32 %v7253, %v7262
          %v7266 = vld [vmem:[%s3346] sm:$0xff]
          %v7267 = vld [vmem:[%s3346 + $0x8] sm:$0xff]
          %vm7268 = vcmp.eq.f32.partialorder %v7266, 0.0
          %vm7269 = vcmp.eq.f32.partialorder %v7267, 0.0
          %v7270 = vsel %vm7268, 1.0, %v7266
          %v7271 = vsel %vm7269, 1.0, %v7267
          %v7272 = vrcp.pop %v7270
          %v7273 = vmul.f32 1.0, %v7272
          %v7274 = vrcp.pop %v7271
          %v7275 = vmul.f32 1.0, %v7274
          %v7276 = vld [vmem:[%s3359] sm:$0xff]
          %v7277 = vld [vmem:[%s3359 + $0x8] sm:$0xff]
          %7279 = vset.pattern.permute.xlu0 0
          %7280 = vperm.xlu0 %7279, %v7273
          %v7281 = vpop.permute.xlu0 %7280
          %7284 = vset.pattern.permute.xlu0 0
          %7285 = vperm.xlu0 %7284, %v7275
          %v7286 = vpop.permute.xlu0 %7285
          %v7288 = vmul.f32 %v7276, %v7281
          %v7289 = vmul.f32 %v7277, %v7286
          %v7290 = vld [vmem:[%s4917] sm:$0xff]
          %v7291 = vld [vmem:[%s4917 + $0x8] sm:$0xff]
          %vm7292 = vcmp.eq.f32.partialorder %v7290, 0.0
          %vm7293 = vcmp.eq.f32.partialorder %v7291, 0.0
          %v7294 = vsel %vm7292, 1.0, %v7290
          %v7295 = vsel %vm7293, 1.0, %v7291
          %v7296 = vrcp.pop %v7294
          %v7297 = vmul.f32 1.0, %v7296
          %v7298 = vrcp.pop %v7295
          %v7299 = vmul.f32 1.0, %v7298
          %v7300 = vld [vmem:[%s4930] sm:$0xff]
          %v7301 = vld [vmem:[%s4930 + $0x8] sm:$0xff]
          %7303 = vset.pattern.permute.xlu0 0
          %7304 = vperm.xlu0 %7303, %v7297
          %v7305 = vpop.permute.xlu0 %7304
          %7308 = vset.pattern.permute.xlu0 0
          %7309 = vperm.xlu0 %7308, %v7299
          %v7310 = vpop.permute.xlu0 %7309
          %v7312 = vmul.f32 %v7300, %v7305
          %v7313 = vmul.f32 %v7301, %v7310
          %v7314 = vld [vmem:[%s6472] sm:$0xff]
          %v7315 = vld [vmem:[%s6472 + $0x8] sm:$0xff]
          %vm7316 = vcmp.eq.f32.partialorder %v7314, 0.0
          %vm7317 = vcmp.eq.f32.partialorder %v7315, 0.0
          %v7318 = vsel %vm7316, 1.0, %v7314
          %v7319 = vsel %vm7317, 1.0, %v7315
          %v7320 = vrcp.pop %v7318
          %v7321 = vmul.f32 1.0, %v7320
          %v7322 = vrcp.pop %v7319
          %v7323 = vmul.f32 1.0, %v7322
          %v7324 = vld [vmem:[%s6485] sm:$0xff]
          %v7325 = vld [vmem:[%s6485 + $0x8] sm:$0xff]
          %7327 = vset.pattern.permute.xlu0 0
          %7328 = vperm.xlu0 %7327, %v7321
          %v7329 = vpop.permute.xlu0 %7328
          %7332 = vset.pattern.permute.xlu0 0
          %7333 = vperm.xlu0 %7332, %v7323
          %v7334 = vpop.permute.xlu0 %7333
          %v7336 = vmul.f32 %v7324, %v7329
          %v7337 = vmul.f32 %v7325, %v7334
          %7340 = vrot.lane.b32.xlu0 %v7288, 8
          %v7341 = vpop.permute.xlu0 %7340
          %7342 = vrot.lane.b32.xlu0 %v7289, 8
          %v7343 = vpop.permute.xlu0 %7342
          %7348 = vrot.lane.b32.xlu0 %v7312, 16
          %v7349 = vpop.permute.xlu0 %7348
          %7350 = vrot.lane.b32.xlu0 %v7313, 16
          %v7351 = vpop.permute.xlu0 %7350
          %7356 = vrot.lane.b32.xlu0 %v7336, 24
          %v7357 = vpop.permute.xlu0 %7356
          %7358 = vrot.lane.b32.xlu0 %v7337, 24
          %v7359 = vpop.permute.xlu0 %7358
          %v7362 = vsel %vm1069, %v7264, %v7341
          %v7363 = vsel %vm1069, %v7265, %v7343
          %vm7364 = vcmask 130048
          %v7365 = vsel %vm7364, %v7362, %v7349
          %v7366 = vsel %vm7364, %v7363, %v7351
          %vm7367 = vcmask 195584
          %v7368 = vsel %vm7367, %v7365, %v7357
          %v7369 = vsel %vm7367, %v7366, %v7359
          %vm7370 = vcmask 261120
          %v7371 = vsel %vm7370, %v7368, 0.0
          %v7372 = vsel %vm7370, %v7369, 0.0
          %v7373 = vld [vmem:[%s5] sm:$0x1]
          %v7375 = vlaneseq
          %v7376 = vshrl.u32 %v7375, 7
          %v7377 = vsub.s32 0, %v7376
          %v7378 = vrot.slane %v7373, %v7377
          %v7380 = vmul.f32 %v7371, %v7378
          %v7381 = vmul.f32 %v7372, %v7378
          %7382 = vadd.xlane.f32.xlu0 %v7380
          %v7383 = vpop.xlane.xlu0 %7382
          %7384 = vadd.xlane.f32.xlu0 %v7381
          %v7385 = vpop.xlane.xlu0 %7384
          %v7386 = vld [vmem:[%s6] sm:$0x1]
          %v7388 = vlaneseq
          %v7389 = vshrl.u32 %v7388, 7
          %v7390 = vsub.s32 0, %v7389
          %v7391 = vrot.slane %v7386, %v7390
          %v7393 = vmul.f32 %v1066, %v7391
          %v7394 = vmul.f32 %v1068, %v7391
          %7395 = vadd.xlane.f32.xlu0 %v7393
          %v7396 = vpop.xlane.xlu0 %7395
          %7397 = vadd.xlane.f32.xlu0 %v7394
          %v7398 = vpop.xlane.xlu0 %7397
          %v7399 = vadd.f32 %v7383, %v7396
          %v7400 = vadd.f32 %v7385, %v7398
          %v7401 = vxor.u32 %v7399, 2147483648
          %v7402 = vxor.u32 %v7400, 2147483648
          %v7403 = vmul.f32 %v7401, 1.442695
          %v7404 = vpow.pop %v7403
          %v7405 = vmul.f32 %v7402, 1.442695
          %v7406 = vpow.pop %v7405
          %v7407 = vadd.f32 %v7404, 1.0
          %v7408 = vadd.f32 %v7406, 1.0
          %v7409 = vrcp.pop %v7407
          %v7410 = vmul.f32 1.0, %v7409
          %v7411 = vrcp.pop %v7408
          %v7412 = vmul.f32 1.0, %v7411
          %v7413 = vmul.f32 %v7410, %v1066
          %v7414 = vmul.f32 %v7412, %v1068
          %v7415 = vsub.f32 1.0, %v7410
          %v7416 = vsub.f32 1.0, %v7412
          %v7417 = vmul.f32 %v7415, %v7371
          %v7418 = vmul.f32 %v7416, %v7372
          %v7419 = vadd.f32 %v7413, %v7417
          %v7420 = vadd.f32 %v7414, %v7418
          %7421 = vadd.xlane.f32.xlu0 %v7419
          %v7422 = vpop.xlane.xlu0 %7421
          %7423 = vadd.xlane.f32.xlu0 %v7420
          %v7424 = vpop.xlane.xlu0 %7423
          %v7425 = vmul.f32 %v7422, 0.03125
          %v7426 = vmul.f32 %v7424, 0.03125
          %v7427 = vmul.f32 %v7419, %v7419
          %v7428 = vmul.f32 %v7420, %v7420
          %7429 = vadd.xlane.f32.xlu0 %v7427
          %v7430 = vpop.xlane.xlu0 %7429
          %7431 = vadd.xlane.f32.xlu0 %v7428
          %v7432 = vpop.xlane.xlu0 %7431
          %v7433 = vmul.f32 %v7430, 0.03125
          %v7434 = vmul.f32 %v7432, 0.03125
          %v7435 = vmul.f32 %v7425, %v7425
          %v7436 = vmul.f32 %v7426, %v7426
          %v7437 = vsub.f32 %v7433, %v7435
          %v7438 = vsub.f32 %v7434, %v7436
          %v7439 = vmax.f32 %v7437, 0.0
          %v7440 = vmax.f32 %v7438, 0.0
          %v7441 = vsub.f32 %v7419, %v7425
          %v7442 = vsub.f32 %v7420, %v7426
          %v7443 = vadd.f32 %v7439, 1e-05
          %v7444 = vadd.f32 %v7440, 1e-05
          %v7445 = vrsqrt.pop %v7443
          %v7446 = vrsqrt.pop %v7444
          %v7447 = vmul.f32 %v7441, %v7445
          %v7448 = vmul.f32 %v7442, %v7446
          %v7449 = vld [vmem:[%s7] sm:$0x1]
          %v7451 = vlaneseq
          %v7452 = vshrl.u32 %v7451, 7
          %v7453 = vsub.s32 0, %v7452
          %v7454 = vrot.slane %v7449, %v7453
          %v7456 = vmul.f32 %v7447, %v7454
          %v7457 = vmul.f32 %v7448, %v7454
          %v7458 = vld [vmem:[%s8] sm:$0x1]
          %v7460 = vlaneseq
          %v7461 = vshrl.u32 %v7460, 7
          %v7462 = vsub.s32 0, %v7461
          %v7463 = vrot.slane %v7458, %v7462
          %v7465 = vadd.f32 %v7456, %v7463
          %v7466 = vadd.f32 %v7457, %v7463
          %v7467 = vmax.f32 %v7465, 0.0
          %v7468 = vmax.f32 %v7466, 0.0
          %7469 = vst [vmem:[%s449] sm:$0xff] %v7467
          %7470 = vst [vmem:[%s449 + $0x8] sm:$0xff] %v7468
        $region109: #{tpu_custom_call.1} parent=92 // pred_fallthru
          _
        %s7471 = sand.u32 %s252, 1
        %s7472 = scalar_lea.sflag [#allocation9], %s7471
        %s7473 = sand.u32 %s252, 1
        %s7474 = smul.addr %s7473, 16
        %s7475 = scalar_lea.vmem [#allocation10], %s7474
        // Predicated region
        $region110: #{tpu_custom_call.1} parent=92 // pred_check
          %p7476 = pneg %p262
        $region111: #{tpu_custom_call.1} parent=92 // pred_check_branch
          %7478 = sbr.rel (%p7476) target = $region113
        $region112: #{tpu_custom_call.1} parent=92 // pred_region
          %s7479 = smul.u32 2, %s30
          %s7481 = ssub.s32 256, 256
          %7482 = vsyncadd %s7472, %s7481
          %s7483 = smul.addr %s7479, 128
          %s7484 = scalar_lea.hbm %s9, %s7483
          %s7485 = sshll.u32 %s7475, 4
          %s7486 = int_to_ptr.vmem [resolvable:$true] %s7485
          %7491 = dma.vmem_to_hbm [thread:$0]  %s7486, 256, %s7484, %s7472, 128, 128, 8
        $region113: #{tpu_custom_call.1} parent=92 // pred_fallthru
          _
      $region93: #{tpu_custom_call.1} parent=5 // pred_fallthru
        _
      %p7492 = scmp.le.s32.totalorder 2, %s21
      // Predicated region
      $region114: #{tpu_custom_call.1} parent=5 // pred_check
        %p7493 = pneg %p7492
      $region115: #{tpu_custom_call.1} parent=5 // pred_check_branch
        %7495 = sbr.rel (%p7493) target = $region117
      $region116: #{tpu_custom_call.1} parent=5 // pred_region
        %s7496 = ssub.s32 %s21, 2
        // Predicated region
        $region118: #{tpu_custom_call.1} parent=116 // pred_check
          %p7497 = pneg %p268
        $region119: #{tpu_custom_call.1} parent=116 // pred_check_branch
          %7499 = sbr.rel (%p7497) target = $region121
        $region120: #{tpu_custom_call.1} parent=116 // pred_region
          %s7500 = sand.u32 %s253, 1
          %s7501 = scalar_lea.sflag [#allocation9], %s7500
          %s7502 = sand.u32 %s253, 1
          %s7503 = smul.addr %s7502, 16
          %s7504 = scalar_lea.vmem [#allocation10], %s7503
          %7505 = dma.done %s7501, 256
        $region121: #{tpu_custom_call.1} parent=116 // pred_fallthru
          _
      $region117: #{tpu_custom_call.1} parent=5 // pred_fallthru
        _
    $region6: #{tpu_custom_call.1} parent=1 // loop_footer
      %s25 = sadd.s32 1, %s21
    $region7: #{tpu_custom_call.1} parent=1 // loop_footer_branch
      %20 = sbr.rel target = $region3
    $region8: #{tpu_custom_call.1} parent=1 // loop_exit
      _
    %7506 = vsyncpa [#allocation8], 1
    %s7507 = scalar_lea.sflag [#allocation8], 1
    %7508 = vsyncpa %s7507, 1
    %7509 = vsyncpa [#allocation9], 1
    %s7510 = scalar_lea.sflag [#allocation9], 1
    %7511 = vsyncpa %s7510, 1

</llo_original>
